<compile_context>
chip_gen: v7x
topology: tpu7x:2x2x1
jax: 0.10.0
libtpu: 0.0.40
codegen_flags: <defaults>
</compile_context>

<pallas_src>
import functools

import jax
import jax.numpy as jnp
import numpy as np
from jax import lax
from jax.experimental import pallas as pl
from jax.experimental.pallas import tpu as pltpu


def _round_up(x, m):
    return (x + m - 1) // m * m


def pick_bt(batch):
    """Images per grid step (<=8 so BT*16 lanes <= 128); keep >=2 grid steps if possible."""
    for c in (8, 4, 2, 1):
        if batch % c == 0 and batch // c >= 2:
            return c
    return 1


# ----------------------------------------------------------------------------
# Fused conv1+ReLU+pool -> conv2+ReLU+pool kernel (BT images per grid step).
# Lane layout everywhere: lane = (image b, channel c), c minor.
# ----------------------------------------------------------------------------
def _convnet_kernel(x1_ref, w1_ref, b1_ref, w2_ref, b2_ref, o_ref,
                    x2e_ref, x2o_ref, *, bt):
    cl1 = 16 * bt                     # conv1 output lanes (b, c)
    WP1, Q1 = 32, 28 * 8              # conv1 padded width / rows per (w mod 4) class
    WP2, Q2 = 16, 14 * 8              # conv2 padded width / rows per parity class

    # ---------------- conv1: 3x3 "same" conv + bias + ReLU (block-diag MXU dot) --------
    # x1_ref[0]: (241, 4*bt) f32, lanes = (w-mod-4 class r, image b).  Tap (kh,kw) for
    # output class r is a contiguous static row slice of class (r+off)%4.
    cls = [x1_ref[0, :, r * bt:(r + 1) * bt] for r in range(4)]       # (241, bt) each
    w1 = w1_ref[...]                                                  # (9*bt, 16*bt) bf16
    b1 = b1_ref[...]                                                  # (1, 16*bt) f32
    ys = []
    for r in range(4):
        taps = []
        for kh in range(3):
            for kw in range(3):
                off = kh * WP1 + kw
                src, start = (r + off) % 4, (r + off) // 4
                taps.append(cls[src][start:start + Q1, :])
        lhs = jnp.concatenate(taps, axis=1)                           # (224, 9*bt)
        y = jnp.dot(lhs.astype(jnp.bfloat16), w1,
                    preferred_element_type=jnp.float32)               # (224, 16*bt)
        ys.append(jnp.maximum(y + b1, 0.0))

    # ---------------- 2x2 maxpool + repack into conv2's padded parity layout -----------
    # ys[r] row = h*8 + a  <->  conv1 output (h, w = 4a+r); a == 7 columns are junk and
    # are discarded (pool extraction only reads a < 7).
    wpe = jnp.maximum(ys[0], ys[1])                      # w-pooled, even wo; rows h*8+m
    wpo = jnp.maximum(ys[2], ys[3])                      # odd wo
    hpe = jnp.maximum(wpe[0:Q1 - 8, :], wpe[8:Q1, :])    # valid at rows 16*ho + m
    hpo = jnp.maximum(wpo[0:Q1 - 8, :], wpo[8:Q1, :])
    x2e_ref[...] = jnp.zeros_like(x2e_ref)               # zero halo + slack rows
    x2o_ref[...] = jnp.zeros_like(x2o_ref)
    for ho in range(14):
        r2 = 8 * (ho + 1)
        # pooled (ho, 2m)   -> padded p2 = 16*(ho+1)+2m+1 (odd)  -> x2o row r2 + m
        # pooled (ho, 2m+1) -> padded p2 = 16*(ho+1)+2m+2 (even) -> x2e row r2 + m + 1
        x2o_ref[r2:r2 + 7, :] = hpe[16 * ho:16 * ho + 7, :]
        x2e_ref[r2 + 1:r2 + 8, :] = hpo[16 * ho:16 * ho + 7, :]

    # ---------------- conv2: one K = 9*16*bt block-diag MXU dot per output parity ------
    w2 = w2_ref[...]                                                  # (9*16*bt, 32*bt)
    b2 = b2_ref[...]                                                  # (1, 32*bt) f32
    taps_e, taps_o = [], []
    for kh in range(3):
        for kw in range(3):
            off = kh * WP2 + kw
            if off % 2 == 0:
                taps_e.append(x2e_ref[off // 2:off // 2 + Q2, :])
                taps_o.append(x2o_ref[off // 2:off // 2 + Q2, :])
            else:
                taps_e.append(x2o_ref[(off - 1) // 2:(off - 1) // 2 + Q2, :])
                taps_o.append(x2e_ref[(off + 1) // 2:(off + 1) // 2 + Q2, :])
    lhs_e = jnp.concatenate(taps_e, axis=1).astype(jnp.bfloat16)      # (112, 9*16*bt)
    lhs_o = jnp.concatenate(taps_o, axis=1).astype(jnp.bfloat16)
    y2e = jnp.maximum(jnp.dot(lhs_e, w2, preferred_element_type=jnp.float32) + b2, 0.0)
    y2o = jnp.maximum(jnp.dot(lhs_o, w2, preferred_element_type=jnp.float32) + b2, 0.0)

    # ---------------- 2x2 maxpool + lane-dense store of (49, 32*bt) features -----------
    wm2 = jnp.maximum(y2e, y2o)                          # rows h2*8 + j2 (j2 == 7 junk)
    hm2 = jnp.maximum(wm2[0:Q2 - 8, :], wm2[8:Q2, :])    # valid at rows 16*ho2 + wo2
    for ho2 in range(7):
        o_ref[0, 7 * ho2:7 * ho2 + 7, :] = hm2[16 * ho2:16 * ho2 + 7, :].astype(o_ref.dtype)


def conv_features(x4, w1bd, b1t, w2bd, b2t, *, bt):
    """x4: (NT, 241, 4*bt) f32 -> (NT, 49, 32*bt) f32 pooled conv2 features."""
    nt = x4.shape[0]
    cl1, cl2 = 16 * bt, 32 * bt
    kernel = functools.partial(_convnet_kernel, bt=bt)
    flops = int(nt * (4 * 2 * 224 * (9 * bt) * cl1 + 2 * 2 * 112 * (9 * cl1) * cl2))
    bytes_accessed = int(x4.size * 4 + w1bd.size * 2 + w2bd.size * 2
                         + (b1t.size + b2t.size) * 4 + nt * 49 * cl2 * 4)
    return pl.pallas_call(
        kernel,
        out_shape=jax.ShapeDtypeStruct((nt, 49, cl2), jnp.float32),
        grid=(nt,),
        in_specs=[
            pl.BlockSpec((1, 241, 4 * bt), lambda i: (i, 0, 0)),
            pl.BlockSpec(w1bd.shape, lambda i: (0, 0)),
            pl.BlockSpec(b1t.shape, lambda i: (0, 0)),
            pl.BlockSpec(w2bd.shape, lambda i: (0, 0)),
            pl.BlockSpec(b2t.shape, lambda i: (0, 0)),
        ],
        out_specs=pl.BlockSpec((1, 49, cl2), lambda i: (i, 0, 0)),
        scratch_shapes=[pltpu.VMEM((129, cl1), jnp.float32),
                        pltpu.VMEM((129, cl1), jnp.float32)],
        compiler_params=pltpu.CompilerParams(
            dimension_semantics=("parallel",),
            vmem_limit_bytes=32 * 1024 * 1024),
        cost_estimate=pl.CostEstimate(flops=flops, transcendentals=0,
                                      bytes_accessed=bytes_accessed),
    )(x4, w1bd, b1t, w2bd, b2t)


# ----------------------------------------------------------------------------
# Fused classifier: o = (relu(x @ W1 + b1)) @ W2 + b2, M-tiled, bf16 MXU, f32 epilogue.
# ----------------------------------------------------------------------------
def _fc_kernel(x_ref, w1_ref, b1_ref, w2_ref, b2_ref, o_ref):
    h = jnp.dot(x_ref[...], w1_ref[...], preferred_element_type=jnp.float32)
    h = jnp.maximum(h + b1_ref[...], 0.0)
    o = jnp.dot(h.astype(jnp.bfloat16), w2_ref[...], preferred_element_type=jnp.float32)
    o_ref[...] = (o + b2_ref[...]).astype(o_ref.dtype)


def fc_head(feats, w1, b1, w2, b2, *, block_m=512):
    M, K = feats.shape
    N1, N2 = w1.shape[1], w2.shape[1]
    tm = min(block_m, _round_up(M, 8))
    Mp = _round_up(M, tm)
    x = feats.astype(jnp.bfloat16)
    if Mp != M:
        x = jnp.pad(x, ((0, Mp - M), (0, 0)))
    flops = int(2 * Mp * (K * N1 + N1 * N2))
    bytes_accessed = int(Mp * K * 2 + K * N1 * 2 + N1 * N2 * 2 + (N1 + N2) * 4 + Mp * N2 * 4)
    out = pl.pallas_call(
        _fc_kernel,
        out_shape=jax.ShapeDtypeStruct((Mp, N2), jnp.float32),
        grid=(Mp // tm,),
        in_specs=[
            pl.BlockSpec((tm, K), lambda i: (i, 0)),
            pl.BlockSpec((K, N1), lambda i: (0, 0)),
            pl.BlockSpec((1, N1), lambda i: (0, 0)),
            pl.BlockSpec((N1, N2), lambda i: (0, 0)),
            pl.BlockSpec((1, N2), lambda i: (0, 0)),
        ],
        out_specs=pl.BlockSpec((tm, N2), lambda i: (i, 0)),
        compiler_params=pltpu.CompilerParams(
            dimension_semantics=("parallel",),
            vmem_limit_bytes=32 * 1024 * 1024),
        cost_estimate=pl.CostEstimate(flops=flops, transcendentals=0,
                                      bytes_accessed=bytes_accessed),
    )(x, w1, b1, w2, b2)
    return out[:M] if Mp != M else out


# ----------------------------------------------------------------------------
# Parameter preparation (ONCE): transposes, block-diag expansion, permutations, padding.
# ----------------------------------------------------------------------------
def init_torch_params(num_classes, key):
    ks = jax.random.split(key, 8)
    s = 0.05
    return {
        "conv1_w": jax.random.normal(ks[0], (16, 1, 3, 3), jnp.float32) * s,
        "conv1_b": jax.random.normal(ks[1], (16,), jnp.float32) * s,
        "conv2_w": jax.random.normal(ks[2], (32, 16, 3, 3), jnp.float32) * s,
        "conv2_b": jax.random.normal(ks[3], (32,), jnp.float32) * s,
        "fc1_w": jax.random.normal(ks[4], (256, 32 * 7 * 7), jnp.float32) * s,
        "fc1_b": jax.random.normal(ks[5], (256,), jnp.float32) * s,
        "fc2_w": jax.random.normal(ks[6], (num_classes, 256), jnp.float32) * s,
        "fc2_b": jax.random.normal(ks[7], (num_classes,), jnp.float32) * s,
    }


def prepare_params(tp, *, bt):
    num_classes = tp["fc2_w"].shape[0]
    eye = jnp.eye(bt, dtype=jnp.float32)
    # conv1 (co,1,kh,kw) -> (t=kh*3+kw, co) -> block-diag over the bt lane-packed images.
    w1_t = jnp.transpose(tp["conv1_w"], (2, 3, 1, 0)).reshape(9, 16)
    w1bd = (w1_t[:, None, None, :] * eye[None, :, :, None]) \
        .reshape(9 * bt, 16 * bt).astype(jnp.bfloat16)                # rows (t,b), cols (b,c)
    b1t = jnp.tile(tp["conv1_b"], bt).reshape(1, 16 * bt).astype(jnp.float32)
    # conv2 (co,ci,kh,kw) -> (t, ci, co) -> block-diag, rows ordered (t, b, ci).
    w2_t = jnp.transpose(tp["conv2_w"], (2, 3, 1, 0)).reshape(9, 16, 32)
    w2bd = (w2_t[:, None, :, None, :] * eye[None, :, None, :, None]) \
        .reshape(9 * 16 * bt, 32 * bt).astype(jnp.bfloat16)
    b2t = jnp.tile(tp["conv2_b"], bt).reshape(1, 32 * bt).astype(jnp.float32)
    # fc1: permute columns once so the (spatial, channel) feature order matches torch's
    # flatten of NCHW ((c,h,w) order) bit-exactly.
    w_fc1 = (tp["fc1_w"].reshape(256, 32, 7, 7).transpose(2, 3, 1, 0)
             .reshape(7 * 7 * 32, 256).astype(jnp.bfloat16))
    b_fc1 = tp["fc1_b"].reshape(1, 256).astype(jnp.float32)
    # fc2: transpose + pad the output dim up to a full 128-lane width (unmasked stores).
    ncp = _round_up(max(num_classes, 128), 128)
    w_fc2 = jnp.zeros((256, ncp), jnp.float32).at[:, :num_classes].set(tp["fc2_w"].T)
    b_fc2 = jnp.zeros((1, ncp), jnp.float32).at[0, :num_classes].set(tp["fc2_b"])
    return {"w1bd": w1bd, "b1t": b1t, "w2bd": w2bd, "b2t": b2t,
            "w_fc1": w_fc1, "b_fc1": b_fc1,
            "w_fc2": w_fc2.astype(jnp.bfloat16), "b_fc2": b_fc2}


# ----------------------------------------------------------------------------
# Forward pass
# ----------------------------------------------------------------------------
def custom_cnn_forward(params, x_nchw, *, bt, num_classes):
    """x_nchw: (B, 1, 28, 28) float32 -> logits (B, num_classes)."""
    B = x_nchw.shape[0]
    assert B % bt == 0, "batch must be divisible by the batch tile"
    nt = B // bt

    # ---- layout plumbing on the raw input only: pad 28x28 -> 30x32, flatten, split by
    #      (flat index mod 4), pack images into lanes (lane = r*bt + b). ----
    img = x_nchw.reshape(B, 28, 28).astype(jnp.float32)
    xp = jnp.pad(img, ((0, 0), (1, 1), (1, 3)))                  # (B, 30, 32)
    xf = jnp.pad(xp.reshape(B, 960), ((0, 0), (0, 4)))           # (B, 964)
    x4 = xf.reshape(nt, bt, 241, 4)
    x4 = jnp.transpose(x4, (0, 2, 3, 1)).reshape(nt, 241, 4 * bt)

    # ---- conv1+ReLU+pool+conv2+ReLU+pool: ONE pallas_call, no HBM between layers ----
    h2 = conv_features(x4, params["w1bd"], params["b1t"],
                       params["w2bd"], params["b2t"], bt=bt)     # (nt, 49, 32*bt)

    # ---- flatten to (B, 1568) feature rows (fc1 weights pre-permuted to match) ----
    feats = jnp.transpose(h2.reshape(nt, 49, bt, 32), (0, 2, 1, 3)).reshape(B, 49 * 32)

    # ---- fused fc1+ReLU+fc2 (one pallas_call, 128-wide padded logits) ----
    logits = fc_head(feats, params["w_fc1"], params["b_fc1"],
                     params["w_fc2"], params["b_fc2"])
    return logits[:, :num_classes]


# ----------------------------------------------------------------------------
# Pure-JAX f32 reference (correctness check only)
# ----------------------------------------------------------------------------
def reference_forward(tp, x_nchw):
    x = jnp.transpose(x_nchw, (0, 2, 3, 1))
    dn = ("NHWC", "HWIO", "NHWC")

    def conv(x, w, b):
        wk = jnp.transpose(w, (2, 3, 1, 0))
        y = lax.conv_general_dilated(x, wk, (1, 1), "SAME", dimension_numbers=dn)
        return jnp.maximum(y + b, 0.0)

    def pool(x):
        return lax.reduce_window(x, -jnp.inf, lax.max, (1, 2, 2, 1), (1, 2, 2, 1), "VALID")

    x = pool(conv(x, tp["conv1_w"], tp["conv1_b"]))
    x = pool(conv(x, tp["conv2_w"], tp["conv2_b"]))
    B = x.shape[0]
    x = jnp.transpose(x, (0, 3, 1, 2)).reshape(B, -1)            # torch.flatten order
    x = jnp.maximum(x @ tp["fc1_w"].T + tp["fc1_b"], 0.0)
    return x @ tp["fc2_w"].T + tp["fc2_b"]


if __name__ == "__main__":
    num_classes = 10
    key = jax.random.PRNGKey(0)
    k_params, k_x = jax.random.split(key)
    torch_params = init_torch_params(num_classes, k_params)

    B = 2
    BT = pick_bt(B)                       # -> BT=1, grid of 2 steps (keeps both v7x TCs busy)
    params = prepare_params(torch_params, bt=BT)
    x = jax.random.normal(k_x, (B, 1, 28, 28), jnp.float32)   # NCHW; 28x28 -> 32*7*7 feats

    fwd = jax.jit(functools.partial(custom_cnn_forward, bt=BT, num_classes=num_classes))
    out = jax.block_until_ready(fwd(params, x))

    ref = jax.block_until_ready(reference_forward(torch_params, x))
    assert out.shape == (B, num_classes)
    # bf16 MXU inputs (f32 accumulate) -> small numerical drift vs f32 reference.
    np.testing.assert_allclose(np.asarray(out), np.asarray(ref), rtol=2e-2, atol=2e-2)

    print("KERNEL_OK")
</pallas_src>

<mosaic_0001>
module attributes {stable_mosaic.version = 11 : i64} {
  func.func @_convnet_kernel(%arg0: i32, %arg1: memref<1x241x4xf32, #tpu.memory_space<vmem>>, %arg2: memref<9x16xbf16, #tpu.memory_space<vmem>>, %arg3: memref<1x16xf32, #tpu.memory_space<vmem>>, %arg4: memref<144x32xbf16, #tpu.memory_space<vmem>>, %arg5: memref<1x32xf32, #tpu.memory_space<vmem>>, %arg6: memref<1x49x32xf32, #tpu.memory_space<vmem>>, %arg7: memref<129x16xf32, #tpu.memory_space<vmem>>, %arg8: memref<129x16xf32, #tpu.memory_space<vmem>>) attributes {dimension_semantics = [#tpu.dimension_semantics<parallel>], iteration_bounds = array<i64: 2>, scalar_prefetch = 0 : i64, scratch_operands = 2 : i64, tpu.core_type = #tpu.core_type<tc>, window_params = [{transform_indices = @transform_0, window_bounds = array<i64: 1, 241, 4>}, {pipeline_mode = #tpu.pipeline_mode<synchronous>, transform_indices = @transform_1, window_bounds = array<i64: 9, 16>}, {pipeline_mode = #tpu.pipeline_mode<synchronous>, transform_indices = @transform_2, window_bounds = array<i64: 1, 16>}, {pipeline_mode = #tpu.pipeline_mode<synchronous>, transform_indices = @transform_3, window_bounds = array<i64: 144, 32>}, {pipeline_mode = #tpu.pipeline_mode<synchronous>, transform_indices = @transform_4, window_bounds = array<i64: 1, 32>}, {transform_indices = @transform_5, window_bounds = array<i64: 1, 49, 32>}]} {
    %c0 = arith.constant 0 : index
    %c0_0 = arith.constant 0 : index
    %c0_1 = arith.constant 0 : index
    %0 = vector.load %arg1[%c0, %c0_0, %c0_1] : memref<1x241x4xf32, #tpu.memory_space<vmem>>, vector<1x241x1xf32>
    %1 = vector.shape_cast %0 : vector<1x241x1xf32> to vector<241x1xf32>
    %c0_2 = arith.constant 0 : index
    %c0_3 = arith.constant 0 : index
    %c1 = arith.constant 1 : index
    %2 = vector.load %arg1[%c0_2, %c0_3, %c1] : memref<1x241x4xf32, #tpu.memory_space<vmem>>, vector<1x241x1xf32>
    %3 = vector.shape_cast %2 : vector<1x241x1xf32> to vector<241x1xf32>
    %c0_4 = arith.constant 0 : index
    %c0_5 = arith.constant 0 : index
    %c2 = arith.constant 2 : index
    %4 = vector.load %arg1[%c0_4, %c0_5, %c2] : memref<1x241x4xf32, #tpu.memory_space<vmem>>, vector<1x241x1xf32>
    %5 = vector.shape_cast %4 : vector<1x241x1xf32> to vector<241x1xf32>
    %c0_6 = arith.constant 0 : index
    %c0_7 = arith.constant 0 : index
    %c3 = arith.constant 3 : index
    %6 = vector.load %arg1[%c0_6, %c0_7, %c3] : memref<1x241x4xf32, #tpu.memory_space<vmem>>, vector<1x241x1xf32>
    %7 = vector.shape_cast %6 : vector<1x241x1xf32> to vector<241x1xf32>
    %c0_8 = arith.constant 0 : index
    %c0_9 = arith.constant 0 : index
    %8 = vector.load %arg2[%c0_8, %c0_9] : memref<9x16xbf16, #tpu.memory_space<vmem>>, vector<9x16xbf16>
    %c0_10 = arith.constant 0 : index
    %c0_11 = arith.constant 0 : index
    %9 = vector.load %arg3[%c0_10, %c0_11] : memref<1x16xf32, #tpu.memory_space<vmem>>, vector<1x16xf32>
    %10 = vector.extract_strided_slice %1 {offsets = [0, 0], sizes = [224, 1], strides = [1, 1]} : vector<241x1xf32> to vector<224x1xf32>
    %11 = vector.extract_strided_slice %3 {offsets = [0, 0], sizes = [224, 1], strides = [1, 1]} : vector<241x1xf32> to vector<224x1xf32>
    %12 = vector.extract_strided_slice %5 {offsets = [0, 0], sizes = [224, 1], strides = [1, 1]} : vector<241x1xf32> to vector<224x1xf32>
    %13 = vector.extract_strided_slice %1 {offsets = [8, 0], sizes = [224, 1], strides = [1, 1]} : vector<241x1xf32> to vector<224x1xf32>
    %14 = vector.extract_strided_slice %3 {offsets = [8, 0], sizes = [224, 1], strides = [1, 1]} : vector<241x1xf32> to vector<224x1xf32>
    %15 = vector.extract_strided_slice %5 {offsets = [8, 0], sizes = [224, 1], strides = [1, 1]} : vector<241x1xf32> to vector<224x1xf32>
    %16 = vector.extract_strided_slice %1 {offsets = [16, 0], sizes = [224, 1], strides = [1, 1]} : vector<241x1xf32> to vector<224x1xf32>
    %17 = vector.extract_strided_slice %3 {offsets = [16, 0], sizes = [224, 1], strides = [1, 1]} : vector<241x1xf32> to vector<224x1xf32>
    %18 = vector.extract_strided_slice %5 {offsets = [16, 0], sizes = [224, 1], strides = [1, 1]} : vector<241x1xf32> to vector<224x1xf32>
    %19 = tpu.concatenate %10, %11, %12, %13, %14, %15, %16, %17, %18 in 1 : vector<224x1xf32>, vector<224x1xf32>, vector<224x1xf32>, vector<224x1xf32>, vector<224x1xf32>, vector<224x1xf32>, vector<224x1xf32>, vector<224x1xf32>, vector<224x1xf32> -> vector<224x9xf32>
    %20 = arith.truncf %19 : vector<224x9xf32> to vector<224x9xbf16>
    %cst = arith.constant dense<0.000000e+00> : vector<224x16xf32>
    %21 = tpu.matmul %20, %8, %cst {dimension_numbers = #tpu.dot_dimension_numbers<[1], [0], [0], [1], [0, 0, 1, 1], [], []>} : vector<224x9xbf16>, vector<9x16xbf16>, vector<224x16xf32> -> vector<224x16xf32>
    %22 = vector.broadcast %9 : vector<1x16xf32> to vector<224x16xf32>
    %23 = arith.addf %21, %22 : vector<224x16xf32>
    %cst_12 = arith.constant 0.000000e+00 : f32
    %24 = vector.broadcast %cst_12 : f32 to vector<224x16xf32>
    %25 = arith.maximumf %23, %24 : vector<224x16xf32>
    %26 = vector.extract_strided_slice %3 {offsets = [0, 0], sizes = [224, 1], strides = [1, 1]} : vector<241x1xf32> to vector<224x1xf32>
    %27 = vector.extract_strided_slice %5 {offsets = [0, 0], sizes = [224, 1], strides = [1, 1]} : vector<241x1xf32> to vector<224x1xf32>
    %28 = vector.extract_strided_slice %7 {offsets = [0, 0], sizes = [224, 1], strides = [1, 1]} : vector<241x1xf32> to vector<224x1xf32>
    %29 = vector.extract_strided_slice %3 {offsets = [8, 0], sizes = [224, 1], strides = [1, 1]} : vector<241x1xf32> to vector<224x1xf32>
    %30 = vector.extract_strided_slice %5 {offsets = [8, 0], sizes = [224, 1], strides = [1, 1]} : vector<241x1xf32> to vector<224x1xf32>
    %31 = vector.extract_strided_slice %7 {offsets = [8, 0], sizes = [224, 1], strides = [1, 1]} : vector<241x1xf32> to vector<224x1xf32>
    %32 = vector.extract_strided_slice %3 {offsets = [16, 0], sizes = [224, 1], strides = [1, 1]} : vector<241x1xf32> to vector<224x1xf32>
    %33 = vector.extract_strided_slice %5 {offsets = [16, 0], sizes = [224, 1], strides = [1, 1]} : vector<241x1xf32> to vector<224x1xf32>
    %34 = vector.extract_strided_slice %7 {offsets = [16, 0], sizes = [224, 1], strides = [1, 1]} : vector<241x1xf32> to vector<224x1xf32>
    %35 = tpu.concatenate %26, %27, %28, %29, %30, %31, %32, %33, %34 in 1 : vector<224x1xf32>, vector<224x1xf32>, vector<224x1xf32>, vector<224x1xf32>, vector<224x1xf32>, vector<224x1xf32>, vector<224x1xf32>, vector<224x1xf32>, vector<224x1xf32> -> vector<224x9xf32>
    %36 = arith.truncf %35 : vector<224x9xf32> to vector<224x9xbf16>
    %cst_13 = arith.constant dense<0.000000e+00> : vector<224x16xf32>
    %37 = tpu.matmul %36, %8, %cst_13 {dimension_numbers = #tpu.dot_dimension_numbers<[1], [0], [0], [1], [0, 0, 1, 1], [], []>} : vector<224x9xbf16>, vector<9x16xbf16>, vector<224x16xf32> -> vector<224x16xf32>
    %38 = vector.broadcast %9 : vector<1x16xf32> to vector<224x16xf32>
    %39 = arith.addf %37, %38 : vector<224x16xf32>
    %cst_14 = arith.constant 0.000000e+00 : f32
    %40 = vector.broadcast %cst_14 : f32 to vector<224x16xf32>
    %41 = arith.maximumf %39, %40 : vector<224x16xf32>
    %42 = vector.extract_strided_slice %5 {offsets = [0, 0], sizes = [224, 1], strides = [1, 1]} : vector<241x1xf32> to vector<224x1xf32>
    %43 = vector.extract_strided_slice %7 {offsets = [0, 0], sizes = [224, 1], strides = [1, 1]} : vector<241x1xf32> to vector<224x1xf32>
    %44 = vector.extract_strided_slice %1 {offsets = [1, 0], sizes = [224, 1], strides = [1, 1]} : vector<241x1xf32> to vector<224x1xf32>
    %45 = vector.extract_strided_slice %5 {offsets = [8, 0], sizes = [224, 1], strides = [1, 1]} : vector<241x1xf32> to vector<224x1xf32>
    %46 = vector.extract_strided_slice %7 {offsets = [8, 0], sizes = [224, 1], strides = [1, 1]} : vector<241x1xf32> to vector<224x1xf32>
    %47 = vector.extract_strided_slice %1 {offsets = [9, 0], sizes = [224, 1], strides = [1, 1]} : vector<241x1xf32> to vector<224x1xf32>
    %48 = vector.extract_strided_slice %5 {offsets = [16, 0], sizes = [224, 1], strides = [1, 1]} : vector<241x1xf32> to vector<224x1xf32>
    %49 = vector.extract_strided_slice %7 {offsets = [16, 0], sizes = [224, 1], strides = [1, 1]} : vector<241x1xf32> to vector<224x1xf32>
    %50 = vector.extract_strided_slice %1 {offsets = [17, 0], sizes = [224, 1], strides = [1, 1]} : vector<241x1xf32> to vector<224x1xf32>
    %51 = tpu.concatenate %42, %43, %44, %45, %46, %47, %48, %49, %50 in 1 : vector<224x1xf32>, vector<224x1xf32>, vector<224x1xf32>, vector<224x1xf32>, vector<224x1xf32>, vector<224x1xf32>, vector<224x1xf32>, vector<224x1xf32>, vector<224x1xf32> -> vector<224x9xf32>
    %52 = arith.truncf %51 : vector<224x9xf32> to vector<224x9xbf16>
    %cst_15 = arith.constant dense<0.000000e+00> : vector<224x16xf32>
    %53 = tpu.matmul %52, %8, %cst_15 {dimension_numbers = #tpu.dot_dimension_numbers<[1], [0], [0], [1], [0, 0, 1, 1], [], []>} : vector<224x9xbf16>, vector<9x16xbf16>, vector<224x16xf32> -> vector<224x16xf32>
    %54 = vector.broadcast %9 : vector<1x16xf32> to vector<224x16xf32>
    %55 = arith.addf %53, %54 : vector<224x16xf32>
    %cst_16 = arith.constant 0.000000e+00 : f32
    %56 = vector.broadcast %cst_16 : f32 to vector<224x16xf32>
    %57 = arith.maximumf %55, %56 : vector<224x16xf32>
    %58 = vector.extract_strided_slice %7 {offsets = [0, 0], sizes = [224, 1], strides = [1, 1]} : vector<241x1xf32> to vector<224x1xf32>
    %59 = vector.extract_strided_slice %1 {offsets = [1, 0], sizes = [224, 1], strides = [1, 1]} : vector<241x1xf32> to vector<224x1xf32>
    %60 = vector.extract_strided_slice %3 {offsets = [1, 0], sizes = [224, 1], strides = [1, 1]} : vector<241x1xf32> to vector<224x1xf32>
    %61 = vector.extract_strided_slice %7 {offsets = [8, 0], sizes = [224, 1], strides = [1, 1]} : vector<241x1xf32> to vector<224x1xf32>
    %62 = vector.extract_strided_slice %1 {offsets = [9, 0], sizes = [224, 1], strides = [1, 1]} : vector<241x1xf32> to vector<224x1xf32>
    %63 = vector.extract_strided_slice %3 {offsets = [9, 0], sizes = [224, 1], strides = [1, 1]} : vector<241x1xf32> to vector<224x1xf32>
    %64 = vector.extract_strided_slice %7 {offsets = [16, 0], sizes = [224, 1], strides = [1, 1]} : vector<241x1xf32> to vector<224x1xf32>
    %65 = vector.extract_strided_slice %1 {offsets = [17, 0], sizes = [224, 1], strides = [1, 1]} : vector<241x1xf32> to vector<224x1xf32>
    %66 = vector.extract_strided_slice %3 {offsets = [17, 0], sizes = [224, 1], strides = [1, 1]} : vector<241x1xf32> to vector<224x1xf32>
    %67 = tpu.concatenate %58, %59, %60, %61, %62, %63, %64, %65, %66 in 1 : vector<224x1xf32>, vector<224x1xf32>, vector<224x1xf32>, vector<224x1xf32>, vector<224x1xf32>, vector<224x1xf32>, vector<224x1xf32>, vector<224x1xf32>, vector<224x1xf32> -> vector<224x9xf32>
    %68 = arith.truncf %67 : vector<224x9xf32> to vector<224x9xbf16>
    %cst_17 = arith.constant dense<0.000000e+00> : vector<224x16xf32>
    %69 = tpu.matmul %68, %8, %cst_17 {dimension_numbers = #tpu.dot_dimension_numbers<[1], [0], [0], [1], [0, 0, 1, 1], [], []>} : vector<224x9xbf16>, vector<9x16xbf16>, vector<224x16xf32> -> vector<224x16xf32>
    %70 = vector.broadcast %9 : vector<1x16xf32> to vector<224x16xf32>
    %71 = arith.addf %69, %70 : vector<224x16xf32>
    %cst_18 = arith.constant 0.000000e+00 : f32
    %72 = vector.broadcast %cst_18 : f32 to vector<224x16xf32>
    %73 = arith.maximumf %71, %72 : vector<224x16xf32>
    %74 = arith.maximumf %25, %41 : vector<224x16xf32>
    %75 = arith.maximumf %57, %73 : vector<224x16xf32>
    %76 = vector.extract_strided_slice %74 {offsets = [0, 0], sizes = [216, 16], strides = [1, 1]} : vector<224x16xf32> to vector<216x16xf32>
    %77 = vector.extract_strided_slice %74 {offsets = [8, 0], sizes = [216, 16], strides = [1, 1]} : vector<224x16xf32> to vector<216x16xf32>
    %78 = arith.maximumf %76, %77 : vector<216x16xf32>
    %79 = vector.extract_strided_slice %75 {offsets = [0, 0], sizes = [216, 16], strides = [1, 1]} : vector<224x16xf32> to vector<216x16xf32>
    %80 = vector.extract_strided_slice %75 {offsets = [8, 0], sizes = [216, 16], strides = [1, 1]} : vector<224x16xf32> to vector<216x16xf32>
    %81 = arith.maximumf %79, %80 : vector<216x16xf32>
    %cst_19 = arith.constant 0.000000e+00 : f32
    %82 = vector.broadcast %cst_19 : f32 to vector<129x16xf32>
    %c0_20 = arith.constant 0 : index
    %c0_21 = arith.constant 0 : index
    %83 = vector.load %arg7[%c0_20, %c0_21] : memref<129x16xf32, #tpu.memory_space<vmem>>, vector<129x16xf32>
    tpu.vector_store %arg7[%c0_20, %c0_21], %82 {strides = array<i32>} : memref<129x16xf32, #tpu.memory_space<vmem>>, vector<129x16xf32>,
    %cst_22 = arith.constant 0.000000e+00 : f32
    %84 = vector.broadcast %cst_22 : f32 to vector<129x16xf32>
    %c0_23 = arith.constant 0 : index
    %c0_24 = arith.constant 0 : index
    %85 = vector.load %arg8[%c0_23, %c0_24] : memref<129x16xf32, #tpu.memory_space<vmem>>, vector<129x16xf32>
    tpu.vector_store %arg8[%c0_23, %c0_24], %84 {strides = array<i32>} : memref<129x16xf32, #tpu.memory_space<vmem>>, vector<129x16xf32>,
    %86 = vector.extract_strided_slice %78 {offsets = [0, 0], sizes = [7, 16], strides = [1, 1]} : vector<216x16xf32> to vector<7x16xf32>
    %c8 = arith.constant 8 : index
    %c0_25 = arith.constant 0 : index
    %87 = vector.load %arg8[%c8, %c0_25] : memref<129x16xf32, #tpu.memory_space<vmem>>, vector<7x16xf32>
    tpu.vector_store %arg8[%c8, %c0_25], %86 {strides = array<i32>} : memref<129x16xf32, #tpu.memory_space<vmem>>, vector<7x16xf32>,
    %88 = vector.extract_strided_slice %81 {offsets = [0, 0], sizes = [7, 16], strides = [1, 1]} : vector<216x16xf32> to vector<7x16xf32>
    %c9 = arith.constant 9 : index
    %c0_26 = arith.constant 0 : index
    %89 = vector.load %arg7[%c9, %c0_26] : memref<129x16xf32, #tpu.memory_space<vmem>>, vector<7x16xf32>
    tpu.vector_store %arg7[%c9, %c0_26], %88 {strides = array<i32>} : memref<129x16xf32, #tpu.memory_space<vmem>>, vector<7x16xf32>,
    %90 = vector.extract_strided_slice %78 {offsets = [16, 0], sizes = [7, 16], strides = [1, 1]} : vector<216x16xf32> to vector<7x16xf32>
    %c16 = arith.constant 16 : index
    %c0_27 = arith.constant 0 : index
    %91 = vector.load %arg8[%c16, %c0_27] : memref<129x16xf32, #tpu.memory_space<vmem>>, vector<7x16xf32>
    tpu.vector_store %arg8[%c16, %c0_27], %90 {strides = array<i32>} : memref<129x16xf32, #tpu.memory_space<vmem>>, vector<7x16xf32>,
    %92 = vector.extract_strided_slice %81 {offsets = [16, 0], sizes = [7, 16], strides = [1, 1]} : vector<216x16xf32> to vector<7x16xf32>
    %c17 = arith.constant 17 : index
    %c0_28 = arith.constant 0 : index
    %93 = vector.load %arg7[%c17, %c0_28] : memref<129x16xf32, #tpu.memory_space<vmem>>, vector<7x16xf32>
    tpu.vector_store %arg7[%c17, %c0_28], %92 {strides = array<i32>} : memref<129x16xf32, #tpu.memory_space<vmem>>, vector<7x16xf32>,
    %94 = vector.extract_strided_slice %78 {offsets = [32, 0], sizes = [7, 16], strides = [1, 1]} : vector<216x16xf32> to vector<7x16xf32>
    %c24 = arith.constant 24 : index
    %c0_29 = arith.constant 0 : index
    %95 = vector.load %arg8[%c24, %c0_29] : memref<129x16xf32, #tpu.memory_space<vmem>>, vector<7x16xf32>
    tpu.vector_store %arg8[%c24, %c0_29], %94 {strides = array<i32>} : memref<129x16xf32, #tpu.memory_space<vmem>>, vector<7x16xf32>,
    %96 = vector.extract_strided_slice %81 {offsets = [32, 0], sizes = [7, 16], strides = [1, 1]} : vector<216x16xf32> to vector<7x16xf32>
    %c25 = arith.constant 25 : index
    %c0_30 = arith.constant 0 : index
    %97 = vector.load %arg7[%c25, %c0_30] : memref<129x16xf32, #tpu.memory_space<vmem>>, vector<7x16xf32>
    tpu.vector_store %arg7[%c25, %c0_30], %96 {strides = array<i32>} : memref<129x16xf32, #tpu.memory_space<vmem>>, vector<7x16xf32>,
    %98 = vector.extract_strided_slice %78 {offsets = [48, 0], sizes = [7, 16], strides = [1, 1]} : vector<216x16xf32> to vector<7x16xf32>
    %c32 = arith.constant 32 : index
    %c0_31 = arith.constant 0 : index
    %99 = vector.load %arg8[%c32, %c0_31] : memref<129x16xf32, #tpu.memory_space<vmem>>, vector<7x16xf32>
    tpu.vector_store %arg8[%c32, %c0_31], %98 {strides = array<i32>} : memref<129x16xf32, #tpu.memory_space<vmem>>, vector<7x16xf32>,
    %100 = vector.extract_strided_slice %81 {offsets = [48, 0], sizes = [7, 16], strides = [1, 1]} : vector<216x16xf32> to vector<7x16xf32>
    %c33 = arith.constant 33 : index
    %c0_32 = arith.constant 0 : index
    %101 = vector.load %arg7[%c33, %c0_32] : memref<129x16xf32, #tpu.memory_space<vmem>>, vector<7x16xf32>
    tpu.vector_store %arg7[%c33, %c0_32], %100 {strides = array<i32>} : memref<129x16xf32, #tpu.memory_space<vmem>>, vector<7x16xf32>,
    %102 = vector.extract_strided_slice %78 {offsets = [64, 0], sizes = [7, 16], strides = [1, 1]} : vector<216x16xf32> to vector<7x16xf32>
    %c40 = arith.constant 40 : index
    %c0_33 = arith.constant 0 : index
    %103 = vector.load %arg8[%c40, %c0_33] : memref<129x16xf32, #tpu.memory_space<vmem>>, vector<7x16xf32>
    tpu.vector_store %arg8[%c40, %c0_33], %102 {strides = array<i32>} : memref<129x16xf32, #tpu.memory_space<vmem>>, vector<7x16xf32>,
    %104 = vector.extract_strided_slice %81 {offsets = [64, 0], sizes = [7, 16], strides = [1, 1]} : vector<216x16xf32> to vector<7x16xf32>
    %c41 = arith.constant 41 : index
    %c0_34 = arith.constant 0 : index
    %105 = vector.load %arg7[%c41, %c0_34] : memref<129x16xf32, #tpu.memory_space<vmem>>, vector<7x16xf32>
    tpu.vector_store %arg7[%c41, %c0_34], %104 {strides = array<i32>} : memref<129x16xf32, #tpu.memory_space<vmem>>, vector<7x16xf32>,
    %106 = vector.extract_strided_slice %78 {offsets = [80, 0], sizes = [7, 16], strides = [1, 1]} : vector<216x16xf32> to vector<7x16xf32>
    %c48 = arith.constant 48 : index
    %c0_35 = arith.constant 0 : index
    %107 = vector.load %arg8[%c48, %c0_35] : memref<129x16xf32, #tpu.memory_space<vmem>>, vector<7x16xf32>
    tpu.vector_store %arg8[%c48, %c0_35], %106 {strides = array<i32>} : memref<129x16xf32, #tpu.memory_space<vmem>>, vector<7x16xf32>,
    %108 = vector.extract_strided_slice %81 {offsets = [80, 0], sizes = [7, 16], strides = [1, 1]} : vector<216x16xf32> to vector<7x16xf32>
    %c49 = arith.constant 49 : index
    %c0_36 = arith.constant 0 : index
    %109 = vector.load %arg7[%c49, %c0_36] : memref<129x16xf32, #tpu.memory_space<vmem>>, vector<7x16xf32>
    tpu.vector_store %arg7[%c49, %c0_36], %108 {strides = array<i32>} : memref<129x16xf32, #tpu.memory_space<vmem>>, vector<7x16xf32>,
    %110 = vector.extract_strided_slice %78 {offsets = [96, 0], sizes = [7, 16], strides = [1, 1]} : vector<216x16xf32> to vector<7x16xf32>
    %c56 = arith.constant 56 : index
    %c0_37 = arith.constant 0 : index
    %111 = vector.load %arg8[%c56, %c0_37] : memref<129x16xf32, #tpu.memory_space<vmem>>, vector<7x16xf32>
    tpu.vector_store %arg8[%c56, %c0_37], %110 {strides = array<i32>} : memref<129x16xf32, #tpu.memory_space<vmem>>, vector<7x16xf32>,
    %112 = vector.extract_strided_slice %81 {offsets = [96, 0], sizes = [7, 16], strides = [1, 1]} : vector<216x16xf32> to vector<7x16xf32>
    %c57 = arith.constant 57 : index
    %c0_38 = arith.constant 0 : index
    %113 = vector.load %arg7[%c57, %c0_38] : memref<129x16xf32, #tpu.memory_space<vmem>>, vector<7x16xf32>
    tpu.vector_store %arg7[%c57, %c0_38], %112 {strides = array<i32>} : memref<129x16xf32, #tpu.memory_space<vmem>>, vector<7x16xf32>,
    %114 = vector.extract_strided_slice %78 {offsets = [112, 0], sizes = [7, 16], strides = [1, 1]} : vector<216x16xf32> to vector<7x16xf32>
    %c64 = arith.constant 64 : index
    %c0_39 = arith.constant 0 : index
    %115 = vector.load %arg8[%c64, %c0_39] : memref<129x16xf32, #tpu.memory_space<vmem>>, vector<7x16xf32>
    tpu.vector_store %arg8[%c64, %c0_39], %114 {strides = array<i32>} : memref<129x16xf32, #tpu.memory_space<vmem>>, vector<7x16xf32>,
    %116 = vector.extract_strided_slice %81 {offsets = [112, 0], sizes = [7, 16], strides = [1, 1]} : vector<216x16xf32> to vector<7x16xf32>
    %c65 = arith.constant 65 : index
    %c0_40 = arith.constant 0 : index
    %117 = vector.load %arg7[%c65, %c0_40] : memref<129x16xf32, #tpu.memory_space<vmem>>, vector<7x16xf32>
    tpu.vector_store %arg7[%c65, %c0_40], %116 {strides = array<i32>} : memref<129x16xf32, #tpu.memory_space<vmem>>, vector<7x16xf32>,
    %118 = vector.extract_strided_slice %78 {offsets = [128, 0], sizes = [7, 16], strides = [1, 1]} : vector<216x16xf32> to vector<7x16xf32>
    %c72 = arith.constant 72 : index
    %c0_41 = arith.constant 0 : index
    %119 = vector.load %arg8[%c72, %c0_41] : memref<129x16xf32, #tpu.memory_space<vmem>>, vector<7x16xf32>
    tpu.vector_store %arg8[%c72, %c0_41], %118 {strides = array<i32>} : memref<129x16xf32, #tpu.memory_space<vmem>>, vector<7x16xf32>,
    %120 = vector.extract_strided_slice %81 {offsets = [128, 0], sizes = [7, 16], strides = [1, 1]} : vector<216x16xf32> to vector<7x16xf32>
    %c73 = arith.constant 73 : index
    %c0_42 = arith.constant 0 : index
    %121 = vector.load %arg7[%c73, %c0_42] : memref<129x16xf32, #tpu.memory_space<vmem>>, vector<7x16xf32>
    tpu.vector_store %arg7[%c73, %c0_42], %120 {strides = array<i32>} : memref<129x16xf32, #tpu.memory_space<vmem>>, vector<7x16xf32>,
    %122 = vector.extract_strided_slice %78 {offsets = [144, 0], sizes = [7, 16], strides = [1, 1]} : vector<216x16xf32> to vector<7x16xf32>
    %c80 = arith.constant 80 : index
    %c0_43 = arith.constant 0 : index
    %123 = vector.load %arg8[%c80, %c0_43] : memref<129x16xf32, #tpu.memory_space<vmem>>, vector<7x16xf32>
    tpu.vector_store %arg8[%c80, %c0_43], %122 {strides = array<i32>} : memref<129x16xf32, #tpu.memory_space<vmem>>, vector<7x16xf32>,
    %124 = vector.extract_strided_slice %81 {offsets = [144, 0], sizes = [7, 16], strides = [1, 1]} : vector<216x16xf32> to vector<7x16xf32>
    %c81 = arith.constant 81 : index
    %c0_44 = arith.constant 0 : index
    %125 = vector.load %arg7[%c81, %c0_44] : memref<129x16xf32, #tpu.memory_space<vmem>>, vector<7x16xf32>
    tpu.vector_store %arg7[%c81, %c0_44], %124 {strides = array<i32>} : memref<129x16xf32, #tpu.memory_space<vmem>>, vector<7x16xf32>,
    %126 = vector.extract_strided_slice %78 {offsets = [160, 0], sizes = [7, 16], strides = [1, 1]} : vector<216x16xf32> to vector<7x16xf32>
    %c88 = arith.constant 88 : index
    %c0_45 = arith.constant 0 : index
    %127 = vector.load %arg8[%c88, %c0_45] : memref<129x16xf32, #tpu.memory_space<vmem>>, vector<7x16xf32>
    tpu.vector_store %arg8[%c88, %c0_45], %126 {strides = array<i32>} : memref<129x16xf32, #tpu.memory_space<vmem>>, vector<7x16xf32>,
    %128 = vector.extract_strided_slice %81 {offsets = [160, 0], sizes = [7, 16], strides = [1, 1]} : vector<216x16xf32> to vector<7x16xf32>
    %c89 = arith.constant 89 : index
    %c0_46 = arith.constant 0 : index
    %129 = vector.load %arg7[%c89, %c0_46] : memref<129x16xf32, #tpu.memory_space<vmem>>, vector<7x16xf32>
    tpu.vector_store %arg7[%c89, %c0_46], %128 {strides = array<i32>} : memref<129x16xf32, #tpu.memory_space<vmem>>, vector<7x16xf32>,
    %130 = vector.extract_strided_slice %78 {offsets = [176, 0], sizes = [7, 16], strides = [1, 1]} : vector<216x16xf32> to vector<7x16xf32>
    %c96 = arith.constant 96 : index
    %c0_47 = arith.constant 0 : index
    %131 = vector.load %arg8[%c96, %c0_47] : memref<129x16xf32, #tpu.memory_space<vmem>>, vector<7x16xf32>
    tpu.vector_store %arg8[%c96, %c0_47], %130 {strides = array<i32>} : memref<129x16xf32, #tpu.memory_space<vmem>>, vector<7x16xf32>,
    %132 = vector.extract_strided_slice %81 {offsets = [176, 0], sizes = [7, 16], strides = [1, 1]} : vector<216x16xf32> to vector<7x16xf32>
    %c97 = arith.constant 97 : index
    %c0_48 = arith.constant 0 : index
    %133 = vector.load %arg7[%c97, %c0_48] : memref<129x16xf32, #tpu.memory_space<vmem>>, vector<7x16xf32>
    tpu.vector_store %arg7[%c97, %c0_48], %132 {strides = array<i32>} : memref<129x16xf32, #tpu.memory_space<vmem>>, vector<7x16xf32>,
    %134 = vector.extract_strided_slice %78 {offsets = [192, 0], sizes = [7, 16], strides = [1, 1]} : vector<216x16xf32> to vector<7x16xf32>
    %c104 = arith.constant 104 : index
    %c0_49 = arith.constant 0 : index
    %135 = vector.load %arg8[%c104, %c0_49] : memref<129x16xf32, #tpu.memory_space<vmem>>, vector<7x16xf32>
    tpu.vector_store %arg8[%c104, %c0_49], %134 {strides = array<i32>} : memref<129x16xf32, #tpu.memory_space<vmem>>, vector<7x16xf32>,
    %136 = vector.extract_strided_slice %81 {offsets = [192, 0], sizes = [7, 16], strides = [1, 1]} : vector<216x16xf32> to vector<7x16xf32>
    %c105 = arith.constant 105 : index
    %c0_50 = arith.constant 0 : index
    %137 = vector.load %arg7[%c105, %c0_50] : memref<129x16xf32, #tpu.memory_space<vmem>>, vector<7x16xf32>
    tpu.vector_store %arg7[%c105, %c0_50], %136 {strides = array<i32>} : memref<129x16xf32, #tpu.memory_space<vmem>>, vector<7x16xf32>,
    %138 = vector.extract_strided_slice %78 {offsets = [208, 0], sizes = [7, 16], strides = [1, 1]} : vector<216x16xf32> to vector<7x16xf32>
    %c112 = arith.constant 112 : index
    %c0_51 = arith.constant 0 : index
    %139 = vector.load %arg8[%c112, %c0_51] : memref<129x16xf32, #tpu.memory_space<vmem>>, vector<7x16xf32>
    tpu.vector_store %arg8[%c112, %c0_51], %138 {strides = array<i32>} : memref<129x16xf32, #tpu.memory_space<vmem>>, vector<7x16xf32>,
    %140 = vector.extract_strided_slice %81 {offsets = [208, 0], sizes = [7, 16], strides = [1, 1]} : vector<216x16xf32> to vector<7x16xf32>
    %c113 = arith.constant 113 : index
    %c0_52 = arith.constant 0 : index
    %141 = vector.load %arg7[%c113, %c0_52] : memref<129x16xf32, #tpu.memory_space<vmem>>, vector<7x16xf32>
    tpu.vector_store %arg7[%c113, %c0_52], %140 {strides = array<i32>} : memref<129x16xf32, #tpu.memory_space<vmem>>, vector<7x16xf32>,
    %c0_53 = arith.constant 0 : index
    %c0_54 = arith.constant 0 : index
    %142 = vector.load %arg4[%c0_53, %c0_54] : memref<144x32xbf16, #tpu.memory_space<vmem>>, vector<144x32xbf16>
    %c0_55 = arith.constant 0 : index
    %c0_56 = arith.constant 0 : index
    %143 = vector.load %arg5[%c0_55, %c0_56] : memref<1x32xf32, #tpu.memory_space<vmem>>, vector<1x32xf32>
    %c0_57 = arith.constant 0 : index
    %c0_58 = arith.constant 0 : index
    %144 = vector.load %arg7[%c0_57, %c0_58] : memref<129x16xf32, #tpu.memory_space<vmem>>, vector<112x16xf32>
    %c0_59 = arith.constant 0 : index
    %c0_60 = arith.constant 0 : index
    %145 = vector.load %arg8[%c0_59, %c0_60] : memref<129x16xf32, #tpu.memory_space<vmem>>, vector<112x16xf32>
    %c0_61 = arith.constant 0 : index
    %c0_62 = arith.constant 0 : index
    %146 = vector.load %arg8[%c0_61, %c0_62] : memref<129x16xf32, #tpu.memory_space<vmem>>, vector<112x16xf32>
    %c1_63 = arith.constant 1 : index
    %c0_64 = arith.constant 0 : index
    %147 = vector.load %arg7[%c1_63, %c0_64] : memref<129x16xf32, #tpu.memory_space<vmem>>, vector<112x16xf32>
    %c1_65 = arith.constant 1 : index
    %c0_66 = arith.constant 0 : index
    %148 = vector.load %arg7[%c1_65, %c0_66] : memref<129x16xf32, #tpu.memory_space<vmem>>, vector<112x16xf32>
    %c1_67 = arith.constant 1 : index
    %c0_68 = arith.constant 0 : index
    %149 = vector.load %arg8[%c1_67, %c0_68] : memref<129x16xf32, #tpu.memory_space<vmem>>, vector<112x16xf32>
    %c8_69 = arith.constant 8 : index
    %c0_70 = arith.constant 0 : index
    %150 = vector.load %arg7[%c8_69, %c0_70] : memref<129x16xf32, #tpu.memory_space<vmem>>, vector<112x16xf32>
    %c8_71 = arith.constant 8 : index
    %c0_72 = arith.constant 0 : index
    %151 = vector.load %arg8[%c8_71, %c0_72] : memref<129x16xf32, #tpu.memory_space<vmem>>, vector<112x16xf32>
    %c8_73 = arith.constant 8 : index
    %c0_74 = arith.constant 0 : index
    %152 = vector.load %arg8[%c8_73, %c0_74] : memref<129x16xf32, #tpu.memory_space<vmem>>, vector<112x16xf32>
    %c9_75 = arith.constant 9 : index
    %c0_76 = arith.constant 0 : index
    %153 = vector.load %arg7[%c9_75, %c0_76] : memref<129x16xf32, #tpu.memory_space<vmem>>, vector<112x16xf32>
    %c9_77 = arith.constant 9 : index
    %c0_78 = arith.constant 0 : index
    %154 = vector.load %arg7[%c9_77, %c0_78] : memref<129x16xf32, #tpu.memory_space<vmem>>, vector<112x16xf32>
    %c9_79 = arith.constant 9 : index
    %c0_80 = arith.constant 0 : index
    %155 = vector.load %arg8[%c9_79, %c0_80] : memref<129x16xf32, #tpu.memory_space<vmem>>, vector<112x16xf32>
    %c16_81 = arith.constant 16 : index
    %c0_82 = arith.constant 0 : index
    %156 = vector.load %arg7[%c16_81, %c0_82] : memref<129x16xf32, #tpu.memory_space<vmem>>, vector<112x16xf32>
    %c16_83 = arith.constant 16 : index
    %c0_84 = arith.constant 0 : index
    %157 = vector.load %arg8[%c16_83, %c0_84] : memref<129x16xf32, #tpu.memory_space<vmem>>, vector<112x16xf32>
    %c16_85 = arith.constant 16 : index
    %c0_86 = arith.constant 0 : index
    %158 = vector.load %arg8[%c16_85, %c0_86] : memref<129x16xf32, #tpu.memory_space<vmem>>, vector<112x16xf32>
    %c17_87 = arith.constant 17 : index
    %c0_88 = arith.constant 0 : index
    %159 = vector.load %arg7[%c17_87, %c0_88] : memref<129x16xf32, #tpu.memory_space<vmem>>, vector<112x16xf32>
    %c17_89 = arith.constant 17 : index
    %c0_90 = arith.constant 0 : index
    %160 = vector.load %arg7[%c17_89, %c0_90] : memref<129x16xf32, #tpu.memory_space<vmem>>, vector<112x16xf32>
    %c17_91 = arith.constant 17 : index
    %c0_92 = arith.constant 0 : index
    %161 = vector.load %arg8[%c17_91, %c0_92] : memref<129x16xf32, #tpu.memory_space<vmem>>, vector<112x16xf32>
    %162 = tpu.concatenate %144, %146, %148, %150, %152, %154, %156, %158, %160 in 1 : vector<112x16xf32>, vector<112x16xf32>, vector<112x16xf32>, vector<112x16xf32>, vector<112x16xf32>, vector<112x16xf32>, vector<112x16xf32>, vector<112x16xf32>, vector<112x16xf32> -> vector<112x144xf32>
    %163 = arith.truncf %162 : vector<112x144xf32> to vector<112x144xbf16>
    %164 = tpu.concatenate %145, %147, %149, %151, %153, %155, %157, %159, %161 in 1 : vector<112x16xf32>, vector<112x16xf32>, vector<112x16xf32>, vector<112x16xf32>, vector<112x16xf32>, vector<112x16xf32>, vector<112x16xf32>, vector<112x16xf32>, vector<112x16xf32> -> vector<112x144xf32>
    %165 = arith.truncf %164 : vector<112x144xf32> to vector<112x144xbf16>
    %cst_93 = arith.constant dense<0.000000e+00> : vector<112x32xf32>
    %166 = tpu.matmul %163, %142, %cst_93 {dimension_numbers = #tpu.dot_dimension_numbers<[1], [0], [0], [1], [0, 0, 1, 1], [], []>} : vector<112x144xbf16>, vector<144x32xbf16>, vector<112x32xf32> -> vector<112x32xf32>
    %167 = vector.broadcast %143 : vector<1x32xf32> to vector<112x32xf32>
    %168 = arith.addf %166, %167 : vector<112x32xf32>
    %cst_94 = arith.constant 0.000000e+00 : f32
    %169 = vector.broadcast %cst_94 : f32 to vector<112x32xf32>
    %170 = arith.maximumf %168, %169 : vector<112x32xf32>
    %cst_95 = arith.constant dense<0.000000e+00> : vector<112x32xf32>
    %171 = tpu.matmul %165, %142, %cst_95 {dimension_numbers = #tpu.dot_dimension_numbers<[1], [0], [0], [1], [0, 0, 1, 1], [], []>} : vector<112x144xbf16>, vector<144x32xbf16>, vector<112x32xf32> -> vector<112x32xf32>
    %172 = vector.broadcast %143 : vector<1x32xf32> to vector<112x32xf32>
    %173 = arith.addf %171, %172 : vector<112x32xf32>
    %cst_96 = arith.constant 0.000000e+00 : f32
    %174 = vector.broadcast %cst_96 : f32 to vector<112x32xf32>
    %175 = arith.maximumf %173, %174 : vector<112x32xf32>
    %176 = arith.maximumf %170, %175 : vector<112x32xf32>
    %177 = vector.extract_strided_slice %176 {offsets = [0, 0], sizes = [104, 32], strides = [1, 1]} : vector<112x32xf32> to vector<104x32xf32>
    %178 = vector.extract_strided_slice %176 {offsets = [8, 0], sizes = [104, 32], strides = [1, 1]} : vector<112x32xf32> to vector<104x32xf32>
    %179 = arith.maximumf %177, %178 : vector<104x32xf32>
    %180 = vector.extract_strided_slice %179 {offsets = [0, 0], sizes = [7, 32], strides = [1, 1]} : vector<104x32xf32> to vector<7x32xf32>
    %c0_97 = arith.constant 0 : index
    %c0_98 = arith.constant 0 : index
    %c0_99 = arith.constant 0 : index
    %181 = vector.load %arg6[%c0_97, %c0_98, %c0_99] : memref<1x49x32xf32, #tpu.memory_space<vmem>>, vector<1x7x32xf32>
    %182 = vector.shape_cast %181 : vector<1x7x32xf32> to vector<7x32xf32>
    %183 = vector.shape_cast %180 : vector<7x32xf32> to vector<1x7x32xf32>
    tpu.vector_store %arg6[%c0_97, %c0_98, %c0_99], %183 {strides = array<i32>} : memref<1x49x32xf32, #tpu.memory_space<vmem>>, vector<1x7x32xf32>,
    %184 = vector.extract_strided_slice %179 {offsets = [16, 0], sizes = [7, 32], strides = [1, 1]} : vector<104x32xf32> to vector<7x32xf32>
    %c0_100 = arith.constant 0 : index
    %c7 = arith.constant 7 : index
    %c0_101 = arith.constant 0 : index
    %185 = vector.load %arg6[%c0_100, %c7, %c0_101] : memref<1x49x32xf32, #tpu.memory_space<vmem>>, vector<1x7x32xf32>
    %186 = vector.shape_cast %185 : vector<1x7x32xf32> to vector<7x32xf32>
    %187 = vector.shape_cast %184 : vector<7x32xf32> to vector<1x7x32xf32>
    tpu.vector_store %arg6[%c0_100, %c7, %c0_101], %187 {strides = array<i32>} : memref<1x49x32xf32, #tpu.memory_space<vmem>>, vector<1x7x32xf32>,
    %188 = vector.extract_strided_slice %179 {offsets = [32, 0], sizes = [7, 32], strides = [1, 1]} : vector<104x32xf32> to vector<7x32xf32>
    %c0_102 = arith.constant 0 : index
    %c14 = arith.constant 14 : index
    %c0_103 = arith.constant 0 : index
    %189 = vector.load %arg6[%c0_102, %c14, %c0_103] : memref<1x49x32xf32, #tpu.memory_space<vmem>>, vector<1x7x32xf32>
    %190 = vector.shape_cast %189 : vector<1x7x32xf32> to vector<7x32xf32>
    %191 = vector.shape_cast %188 : vector<7x32xf32> to vector<1x7x32xf32>
    tpu.vector_store %arg6[%c0_102, %c14, %c0_103], %191 {strides = array<i32>} : memref<1x49x32xf32, #tpu.memory_space<vmem>>, vector<1x7x32xf32>,
    %192 = vector.extract_strided_slice %179 {offsets = [48, 0], sizes = [7, 32], strides = [1, 1]} : vector<104x32xf32> to vector<7x32xf32>
    %c0_104 = arith.constant 0 : index
    %c21 = arith.constant 21 : index
    %c0_105 = arith.constant 0 : index
    %193 = vector.load %arg6[%c0_104, %c21, %c0_105] : memref<1x49x32xf32, #tpu.memory_space<vmem>>, vector<1x7x32xf32>
    %194 = vector.shape_cast %193 : vector<1x7x32xf32> to vector<7x32xf32>
    %195 = vector.shape_cast %192 : vector<7x32xf32> to vector<1x7x32xf32>
    tpu.vector_store %arg6[%c0_104, %c21, %c0_105], %195 {strides = array<i32>} : memref<1x49x32xf32, #tpu.memory_space<vmem>>, vector<1x7x32xf32>,
    %196 = vector.extract_strided_slice %179 {offsets = [64, 0], sizes = [7, 32], strides = [1, 1]} : vector<104x32xf32> to vector<7x32xf32>
    %c0_106 = arith.constant 0 : index
    %c28 = arith.constant 28 : index
    %c0_107 = arith.constant 0 : index
    %197 = vector.load %arg6[%c0_106, %c28, %c0_107] : memref<1x49x32xf32, #tpu.memory_space<vmem>>, vector<1x7x32xf32>
    %198 = vector.shape_cast %197 : vector<1x7x32xf32> to vector<7x32xf32>
    %199 = vector.shape_cast %196 : vector<7x32xf32> to vector<1x7x32xf32>
    tpu.vector_store %arg6[%c0_106, %c28, %c0_107], %199 {strides = array<i32>} : memref<1x49x32xf32, #tpu.memory_space<vmem>>, vector<1x7x32xf32>,
    %200 = vector.extract_strided_slice %179 {offsets = [80, 0], sizes = [7, 32], strides = [1, 1]} : vector<104x32xf32> to vector<7x32xf32>
    %c0_108 = arith.constant 0 : index
    %c35 = arith.constant 35 : index
    %c0_109 = arith.constant 0 : index
    %201 = vector.load %arg6[%c0_108, %c35, %c0_109] : memref<1x49x32xf32, #tpu.memory_space<vmem>>, vector<1x7x32xf32>
    %202 = vector.shape_cast %201 : vector<1x7x32xf32> to vector<7x32xf32>
    %203 = vector.shape_cast %200 : vector<7x32xf32> to vector<1x7x32xf32>
    tpu.vector_store %arg6[%c0_108, %c35, %c0_109], %203 {strides = array<i32>} : memref<1x49x32xf32, #tpu.memory_space<vmem>>, vector<1x7x32xf32>,
    %204 = vector.extract_strided_slice %179 {offsets = [96, 0], sizes = [7, 32], strides = [1, 1]} : vector<104x32xf32> to vector<7x32xf32>
    %c0_110 = arith.constant 0 : index
    %c42 = arith.constant 42 : index
    %c0_111 = arith.constant 0 : index
    %205 = vector.load %arg6[%c0_110, %c42, %c0_111] : memref<1x49x32xf32, #tpu.memory_space<vmem>>, vector<1x7x32xf32>
    %206 = vector.shape_cast %205 : vector<1x7x32xf32> to vector<7x32xf32>
    %207 = vector.shape_cast %204 : vector<7x32xf32> to vector<1x7x32xf32>
    tpu.vector_store %arg6[%c0_110, %c42, %c0_111], %207 {strides = array<i32>} : memref<1x49x32xf32, #tpu.memory_space<vmem>>, vector<1x7x32xf32>,
    return
  }
  func.func @transform_0(%arg0: i32) -> (i32, i32, i32) {
    %c0_i32 = arith.constant 0 : i32
    %c0_i32_0 = arith.constant 0 : i32
    %c0_i32_1 = arith.constant 0 : i32
    return %arg0, %c0_i32, %c0_i32_0 : i32, i32, i32
  }
  func.func @transform_1(%arg0: i32) -> (i32, i32) {
    %c0_i32 = arith.constant 0 : i32
    %c0_i32_0 = arith.constant 0 : i32
    %c0_i32_1 = arith.constant 0 : i32
    return %c0_i32, %c0_i32_0 : i32, i32
  }
  func.func @transform_2(%arg0: i32) -> (i32, i32) {
    %c0_i32 = arith.constant 0 : i32
    %c0_i32_0 = arith.constant 0 : i32
    %c0_i32_1 = arith.constant 0 : i32
    return %c0_i32, %c0_i32_0 : i32, i32
  }
  func.func @transform_3(%arg0: i32) -> (i32, i32) {
    %c0_i32 = arith.constant 0 : i32
    %c0_i32_0 = arith.constant 0 : i32
    %c0_i32_1 = arith.constant 0 : i32
    return %c0_i32, %c0_i32_0 : i32, i32
  }
  func.func @transform_4(%arg0: i32) -> (i32, i32) {
    %c0_i32 = arith.constant 0 : i32
    %c0_i32_0 = arith.constant 0 : i32
    %c0_i32_1 = arith.constant 0 : i32
    return %c0_i32, %c0_i32_0 : i32, i32
  }
  func.func @transform_5(%arg0: i32) -> (i32, i32, i32) {
    %c0_i32 = arith.constant 0 : i32
    %c0_i32_0 = arith.constant 0 : i32
    %c0_i32_1 = arith.constant 0 : i32
    return %arg0, %c0_i32, %c0_i32_0 : i32, i32, i32
  }
}

module attributes {stable_mosaic.version = 11 : i64} {
  func.func @_fc_kernel(%arg0: i32, %arg1: memref<8x1568xbf16, #tpu.memory_space<vmem>>, %arg2: memref<1568x256xbf16, #tpu.memory_space<vmem>>, %arg3: memref<1x256xf32, #tpu.memory_space<vmem>>, %arg4: memref<256x128xbf16, #tpu.memory_space<vmem>>, %arg5: memref<1x128xf32, #tpu.memory_space<vmem>>, %arg6: memref<8x128xf32, #tpu.memory_space<vmem>>) attributes {dimension_semantics = [#tpu.dimension_semantics<parallel>], iteration_bounds = array<i64: 1>, scalar_prefetch = 0 : i64, scratch_operands = 0 : i64, tpu.core_type = #tpu.core_type<tc>, window_params = [{transform_indices = @transform_0, window_bounds = array<i64: 8, 1568>}, {pipeline_mode = #tpu.pipeline_mode<synchronous>, transform_indices = @transform_1, window_bounds = array<i64: 1568, 256>}, {pipeline_mode = #tpu.pipeline_mode<synchronous>, transform_indices = @transform_2, window_bounds = array<i64: 1, 256>}, {pipeline_mode = #tpu.pipeline_mode<synchronous>, transform_indices = @transform_3, window_bounds = array<i64: 256, 128>}, {pipeline_mode = #tpu.pipeline_mode<synchronous>, transform_indices = @transform_4, window_bounds = array<i64: 1, 128>}, {transform_indices = @transform_5, window_bounds = array<i64: 8, 128>}]} {
    %c0 = arith.constant 0 : index
    %c0_0 = arith.constant 0 : index
    %0 = vector.load %arg1[%c0, %c0_0] : memref<8x1568xbf16, #tpu.memory_space<vmem>>, vector<8x1568xbf16>
    %c0_1 = arith.constant 0 : index
    %c0_2 = arith.constant 0 : index
    %1 = vector.load %arg2[%c0_1, %c0_2] : memref<1568x256xbf16, #tpu.memory_space<vmem>>, vector<1568x256xbf16>
    %cst = arith.constant dense<0.000000e+00> : vector<8x256xf32>
    %2 = tpu.matmul %0, %1, %cst {dimension_numbers = #tpu.dot_dimension_numbers<[1], [0], [0], [1], [0, 0, 1, 1], [], []>} : vector<8x1568xbf16>, vector<1568x256xbf16>, vector<8x256xf32> -> vector<8x256xf32>
    %c0_3 = arith.constant 0 : index
    %c0_4 = arith.constant 0 : index
    %3 = vector.load %arg3[%c0_3, %c0_4] : memref<1x256xf32, #tpu.memory_space<vmem>>, vector<1x256xf32>
    %4 = vector.broadcast %3 : vector<1x256xf32> to vector<8x256xf32>
    %5 = arith.addf %2, %4 : vector<8x256xf32>
    %cst_5 = arith.constant 0.000000e+00 : f32
    %6 = vector.broadcast %cst_5 : f32 to vector<8x256xf32>
    %7 = arith.maximumf %5, %6 : vector<8x256xf32>
    %8 = arith.truncf %7 : vector<8x256xf32> to vector<8x256xbf16>
    %c0_6 = arith.constant 0 : index
    %c0_7 = arith.constant 0 : index
    %9 = vector.load %arg4[%c0_6, %c0_7] : memref<256x128xbf16, #tpu.memory_space<vmem>>, vector<256x128xbf16>
    %cst_8 = arith.constant dense<0.000000e+00> : vector<8x128xf32>
    %10 = tpu.matmul %8, %9, %cst_8 {dimension_numbers = #tpu.dot_dimension_numbers<[1], [0], [0], [1], [0, 0, 1, 1], [], []>} : vector<8x256xbf16>, vector<256x128xbf16>, vector<8x128xf32> -> vector<8x128xf32>
    %c0_9 = arith.constant 0 : index
    %c0_10 = arith.constant 0 : index
    %11 = vector.load %arg5[%c0_9, %c0_10] : memref<1x128xf32, #tpu.memory_space<vmem>>, vector<1x128xf32>
    %12 = vector.broadcast %11 : vector<1x128xf32> to vector<8x128xf32>
    %13 = arith.addf %10, %12 : vector<8x128xf32>
    %c0_11 = arith.constant 0 : index
    %c0_12 = arith.constant 0 : index
    %14 = vector.load %arg6[%c0_11, %c0_12] : memref<8x128xf32, #tpu.memory_space<vmem>>, vector<8x128xf32>
    tpu.vector_store %arg6[%c0_11, %c0_12], %13 {strides = array<i32>} : memref<8x128xf32, #tpu.memory_space<vmem>>, vector<8x128xf32>,
    return
  }
  func.func @transform_0(%arg0: i32) -> (i32, i32) {
    %c0_i32 = arith.constant 0 : i32
    %c0_i32_0 = arith.constant 0 : i32
    return %arg0, %c0_i32 : i32, i32
  }
  func.func @transform_1(%arg0: i32) -> (i32, i32) {
    %c0_i32 = arith.constant 0 : i32
    %c0_i32_0 = arith.constant 0 : i32
    %c0_i32_1 = arith.constant 0 : i32
    return %c0_i32, %c0_i32_0 : i32, i32
  }
  func.func @transform_2(%arg0: i32) -> (i32, i32) {
    %c0_i32 = arith.constant 0 : i32
    %c0_i32_0 = arith.constant 0 : i32
    %c0_i32_1 = arith.constant 0 : i32
    return %c0_i32, %c0_i32_0 : i32, i32
  }
  func.func @transform_3(%arg0: i32) -> (i32, i32) {
    %c0_i32 = arith.constant 0 : i32
    %c0_i32_0 = arith.constant 0 : i32
    %c0_i32_1 = arith.constant 0 : i32
    return %c0_i32, %c0_i32_0 : i32, i32
  }
  func.func @transform_4(%arg0: i32) -> (i32, i32) {
    %c0_i32 = arith.constant 0 : i32
    %c0_i32_0 = arith.constant 0 : i32
    %c0_i32_1 = arith.constant 0 : i32
    return %c0_i32, %c0_i32_0 : i32, i32
  }
  func.func @transform_5(%arg0: i32) -> (i32, i32) {
    %c0_i32 = arith.constant 0 : i32
    %c0_i32_0 = arith.constant 0 : i32
    return %arg0, %c0_i32 : i32, i32
  }
}

</mosaic_0001>

<llo_original>
// kernel: custom_cnn_forward.3
$region0: #{custom_cnn_forward.3}
  #allocation0 [shape = 'u32[]', space=smem, size = 0x4, offset = 0x4, fixed_abs, tag = 'smem constant byte address 0x4 - core index']
  #allocation1 [shape = 'u32[144,128]{1,0:T(1,128)}', space=vmem, size = 0x12000, scoped, tag = 'internal scratch']
  %s0 = inlined_call_operand.vmem [shape: bf16[8,1568], index: 0, kind: input, shape index: {}]
  %s1 = inlined_call_operand.vmem [shape: bf16[1568,256], index: 1, kind: input, shape index: {}]
  %s2 = inlined_call_operand.vmem [shape: f32[1,256], index: 2, kind: input, shape index: {}]
  %s3 = inlined_call_operand.vmem [shape: bf16[256,128], index: 3, kind: input, shape index: {}]
  %s4 = inlined_call_operand.vmem [shape: f32[1,128], index: 4, kind: input, shape index: {}]
  %s5 = inlined_call_operand.vmem [shape: f32[8,128], index: 5, kind: output, shape index: {}]
  %s6 = sld [smem:[#allocation0]]
  $region30: #{custom_cnn_forward.3} parent=0
    _
  %s8 = ssub.s32 1, %s6
  %s9 = scalar_select 0, %s8, %s6
  // Predicated region
  $region2: #{custom_cnn_forward.3} parent=0 // pred_check
    _
  $region3: #{custom_cnn_forward.3} parent=0 // pred_check_branch
    %11 = sbr.rel (0) target = $region5
  $region4: #{custom_cnn_forward.3} parent=0 // pred_region
    _
  $region5: #{custom_cnn_forward.3} parent=0 // pred_fallthru
    _
  // Predicated region
  $region6: #{custom_cnn_forward.3} parent=0 // pred_check
    _
  $region7: #{custom_cnn_forward.3} parent=0 // pred_check_branch
    %13 = sbr.rel (0) target = $region9
  $region8: #{custom_cnn_forward.3} parent=0 // pred_region
    _
  $region9: #{custom_cnn_forward.3} parent=0 // pred_fallthru
    _
  // Predicated region
  $region10: #{custom_cnn_forward.3} parent=0 // pred_check
    _
  $region11: #{custom_cnn_forward.3} parent=0 // pred_check_branch
    %15 = sbr.rel (0) target = $region13
  $region12: #{custom_cnn_forward.3} parent=0 // pred_region
    _
  $region13: #{custom_cnn_forward.3} parent=0 // pred_fallthru
    _
  // Predicated region
  $region14: #{custom_cnn_forward.3} parent=0 // pred_check
    _
  $region15: #{custom_cnn_forward.3} parent=0 // pred_check_branch
    %17 = sbr.rel (0) target = $region17
  $region16: #{custom_cnn_forward.3} parent=0 // pred_region
    _
  $region17: #{custom_cnn_forward.3} parent=0 // pred_fallthru
    _
  // Predicated region
  $region18: #{custom_cnn_forward.3} parent=0 // pred_check
    _
  $region19: #{custom_cnn_forward.3} parent=0 // pred_check_branch
    %19 = sbr.rel (0) target = $region21
  $region20: #{custom_cnn_forward.3} parent=0 // pred_region
    _
  $region21: #{custom_cnn_forward.3} parent=0 // pred_fallthru
    _
  %v21 = vld [vmem:[%s0] sm:$0xff]
  %v22 = vld [vmem:[%s0 + $0x8] sm:$0xff]
  %v23 = vld [vmem:[%s0 + $0x10] sm:$0xff]
  %v24 = vld [vmem:[%s0 + $0x18] sm:$0xff]
  %v25 = vld [vmem:[%s0 + $0x20] sm:$0xff]
  %v26 = vld [vmem:[%s0 + $0x28] sm:$0xff]
  %v27 = vld [vmem:[%s0 + $0x30] sm:$0xf]
  %v28 = vld [vmem:[%s1] sm:$0xff]
  %v29 = vld [vmem:[%s1 + $0x8] sm:$0xff]
  %v30 = vld [vmem:[%s1 + $0x10] sm:$0xff]
  %v31 = vld [vmem:[%s1 + $0x18] sm:$0xff]
  %v32 = vld [vmem:[%s1 + $0x20] sm:$0xff]
  %v33 = vld [vmem:[%s1 + $0x28] sm:$0xff]
  %v34 = vld [vmem:[%s1 + $0x30] sm:$0xff]
  %v35 = vld [vmem:[%s1 + $0x38] sm:$0xff]
  %v36 = vld [vmem:[%s1 + $0x40] sm:$0xff]
  %v37 = vld [vmem:[%s1 + $0x48] sm:$0xff]
  %v38 = vld [vmem:[%s1 + $0x50] sm:$0xff]
  %v39 = vld [vmem:[%s1 + $0x58] sm:$0xff]
  %v40 = vld [vmem:[%s1 + $0x60] sm:$0xff]
  %v41 = vld [vmem:[%s1 + $0x68] sm:$0xff]
  %v42 = vld [vmem:[%s1 + $0x70] sm:$0xff]
  %v43 = vld [vmem:[%s1 + $0x78] sm:$0xff]
  %v44 = vld [vmem:[%s1 + $0x80] sm:$0xff]
  %v45 = vld [vmem:[%s1 + $0x88] sm:$0xff]
  %v46 = vld [vmem:[%s1 + $0x90] sm:$0xff]
  %v47 = vld [vmem:[%s1 + $0x98] sm:$0xff]
  %v48 = vld [vmem:[%s1 + $0xa0] sm:$0xff]
  %v49 = vld [vmem:[%s1 + $0xa8] sm:$0xff]
  %v50 = vld [vmem:[%s1 + $0xb0] sm:$0xff]
  %v51 = vld [vmem:[%s1 + $0xb8] sm:$0xff]
  %v52 = vld [vmem:[%s1 + $0xc0] sm:$0xff]
  %v53 = vld [vmem:[%s1 + $0xc8] sm:$0xff]
  %v54 = vld [vmem:[%s1 + $0xd0] sm:$0xff]
  %v55 = vld [vmem:[%s1 + $0xd8] sm:$0xff]
  %v56 = vld [vmem:[%s1 + $0xe0] sm:$0xff]
  %v57 = vld [vmem:[%s1 + $0xe8] sm:$0xff]
  %v58 = vld [vmem:[%s1 + $0xf0] sm:$0xff]
  %v59 = vld [vmem:[%s1 + $0xf8] sm:$0xff]
  %v60 = vld [vmem:[%s1 + $0x100] sm:$0xff]
  %v61 = vld [vmem:[%s1 + $0x108] sm:$0xff]
  %v62 = vld [vmem:[%s1 + $0x110] sm:$0xff]
  %v63 = vld [vmem:[%s1 + $0x118] sm:$0xff]
  %v64 = vld [vmem:[%s1 + $0x120] sm:$0xff]
  %v65 = vld [vmem:[%s1 + $0x128] sm:$0xff]
  %v66 = vld [vmem:[%s1 + $0x130] sm:$0xff]
  %v67 = vld [vmem:[%s1 + $0x138] sm:$0xff]
  %v68 = vld [vmem:[%s1 + $0x140] sm:$0xff]
  %v69 = vld [vmem:[%s1 + $0x148] sm:$0xff]
  %v70 = vld [vmem:[%s1 + $0x150] sm:$0xff]
  %v71 = vld [vmem:[%s1 + $0x158] sm:$0xff]
  %v72 = vld [vmem:[%s1 + $0x160] sm:$0xff]
  %v73 = vld [vmem:[%s1 + $0x168] sm:$0xff]
  %v74 = vld [vmem:[%s1 + $0x170] sm:$0xff]
  %v75 = vld [vmem:[%s1 + $0x178] sm:$0xff]
  %v76 = vld [vmem:[%s1 + $0x180] sm:$0xff]
  %v77 = vld [vmem:[%s1 + $0x188] sm:$0xff]
  %v78 = vld [vmem:[%s1 + $0x190] sm:$0xff]
  %v79 = vld [vmem:[%s1 + $0x198] sm:$0xff]
  %v80 = vld [vmem:[%s1 + $0x1a0] sm:$0xff]
  %v81 = vld [vmem:[%s1 + $0x1a8] sm:$0xff]
  %v82 = vld [vmem:[%s1 + $0x1b0] sm:$0xff]
  %v83 = vld [vmem:[%s1 + $0x1b8] sm:$0xff]
  %v84 = vld [vmem:[%s1 + $0x1c0] sm:$0xff]
  %v85 = vld [vmem:[%s1 + $0x1c8] sm:$0xff]
  %v86 = vld [vmem:[%s1 + $0x1d0] sm:$0xff]
  %v87 = vld [vmem:[%s1 + $0x1d8] sm:$0xff]
  %v88 = vld [vmem:[%s1 + $0x1e0] sm:$0xff]
  %v89 = vld [vmem:[%s1 + $0x1e8] sm:$0xff]
  %v90 = vld [vmem:[%s1 + $0x1f0] sm:$0xff]
  %v91 = vld [vmem:[%s1 + $0x1f8] sm:$0xff]
  %v92 = vld [vmem:[%s1 + $0x200] sm:$0xff]
  %v93 = vld [vmem:[%s1 + $0x208] sm:$0xff]
  %v94 = vld [vmem:[%s1 + $0x210] sm:$0xff]
  %v95 = vld [vmem:[%s1 + $0x218] sm:$0xff]
  %v96 = vld [vmem:[%s1 + $0x220] sm:$0xff]
  %v97 = vld [vmem:[%s1 + $0x228] sm:$0xff]
  %v98 = vld [vmem:[%s1 + $0x230] sm:$0xff]
  %v99 = vld [vmem:[%s1 + $0x238] sm:$0xff]
  %v100 = vld [vmem:[%s1 + $0x240] sm:$0xff]
  %v101 = vld [vmem:[%s1 + $0x248] sm:$0xff]
  %v102 = vld [vmem:[%s1 + $0x250] sm:$0xff]
  %v103 = vld [vmem:[%s1 + $0x258] sm:$0xff]
  %v104 = vld [vmem:[%s1 + $0x260] sm:$0xff]
  %v105 = vld [vmem:[%s1 + $0x268] sm:$0xff]
  %v106 = vld [vmem:[%s1 + $0x270] sm:$0xff]
  %v107 = vld [vmem:[%s1 + $0x278] sm:$0xff]
  %v108 = vld [vmem:[%s1 + $0x280] sm:$0xff]
  %v109 = vld [vmem:[%s1 + $0x288] sm:$0xff]
  %v110 = vld [vmem:[%s1 + $0x290] sm:$0xff]
  %v111 = vld [vmem:[%s1 + $0x298] sm:$0xff]
  %v112 = vld [vmem:[%s1 + $0x2a0] sm:$0xff]
  %v113 = vld [vmem:[%s1 + $0x2a8] sm:$0xff]
  %v114 = vld [vmem:[%s1 + $0x2b0] sm:$0xff]
  %v115 = vld [vmem:[%s1 + $0x2b8] sm:$0xff]
  %v116 = vld [vmem:[%s1 + $0x2c0] sm:$0xff]
  %v117 = vld [vmem:[%s1 + $0x2c8] sm:$0xff]
  %v118 = vld [vmem:[%s1 + $0x2d0] sm:$0xff]
  %v119 = vld [vmem:[%s1 + $0x2d8] sm:$0xff]
  %v120 = vld [vmem:[%s1 + $0x2e0] sm:$0xff]
  %v121 = vld [vmem:[%s1 + $0x2e8] sm:$0xff]
  %v122 = vld [vmem:[%s1 + $0x2f0] sm:$0xff]
  %v123 = vld [vmem:[%s1 + $0x2f8] sm:$0xff]
  %v124 = vld [vmem:[%s1 + $0x300] sm:$0xff]
  %v125 = vld [vmem:[%s1 + $0x308] sm:$0xff]
  %v126 = vld [vmem:[%s1 + $0x310] sm:$0xff]
  %v127 = vld [vmem:[%s1 + $0x318] sm:$0xff]
  %v128 = vld [vmem:[%s1 + $0x320] sm:$0xff]
  %v129 = vld [vmem:[%s1 + $0x328] sm:$0xff]
  %v130 = vld [vmem:[%s1 + $0x330] sm:$0xff]
  %v131 = vld [vmem:[%s1 + $0x338] sm:$0xff]
  %v132 = vld [vmem:[%s1 + $0x340] sm:$0xff]
  %v133 = vld [vmem:[%s1 + $0x348] sm:$0xff]
  %v134 = vld [vmem:[%s1 + $0x350] sm:$0xff]
  %v135 = vld [vmem:[%s1 + $0x358] sm:$0xff]
  %v136 = vld [vmem:[%s1 + $0x360] sm:$0xff]
  %v137 = vld [vmem:[%s1 + $0x368] sm:$0xff]
  %v138 = vld [vmem:[%s1 + $0x370] sm:$0xff]
  %v139 = vld [vmem:[%s1 + $0x378] sm:$0xff]
  %v140 = vld [vmem:[%s1 + $0x380] sm:$0xff]
  %v141 = vld [vmem:[%s1 + $0x388] sm:$0xff]
  %v142 = vld [vmem:[%s1 + $0x390] sm:$0xff]
  %v143 = vld [vmem:[%s1 + $0x398] sm:$0xff]
  %v144 = vld [vmem:[%s1 + $0x3a0] sm:$0xff]
  %v145 = vld [vmem:[%s1 + $0x3a8] sm:$0xff]
  %v146 = vld [vmem:[%s1 + $0x3b0] sm:$0xff]
  %v147 = vld [vmem:[%s1 + $0x3b8] sm:$0xff]
  %v148 = vld [vmem:[%s1 + $0x3c0] sm:$0xff]
  %v149 = vld [vmem:[%s1 + $0x3c8] sm:$0xff]
  %v150 = vld [vmem:[%s1 + $0x3d0] sm:$0xff]
  %v151 = vld [vmem:[%s1 + $0x3d8] sm:$0xff]
  %v152 = vld [vmem:[%s1 + $0x3e0] sm:$0xff]
  %v153 = vld [vmem:[%s1 + $0x3e8] sm:$0xff]
  %v154 = vld [vmem:[%s1 + $0x3f0] sm:$0xff]
  %v155 = vld [vmem:[%s1 + $0x3f8] sm:$0xff]
  %v156 = vld [vmem:[%s1 + $0x400] sm:$0xff]
  %v157 = vld [vmem:[%s1 + $0x408] sm:$0xff]
  %v158 = vld [vmem:[%s1 + $0x410] sm:$0xff]
  %v159 = vld [vmem:[%s1 + $0x418] sm:$0xff]
  %v160 = vld [vmem:[%s1 + $0x420] sm:$0xff]
  %v161 = vld [vmem:[%s1 + $0x428] sm:$0xff]
  %v162 = vld [vmem:[%s1 + $0x430] sm:$0xff]
  %v163 = vld [vmem:[%s1 + $0x438] sm:$0xff]
  %v164 = vld [vmem:[%s1 + $0x440] sm:$0xff]
  %v165 = vld [vmem:[%s1 + $0x448] sm:$0xff]
  %v166 = vld [vmem:[%s1 + $0x450] sm:$0xff]
  %v167 = vld [vmem:[%s1 + $0x458] sm:$0xff]
  %v168 = vld [vmem:[%s1 + $0x460] sm:$0xff]
  %v169 = vld [vmem:[%s1 + $0x468] sm:$0xff]
  %v170 = vld [vmem:[%s1 + $0x470] sm:$0xff]
  %v171 = vld [vmem:[%s1 + $0x478] sm:$0xff]
  %v172 = vld [vmem:[%s1 + $0x480] sm:$0xff]
  %v173 = vld [vmem:[%s1 + $0x488] sm:$0xff]
  %v174 = vld [vmem:[%s1 + $0x490] sm:$0xff]
  %v175 = vld [vmem:[%s1 + $0x498] sm:$0xff]
  %v176 = vld [vmem:[%s1 + $0x4a0] sm:$0xff]
  %v177 = vld [vmem:[%s1 + $0x4a8] sm:$0xff]
  %v178 = vld [vmem:[%s1 + $0x4b0] sm:$0xff]
  %v179 = vld [vmem:[%s1 + $0x4b8] sm:$0xff]
  %v180 = vld [vmem:[%s1 + $0x4c0] sm:$0xff]
  %v181 = vld [vmem:[%s1 + $0x4c8] sm:$0xff]
  %v182 = vld [vmem:[%s1 + $0x4d0] sm:$0xff]
  %v183 = vld [vmem:[%s1 + $0x4d8] sm:$0xff]
  %v184 = vld [vmem:[%s1 + $0x4e0] sm:$0xff]
  %v185 = vld [vmem:[%s1 + $0x4e8] sm:$0xff]
  %v186 = vld [vmem:[%s1 + $0x4f0] sm:$0xff]
  %v187 = vld [vmem:[%s1 + $0x4f8] sm:$0xff]
  %v188 = vld [vmem:[%s1 + $0x500] sm:$0xff]
  %v189 = vld [vmem:[%s1 + $0x508] sm:$0xff]
  %v190 = vld [vmem:[%s1 + $0x510] sm:$0xff]
  %v191 = vld [vmem:[%s1 + $0x518] sm:$0xff]
  %v192 = vld [vmem:[%s1 + $0x520] sm:$0xff]
  %v193 = vld [vmem:[%s1 + $0x528] sm:$0xff]
  %v194 = vld [vmem:[%s1 + $0x530] sm:$0xff]
  %v195 = vld [vmem:[%s1 + $0x538] sm:$0xff]
  %v196 = vld [vmem:[%s1 + $0x540] sm:$0xff]
  %v197 = vld [vmem:[%s1 + $0x548] sm:$0xff]
  %v198 = vld [vmem:[%s1 + $0x550] sm:$0xff]
  %v199 = vld [vmem:[%s1 + $0x558] sm:$0xff]
  %v200 = vld [vmem:[%s1 + $0x560] sm:$0xff]
  %v201 = vld [vmem:[%s1 + $0x568] sm:$0xff]
  %v202 = vld [vmem:[%s1 + $0x570] sm:$0xff]
  %v203 = vld [vmem:[%s1 + $0x578] sm:$0xff]
  %v204 = vld [vmem:[%s1 + $0x580] sm:$0xff]
  %v205 = vld [vmem:[%s1 + $0x588] sm:$0xff]
  %v206 = vld [vmem:[%s1 + $0x590] sm:$0xff]
  %v207 = vld [vmem:[%s1 + $0x598] sm:$0xff]
  %v208 = vld [vmem:[%s1 + $0x5a0] sm:$0xff]
  %v209 = vld [vmem:[%s1 + $0x5a8] sm:$0xff]
  %v210 = vld [vmem:[%s1 + $0x5b0] sm:$0xff]
  %v211 = vld [vmem:[%s1 + $0x5b8] sm:$0xff]
  %v212 = vld [vmem:[%s1 + $0x5c0] sm:$0xff]
  %v213 = vld [vmem:[%s1 + $0x5c8] sm:$0xff]
  %v214 = vld [vmem:[%s1 + $0x5d0] sm:$0xff]
  %v215 = vld [vmem:[%s1 + $0x5d8] sm:$0xff]
  %v216 = vld [vmem:[%s1 + $0x5e0] sm:$0xff]
  %v217 = vld [vmem:[%s1 + $0x5e8] sm:$0xff]
  %v218 = vld [vmem:[%s1 + $0x5f0] sm:$0xff]
  %v219 = vld [vmem:[%s1 + $0x5f8] sm:$0xff]
  %v220 = vld [vmem:[%s1 + $0x600] sm:$0xff]
  %v221 = vld [vmem:[%s1 + $0x608] sm:$0xff]
  %v222 = vld [vmem:[%s1 + $0x610] sm:$0xff]
  %v223 = vld [vmem:[%s1 + $0x618] sm:$0xff]
  %v224 = vld [vmem:[%s2] sm:$0x3]
  %v226 = vlaneseq
  %v227 = vshrl.u32 %v226, 7
  %v228 = vsub.s32 0, %v227
  %v229 = vrot.slane %v224, %v228
  %v230 = vlaneseq
  %v231 = vshrl.u32 %v230, 7
  %v232 = vsub.s32 1, %v231
  %v233 = vrot.slane %v224, %v232
  %v243 = vunpack.c.l.b16 %v21
  %v244 = vunpack.c.h.b16 %v21
  %v245 = vunpack.c.l.b16 %v22
  %v246 = vunpack.c.h.b16 %v22
  %v247 = vunpack.c.l.b16 %v23
  %v248 = vunpack.c.h.b16 %v23
  %v249 = vunpack.c.l.b16 %v24
  %v250 = vunpack.c.h.b16 %v24
  %v251 = vunpack.c.l.b16 %v25
  %v252 = vunpack.c.h.b16 %v25
  %v253 = vunpack.c.l.b16 %v26
  %v254 = vunpack.c.h.b16 %v26
  %v255 = vunpack.c.l.b16 %v27
  %v256 = vpack.c.b16 %v243, %v243
  %v257 = vpack.c.b16 %v244, %v244
  %v258 = vpack.c.b16 %v245, %v245
  %v259 = vpack.c.b16 %v246, %v246
  %v260 = vpack.c.b16 %v247, %v247
  %v261 = vpack.c.b16 %v248, %v248
  %v262 = vpack.c.b16 %v249, %v249
  %v263 = vpack.c.b16 %v250, %v250
  %v264 = vpack.c.b16 %v251, %v251
  %v265 = vpack.c.b16 %v252, %v252
  %v266 = vpack.c.b16 %v253, %v253
  %v267 = vpack.c.b16 %v254, %v254
  %v268 = vpack.c.b16 %v255, %v255
  %v477 = vunpack.c.l.b16 %v28
  %v478 = vunpack.c.h.b16 %v28
  %v479 = vunpack.c.l.b16 %v29
  %v480 = vunpack.c.h.b16 %v29
  %v481 = vunpack.c.l.b16 %v30
  %v482 = vunpack.c.h.b16 %v30
  %v483 = vunpack.c.l.b16 %v31
  %v484 = vunpack.c.h.b16 %v31
  %v485 = vunpack.c.l.b16 %v32
  %v486 = vunpack.c.h.b16 %v32
  %v487 = vunpack.c.l.b16 %v33
  %v488 = vunpack.c.h.b16 %v33
  %v489 = vunpack.c.l.b16 %v34
  %v490 = vunpack.c.h.b16 %v34
  %v491 = vunpack.c.l.b16 %v35
  %v492 = vunpack.c.h.b16 %v35
  %v493 = vunpack.c.l.b16 %v36
  %v494 = vunpack.c.h.b16 %v36
  %v495 = vunpack.c.l.b16 %v37
  %v496 = vunpack.c.h.b16 %v37
  %v497 = vunpack.c.l.b16 %v38
  %v498 = vunpack.c.h.b16 %v38
  %v499 = vunpack.c.l.b16 %v39
  %v500 = vunpack.c.h.b16 %v39
  %v501 = vunpack.c.l.b16 %v40
  %v502 = vunpack.c.h.b16 %v40
  %v503 = vunpack.c.l.b16 %v41
  %v504 = vunpack.c.h.b16 %v41
  %v505 = vunpack.c.l.b16 %v42
  %v506 = vunpack.c.h.b16 %v42
  %v507 = vunpack.c.l.b16 %v43
  %v508 = vunpack.c.h.b16 %v43
  %v509 = vunpack.c.l.b16 %v44
  %v510 = vunpack.c.h.b16 %v44
  %v511 = vunpack.c.l.b16 %v45
  %v512 = vunpack.c.h.b16 %v45
  %v513 = vunpack.c.l.b16 %v46
  %v514 = vunpack.c.h.b16 %v46
  %v515 = vunpack.c.l.b16 %v47
  %v516 = vunpack.c.h.b16 %v47
  %v517 = vunpack.c.l.b16 %v48
  %v518 = vunpack.c.h.b16 %v48
  %v519 = vunpack.c.l.b16 %v49
  %v520 = vunpack.c.h.b16 %v49
  %v521 = vunpack.c.l.b16 %v50
  %v522 = vunpack.c.h.b16 %v50
  %v523 = vunpack.c.l.b16 %v51
  %v524 = vunpack.c.h.b16 %v51
  %v525 = vunpack.c.l.b16 %v52
  %v526 = vunpack.c.h.b16 %v52
  %v527 = vunpack.c.l.b16 %v53
  %v528 = vunpack.c.h.b16 %v53
  %v529 = vunpack.c.l.b16 %v54
  %v530 = vunpack.c.h.b16 %v54
  %v531 = vunpack.c.l.b16 %v55
  %v532 = vunpack.c.h.b16 %v55
  %v533 = vunpack.c.l.b16 %v56
  %v534 = vunpack.c.h.b16 %v56
  %v535 = vunpack.c.l.b16 %v57
  %v536 = vunpack.c.h.b16 %v57
  %v537 = vunpack.c.l.b16 %v58
  %v538 = vunpack.c.h.b16 %v58
  %v539 = vunpack.c.l.b16 %v59
  %v540 = vunpack.c.h.b16 %v59
  %v541 = vunpack.c.l.b16 %v60
  %v542 = vunpack.c.h.b16 %v60
  %v543 = vunpack.c.l.b16 %v61
  %v544 = vunpack.c.h.b16 %v61
  %v545 = vunpack.c.l.b16 %v62
  %v546 = vunpack.c.h.b16 %v62
  %v547 = vunpack.c.l.b16 %v63
  %v548 = vunpack.c.h.b16 %v63
  %v549 = vunpack.c.l.b16 %v64
  %v550 = vunpack.c.h.b16 %v64
  %v551 = vunpack.c.l.b16 %v65
  %v552 = vunpack.c.h.b16 %v65
  %v553 = vunpack.c.l.b16 %v66
  %v554 = vunpack.c.h.b16 %v66
  %v555 = vunpack.c.l.b16 %v67
  %v556 = vunpack.c.h.b16 %v67
  %v557 = vunpack.c.l.b16 %v68
  %v558 = vunpack.c.h.b16 %v68
  %v559 = vunpack.c.l.b16 %v69
  %v560 = vunpack.c.h.b16 %v69
  %v561 = vunpack.c.l.b16 %v70
  %v562 = vunpack.c.h.b16 %v70
  %v563 = vunpack.c.l.b16 %v71
  %v564 = vunpack.c.h.b16 %v71
  %v565 = vunpack.c.l.b16 %v72
  %v566 = vunpack.c.h.b16 %v72
  %v567 = vunpack.c.l.b16 %v73
  %v568 = vunpack.c.h.b16 %v73
  %v569 = vunpack.c.l.b16 %v74
  %v570 = vunpack.c.h.b16 %v74
  %v571 = vunpack.c.l.b16 %v75
  %v572 = vunpack.c.h.b16 %v75
  %v573 = vunpack.c.l.b16 %v76
  %v574 = vunpack.c.h.b16 %v76
  %v575 = vunpack.c.l.b16 %v77
  %v576 = vunpack.c.h.b16 %v77
  %v577 = vunpack.c.l.b16 %v78
  %v578 = vunpack.c.h.b16 %v78
  %v579 = vunpack.c.l.b16 %v79
  %v580 = vunpack.c.h.b16 %v79
  %v581 = vunpack.c.l.b16 %v80
  %v582 = vunpack.c.h.b16 %v80
  %v583 = vunpack.c.l.b16 %v81
  %v584 = vunpack.c.h.b16 %v81
  %v585 = vunpack.c.l.b16 %v82
  %v586 = vunpack.c.h.b16 %v82
  %v587 = vunpack.c.l.b16 %v83
  %v588 = vunpack.c.h.b16 %v83
  %v589 = vunpack.c.l.b16 %v84
  %v590 = vunpack.c.h.b16 %v84
  %v591 = vunpack.c.l.b16 %v85
  %v592 = vunpack.c.h.b16 %v85
  %v593 = vunpack.c.l.b16 %v86
  %v594 = vunpack.c.h.b16 %v86
  %v595 = vunpack.c.l.b16 %v87
  %v596 = vunpack.c.h.b16 %v87
  %v597 = vunpack.c.l.b16 %v88
  %v598 = vunpack.c.h.b16 %v88
  %v599 = vunpack.c.l.b16 %v89
  %v600 = vunpack.c.h.b16 %v89
  %v601 = vunpack.c.l.b16 %v90
  %v602 = vunpack.c.h.b16 %v90
  %v603 = vunpack.c.l.b16 %v91
  %v604 = vunpack.c.h.b16 %v91
  %v605 = vunpack.c.l.b16 %v92
  %v606 = vunpack.c.h.b16 %v92
  %v607 = vunpack.c.l.b16 %v93
  %v608 = vunpack.c.h.b16 %v93
  %v609 = vunpack.c.l.b16 %v94
  %v610 = vunpack.c.h.b16 %v94
  %v611 = vunpack.c.l.b16 %v95
  %v612 = vunpack.c.h.b16 %v95
  %v613 = vunpack.c.l.b16 %v96
  %v614 = vunpack.c.h.b16 %v96
  %v615 = vunpack.c.l.b16 %v97
  %v616 = vunpack.c.h.b16 %v97
  %v617 = vunpack.c.l.b16 %v98
  %v618 = vunpack.c.h.b16 %v98
  %v619 = vunpack.c.l.b16 %v99
  %v620 = vunpack.c.h.b16 %v99
  %v621 = vunpack.c.l.b16 %v100
  %v622 = vunpack.c.h.b16 %v100
  %v623 = vunpack.c.l.b16 %v101
  %v624 = vunpack.c.h.b16 %v101
  %v625 = vunpack.c.l.b16 %v102
  %v626 = vunpack.c.h.b16 %v102
  %v627 = vunpack.c.l.b16 %v103
  %v628 = vunpack.c.h.b16 %v103
  %v629 = vunpack.c.l.b16 %v104
  %v630 = vunpack.c.h.b16 %v104
  %v631 = vunpack.c.l.b16 %v105
  %v632 = vunpack.c.h.b16 %v105
  %v633 = vunpack.c.l.b16 %v106
  %v634 = vunpack.c.h.b16 %v106
  %v635 = vunpack.c.l.b16 %v107
  %v636 = vunpack.c.h.b16 %v107
  %v637 = vunpack.c.l.b16 %v108
  %v638 = vunpack.c.h.b16 %v108
  %v639 = vunpack.c.l.b16 %v109
  %v640 = vunpack.c.h.b16 %v109
  %v641 = vunpack.c.l.b16 %v110
  %v642 = vunpack.c.h.b16 %v110
  %v643 = vunpack.c.l.b16 %v111
  %v644 = vunpack.c.h.b16 %v111
  %v645 = vunpack.c.l.b16 %v112
  %v646 = vunpack.c.h.b16 %v112
  %v647 = vunpack.c.l.b16 %v113
  %v648 = vunpack.c.h.b16 %v113
  %v649 = vunpack.c.l.b16 %v114
  %v650 = vunpack.c.h.b16 %v114
  %v651 = vunpack.c.l.b16 %v115
  %v652 = vunpack.c.h.b16 %v115
  %v653 = vunpack.c.l.b16 %v116
  %v654 = vunpack.c.h.b16 %v116
  %v655 = vunpack.c.l.b16 %v117
  %v656 = vunpack.c.h.b16 %v117
  %v657 = vunpack.c.l.b16 %v118
  %v658 = vunpack.c.h.b16 %v118
  %v659 = vunpack.c.l.b16 %v119
  %v660 = vunpack.c.h.b16 %v119
  %v661 = vunpack.c.l.b16 %v120
  %v662 = vunpack.c.h.b16 %v120
  %v663 = vunpack.c.l.b16 %v121
  %v664 = vunpack.c.h.b16 %v121
  %v665 = vunpack.c.l.b16 %v122
  %v666 = vunpack.c.h.b16 %v122
  %v667 = vunpack.c.l.b16 %v123
  %v668 = vunpack.c.h.b16 %v123
  %v669 = vunpack.c.l.b16 %v124
  %v670 = vunpack.c.h.b16 %v124
  %v671 = vunpack.c.l.b16 %v125
  %v672 = vunpack.c.h.b16 %v125
  %v673 = vunpack.c.l.b16 %v126
  %v674 = vunpack.c.h.b16 %v126
  %v675 = vunpack.c.l.b16 %v127
  %v676 = vunpack.c.h.b16 %v127
  %v677 = vunpack.c.l.b16 %v128
  %v678 = vunpack.c.h.b16 %v128
  %v679 = vunpack.c.l.b16 %v129
  %v680 = vunpack.c.h.b16 %v129
  %v681 = vunpack.c.l.b16 %v130
  %v682 = vunpack.c.h.b16 %v130
  %v683 = vunpack.c.l.b16 %v131
  %v684 = vunpack.c.h.b16 %v131
  %v685 = vunpack.c.l.b16 %v132
  %v686 = vunpack.c.h.b16 %v132
  %v687 = vunpack.c.l.b16 %v133
  %v688 = vunpack.c.h.b16 %v133
  %v689 = vunpack.c.l.b16 %v134
  %v690 = vunpack.c.h.b16 %v134
  %v691 = vunpack.c.l.b16 %v135
  %v692 = vunpack.c.h.b16 %v135
  %v693 = vunpack.c.l.b16 %v136
  %v694 = vunpack.c.h.b16 %v136
  %v695 = vunpack.c.l.b16 %v137
  %v696 = vunpack.c.h.b16 %v137
  %v697 = vunpack.c.l.b16 %v138
  %v698 = vunpack.c.h.b16 %v138
  %v699 = vunpack.c.l.b16 %v139
  %v700 = vunpack.c.h.b16 %v139
  %v701 = vunpack.c.l.b16 %v140
  %v702 = vunpack.c.h.b16 %v140
  %v703 = vunpack.c.l.b16 %v141
  %v704 = vunpack.c.h.b16 %v141
  %v705 = vunpack.c.l.b16 %v142
  %v706 = vunpack.c.h.b16 %v142
  %v707 = vunpack.c.l.b16 %v143
  %v708 = vunpack.c.h.b16 %v143
  %v709 = vunpack.c.l.b16 %v144
  %v710 = vunpack.c.h.b16 %v144
  %v711 = vunpack.c.l.b16 %v145
  %v712 = vunpack.c.h.b16 %v145
  %v713 = vunpack.c.l.b16 %v146
  %v714 = vunpack.c.h.b16 %v146
  %v715 = vunpack.c.l.b16 %v147
  %v716 = vunpack.c.h.b16 %v147
  %v717 = vunpack.c.l.b16 %v148
  %v718 = vunpack.c.h.b16 %v148
  %v719 = vunpack.c.l.b16 %v149
  %v720 = vunpack.c.h.b16 %v149
  %v721 = vunpack.c.l.b16 %v150
  %v722 = vunpack.c.h.b16 %v150
  %v723 = vunpack.c.l.b16 %v151
  %v724 = vunpack.c.h.b16 %v151
  %v725 = vunpack.c.l.b16 %v152
  %v726 = vunpack.c.h.b16 %v152
  %v727 = vunpack.c.l.b16 %v153
  %v728 = vunpack.c.h.b16 %v153
  %v729 = vunpack.c.l.b16 %v154
  %v730 = vunpack.c.h.b16 %v154
  %v731 = vunpack.c.l.b16 %v155
  %v732 = vunpack.c.h.b16 %v155
  %v733 = vunpack.c.l.b16 %v156
  %v734 = vunpack.c.h.b16 %v156
  %v735 = vunpack.c.l.b16 %v157
  %v736 = vunpack.c.h.b16 %v157
  %v737 = vunpack.c.l.b16 %v158
  %v738 = vunpack.c.h.b16 %v158
  %v739 = vunpack.c.l.b16 %v159
  %v740 = vunpack.c.h.b16 %v159
  %v741 = vunpack.c.l.b16 %v160
  %v742 = vunpack.c.h.b16 %v160
  %v743 = vunpack.c.l.b16 %v161
  %v744 = vunpack.c.h.b16 %v161
  %v745 = vunpack.c.l.b16 %v162
  %v746 = vunpack.c.h.b16 %v162
  %v747 = vunpack.c.l.b16 %v163
  %v748 = vunpack.c.h.b16 %v163
  %v749 = vunpack.c.l.b16 %v164
  %v750 = vunpack.c.h.b16 %v164
  %v751 = vunpack.c.l.b16 %v165
  %v752 = vunpack.c.h.b16 %v165
  %v753 = vunpack.c.l.b16 %v166
  %v754 = vunpack.c.h.b16 %v166
  %v755 = vunpack.c.l.b16 %v167
  %v756 = vunpack.c.h.b16 %v167
  %v757 = vunpack.c.l.b16 %v168
  %v758 = vunpack.c.h.b16 %v168
  %v759 = vunpack.c.l.b16 %v169
  %v760 = vunpack.c.h.b16 %v169
  %v761 = vunpack.c.l.b16 %v170
  %v762 = vunpack.c.h.b16 %v170
  %v763 = vunpack.c.l.b16 %v171
  %v764 = vunpack.c.h.b16 %v171
  %v765 = vunpack.c.l.b16 %v172
  %v766 = vunpack.c.h.b16 %v172
  %v767 = vunpack.c.l.b16 %v173
  %v768 = vunpack.c.h.b16 %v173
  %v769 = vunpack.c.l.b16 %v174
  %v770 = vunpack.c.h.b16 %v174
  %v771 = vunpack.c.l.b16 %v175
  %v772 = vunpack.c.h.b16 %v175
  %v773 = vunpack.c.l.b16 %v176
  %v774 = vunpack.c.h.b16 %v176
  %v775 = vunpack.c.l.b16 %v177
  %v776 = vunpack.c.h.b16 %v177
  %v777 = vunpack.c.l.b16 %v178
  %v778 = vunpack.c.h.b16 %v178
  %v779 = vunpack.c.l.b16 %v179
  %v780 = vunpack.c.h.b16 %v179
  %v781 = vunpack.c.l.b16 %v180
  %v782 = vunpack.c.h.b16 %v180
  %v783 = vunpack.c.l.b16 %v181
  %v784 = vunpack.c.h.b16 %v181
  %v785 = vunpack.c.l.b16 %v182
  %v786 = vunpack.c.h.b16 %v182
  %v787 = vunpack.c.l.b16 %v183
  %v788 = vunpack.c.h.b16 %v183
  %v789 = vunpack.c.l.b16 %v184
  %v790 = vunpack.c.h.b16 %v184
  %v791 = vunpack.c.l.b16 %v185
  %v792 = vunpack.c.h.b16 %v185
  %v793 = vunpack.c.l.b16 %v186
  %v794 = vunpack.c.h.b16 %v186
  %v795 = vunpack.c.l.b16 %v187
  %v796 = vunpack.c.h.b16 %v187
  %v797 = vunpack.c.l.b16 %v188
  %v798 = vunpack.c.h.b16 %v188
  %v799 = vunpack.c.l.b16 %v189
  %v800 = vunpack.c.h.b16 %v189
  %v801 = vunpack.c.l.b16 %v190
  %v802 = vunpack.c.h.b16 %v190
  %v803 = vunpack.c.l.b16 %v191
  %v804 = vunpack.c.h.b16 %v191
  %v805 = vunpack.c.l.b16 %v192
  %v806 = vunpack.c.h.b16 %v192
  %v807 = vunpack.c.l.b16 %v193
  %v808 = vunpack.c.h.b16 %v193
  %v809 = vunpack.c.l.b16 %v194
  %v810 = vunpack.c.h.b16 %v194
  %v811 = vunpack.c.l.b16 %v195
  %v812 = vunpack.c.h.b16 %v195
  %v813 = vunpack.c.l.b16 %v196
  %v814 = vunpack.c.h.b16 %v196
  %v815 = vunpack.c.l.b16 %v197
  %v816 = vunpack.c.h.b16 %v197
  %v817 = vunpack.c.l.b16 %v198
  %v818 = vunpack.c.h.b16 %v198
  %v819 = vunpack.c.l.b16 %v199
  %v820 = vunpack.c.h.b16 %v199
  %v821 = vunpack.c.l.b16 %v200
  %v822 = vunpack.c.h.b16 %v200
  %v823 = vunpack.c.l.b16 %v201
  %v824 = vunpack.c.h.b16 %v201
  %v825 = vunpack.c.l.b16 %v202
  %v826 = vunpack.c.h.b16 %v202
  %v827 = vunpack.c.l.b16 %v203
  %v828 = vunpack.c.h.b16 %v203
  %v829 = vunpack.c.l.b16 %v204
  %v830 = vunpack.c.h.b16 %v204
  %v831 = vunpack.c.l.b16 %v205
  %v832 = vunpack.c.h.b16 %v205
  %v833 = vunpack.c.l.b16 %v206
  %v834 = vunpack.c.h.b16 %v206
  %v835 = vunpack.c.l.b16 %v207
  %v836 = vunpack.c.h.b16 %v207
  %v837 = vunpack.c.l.b16 %v208
  %v838 = vunpack.c.h.b16 %v208
  %v839 = vunpack.c.l.b16 %v209
  %v840 = vunpack.c.h.b16 %v209
  %v841 = vunpack.c.l.b16 %v210
  %v842 = vunpack.c.h.b16 %v210
  %v843 = vunpack.c.l.b16 %v211
  %v844 = vunpack.c.h.b16 %v211
  %v845 = vunpack.c.l.b16 %v212
  %v846 = vunpack.c.h.b16 %v212
  %v847 = vunpack.c.l.b16 %v213
  %v848 = vunpack.c.h.b16 %v213
  %v849 = vunpack.c.l.b16 %v214
  %v850 = vunpack.c.h.b16 %v214
  %v851 = vunpack.c.l.b16 %v215
  %v852 = vunpack.c.h.b16 %v215
  %v853 = vunpack.c.l.b16 %v216
  %v854 = vunpack.c.h.b16 %v216
  %v855 = vunpack.c.l.b16 %v217
  %v856 = vunpack.c.h.b16 %v217
  %v857 = vunpack.c.l.b16 %v218
  %v858 = vunpack.c.h.b16 %v218
  %v859 = vunpack.c.l.b16 %v219
  %v860 = vunpack.c.h.b16 %v219
  %v861 = vunpack.c.l.b16 %v220
  %v862 = vunpack.c.h.b16 %v220
  %v863 = vunpack.c.l.b16 %v221
  %v864 = vunpack.c.h.b16 %v221
  %v865 = vunpack.c.l.b16 %v222
  %v866 = vunpack.c.h.b16 %v222
  %v867 = vunpack.c.l.b16 %v223
  %v868 = vunpack.c.h.b16 %v223
  %v869 = vpack.c.b16 %v479, %v477
  %v870 = vpack.c.b16 %v480, %v478
  %v871 = vpack.c.b16 %v483, %v481
  %v872 = vpack.c.b16 %v484, %v482
  %v873 = vpack.c.b16 %v487, %v485
  %v874 = vpack.c.b16 %v488, %v486
  %v875 = vpack.c.b16 %v491, %v489
  %v876 = vpack.c.b16 %v492, %v490
  %v877 = vpack.c.b16 %v495, %v493
  %v878 = vpack.c.b16 %v496, %v494
  %v879 = vpack.c.b16 %v499, %v497
  %v880 = vpack.c.b16 %v500, %v498
  %v881 = vpack.c.b16 %v503, %v501
  %v882 = vpack.c.b16 %v504, %v502
  %v883 = vpack.c.b16 %v507, %v505
  %v884 = vpack.c.b16 %v508, %v506
  %v885 = vpack.c.b16 %v511, %v509
  %v886 = vpack.c.b16 %v512, %v510
  %v887 = vpack.c.b16 %v515, %v513
  %v888 = vpack.c.b16 %v516, %v514
  %v889 = vpack.c.b16 %v519, %v517
  %v890 = vpack.c.b16 %v520, %v518
  %v891 = vpack.c.b16 %v523, %v521
  %v892 = vpack.c.b16 %v524, %v522
  %v893 = vpack.c.b16 %v527, %v525
  %v894 = vpack.c.b16 %v528, %v526
  %v895 = vpack.c.b16 %v531, %v529
  %v896 = vpack.c.b16 %v532, %v530
  %v897 = vpack.c.b16 %v535, %v533
  %v898 = vpack.c.b16 %v536, %v534
  %v899 = vpack.c.b16 %v539, %v537
  %v900 = vpack.c.b16 %v540, %v538
  %v901 = vpack.c.b16 %v543, %v541
  %v902 = vpack.c.b16 %v544, %v542
  %v903 = vpack.c.b16 %v547, %v545
  %v904 = vpack.c.b16 %v548, %v546
  %v905 = vpack.c.b16 %v551, %v549
  %v906 = vpack.c.b16 %v552, %v550
  %v907 = vpack.c.b16 %v555, %v553
  %v908 = vpack.c.b16 %v556, %v554
  %v909 = vpack.c.b16 %v559, %v557
  %v910 = vpack.c.b16 %v560, %v558
  %v911 = vpack.c.b16 %v563, %v561
  %v912 = vpack.c.b16 %v564, %v562
  %v913 = vpack.c.b16 %v567, %v565
  %v914 = vpack.c.b16 %v568, %v566
  %v915 = vpack.c.b16 %v571, %v569
  %v916 = vpack.c.b16 %v572, %v570
  %v917 = vpack.c.b16 %v575, %v573
  %v918 = vpack.c.b16 %v576, %v574
  %v919 = vpack.c.b16 %v579, %v577
  %v920 = vpack.c.b16 %v580, %v578
  %v921 = vpack.c.b16 %v583, %v581
  %v922 = vpack.c.b16 %v584, %v582
  %v923 = vpack.c.b16 %v587, %v585
  %v924 = vpack.c.b16 %v588, %v586
  %v925 = vpack.c.b16 %v591, %v589
  %v926 = vpack.c.b16 %v592, %v590
  %v927 = vpack.c.b16 %v595, %v593
  %v928 = vpack.c.b16 %v596, %v594
  %v929 = vpack.c.b16 %v599, %v597
  %v930 = vpack.c.b16 %v600, %v598
  %v931 = vpack.c.b16 %v603, %v601
  %v932 = vpack.c.b16 %v604, %v602
  %v933 = vpack.c.b16 %v607, %v605
  %v934 = vpack.c.b16 %v608, %v606
  %v935 = vpack.c.b16 %v611, %v609
  %v936 = vpack.c.b16 %v612, %v610
  %v937 = vpack.c.b16 %v615, %v613
  %v938 = vpack.c.b16 %v616, %v614
  %v939 = vpack.c.b16 %v619, %v617
  %v940 = vpack.c.b16 %v620, %v618
  %v941 = vpack.c.b16 %v623, %v621
  %v942 = vpack.c.b16 %v624, %v622
  %v943 = vpack.c.b16 %v627, %v625
  %v944 = vpack.c.b16 %v628, %v626
  %v945 = vpack.c.b16 %v631, %v629
  %v946 = vpack.c.b16 %v632, %v630
  %v947 = vpack.c.b16 %v635, %v633
  %v948 = vpack.c.b16 %v636, %v634
  %v949 = vpack.c.b16 %v639, %v637
  %v950 = vpack.c.b16 %v640, %v638
  %v951 = vpack.c.b16 %v643, %v641
  %v952 = vpack.c.b16 %v644, %v642
  %v953 = vpack.c.b16 %v647, %v645
  %v954 = vpack.c.b16 %v648, %v646
  %v955 = vpack.c.b16 %v651, %v649
  %v956 = vpack.c.b16 %v652, %v650
  %v957 = vpack.c.b16 %v655, %v653
  %v958 = vpack.c.b16 %v656, %v654
  %v959 = vpack.c.b16 %v659, %v657
  %v960 = vpack.c.b16 %v660, %v658
  %v961 = vpack.c.b16 %v663, %v661
  %v962 = vpack.c.b16 %v664, %v662
  %v963 = vpack.c.b16 %v667, %v665
  %v964 = vpack.c.b16 %v668, %v666
  %v965 = vpack.c.b16 %v671, %v669
  %v966 = vpack.c.b16 %v672, %v670
  %v967 = vpack.c.b16 %v675, %v673
  %v968 = vpack.c.b16 %v676, %v674
  %v969 = vpack.c.b16 %v679, %v677
  %v970 = vpack.c.b16 %v680, %v678
  %v971 = vpack.c.b16 %v683, %v681
  %v972 = vpack.c.b16 %v684, %v682
  %v973 = vpack.c.b16 %v687, %v685
  %v974 = vpack.c.b16 %v688, %v686
  %v975 = vpack.c.b16 %v691, %v689
  %v976 = vpack.c.b16 %v692, %v690
  %v977 = vpack.c.b16 %v695, %v693
  %v978 = vpack.c.b16 %v696, %v694
  %v979 = vpack.c.b16 %v699, %v697
  %v980 = vpack.c.b16 %v700, %v698
  %v981 = vpack.c.b16 %v703, %v701
  %v982 = vpack.c.b16 %v704, %v702
  %v983 = vpack.c.b16 %v707, %v705
  %v984 = vpack.c.b16 %v708, %v706
  %v985 = vpack.c.b16 %v711, %v709
  %v986 = vpack.c.b16 %v712, %v710
  %v987 = vpack.c.b16 %v715, %v713
  %v988 = vpack.c.b16 %v716, %v714
  %v989 = vpack.c.b16 %v719, %v717
  %v990 = vpack.c.b16 %v720, %v718
  %v991 = vpack.c.b16 %v723, %v721
  %v992 = vpack.c.b16 %v724, %v722
  %v993 = vpack.c.b16 %v727, %v725
  %v994 = vpack.c.b16 %v728, %v726
  %v995 = vpack.c.b16 %v731, %v729
  %v996 = vpack.c.b16 %v732, %v730
  %v997 = vpack.c.b16 %v735, %v733
  %v998 = vpack.c.b16 %v736, %v734
  %v999 = vpack.c.b16 %v739, %v737
  %v1000 = vpack.c.b16 %v740, %v738
  %v1001 = vpack.c.b16 %v743, %v741
  %v1002 = vpack.c.b16 %v744, %v742
  %v1003 = vpack.c.b16 %v747, %v745
  %v1004 = vpack.c.b16 %v748, %v746
  %v1005 = vpack.c.b16 %v751, %v749
  %v1006 = vpack.c.b16 %v752, %v750
  %v1007 = vpack.c.b16 %v755, %v753
  %v1008 = vpack.c.b16 %v756, %v754
  %v1009 = vpack.c.b16 %v759, %v757
  %v1010 = vpack.c.b16 %v760, %v758
  %v1011 = vpack.c.b16 %v763, %v761
  %v1012 = vpack.c.b16 %v764, %v762
  %v1013 = vpack.c.b16 %v767, %v765
  %v1014 = vpack.c.b16 %v768, %v766
  %v1015 = vpack.c.b16 %v771, %v769
  %v1016 = vpack.c.b16 %v772, %v770
  %v1017 = vpack.c.b16 %v775, %v773
  %v1018 = vpack.c.b16 %v776, %v774
  %v1019 = vpack.c.b16 %v779, %v777
  %v1020 = vpack.c.b16 %v780, %v778
  %v1021 = vpack.c.b16 %v783, %v781
  %v1022 = vpack.c.b16 %v784, %v782
  %v1023 = vpack.c.b16 %v787, %v785
  %v1024 = vpack.c.b16 %v788, %v786
  %v1025 = vpack.c.b16 %v791, %v789
  %v1026 = vpack.c.b16 %v792, %v790
  %v1027 = vpack.c.b16 %v795, %v793
  %v1028 = vpack.c.b16 %v796, %v794
  %v1029 = vpack.c.b16 %v799, %v797
  %v1030 = vpack.c.b16 %v800, %v798
  %v1031 = vpack.c.b16 %v803, %v801
  %v1032 = vpack.c.b16 %v804, %v802
  %v1033 = vpack.c.b16 %v807, %v805
  %v1034 = vpack.c.b16 %v808, %v806
  %v1035 = vpack.c.b16 %v811, %v809
  %v1036 = vpack.c.b16 %v812, %v810
  %v1037 = vpack.c.b16 %v815, %v813
  %v1038 = vpack.c.b16 %v816, %v814
  %v1039 = vpack.c.b16 %v819, %v817
  %v1040 = vpack.c.b16 %v820, %v818
  %v1041 = vpack.c.b16 %v823, %v821
  %v1042 = vpack.c.b16 %v824, %v822
  %v1043 = vpack.c.b16 %v827, %v825
  %v1044 = vpack.c.b16 %v828, %v826
  %v1045 = vpack.c.b16 %v831, %v829
  %v1046 = vpack.c.b16 %v832, %v830
  %v1047 = vpack.c.b16 %v835, %v833
  %v1048 = vpack.c.b16 %v836, %v834
  %v1049 = vpack.c.b16 %v839, %v837
  %v1050 = vpack.c.b16 %v840, %v838
  %v1051 = vpack.c.b16 %v843, %v841
  %v1052 = vpack.c.b16 %v844, %v842
  %v1053 = vpack.c.b16 %v847, %v845
  %v1054 = vpack.c.b16 %v848, %v846
  %v1055 = vpack.c.b16 %v851, %v849
  %v1056 = vpack.c.b16 %v852, %v850
  %v1057 = vpack.c.b16 %v855, %v853
  %v1058 = vpack.c.b16 %v856, %v854
  %v1059 = vpack.c.b16 %v859, %v857
  %v1060 = vpack.c.b16 %v860, %v858
  %v1061 = vpack.c.b16 %v863, %v861
  %v1062 = vpack.c.b16 %v864, %v862
  %v1063 = vpack.c.b16 %v867, %v865
  %v1064 = vpack.c.b16 %v868, %v866
  %vm1261 = vcmask 261120
  %v1263 = vsel %vm1261, %v268, 0
  %1265 = vmatprep.subr.bf16.mxu0 %v870
  %1266 = vmatpush1.bf16.msra.mxu0 %v869
  %1267 = vmatprep.subr.bf16.mxu0 %v872
  %1268 = vmatpush1.bf16.msra.mxu0 %v871
  %1269 = vmatprep.subr.bf16.mxu0 %v874
  %1270 = vmatpush1.bf16.msra.mxu0 %v873
  %1271 = vmatprep.subr.bf16.mxu0 %v876
  %1272 = vmatpush1.bf16.msra.mxu0 %v875
  %1273 = vmatprep.subr.bf16.mxu0 %v878
  %1274 = vmatpush1.bf16.msra.mxu0 %v877
  %1275 = vmatprep.subr.bf16.mxu0 %v880
  %1276 = vmatpush1.bf16.msra.mxu0 %v879
  %1277 = vmatprep.subr.bf16.mxu0 %v882
  %1278 = vmatpush1.bf16.msra.mxu0 %v881
  %1279 = vmatprep.subr.bf16.mxu0 %v884
  %1280 = vmatpush1.bf16.msra.mxu0 %v883
  %1281 = vmatprep.subr.bf16.mxu0 %v886
  %1282 = vmatpush1.bf16.msra.mxu0 %v885
  %1283 = vmatprep.subr.bf16.mxu0 %v888
  %1284 = vmatpush1.bf16.msra.mxu0 %v887
  %1285 = vmatprep.subr.bf16.mxu0 %v890
  %1286 = vmatpush1.bf16.msra.mxu0 %v889
  %1287 = vmatprep.subr.bf16.mxu0 %v892
  %1288 = vmatpush1.bf16.msra.mxu0 %v891
  %1289 = vmatprep.subr.bf16.mxu0 %v894
  %1290 = vmatpush1.bf16.msra.mxu0 %v893
  %1291 = vmatprep.subr.bf16.mxu0 %v896
  %1292 = vmatpush1.bf16.msra.mxu0 %v895
  %1293 = vmatprep.subr.bf16.mxu0 %v898
  %1294 = vmatpush1.bf16.msra.mxu0 %v897
  %1295 = vmatprep.subr.bf16.mxu0 %v900
  %1296 = vmatpush1.bf16.msra.mxu0 %v899
  %1297 = vmatprep.mubr.bf16.mxu0 %v257
  %1298 = vmatmul.mubr.bf16.gmra.mrb[0].mxu0 %v256
  %v1299 = vpop.f32.mrb[0].mxu0
  %v1300 = vadd.f32 %v229, %v1299
  %v1301 = vpop.f32.mrb[0].mxu0
  %v1302 = vadd.f32 %v233, %v1301
  %v1303 = vpop.f32.mrb[0].mxu0
  %v1304 = vpop.f32.mrb[0].mxu0
  %1305 = vdwg.mxu0
  %1306 = vmatprep.subr.bf16.mxu0 %v902
  %1307 = vmatpush1.bf16.msra.mxu0 %v901
  %1308 = vmatprep.subr.bf16.mxu0 %v904
  %1309 = vmatpush1.bf16.msra.mxu0 %v903
  %1310 = vmatprep.subr.bf16.mxu0 %v906
  %1311 = vmatpush1.bf16.msra.mxu0 %v905
  %1312 = vmatprep.subr.bf16.mxu0 %v908
  %1313 = vmatpush1.bf16.msra.mxu0 %v907
  %1314 = vmatprep.subr.bf16.mxu0 %v910
  %1315 = vmatpush1.bf16.msra.mxu0 %v909
  %1316 = vmatprep.subr.bf16.mxu0 %v912
  %1317 = vmatpush1.bf16.msra.mxu0 %v911
  %1318 = vmatprep.subr.bf16.mxu0 %v914
  %1319 = vmatpush1.bf16.msra.mxu0 %v913
  %1320 = vmatprep.subr.bf16.mxu0 %v916
  %1321 = vmatpush1.bf16.msra.mxu0 %v915
  %1322 = vmatprep.subr.bf16.mxu0 %v918
  %1323 = vmatpush1.bf16.msra.mxu0 %v917
  %1324 = vmatprep.subr.bf16.mxu0 %v920
  %1325 = vmatpush1.bf16.msra.mxu0 %v919
  %1326 = vmatprep.subr.bf16.mxu0 %v922
  %1327 = vmatpush1.bf16.msra.mxu0 %v921
  %1328 = vmatprep.subr.bf16.mxu0 %v924
  %1329 = vmatpush1.bf16.msra.mxu0 %v923
  %1330 = vmatprep.subr.bf16.mxu0 %v926
  %1331 = vmatpush1.bf16.msra.mxu0 %v925
  %1332 = vmatprep.subr.bf16.mxu0 %v928
  %1333 = vmatpush1.bf16.msra.mxu0 %v927
  %1334 = vmatprep.subr.bf16.mxu0 %v930
  %1335 = vmatpush1.bf16.msra.mxu0 %v929
  %1336 = vmatprep.subr.bf16.mxu0 %v932
  %1337 = vmatpush1.bf16.msra.mxu0 %v931
  %1338 = vmatprep.mubr.bf16.mxu0 %v259
  %1339 = vmatmul.mubr.bf16.gmra.mrb[0].mxu0 %v258
  %v1340 = vpop.f32.mrb[0].mxu0
  %v1341 = vadd.f32 %v1300, %v1340
  %v1342 = vpop.f32.mrb[0].mxu0
  %v1343 = vadd.f32 %v1302, %v1342
  %v1344 = vpop.f32.mrb[0].mxu0
  %v1345 = vpop.f32.mrb[0].mxu0
  %1346 = vdwg.mxu0
  %1347 = vmatprep.subr.bf16.mxu0 %v934
  %1348 = vmatpush1.bf16.msra.mxu0 %v933
  %1349 = vmatprep.subr.bf16.mxu0 %v936
  %1350 = vmatpush1.bf16.msra.mxu0 %v935
  %1351 = vmatprep.subr.bf16.mxu0 %v938
  %1352 = vmatpush1.bf16.msra.mxu0 %v937
  %1353 = vmatprep.subr.bf16.mxu0 %v940
  %1354 = vmatpush1.bf16.msra.mxu0 %v939
  %1355 = vmatprep.subr.bf16.mxu0 %v942
  %1356 = vmatpush1.bf16.msra.mxu0 %v941
  %1357 = vmatprep.subr.bf16.mxu0 %v944
  %1358 = vmatpush1.bf16.msra.mxu0 %v943
  %1359 = vmatprep.subr.bf16.mxu0 %v946
  %1360 = vmatpush1.bf16.msra.mxu0 %v945
  %1361 = vmatprep.subr.bf16.mxu0 %v948
  %1362 = vmatpush1.bf16.msra.mxu0 %v947
  %1363 = vmatprep.subr.bf16.mxu0 %v950
  %1364 = vmatpush1.bf16.msra.mxu0 %v949
  %1365 = vmatprep.subr.bf16.mxu0 %v952
  %1366 = vmatpush1.bf16.msra.mxu0 %v951
  %1367 = vmatprep.subr.bf16.mxu0 %v954
  %1368 = vmatpush1.bf16.msra.mxu0 %v953
  %1369 = vmatprep.subr.bf16.mxu0 %v956
  %1370 = vmatpush1.bf16.msra.mxu0 %v955
  %1371 = vmatprep.subr.bf16.mxu0 %v958
  %1372 = vmatpush1.bf16.msra.mxu0 %v957
  %1373 = vmatprep.subr.bf16.mxu0 %v960
  %1374 = vmatpush1.bf16.msra.mxu0 %v959
  %1375 = vmatprep.subr.bf16.mxu0 %v962
  %1376 = vmatpush1.bf16.msra.mxu0 %v961
  %1377 = vmatprep.subr.bf16.mxu0 %v964
  %1378 = vmatpush1.bf16.msra.mxu0 %v963
  %1379 = vmatprep.mubr.bf16.mxu0 %v261
  %1380 = vmatmul.mubr.bf16.gmra.mrb[0].mxu0 %v260
  %v1381 = vpop.f32.mrb[0].mxu0
  %v1382 = vadd.f32 %v1341, %v1381
  %v1383 = vpop.f32.mrb[0].mxu0
  %v1384 = vadd.f32 %v1343, %v1383
  %v1385 = vpop.f32.mrb[0].mxu0
  %v1386 = vpop.f32.mrb[0].mxu0
  %1387 = vdwg.mxu0
  %1388 = vmatprep.subr.bf16.mxu0 %v966
  %1389 = vmatpush1.bf16.msra.mxu0 %v965
  %1390 = vmatprep.subr.bf16.mxu0 %v968
  %1391 = vmatpush1.bf16.msra.mxu0 %v967
  %1392 = vmatprep.subr.bf16.mxu0 %v970
  %1393 = vmatpush1.bf16.msra.mxu0 %v969
  %1394 = vmatprep.subr.bf16.mxu0 %v972
  %1395 = vmatpush1.bf16.msra.mxu0 %v971
  %1396 = vmatprep.subr.bf16.mxu0 %v974
  %1397 = vmatpush1.bf16.msra.mxu0 %v973
  %1398 = vmatprep.subr.bf16.mxu0 %v976
  %1399 = vmatpush1.bf16.msra.mxu0 %v975
  %1400 = vmatprep.subr.bf16.mxu0 %v978
  %1401 = vmatpush1.bf16.msra.mxu0 %v977
  %1402 = vmatprep.subr.bf16.mxu0 %v980
  %1403 = vmatpush1.bf16.msra.mxu0 %v979
  %1404 = vmatprep.subr.bf16.mxu0 %v982
  %1405 = vmatpush1.bf16.msra.mxu0 %v981
  %1406 = vmatprep.subr.bf16.mxu0 %v984
  %1407 = vmatpush1.bf16.msra.mxu0 %v983
  %1408 = vmatprep.subr.bf16.mxu0 %v986
  %1409 = vmatpush1.bf16.msra.mxu0 %v985
  %1410 = vmatprep.subr.bf16.mxu0 %v988
  %1411 = vmatpush1.bf16.msra.mxu0 %v987
  %1412 = vmatprep.subr.bf16.mxu0 %v990
  %1413 = vmatpush1.bf16.msra.mxu0 %v989
  %1414 = vmatprep.subr.bf16.mxu0 %v992
  %1415 = vmatpush1.bf16.msra.mxu0 %v991
  %1416 = vmatprep.subr.bf16.mxu0 %v994
  %1417 = vmatpush1.bf16.msra.mxu0 %v993
  %1418 = vmatprep.subr.bf16.mxu0 %v996
  %1419 = vmatpush1.bf16.msra.mxu0 %v995
  %1420 = vmatprep.mubr.bf16.mxu0 %v263
  %1421 = vmatmul.mubr.bf16.gmra.mrb[0].mxu0 %v262
  %v1422 = vpop.f32.mrb[0].mxu0
  %v1423 = vadd.f32 %v1382, %v1422
  %v1424 = vpop.f32.mrb[0].mxu0
  %v1425 = vadd.f32 %v1384, %v1424
  %v1426 = vpop.f32.mrb[0].mxu0
  %v1427 = vpop.f32.mrb[0].mxu0
  %1428 = vdwg.mxu0
  %1429 = vmatprep.subr.bf16.mxu0 %v998
  %1430 = vmatpush1.bf16.msra.mxu0 %v997
  %1431 = vmatprep.subr.bf16.mxu0 %v1000
  %1432 = vmatpush1.bf16.msra.mxu0 %v999
  %1433 = vmatprep.subr.bf16.mxu0 %v1002
  %1434 = vmatpush1.bf16.msra.mxu0 %v1001
  %1435 = vmatprep.subr.bf16.mxu0 %v1004
  %1436 = vmatpush1.bf16.msra.mxu0 %v1003
  %1437 = vmatprep.subr.bf16.mxu0 %v1006
  %1438 = vmatpush1.bf16.msra.mxu0 %v1005
  %1439 = vmatprep.subr.bf16.mxu0 %v1008
  %1440 = vmatpush1.bf16.msra.mxu0 %v1007
  %1441 = vmatprep.subr.bf16.mxu0 %v1010
  %1442 = vmatpush1.bf16.msra.mxu0 %v1009
  %1443 = vmatprep.subr.bf16.mxu0 %v1012
  %1444 = vmatpush1.bf16.msra.mxu0 %v1011
  %1445 = vmatprep.subr.bf16.mxu0 %v1014
  %1446 = vmatpush1.bf16.msra.mxu0 %v1013
  %1447 = vmatprep.subr.bf16.mxu0 %v1016
  %1448 = vmatpush1.bf16.msra.mxu0 %v1015
  %1449 = vmatprep.subr.bf16.mxu0 %v1018
  %1450 = vmatpush1.bf16.msra.mxu0 %v1017
  %1451 = vmatprep.subr.bf16.mxu0 %v1020
  %1452 = vmatpush1.bf16.msra.mxu0 %v1019
  %1453 = vmatprep.subr.bf16.mxu0 %v1022
  %1454 = vmatpush1.bf16.msra.mxu0 %v1021
  %1455 = vmatprep.subr.bf16.mxu0 %v1024
  %1456 = vmatpush1.bf16.msra.mxu0 %v1023
  %1457 = vmatprep.subr.bf16.mxu0 %v1026
  %1458 = vmatpush1.bf16.msra.mxu0 %v1025
  %1459 = vmatprep.subr.bf16.mxu0 %v1028
  %1460 = vmatpush1.bf16.msra.mxu0 %v1027
  %1461 = vmatprep.mubr.bf16.mxu0 %v265
  %1462 = vmatmul.mubr.bf16.gmra.mrb[0].mxu0 %v264
  %v1463 = vpop.f32.mrb[0].mxu0
  %v1464 = vadd.f32 %v1423, %v1463
  %v1465 = vpop.f32.mrb[0].mxu0
  %v1466 = vadd.f32 %v1425, %v1465
  %v1467 = vpop.f32.mrb[0].mxu0
  %v1468 = vpop.f32.mrb[0].mxu0
  %1469 = vdwg.mxu0
  %1470 = vmatprep.subr.bf16.mxu0 %v1030
  %1471 = vmatpush1.bf16.msra.mxu0 %v1029
  %1472 = vmatprep.subr.bf16.mxu0 %v1032
  %1473 = vmatpush1.bf16.msra.mxu0 %v1031
  %1474 = vmatprep.subr.bf16.mxu0 %v1034
  %1475 = vmatpush1.bf16.msra.mxu0 %v1033
  %1476 = vmatprep.subr.bf16.mxu0 %v1036
  %1477 = vmatpush1.bf16.msra.mxu0 %v1035
  %1478 = vmatprep.subr.bf16.mxu0 %v1038
  %1479 = vmatpush1.bf16.msra.mxu0 %v1037
  %1480 = vmatprep.subr.bf16.mxu0 %v1040
  %1481 = vmatpush1.bf16.msra.mxu0 %v1039
  %1482 = vmatprep.subr.bf16.mxu0 %v1042
  %1483 = vmatpush1.bf16.msra.mxu0 %v1041
  %1484 = vmatprep.subr.bf16.mxu0 %v1044
  %1485 = vmatpush1.bf16.msra.mxu0 %v1043
  %1486 = vmatprep.subr.bf16.mxu0 %v1046
  %1487 = vmatpush1.bf16.msra.mxu0 %v1045
  %1488 = vmatprep.subr.bf16.mxu0 %v1048
  %1489 = vmatpush1.bf16.msra.mxu0 %v1047
  %1490 = vmatprep.subr.bf16.mxu0 %v1050
  %1491 = vmatpush1.bf16.msra.mxu0 %v1049
  %1492 = vmatprep.subr.bf16.mxu0 %v1052
  %1493 = vmatpush1.bf16.msra.mxu0 %v1051
  %1494 = vmatprep.subr.bf16.mxu0 %v1054
  %1495 = vmatpush1.bf16.msra.mxu0 %v1053
  %1496 = vmatprep.subr.bf16.mxu0 %v1056
  %1497 = vmatpush1.bf16.msra.mxu0 %v1055
  %1498 = vmatprep.subr.bf16.mxu0 %v1058
  %1499 = vmatpush1.bf16.msra.mxu0 %v1057
  %1500 = vmatprep.subr.bf16.mxu0 %v1060
  %1501 = vmatpush1.bf16.msra.mxu0 %v1059
  %1502 = vmatprep.mubr.bf16.mxu0 %v267
  %1503 = vmatmul.mubr.bf16.gmra.mrb[0].mxu0 %v266
  %v1504 = vpop.f32.mrb[0].mxu0
  %v1505 = vadd.f32 %v1464, %v1504
  %v1506 = vpop.f32.mrb[0].mxu0
  %v1507 = vadd.f32 %v1466, %v1506
  %v1508 = vpop.f32.mrb[0].mxu0
  %v1509 = vpop.f32.mrb[0].mxu0
  %1510 = vdwg.mxu0
  %1511 = vmatprep.subr.bf16.mxu0 %v1062
  %1512 = vmatpush1.bf16.msra.mxu0 %v1061
  %1513 = vmatprep.subr.bf16.mxu0 %v1064
  %1514 = vmatpush1.bf16.msra.mxu0 %v1063
  %1515 = vmatprep.subr.bf16.mxu0 0
  %1516 = vmatpush1.bf16.msra.mxu0 0
  %1517 = vmatprep.subr.bf16.mxu0 0
  %1518 = vmatpush1.bf16.msra.mxu0 0
  %1519 = vmatprep.subr.bf16.mxu0 0
  %1520 = vmatpush1.bf16.msra.mxu0 0
  %1521 = vmatprep.subr.bf16.mxu0 0
  %1522 = vmatpush1.bf16.msra.mxu0 0
  %1523 = vmatprep.subr.bf16.mxu0 0
  %1524 = vmatpush1.bf16.msra.mxu0 0
  %1525 = vmatprep.subr.bf16.mxu0 0
  %1526 = vmatpush1.bf16.msra.mxu0 0
  %1527 = vmatprep.subr.bf16.mxu0 0
  %1528 = vmatpush1.bf16.msra.mxu0 0
  %1529 = vmatprep.subr.bf16.mxu0 0
  %1530 = vmatpush1.bf16.msra.mxu0 0
  %1531 = vmatprep.subr.bf16.mxu0 0
  %1532 = vmatpush1.bf16.msra.mxu0 0
  %1533 = vmatprep.subr.bf16.mxu0 0
  %1534 = vmatpush1.bf16.msra.mxu0 0
  %1535 = vmatprep.subr.bf16.mxu0 0
  %1536 = vmatpush1.bf16.msra.mxu0 0
  %1537 = vmatprep.subr.bf16.mxu0 0
  %1538 = vmatpush1.bf16.msra.mxu0 0
  %1539 = vmatprep.subr.bf16.mxu0 0
  %1540 = vmatpush1.bf16.msra.mxu0 0
  %1541 = vmatprep.subr.bf16.mxu0 0
  %1542 = vmatpush1.bf16.msra.mxu0 0
  %1543 = vmatprep.mubr.bf16.mxu0 0
  %1544 = vmatmul.mubr.bf16.gmra.mrb[0].mxu0 %v1263
  %v1545 = vpop.f32.mrb[0].mxu0
  %v1546 = vadd.f32 %v1505, %v1545
  %v1547 = vpop.f32.mrb[0].mxu0
  %v1548 = vadd.f32 %v1507, %v1547
  %v1549 = vpop.f32.mrb[0].mxu0
  %v1550 = vpop.f32.mrb[0].mxu0
  %1551 = vdwg.mxu0
  %v1552 = vmax.f32 %v1546, 0.0
  %v1553 = vmax.f32 %v1548, 0.0
  %v1554 = vpack.c.bf16 %v1552, %v1552
  %v1555 = vpack.c.bf16 %v1553, %v1553
  %v1556 = vld [vmem:[%s3] sm:$0xf]
  %v1557 = vld [vmem:[%s3 + $0x4] sm:$0xf]
  %v1558 = vld [vmem:[%s3 + $0x8] sm:$0xf]
  %v1559 = vld [vmem:[%s3 + $0xc] sm:$0xf]
  %v1560 = vld [vmem:[%s3 + $0x10] sm:$0xf]
  %v1561 = vld [vmem:[%s3 + $0x14] sm:$0xf]
  %v1562 = vld [vmem:[%s3 + $0x18] sm:$0xf]
  %v1563 = vld [vmem:[%s3 + $0x1c] sm:$0xf]
  %v1564 = vld [vmem:[%s3 + $0x20] sm:$0xf]
  %v1565 = vld [vmem:[%s3 + $0x24] sm:$0xf]
  %v1566 = vld [vmem:[%s3 + $0x28] sm:$0xf]
  %v1567 = vld [vmem:[%s3 + $0x2c] sm:$0xf]
  %v1568 = vld [vmem:[%s3 + $0x30] sm:$0xf]
  %v1569 = vld [vmem:[%s3 + $0x34] sm:$0xf]
  %v1570 = vld [vmem:[%s3 + $0x38] sm:$0xf]
  %v1571 = vld [vmem:[%s3 + $0x3c] sm:$0xf]
  %v1572 = vld [vmem:[%s3 + $0x40] sm:$0xf]
  %v1573 = vld [vmem:[%s3 + $0x44] sm:$0xf]
  %v1574 = vld [vmem:[%s3 + $0x48] sm:$0xf]
  %v1575 = vld [vmem:[%s3 + $0x4c] sm:$0xf]
  %v1576 = vld [vmem:[%s3 + $0x50] sm:$0xf]
  %v1577 = vld [vmem:[%s3 + $0x54] sm:$0xf]
  %v1578 = vld [vmem:[%s3 + $0x58] sm:$0xf]
  %v1579 = vld [vmem:[%s3 + $0x5c] sm:$0xf]
  %v1580 = vld [vmem:[%s3 + $0x60] sm:$0xf]
  %v1581 = vld [vmem:[%s3 + $0x64] sm:$0xf]
  %v1582 = vld [vmem:[%s3 + $0x68] sm:$0xf]
  %v1583 = vld [vmem:[%s3 + $0x6c] sm:$0xf]
  %v1584 = vld [vmem:[%s3 + $0x70] sm:$0xf]
  %v1585 = vld [vmem:[%s3 + $0x74] sm:$0xf]
  %v1586 = vld [vmem:[%s3 + $0x78] sm:$0xf]
  %v1587 = vld [vmem:[%s3 + $0x7c] sm:$0xf]
  %v1588 = vld [vmem:[%s4] sm:$0x1]
  %v1590 = vlaneseq
  %v1591 = vshrl.u32 %v1590, 7
  %v1592 = vsub.s32 0, %v1591
  %v1593 = vrot.slane %v1588, %v1592
  %v1627 = vunpack.c.l.b16 %v1556
  %v1628 = vunpack.c.l.b16 %v1557
  %v1629 = vunpack.c.l.b16 %v1558
  %v1630 = vunpack.c.l.b16 %v1559
  %v1631 = vunpack.c.l.b16 %v1560
  %v1632 = vunpack.c.l.b16 %v1561
  %v1633 = vunpack.c.l.b16 %v1562
  %v1634 = vunpack.c.l.b16 %v1563
  %v1635 = vunpack.c.l.b16 %v1564
  %v1636 = vunpack.c.l.b16 %v1565
  %v1637 = vunpack.c.l.b16 %v1566
  %v1638 = vunpack.c.l.b16 %v1567
  %v1639 = vunpack.c.l.b16 %v1568
  %v1640 = vunpack.c.l.b16 %v1569
  %v1641 = vunpack.c.l.b16 %v1570
  %v1642 = vunpack.c.l.b16 %v1571
  %v1643 = vunpack.c.l.b16 %v1572
  %v1644 = vunpack.c.l.b16 %v1573
  %v1645 = vunpack.c.l.b16 %v1574
  %v1646 = vunpack.c.l.b16 %v1575
  %v1647 = vunpack.c.l.b16 %v1576
  %v1648 = vunpack.c.l.b16 %v1577
  %v1649 = vunpack.c.l.b16 %v1578
  %v1650 = vunpack.c.l.b16 %v1579
  %v1651 = vunpack.c.l.b16 %v1580
  %v1652 = vunpack.c.l.b16 %v1581
  %v1653 = vunpack.c.l.b16 %v1582
  %v1654 = vunpack.c.l.b16 %v1583
  %v1655 = vunpack.c.l.b16 %v1584
  %v1656 = vunpack.c.l.b16 %v1585
  %v1657 = vunpack.c.l.b16 %v1586
  %v1658 = vunpack.c.l.b16 %v1587
  %v1659 = vpack.c.b16 %v1628, %v1627
  %v1660 = vpack.c.b16 %v1630, %v1629
  %v1661 = vpack.c.b16 %v1632, %v1631
  %v1662 = vpack.c.b16 %v1634, %v1633
  %v1663 = vpack.c.b16 %v1636, %v1635
  %v1664 = vpack.c.b16 %v1638, %v1637
  %v1665 = vpack.c.b16 %v1640, %v1639
  %v1666 = vpack.c.b16 %v1642, %v1641
  %v1667 = vpack.c.b16 %v1644, %v1643
  %v1668 = vpack.c.b16 %v1646, %v1645
  %v1669 = vpack.c.b16 %v1648, %v1647
  %v1670 = vpack.c.b16 %v1650, %v1649
  %v1671 = vpack.c.b16 %v1652, %v1651
  %v1672 = vpack.c.b16 %v1654, %v1653
  %v1673 = vpack.c.b16 %v1656, %v1655
  %v1674 = vpack.c.b16 %v1658, %v1657
  %1691 = vmatprep.subr.bf16.mxu0 0
  %1692 = vmatpush1.bf16.msra.mxu0 %v1659
  %1693 = vmatprep.subr.bf16.mxu0 0
  %1694 = vmatpush1.bf16.msra.mxu0 %v1660
  %1695 = vmatprep.subr.bf16.mxu0 0
  %1696 = vmatpush1.bf16.msra.mxu0 %v1661
  %1697 = vmatprep.subr.bf16.mxu0 0
  %1698 = vmatpush1.bf16.msra.mxu0 %v1662
  %1699 = vmatprep.subr.bf16.mxu0 0
  %1700 = vmatpush1.bf16.msra.mxu0 %v1663
  %1701 = vmatprep.subr.bf16.mxu0 0
  %1702 = vmatpush1.bf16.msra.mxu0 %v1664
  %1703 = vmatprep.subr.bf16.mxu0 0
  %1704 = vmatpush1.bf16.msra.mxu0 %v1665
  %1705 = vmatprep.subr.bf16.mxu0 0
  %1706 = vmatpush1.bf16.msra.mxu0 %v1666
  %1707 = vmatprep.subr.bf16.mxu0 0
  %1708 = vmatpush1.bf16.msra.mxu0 %v1667
  %1709 = vmatprep.subr.bf16.mxu0 0
  %1710 = vmatpush1.bf16.msra.mxu0 %v1668
  %1711 = vmatprep.subr.bf16.mxu0 0
  %1712 = vmatpush1.bf16.msra.mxu0 %v1669
  %1713 = vmatprep.subr.bf16.mxu0 0
  %1714 = vmatpush1.bf16.msra.mxu0 %v1670
  %1715 = vmatprep.subr.bf16.mxu0 0
  %1716 = vmatpush1.bf16.msra.mxu0 %v1671
  %1717 = vmatprep.subr.bf16.mxu0 0
  %1718 = vmatpush1.bf16.msra.mxu0 %v1672
  %1719 = vmatprep.subr.bf16.mxu0 0
  %1720 = vmatpush1.bf16.msra.mxu0 %v1673
  %1721 = vmatprep.subr.bf16.mxu0 0
  %1722 = vmatpush1.bf16.msra.mxu0 %v1674
  %1723 = vmatprep.mubr.bf16.mxu0 %v1555
  %1724 = vmatmul.mubr.bf16.gmra.mrb[0].mxu0 %v1554
  %v1725 = vpop.f32.mrb[0].mxu0
  %v1726 = vadd.f32 %v1593, %v1725
  %v1727 = vpop.f32.mrb[0].mxu0
  %v1728 = vpop.f32.mrb[0].mxu0
  %v1729 = vpop.f32.mrb[0].mxu0
  %1730 = vdwg.mxu0
  %1731 = vst [vmem:[%s5] sm:$0xff] %v1726
  // Predicated region
  $region22: #{custom_cnn_forward.3} parent=0 // pred_check
    _
  $region23: #{custom_cnn_forward.3} parent=0 // pred_check_branch
    %1733 = sbr.rel (0) target = $region25
  $region24: #{custom_cnn_forward.3} parent=0 // pred_region
    _
  $region25: #{custom_cnn_forward.3} parent=0 // pred_fallthru
    _
  // Predicated region
  $region26: #{custom_cnn_forward.3} parent=0 // pred_check
    _
  $region27: #{custom_cnn_forward.3} parent=0 // pred_check_branch
    %1735 = sbr.rel (0) target = $region29
  $region28: #{custom_cnn_forward.3} parent=0 // pred_region
    _
  $region29: #{custom_cnn_forward.3} parent=0 // pred_fallthru
    _

// kernel: custom_cnn_forward.2
$region0: #{custom_cnn_forward.2}
  #allocation0 [shape = 'u32[]', space=smem, size = 0x4, offset = 0x4, fixed_abs, tag = 'smem constant byte address 0x4 - core index']
  #allocation1 [shape = 'u32[144,128]{1,0:T(1,128)}', space=vmem, size = 0x12000, scoped, tag = 'internal scratch']
  #allocation2 [shape = 'f32[129,16]{1,0:T(8,128)}', space=vmem, size = 0x11000, scoped, tag = 'scratch operand']
  #allocation3 [shape = 'f32[129,16]{1,0:T(8,128)}', space=vmem, size = 0x11000, scoped, tag = 'scratch operand']
  %s0 = inlined_call_operand.vmem [shape: f32[2,241,4], index: 0, kind: input, shape index: {}]
  %s1 = inlined_call_operand.hbm [shape: bf16[9,16], index: 1, kind: input, shape index: {}]
  %s2 = inlined_call_operand.hbm [shape: f32[1,16], index: 2, kind: input, shape index: {}]
  %s3 = inlined_call_operand.vmem [shape: bf16[144,32], index: 3, kind: input, shape index: {}]
  %s4 = inlined_call_operand.hbm [shape: f32[1,32], index: 4, kind: input, shape index: {}]
  %s5 = inlined_call_operand.vmem [shape: f32[2,49,32], index: 5, kind: output, shape index: {}]
  %s6 = sld [smem:[#allocation0]]
  $region65: #{custom_cnn_forward.2} parent=0
    _
  %s8 = ssub.s32 1, %s6
  %s9 = scalar_select 0, %s8, %s6
  $region1: #{custom_cnn_forward.2} parent=0
    #allocation4 [shape = 'u8[4096]{0}', space=vmem, size = 0x1000, scoped, tag = 'input window, operand 1, single buffered']
    #allocation5 [shape = 's32[2]{0}', space=sflag, size = 0x8, scoped, tag = 'scoped memory for custom_cnn_forward.2']
    #allocation6 [shape = 'u8[512]{0}', space=vmem, size = 0x400, scoped, tag = 'input window, operand 2, single buffered']
    #allocation7 [shape = 's32[1]{0}', space=sflag, size = 0x4, scoped, tag = 'scoped memory for custom_cnn_forward.2']
    #allocation8 [shape = 'u8[512]{0}', space=vmem, size = 0x400, scoped, tag = 'input window, operand 4, single buffered']
    %10 = vsyncpa [#allocation5], 0
    %11 = vsyncpa [#allocation7], 0
    loop: start=0, step=1, limit=4
    $region2: #{custom_cnn_forward.2} parent=1 // loop_pre_header
      _
    $region3: #{custom_cnn_forward.2} parent=1 // loop_header
      %s13 = sphi 0, %s17
      %p14 = scmp.ge.s32.totalorder %s13, 4
      %s23 = sphi 0, %s25
      %s26 = sphi 0, %s23
      %s27 = sphi 0, %s26
      %s43 = sphi 0, %s27
      %s47 = sphi 0, %s47
      %s49 = sphi 0, %s47
      %s50 = sphi 0, %s49
      %s64 = sphi 0, %s50
      %s68 = sphi 0, %s68
      %s70 = sphi 0, %s68
      %s71 = sphi 0, %s70
      %s85 = sphi 0, %s71
      %s89 = sphi 0, %s89
      %s91 = sphi 0, %s89
      %s92 = sphi 0, %s91
      %s106 = sphi 0, %s92
      %s110 = sphi 0, %s110
      %s112 = sphi 0, %s110
      %s113 = sphi 0, %s112
      %s127 = sphi 0, %s113
      %s133 = sphi 0, %s135
      %s136 = sphi 0, %s133
      %s137 = sphi 0, %s136
      %s153 = sphi 0, %s137
    $region4: #{custom_cnn_forward.2} parent=1 // loop_header_branch
      %16 = sbr.rel (%p14) target = $region8
    $region5: #{custom_cnn_forward.2} parent=1 // loop_body
      %s18 = ssub.s32 %s13, 1
      %s19 = ssub.s32 %s13, 2
      %s20 = sadd.s32 %s13, 1
      %s21 = ssub.s32 %s13, %s20
      %p22 = scmp.eq.s32.totalorder %s21, 0
      %s24 = sadd.s32 %s23, 1
      %s25 = scalar_select %p22, %s23, %s24
      %p28 = pneg %p22
      %p29 = scmp.eq.s32.totalorder %s13, 1
      %p30 = por %p28, %p29
      %p31 = scmp.ne.s32.totalorder %s23, %s26
      %p32 = scmp.eq.s32.totalorder %s13, 0
      %p33 = por %p31, %p32
      %p34 = scmp.ne.s32.totalorder %s23, %s26
      %p35 = scmp.eq.s32.totalorder %s18, 1
      %p36 = por %p34, %p35
      %p37 = scmp.ne.s32.totalorder %s26, %s27
      %p38 = scmp.eq.s32.totalorder %s18, 0
      %p39 = por %p37, %p38
      %p40 = scmp.ne.s32.totalorder %s26, %s27
      %p41 = scmp.eq.s32.totalorder %s19, 1
      %p42 = por %p40, %p41
      %p44 = scmp.ne.s32.totalorder %s27, %s43
      %p45 = scmp.eq.s32.totalorder %s19, 0
      %p46 = por %p44, %p45
      %s48 = sadd.s32 %s47, 1
      %p51 = scmp.eq.s32.totalorder %s13, 1
      %p52 = scmp.ne.s32.totalorder %s47, %s49
      %p53 = scmp.eq.s32.totalorder %s13, 0
      %p54 = por %p52, %p53
      %p55 = scmp.ne.s32.totalorder %s47, %s49
      %p56 = scmp.eq.s32.totalorder %s18, 1
      %p57 = por %p55, %p56
      %p58 = scmp.ne.s32.totalorder %s49, %s50
      %p59 = scmp.eq.s32.totalorder %s18, 0
      %p60 = por %p58, %p59
      %p61 = scmp.ne.s32.totalorder %s49, %s50
      %p62 = scmp.eq.s32.totalorder %s19, 1
      %p63 = por %p61, %p62
      %p65 = scmp.ne.s32.totalorder %s50, %s64
      %p66 = scmp.eq.s32.totalorder %s19, 0
      %p67 = por %p65, %p66
      %s69 = sadd.s32 %s68, 1
      %p72 = scmp.eq.s32.totalorder %s13, 1
      %p73 = scmp.ne.s32.totalorder %s68, %s70
      %p74 = scmp.eq.s32.totalorder %s13, 0
      %p75 = por %p73, %p74
      %p76 = scmp.ne.s32.totalorder %s68, %s70
      %p77 = scmp.eq.s32.totalorder %s18, 1
      %p78 = por %p76, %p77
      %p79 = scmp.ne.s32.totalorder %s70, %s71
      %p80 = scmp.eq.s32.totalorder %s18, 0
      %p81 = por %p79, %p80
      %p82 = scmp.ne.s32.totalorder %s70, %s71
      %p83 = scmp.eq.s32.totalorder %s19, 1
      %p84 = por %p82, %p83
      %p86 = scmp.ne.s32.totalorder %s71, %s85
      %p87 = scmp.eq.s32.totalorder %s19, 0
      %p88 = por %p86, %p87
      %s90 = sadd.s32 %s89, 1
      %p93 = scmp.eq.s32.totalorder %s13, 1
      %p94 = scmp.ne.s32.totalorder %s89, %s91
      %p95 = scmp.eq.s32.totalorder %s13, 0
      %p96 = por %p94, %p95
      %p97 = scmp.ne.s32.totalorder %s89, %s91
      %p98 = scmp.eq.s32.totalorder %s18, 1
      %p99 = por %p97, %p98
      %p100 = scmp.ne.s32.totalorder %s91, %s92
      %p101 = scmp.eq.s32.totalorder %s18, 0
      %p102 = por %p100, %p101
      %p103 = scmp.ne.s32.totalorder %s91, %s92
      %p104 = scmp.eq.s32.totalorder %s19, 1
      %p105 = por %p103, %p104
      %p107 = scmp.ne.s32.totalorder %s92, %s106
      %p108 = scmp.eq.s32.totalorder %s19, 0
      %p109 = por %p107, %p108
      %s111 = sadd.s32 %s110, 1
      %p114 = scmp.eq.s32.totalorder %s13, 1
      %p115 = scmp.ne.s32.totalorder %s110, %s112
      %p116 = scmp.eq.s32.totalorder %s13, 0
      %p117 = por %p115, %p116
      %p118 = scmp.ne.s32.totalorder %s110, %s112
      %p119 = scmp.eq.s32.totalorder %s18, 1
      %p120 = por %p118, %p119
      %p121 = scmp.ne.s32.totalorder %s112, %s113
      %p122 = scmp.eq.s32.totalorder %s18, 0
      %p123 = por %p121, %p122
      %p124 = scmp.ne.s32.totalorder %s112, %s113
      %p125 = scmp.eq.s32.totalorder %s19, 1
      %p126 = por %p124, %p125
      %p128 = scmp.ne.s32.totalorder %s113, %s127
      %p129 = scmp.eq.s32.totalorder %s19, 0
      %p130 = por %p128, %p129
      %s131 = ssub.s32 %s13, %s20
      %p132 = scmp.eq.s32.totalorder %s131, 0
      %s134 = sadd.s32 %s133, 1
      %s135 = scalar_select %p132, %s133, %s134
      %p138 = pneg %p132
      %p139 = scmp.eq.s32.totalorder %s13, 1
      %p140 = por %p138, %p139
      %p141 = scmp.ne.s32.totalorder %s133, %s136
      %p142 = scmp.eq.s32.totalorder %s13, 0
      %p143 = por %p141, %p142
      %p144 = scmp.ne.s32.totalorder %s133, %s136
      %p145 = scmp.eq.s32.totalorder %s18, 1
      %p146 = por %p144, %p145
      %p147 = scmp.ne.s32.totalorder %s136, %s137
      %p148 = scmp.eq.s32.totalorder %s18, 0
      %p149 = por %p147, %p148
      %p150 = scmp.ne.s32.totalorder %s136, %s137
      %p151 = scmp.eq.s32.totalorder %s19, 1
      %p152 = por %p150, %p151
      %p154 = scmp.ne.s32.totalorder %s137, %s153
      %p155 = scmp.eq.s32.totalorder %s19, 0
      %p156 = por %p154, %p155
      %p157 = scmp.le.s32.totalorder 1, %s13
      %p158 = scmp.lt.s32.totalorder %s13, 3
      %p159 = pnand %p157, %p158
      %p160 = pneg %p159
      // Predicated region
      $region9: #{custom_cnn_forward.2} parent=5 // pred_check
        _
      $region10: #{custom_cnn_forward.2} parent=5 // pred_check_branch
        %162 = sbr.rel (%p159) target = $region12
      $region11: #{custom_cnn_forward.2} parent=5 // pred_region
        %s163 = ssub.s32 %s13, 1
        // Predicated region
        $region13: #{custom_cnn_forward.2} parent=11 // pred_check
          %p164 = pneg %p60
        $region14: #{custom_cnn_forward.2} parent=11 // pred_check_branch
          %166 = sbr.rel (%p164) target = $region16
        $region15: #{custom_cnn_forward.2} parent=11 // pred_region
          %s168 = ssub.s32 128, 128
          %169 = vsyncadd [#allocation5], %s168
          %s170 = sshll.u32 [#allocation4], 4
          %s171 = int_to_ptr.vmem [resolvable:$true] %s170
          %176 = dma.hbm_to_vmem [thread:$0]  %s1, 128, %s171, [#allocation5], 64, 64, 4
        $region16: #{custom_cnn_forward.2} parent=11 // pred_fallthru
          _
        // Predicated region
        $region17: #{custom_cnn_forward.2} parent=11 // pred_check
          %p177 = pneg %p81
        $region18: #{custom_cnn_forward.2} parent=11 // pred_check_branch
          %179 = sbr.rel (%p177) target = $region20
        $region19: #{custom_cnn_forward.2} parent=11 // pred_region
          %s181 = ssub.s32 16, 16
          %182 = vsyncadd [#allocation7], %s181
          %s184 = sshll.u32 [#allocation6], 4
          %s185 = int_to_ptr.vmem [resolvable:$true] %s184
          %187 = dma.hbm_to_vmem [thread:$0]  %s2, 16, %s185, [#allocation7]
        $region20: #{custom_cnn_forward.2} parent=11 // pred_fallthru
          _
        // Predicated region
        $region21: #{custom_cnn_forward.2} parent=11 // pred_check
          %p188 = pneg %p102
        $region22: #{custom_cnn_forward.2} parent=11 // pred_check_branch
          %190 = sbr.rel (%p188) target = $region24
        $region23: #{custom_cnn_forward.2} parent=11 // pred_region
          _
        $region24: #{custom_cnn_forward.2} parent=11 // pred_fallthru
          _
        // Predicated region
        $region25: #{custom_cnn_forward.2} parent=11 // pred_check
          %p191 = pneg %p123
        $region26: #{custom_cnn_forward.2} parent=11 // pred_check_branch
          %193 = sbr.rel (%p191) target = $region28
        $region27: #{custom_cnn_forward.2} parent=11 // pred_region
          %s195 = ssub.s32 16, 16
          %196 = vsyncadd [#allocation7], %s195
          %s198 = sshll.u32 [#allocation8], 4
          %s199 = int_to_ptr.vmem [resolvable:$true] %s198
          %201 = dma.hbm_to_vmem [thread:$0]  %s4, 16, %s199, [#allocation7]
        $region28: #{custom_cnn_forward.2} parent=11 // pred_fallthru
          _
      $region12: #{custom_cnn_forward.2} parent=5 // pred_fallthru
        _
      %p202 = scmp.lt.s32.totalorder %s13, 2
      // Predicated region
      $region29: #{custom_cnn_forward.2} parent=5 // pred_check
        %p203 = pneg %p202
      $region30: #{custom_cnn_forward.2} parent=5 // pred_check_branch
        %205 = sbr.rel (%p203) target = $region32
      $region31: #{custom_cnn_forward.2} parent=5 // pred_region
        // Predicated region
        $region33: #{custom_cnn_forward.2} parent=31 // pred_check
          %p206 = pneg %p33
        $region34: #{custom_cnn_forward.2} parent=31 // pred_check_branch
          %208 = sbr.rel (%p206) target = $region36
        $region35: #{custom_cnn_forward.2} parent=31 // pred_region
          %p209 = scmp.lt.s32.totalorder %s13, 1
          %s210 = scalar_select %p209, %s13, 1
          %s211 = smul.addr %s210, 31
          %s212 = smul.addr %s211, 8
          %s213 = scalar_lea.vmem %s0, %s212
        $region36: #{custom_cnn_forward.2} parent=31 // pred_fallthru
          _
      $region32: #{custom_cnn_forward.2} parent=5 // pred_fallthru
        _
      %p214 = scmp.le.s32.totalorder 1, %s13
      %p215 = scmp.lt.s32.totalorder %s13, 3
      %p216 = pnand %p214, %p215
      %p217 = pneg %p216
      // Predicated region
      $region37: #{custom_cnn_forward.2} parent=5 // pred_check
        _
      $region38: #{custom_cnn_forward.2} parent=5 // pred_check_branch
        %219 = sbr.rel (%p216) target = $region40
      $region39: #{custom_cnn_forward.2} parent=5 // pred_region
        %s220 = ssub.s32 %s13, 1
        // Predicated region
        $region41: #{custom_cnn_forward.2} parent=39 // pred_check
          %p221 = pneg %p60
        $region42: #{custom_cnn_forward.2} parent=39 // pred_check_branch
          %223 = sbr.rel (%p221) target = $region44
        $region43: #{custom_cnn_forward.2} parent=39 // pred_region
          %224 = dma.done [#allocation5], 128
        $region44: #{custom_cnn_forward.2} parent=39 // pred_fallthru
          _
        // Predicated region
        $region45: #{custom_cnn_forward.2} parent=39 // pred_check
          %p225 = pneg %p81
        $region46: #{custom_cnn_forward.2} parent=39 // pred_check_branch
          %227 = sbr.rel (%p225) target = $region48
        $region47: #{custom_cnn_forward.2} parent=39 // pred_region
          %228 = dma.done [#allocation7], 16
        $region48: #{custom_cnn_forward.2} parent=39 // pred_fallthru
          _
        // Predicated region
        $region49: #{custom_cnn_forward.2} parent=39 // pred_check
          %p229 = pneg %p123
        $region50: #{custom_cnn_forward.2} parent=39 // pred_check_branch
          %231 = sbr.rel (%p229) target = $region52
        $region51: #{custom_cnn_forward.2} parent=39 // pred_region
          %232 = dma.done [#allocation7], 16
        $region52: #{custom_cnn_forward.2} parent=39 // pred_fallthru
          _
        %p233 = scmp.lt.s32.totalorder %s18, 1
        %s234 = scalar_select %p233, %s18, 1
        %s235 = smul.addr %s234, 31
        %s236 = smul.addr %s235, 8
        %s237 = scalar_lea.vmem %s0, %s236
        %p238 = pneg %p39
        %p239 = pneg %p36
        %p240 = pneg %p60
        %p241 = pneg %p57
        %p242 = pneg %p81
        %p243 = pneg %p78
        %p244 = pneg %p102
        %p245 = pneg %p99
        %p246 = pneg %p123
        %p247 = pneg %p120
        %p248 = pneg %p149
        %p249 = pneg %p146
        %p250 = scmp.lt.s32.totalorder %s18, 1
        %s251 = scalar_select %p250, %s18, 1
        %s252 = smul.addr %s251, 7
        %s253 = smul.addr %s252, 8
        %s254 = scalar_lea.vmem %s5, %s253
        %p255 = scmp.lt.s32.totalorder %s18, 1
        %s256 = scalar_select %p255, %s18, 1
        %s257 = smul.addr %s256, 31
        %s258 = smul.addr %s257, 8
        %s259 = scalar_lea.vmem %s0, %s258
        %p260 = scmp.lt.s32.totalorder %s18, 1
        %s261 = scalar_select %p260, %s18, 1
        %s262 = smul.addr %s261, 7
        %s263 = smul.addr %s262, 8
        %s264 = scalar_lea.vmem %s5, %s263
        %v266 = vld [vmem:[%s259] sm:$0xff]
        %v267 = vld [vmem:[%s259 + $0x8] sm:$0xff]
        %v268 = vld [vmem:[%s259 + $0x10] sm:$0xff]
        %v269 = vld [vmem:[%s259 + $0x18] sm:$0xff]
        %v270 = vld [vmem:[%s259 + $0x20] sm:$0xff]
        %v271 = vld [vmem:[%s259 + $0x28] sm:$0xff]
        %v272 = vld [vmem:[%s259 + $0x30] sm:$0xff]
        %v273 = vld [vmem:[%s259 + $0x38] sm:$0xff]
        %v274 = vld [vmem:[%s259 + $0x40] sm:$0xff]
        %v275 = vld [vmem:[%s259 + $0x48] sm:$0xff]
        %v276 = vld [vmem:[%s259 + $0x50] sm:$0xff]
        %v277 = vld [vmem:[%s259 + $0x58] sm:$0xff]
        %v278 = vld [vmem:[%s259 + $0x60] sm:$0xff]
        %v279 = vld [vmem:[%s259 + $0x68] sm:$0xff]
        %v280 = vld [vmem:[%s259 + $0x70] sm:$0xff]
        %v281 = vld [vmem:[%s259 + $0x78] sm:$0xff]
        %v282 = vld [vmem:[%s259 + $0x80] sm:$0xff]
        %v283 = vld [vmem:[%s259 + $0x88] sm:$0xff]
        %v284 = vld [vmem:[%s259 + $0x90] sm:$0xff]
        %v285 = vld [vmem:[%s259 + $0x98] sm:$0xff]
        %v286 = vld [vmem:[%s259 + $0xa0] sm:$0xff]
        %v287 = vld [vmem:[%s259 + $0xa8] sm:$0xff]
        %v288 = vld [vmem:[%s259 + $0xb0] sm:$0xff]
        %v289 = vld [vmem:[%s259 + $0xb8] sm:$0xff]
        %v290 = vld [vmem:[%s259 + $0xc0] sm:$0xff]
        %v291 = vld [vmem:[%s259 + $0xc8] sm:$0xff]
        %v292 = vld [vmem:[%s259 + $0xd0] sm:$0xff]
        %v293 = vld [vmem:[%s259 + $0xd8] sm:$0xff]
        %v294 = vld [vmem:[%s259 + $0xe0] sm:$0xff]
        %v295 = vld [vmem:[%s259 + $0xe8] sm:$0xff]
        %v296 = vld [vmem:[%s259 + $0xf0] sm:$0x1]
        %v297 = vld [vmem:[#allocation4] sm:$0xf]
        %v298 = vld [vmem:[#allocation4 + $0x4] sm:$0x1]
        %v299 = vld [vmem:[#allocation6] sm:$0x1]
        %328 = vrot.lane.b32.xlu0 %v267, 3
        %v329 = vpop.permute.xlu0 %328
        %330 = vrot.lane.b32.xlu0 %v268, 3
        %v331 = vpop.permute.xlu0 %330
        %332 = vrot.lane.b32.xlu0 %v269, 3
        %v333 = vpop.permute.xlu0 %332
        %334 = vrot.lane.b32.xlu0 %v270, 3
        %v335 = vpop.permute.xlu0 %334
        %336 = vrot.lane.b32.xlu0 %v271, 3
        %v337 = vpop.permute.xlu0 %336
        %338 = vrot.lane.b32.xlu0 %v272, 3
        %v339 = vpop.permute.xlu0 %338
        %340 = vrot.lane.b32.xlu0 %v273, 3
        %v341 = vpop.permute.xlu0 %340
        %342 = vrot.lane.b32.xlu0 %v274, 3
        %v343 = vpop.permute.xlu0 %342
        %344 = vrot.lane.b32.xlu0 %v275, 3
        %v345 = vpop.permute.xlu0 %344
        %346 = vrot.lane.b32.xlu0 %v276, 3
        %v347 = vpop.permute.xlu0 %346
        %348 = vrot.lane.b32.xlu0 %v277, 3
        %v349 = vpop.permute.xlu0 %348
        %350 = vrot.lane.b32.xlu0 %v278, 3
        %v351 = vpop.permute.xlu0 %350
        %352 = vrot.lane.b32.xlu0 %v279, 3
        %v353 = vpop.permute.xlu0 %352
        %354 = vrot.lane.b32.xlu0 %v280, 3
        %v355 = vpop.permute.xlu0 %354
        %356 = vrot.lane.b32.xlu0 %v281, 3
        %v357 = vpop.permute.xlu0 %356
        %358 = vrot.lane.b32.xlu0 %v282, 3
        %v359 = vpop.permute.xlu0 %358
        %360 = vrot.lane.b32.xlu0 %v283, 3
        %v361 = vpop.permute.xlu0 %360
        %362 = vrot.lane.b32.xlu0 %v284, 3
        %v363 = vpop.permute.xlu0 %362
        %364 = vrot.lane.b32.xlu0 %v285, 3
        %v365 = vpop.permute.xlu0 %364
        %366 = vrot.lane.b32.xlu0 %v286, 3
        %v367 = vpop.permute.xlu0 %366
        %368 = vrot.lane.b32.xlu0 %v287, 3
        %v369 = vpop.permute.xlu0 %368
        %370 = vrot.lane.b32.xlu0 %v288, 3
        %v371 = vpop.permute.xlu0 %370
        %372 = vrot.lane.b32.xlu0 %v289, 3
        %v373 = vpop.permute.xlu0 %372
        %374 = vrot.lane.b32.xlu0 %v290, 3
        %v375 = vpop.permute.xlu0 %374
        %376 = vrot.lane.b32.xlu0 %v291, 3
        %v377 = vpop.permute.xlu0 %376
        %378 = vrot.lane.b32.xlu0 %v292, 3
        %v379 = vpop.permute.xlu0 %378
        %380 = vrot.lane.b32.xlu0 %v293, 3
        %v381 = vpop.permute.xlu0 %380
        %382 = vrot.lane.b32.xlu0 %v294, 3
        %v383 = vpop.permute.xlu0 %382
        %413 = vrot.lane.b32.xlu0 %v268, 6
        %v414 = vpop.permute.xlu0 %413
        %415 = vrot.lane.b32.xlu0 %v269, 6
        %v416 = vpop.permute.xlu0 %415
        %417 = vrot.lane.b32.xlu0 %v270, 6
        %v418 = vpop.permute.xlu0 %417
        %419 = vrot.lane.b32.xlu0 %v271, 6
        %v420 = vpop.permute.xlu0 %419
        %421 = vrot.lane.b32.xlu0 %v272, 6
        %v422 = vpop.permute.xlu0 %421
        %423 = vrot.lane.b32.xlu0 %v273, 6
        %v424 = vpop.permute.xlu0 %423
        %425 = vrot.lane.b32.xlu0 %v274, 6
        %v426 = vpop.permute.xlu0 %425
        %427 = vrot.lane.b32.xlu0 %v275, 6
        %v428 = vpop.permute.xlu0 %427
        %429 = vrot.lane.b32.xlu0 %v276, 6
        %v430 = vpop.permute.xlu0 %429
        %431 = vrot.lane.b32.xlu0 %v277, 6
        %v432 = vpop.permute.xlu0 %431
        %433 = vrot.lane.b32.xlu0 %v278, 6
        %v434 = vpop.permute.xlu0 %433
        %435 = vrot.lane.b32.xlu0 %v279, 6
        %v436 = vpop.permute.xlu0 %435
        %437 = vrot.lane.b32.xlu0 %v280, 6
        %v438 = vpop.permute.xlu0 %437
        %439 = vrot.lane.b32.xlu0 %v281, 6
        %v440 = vpop.permute.xlu0 %439
        %441 = vrot.lane.b32.xlu0 %v282, 6
        %v442 = vpop.permute.xlu0 %441
        %443 = vrot.lane.b32.xlu0 %v283, 6
        %v444 = vpop.permute.xlu0 %443
        %445 = vrot.lane.b32.xlu0 %v284, 6
        %v446 = vpop.permute.xlu0 %445
        %447 = vrot.lane.b32.xlu0 %v285, 6
        %v448 = vpop.permute.xlu0 %447
        %449 = vrot.lane.b32.xlu0 %v286, 6
        %v450 = vpop.permute.xlu0 %449
        %451 = vrot.lane.b32.xlu0 %v287, 6
        %v452 = vpop.permute.xlu0 %451
        %453 = vrot.lane.b32.xlu0 %v288, 6
        %v454 = vpop.permute.xlu0 %453
        %455 = vrot.lane.b32.xlu0 %v289, 6
        %v456 = vpop.permute.xlu0 %455
        %457 = vrot.lane.b32.xlu0 %v290, 6
        %v458 = vpop.permute.xlu0 %457
        %459 = vrot.lane.b32.xlu0 %v291, 6
        %v460 = vpop.permute.xlu0 %459
        %461 = vrot.lane.b32.xlu0 %v292, 6
        %v462 = vpop.permute.xlu0 %461
        %463 = vrot.lane.b32.xlu0 %v293, 6
        %v464 = vpop.permute.xlu0 %463
        %465 = vrot.lane.b32.xlu0 %v294, 6
        %v466 = vpop.permute.xlu0 %465
        %467 = vrot.lane.b32.xlu0 %v295, 6
        %v468 = vpop.permute.xlu0 %467
        %vm497 = vcmask 7168
        %vm498 = vcmask 15360
        %v499 = vsel %vm498, %v266, %v266
        %v500 = vsel %vm498, %v267, %v267
        %v501 = vsel %vm498, %v268, %v268
        %v502 = vsel %vm498, %v269, %v269
        %v503 = vsel %vm498, %v270, %v270
        %v504 = vsel %vm498, %v271, %v271
        %v505 = vsel %vm498, %v272, %v272
        %v506 = vsel %vm498, %v273, %v273
        %v507 = vsel %vm498, %v274, %v274
        %v508 = vsel %vm498, %v275, %v275
        %v509 = vsel %vm498, %v276, %v276
        %v510 = vsel %vm498, %v277, %v277
        %v511 = vsel %vm498, %v278, %v278
        %v512 = vsel %vm498, %v279, %v279
        %v513 = vsel %vm498, %v280, %v280
        %v514 = vsel %vm498, %v281, %v281
        %v515 = vsel %vm498, %v282, %v282
        %v516 = vsel %vm498, %v283, %v283
        %v517 = vsel %vm498, %v284, %v284
        %v518 = vsel %vm498, %v285, %v285
        %v519 = vsel %vm498, %v286, %v286
        %v520 = vsel %vm498, %v287, %v287
        %v521 = vsel %vm498, %v288, %v288
        %v522 = vsel %vm498, %v289, %v289
        %v523 = vsel %vm498, %v290, %v290
        %v524 = vsel %vm498, %v291, %v291
        %v525 = vsel %vm498, %v292, %v292
        %v526 = vsel %vm498, %v293, %v293
        %vm527 = vcmask 23552
        %v528 = vsel %vm527, %v499, %v329
        %v529 = vsel %vm527, %v500, %v331
        %v530 = vsel %vm527, %v501, %v333
        %v531 = vsel %vm527, %v502, %v335
        %v532 = vsel %vm527, %v503, %v337
        %v533 = vsel %vm527, %v504, %v339
        %v534 = vsel %vm527, %v505, %v341
        %v535 = vsel %vm527, %v506, %v343
        %v536 = vsel %vm527, %v507, %v345
        %v537 = vsel %vm527, %v508, %v347
        %v538 = vsel %vm527, %v509, %v349
        %v539 = vsel %vm527, %v510, %v351
        %v540 = vsel %vm527, %v511, %v353
        %v541 = vsel %vm527, %v512, %v355
        %v542 = vsel %vm527, %v513, %v357
        %v543 = vsel %vm527, %v514, %v359
        %v544 = vsel %vm527, %v515, %v361
        %v545 = vsel %vm527, %v516, %v363
        %v546 = vsel %vm527, %v517, %v365
        %v547 = vsel %vm527, %v518, %v367
        %v548 = vsel %vm527, %v519, %v369
        %v549 = vsel %vm527, %v520, %v371
        %v550 = vsel %vm527, %v521, %v373
        %v551 = vsel %vm527, %v522, %v375
        %v552 = vsel %vm527, %v523, %v377
        %v553 = vsel %vm527, %v524, %v379
        %v554 = vsel %vm527, %v525, %v381
        %v555 = vsel %vm527, %v526, %v383
        %vm556 = vcmask 31744
        %v557 = vsel %vm556, %v528, %v329
        %v558 = vsel %vm556, %v529, %v331
        %v559 = vsel %vm556, %v530, %v333
        %v560 = vsel %vm556, %v531, %v335
        %v561 = vsel %vm556, %v532, %v337
        %v562 = vsel %vm556, %v533, %v339
        %v563 = vsel %vm556, %v534, %v341
        %v564 = vsel %vm556, %v535, %v343
        %v565 = vsel %vm556, %v536, %v345
        %v566 = vsel %vm556, %v537, %v347
        %v567 = vsel %vm556, %v538, %v349
        %v568 = vsel %vm556, %v539, %v351
        %v569 = vsel %vm556, %v540, %v353
        %v570 = vsel %vm556, %v541, %v355
        %v571 = vsel %vm556, %v542, %v357
        %v572 = vsel %vm556, %v543, %v359
        %v573 = vsel %vm556, %v544, %v361
        %v574 = vsel %vm556, %v545, %v363
        %v575 = vsel %vm556, %v546, %v365
        %v576 = vsel %vm556, %v547, %v367
        %v577 = vsel %vm556, %v548, %v369
        %v578 = vsel %vm556, %v549, %v371
        %v579 = vsel %vm556, %v550, %v373
        %v580 = vsel %vm556, %v551, %v375
        %v581 = vsel %vm556, %v552, %v377
        %v582 = vsel %vm556, %v553, %v379
        %v583 = vsel %vm556, %v554, %v381
        %v584 = vsel %vm556, %v555, %v383
        %vm585 = vcmask 39936
        %v586 = vsel %vm585, %v557, %v329
        %v587 = vsel %vm585, %v558, %v331
        %v588 = vsel %vm585, %v559, %v333
        %v589 = vsel %vm585, %v560, %v335
        %v590 = vsel %vm585, %v561, %v337
        %v591 = vsel %vm585, %v562, %v339
        %v592 = vsel %vm585, %v563, %v341
        %v593 = vsel %vm585, %v564, %v343
        %v594 = vsel %vm585, %v565, %v345
        %v595 = vsel %vm585, %v566, %v347
        %v596 = vsel %vm585, %v567, %v349
        %v597 = vsel %vm585, %v568, %v351
        %v598 = vsel %vm585, %v569, %v353
        %v599 = vsel %vm585, %v570, %v355
        %v600 = vsel %vm585, %v571, %v357
        %v601 = vsel %vm585, %v572, %v359
        %v602 = vsel %vm585, %v573, %v361
        %v603 = vsel %vm585, %v574, %v363
        %v604 = vsel %vm585, %v575, %v365
        %v605 = vsel %vm585, %v576, %v367
        %v606 = vsel %vm585, %v577, %v369
        %v607 = vsel %vm585, %v578, %v371
        %v608 = vsel %vm585, %v579, %v373
        %v609 = vsel %vm585, %v580, %v375
        %v610 = vsel %vm585, %v581, %v377
        %v611 = vsel %vm585, %v582, %v379
        %v612 = vsel %vm585, %v583, %v381
        %v613 = vsel %vm585, %v584, %v383
        %vm614 = vcmask 48128
        %v615 = vsel %vm614, %v586, %v414
        %v616 = vsel %vm614, %v587, %v416
        %v617 = vsel %vm614, %v588, %v418
        %v618 = vsel %vm614, %v589, %v420
        %v619 = vsel %vm614, %v590, %v422
        %v620 = vsel %vm614, %v591, %v424
        %v621 = vsel %vm614, %v592, %v426
        %v622 = vsel %vm614, %v593, %v428
        %v623 = vsel %vm614, %v594, %v430
        %v624 = vsel %vm614, %v595, %v432
        %v625 = vsel %vm614, %v596, %v434
        %v626 = vsel %vm614, %v597, %v436
        %v627 = vsel %vm614, %v598, %v438
        %v628 = vsel %vm614, %v599, %v440
        %v629 = vsel %vm614, %v600, %v442
        %v630 = vsel %vm614, %v601, %v444
        %v631 = vsel %vm614, %v602, %v446
        %v632 = vsel %vm614, %v603, %v448
        %v633 = vsel %vm614, %v604, %v450
        %v634 = vsel %vm614, %v605, %v452
        %v635 = vsel %vm614, %v606, %v454
        %v636 = vsel %vm614, %v607, %v456
        %v637 = vsel %vm614, %v608, %v458
        %v638 = vsel %vm614, %v609, %v460
        %v639 = vsel %vm614, %v610, %v462
        %v640 = vsel %vm614, %v611, %v464
        %v641 = vsel %vm614, %v612, %v466
        %v642 = vsel %vm614, %v613, %v468
        %vm643 = vcmask 56320
        %v644 = vsel %vm643, %v615, %v414
        %v645 = vsel %vm643, %v616, %v416
        %v646 = vsel %vm643, %v617, %v418
        %v647 = vsel %vm643, %v618, %v420
        %v648 = vsel %vm643, %v619, %v422
        %v649 = vsel %vm643, %v620, %v424
        %v650 = vsel %vm643, %v621, %v426
        %v651 = vsel %vm643, %v622, %v428
        %v652 = vsel %vm643, %v623, %v430
        %v653 = vsel %vm643, %v624, %v432
        %v654 = vsel %vm643, %v625, %v434
        %v655 = vsel %vm643, %v626, %v436
        %v656 = vsel %vm643, %v627, %v438
        %v657 = vsel %vm643, %v628, %v440
        %v658 = vsel %vm643, %v629, %v442
        %v659 = vsel %vm643, %v630, %v444
        %v660 = vsel %vm643, %v631, %v446
        %v661 = vsel %vm643, %v632, %v448
        %v662 = vsel %vm643, %v633, %v450
        %v663 = vsel %vm643, %v634, %v452
        %v664 = vsel %vm643, %v635, %v454
        %v665 = vsel %vm643, %v636, %v456
        %v666 = vsel %vm643, %v637, %v458
        %v667 = vsel %vm643, %v638, %v460
        %v668 = vsel %vm643, %v639, %v462
        %v669 = vsel %vm643, %v640, %v464
        %v670 = vsel %vm643, %v641, %v466
        %v671 = vsel %vm643, %v642, %v468
        %vm672 = vcmask 64512
        %v673 = vsel %vm672, %v644, %v414
        %v674 = vsel %vm672, %v645, %v416
        %v675 = vsel %vm672, %v646, %v418
        %v676 = vsel %vm672, %v647, %v420
        %v677 = vsel %vm672, %v648, %v422
        %v678 = vsel %vm672, %v649, %v424
        %v679 = vsel %vm672, %v650, %v426
        %v680 = vsel %vm672, %v651, %v428
        %v681 = vsel %vm672, %v652, %v430
        %v682 = vsel %vm672, %v653, %v432
        %v683 = vsel %vm672, %v654, %v434
        %v684 = vsel %vm672, %v655, %v436
        %v685 = vsel %vm672, %v656, %v438
        %v686 = vsel %vm672, %v657, %v440
        %v687 = vsel %vm672, %v658, %v442
        %v688 = vsel %vm672, %v659, %v444
        %v689 = vsel %vm672, %v660, %v446
        %v690 = vsel %vm672, %v661, %v448
        %v691 = vsel %vm672, %v662, %v450
        %v692 = vsel %vm672, %v663, %v452
        %v693 = vsel %vm672, %v664, %v454
        %v694 = vsel %vm672, %v665, %v456
        %v695 = vsel %vm672, %v666, %v458
        %v696 = vsel %vm672, %v667, %v460
        %v697 = vsel %vm672, %v668, %v462
        %v698 = vsel %vm672, %v669, %v464
        %v699 = vsel %vm672, %v670, %v466
        %v700 = vsel %vm672, %v671, %v468
        %v701 = vpack.c.bf16 %v674, %v673
        %v702 = vpack.c.bf16 %v676, %v675
        %v703 = vpack.c.bf16 %v678, %v677
        %v704 = vpack.c.bf16 %v680, %v679
        %v705 = vpack.c.bf16 %v682, %v681
        %v706 = vpack.c.bf16 %v684, %v683
        %v707 = vpack.c.bf16 %v686, %v685
        %v708 = vpack.c.bf16 %v688, %v687
        %v709 = vpack.c.bf16 %v690, %v689
        %v710 = vpack.c.bf16 %v692, %v691
        %v711 = vpack.c.bf16 %v694, %v693
        %v712 = vpack.c.bf16 %v696, %v695
        %v713 = vpack.c.bf16 %v698, %v697
        %v714 = vpack.c.bf16 %v700, %v699
        %v716 = vlaneseq
        %v717 = vshrl.u32 %v716, 7
        %v718 = vsub.s32 0, %v717
        %v719 = vrot.slane %v299, %v718
        %v723 = vunpack.c.l.b16 %v297
        %v724 = vunpack.c.l.b16 %v298
        %v725 = vpack.c.b16 %v724, %v723
        %vm726 = vcmask 72704
        %v728 = vsel %vm726, %v701, 0
        %v731 = vsel %vm726, %v702, 0
        %v734 = vsel %vm726, %v703, 0
        %v737 = vsel %vm726, %v704, 0
        %v740 = vsel %vm726, %v705, 0
        %v743 = vsel %vm726, %v706, 0
        %v746 = vsel %vm726, %v707, 0
        %v749 = vsel %vm726, %v708, 0
        %v752 = vsel %vm726, %v709, 0
        %v755 = vsel %vm726, %v710, 0
        %v758 = vsel %vm726, %v711, 0
        %v761 = vsel %vm726, %v712, 0
        %v764 = vsel %vm726, %v713, 0
        %v767 = vsel %vm726, %v714, 0
        %vm769 = vcmask 1043456
        %vm770 = vcmask 1044480
        %v771 = vsel %vm769, 4294967295, 65535
        %v772 = vsel %vm770, %v771, 0
        %v774 = vand.u32 %v725, %v772
        %776 = vmatprep.subr.bf16.mxu0 0
        %777 = vmatpush1.bf16.msra.mxu0 %v774
        %778 = vmatprep.subr.bf16.mxu0 0
        %779 = vmatpush1.bf16.msra.mxu0 0
        %780 = vmatprep.subr.bf16.mxu0 0
        %781 = vmatpush1.bf16.msra.mxu0 0
        %782 = vmatprep.subr.bf16.mxu0 0
        %783 = vmatpush1.bf16.msra.mxu0 0
        %784 = vmatprep.subr.bf16.mxu0 0
        %785 = vmatpush1.bf16.msra.mxu0 0
        %786 = vmatprep.subr.bf16.mxu0 0
        %787 = vmatpush1.bf16.msra.mxu0 0
        %788 = vmatprep.subr.bf16.mxu0 0
        %789 = vmatpush1.bf16.msra.mxu0 0
        %790 = vmatprep.subr.bf16.mxu0 0
        %791 = vmatpush1.bf16.msra.mxu0 0
        %792 = vmatprep.subr.bf16.mxu0 0
        %793 = vmatpush1.bf16.msra.mxu0 0
        %794 = vmatprep.subr.bf16.mxu0 0
        %795 = vmatpush1.bf16.msra.mxu0 0
        %796 = vmatprep.subr.bf16.mxu0 0
        %797 = vmatpush1.bf16.msra.mxu0 0
        %798 = vmatprep.subr.bf16.mxu0 0
        %799 = vmatpush1.bf16.msra.mxu0 0
        %800 = vmatprep.subr.bf16.mxu0 0
        %801 = vmatpush1.bf16.msra.mxu0 0
        %802 = vmatprep.subr.bf16.mxu0 0
        %803 = vmatpush1.bf16.msra.mxu0 0
        %804 = vmatprep.subr.bf16.mxu0 0
        %805 = vmatpush1.bf16.msra.mxu0 0
        %806 = vmatprep.subr.bf16.mxu0 0
        %807 = vmatpush1.bf16.msra.mxu0 0
        %808 = vmatprep.mubr.bf16.mxu0 0
        %809 = vmatmul.mubr.bf16.gmra.mrb[0].mxu0 %v728
        %v810 = vpop.f32.mrb[0].mxu0
        %v811 = vadd.f32 %v719, %v810
        %v812 = vpop.f32.mrb[0].mxu0
        %v813 = vpop.f32.mrb[0].mxu0
        %v814 = vadd.f32 %v719, %v813
        %v815 = vpop.f32.mrb[0].mxu0
        %816 = vmatprep.mubr.bf16.mxu0 0
        %817 = vmatmul.mubr.bf16.gmra.mrb[0].mxu0 %v731
        %v818 = vpop.f32.mrb[0].mxu0
        %v819 = vadd.f32 %v719, %v818
        %v820 = vpop.f32.mrb[0].mxu0
        %v821 = vpop.f32.mrb[0].mxu0
        %v822 = vadd.f32 %v719, %v821
        %v823 = vpop.f32.mrb[0].mxu0
        %824 = vmatprep.mubr.bf16.mxu0 0
        %825 = vmatmul.mubr.bf16.gmra.mrb[0].mxu0 %v734
        %v826 = vpop.f32.mrb[0].mxu0
        %v827 = vadd.f32 %v719, %v826
        %v828 = vpop.f32.mrb[0].mxu0
        %v829 = vpop.f32.mrb[0].mxu0
        %v830 = vadd.f32 %v719, %v829
        %v831 = vpop.f32.mrb[0].mxu0
        %832 = vmatprep.mubr.bf16.mxu0 0
        %833 = vmatmul.mubr.bf16.gmra.mrb[0].mxu0 %v737
        %v834 = vpop.f32.mrb[0].mxu0
        %v835 = vadd.f32 %v719, %v834
        %v836 = vpop.f32.mrb[0].mxu0
        %v837 = vpop.f32.mrb[0].mxu0
        %v838 = vadd.f32 %v719, %v837
        %v839 = vpop.f32.mrb[0].mxu0
        %840 = vmatprep.mubr.bf16.mxu0 0
        %841 = vmatmul.mubr.bf16.gmra.mrb[0].mxu0 %v740
        %v842 = vpop.f32.mrb[0].mxu0
        %v843 = vadd.f32 %v719, %v842
        %v844 = vpop.f32.mrb[0].mxu0
        %v845 = vpop.f32.mrb[0].mxu0
        %v846 = vadd.f32 %v719, %v845
        %v847 = vpop.f32.mrb[0].mxu0
        %848 = vmatprep.mubr.bf16.mxu0 0
        %849 = vmatmul.mubr.bf16.gmra.mrb[0].mxu0 %v743
        %v850 = vpop.f32.mrb[0].mxu0
        %v851 = vadd.f32 %v719, %v850
        %v852 = vpop.f32.mrb[0].mxu0
        %v853 = vpop.f32.mrb[0].mxu0
        %v854 = vadd.f32 %v719, %v853
        %v855 = vpop.f32.mrb[0].mxu0
        %856 = vmatprep.mubr.bf16.mxu0 0
        %857 = vmatmul.mubr.bf16.gmra.mrb[0].mxu0 %v746
        %v858 = vpop.f32.mrb[0].mxu0
        %v859 = vadd.f32 %v719, %v858
        %v860 = vpop.f32.mrb[0].mxu0
        %v861 = vpop.f32.mrb[0].mxu0
        %v862 = vadd.f32 %v719, %v861
        %v863 = vpop.f32.mrb[0].mxu0
        %864 = vmatprep.mubr.bf16.mxu0 0
        %865 = vmatmul.mubr.bf16.gmra.mrb[0].mxu0 %v749
        %v866 = vpop.f32.mrb[0].mxu0
        %v867 = vadd.f32 %v719, %v866
        %v868 = vpop.f32.mrb[0].mxu0
        %v869 = vpop.f32.mrb[0].mxu0
        %v870 = vadd.f32 %v719, %v869
        %v871 = vpop.f32.mrb[0].mxu0
        %872 = vmatprep.mubr.bf16.mxu0 0
        %873 = vmatmul.mubr.bf16.gmra.mrb[0].mxu0 %v752
        %v874 = vpop.f32.mrb[0].mxu0
        %v875 = vadd.f32 %v719, %v874
        %v876 = vpop.f32.mrb[0].mxu0
        %v877 = vpop.f32.mrb[0].mxu0
        %v878 = vadd.f32 %v719, %v877
        %v879 = vpop.f32.mrb[0].mxu0
        %880 = vmatprep.mubr.bf16.mxu0 0
        %881 = vmatmul.mubr.bf16.gmra.mrb[0].mxu0 %v755
        %v882 = vpop.f32.mrb[0].mxu0
        %v883 = vadd.f32 %v719, %v882
        %v884 = vpop.f32.mrb[0].mxu0
        %v885 = vpop.f32.mrb[0].mxu0
        %v886 = vadd.f32 %v719, %v885
        %v887 = vpop.f32.mrb[0].mxu0
        %888 = vmatprep.mubr.bf16.mxu0 0
        %889 = vmatmul.mubr.bf16.gmra.mrb[0].mxu0 %v758
        %v890 = vpop.f32.mrb[0].mxu0
        %v891 = vadd.f32 %v719, %v890
        %v892 = vpop.f32.mrb[0].mxu0
        %v893 = vpop.f32.mrb[0].mxu0
        %v894 = vadd.f32 %v719, %v893
        %v895 = vpop.f32.mrb[0].mxu0
        %896 = vmatprep.mubr.bf16.mxu0 0
        %897 = vmatmul.mubr.bf16.gmra.mrb[0].mxu0 %v761
        %v898 = vpop.f32.mrb[0].mxu0
        %v899 = vadd.f32 %v719, %v898
        %v900 = vpop.f32.mrb[0].mxu0
        %v901 = vpop.f32.mrb[0].mxu0
        %v902 = vadd.f32 %v719, %v901
        %v903 = vpop.f32.mrb[0].mxu0
        %904 = vmatprep.mubr.bf16.mxu0 0
        %905 = vmatmul.mubr.bf16.gmra.mrb[0].mxu0 %v764
        %v906 = vpop.f32.mrb[0].mxu0
        %v907 = vadd.f32 %v719, %v906
        %v908 = vpop.f32.mrb[0].mxu0
        %v909 = vpop.f32.mrb[0].mxu0
        %v910 = vadd.f32 %v719, %v909
        %v911 = vpop.f32.mrb[0].mxu0
        %912 = vmatprep.mubr.bf16.mxu0 0
        %913 = vmatmul.mubr.bf16.gmra.mrb[0].mxu0 %v767
        %v914 = vpop.f32.mrb[0].mxu0
        %v915 = vadd.f32 %v719, %v914
        %v916 = vpop.f32.mrb[0].mxu0
        %v917 = vpop.f32.mrb[0].mxu0
        %v918 = vadd.f32 %v719, %v917
        %v919 = vpop.f32.mrb[0].mxu0
        %920 = vdwg.mxu0
        %v921 = vmax.f32 %v811, 0.0
        %v922 = vmax.f32 %v814, 0.0
        %v923 = vmax.f32 %v819, 0.0
        %v924 = vmax.f32 %v822, 0.0
        %v925 = vmax.f32 %v827, 0.0
        %v926 = vmax.f32 %v830, 0.0
        %v927 = vmax.f32 %v835, 0.0
        %v928 = vmax.f32 %v838, 0.0
        %v929 = vmax.f32 %v843, 0.0
        %v930 = vmax.f32 %v846, 0.0
        %v931 = vmax.f32 %v851, 0.0
        %v932 = vmax.f32 %v854, 0.0
        %v933 = vmax.f32 %v859, 0.0
        %v934 = vmax.f32 %v862, 0.0
        %v935 = vmax.f32 %v867, 0.0
        %v936 = vmax.f32 %v870, 0.0
        %v937 = vmax.f32 %v875, 0.0
        %v938 = vmax.f32 %v878, 0.0
        %v939 = vmax.f32 %v883, 0.0
        %v940 = vmax.f32 %v886, 0.0
        %v941 = vmax.f32 %v891, 0.0
        %v942 = vmax.f32 %v894, 0.0
        %v943 = vmax.f32 %v899, 0.0
        %v944 = vmax.f32 %v902, 0.0
        %v945 = vmax.f32 %v907, 0.0
        %v946 = vmax.f32 %v910, 0.0
        %v947 = vmax.f32 %v915, 0.0
        %v948 = vmax.f32 %v918, 0.0
        %950 = vrot.lane.b32.xlu0 %v266, 127
        %v951 = vpop.permute.xlu0 %950
        %952 = vrot.lane.b32.xlu0 %v267, 127
        %v953 = vpop.permute.xlu0 %952
        %954 = vrot.lane.b32.xlu0 %v268, 127
        %v955 = vpop.permute.xlu0 %954
        %956 = vrot.lane.b32.xlu0 %v269, 127
        %v957 = vpop.permute.xlu0 %956
        %958 = vrot.lane.b32.xlu0 %v270, 127
        %v959 = vpop.permute.xlu0 %958
        %960 = vrot.lane.b32.xlu0 %v271, 127
        %v961 = vpop.permute.xlu0 %960
        %962 = vrot.lane.b32.xlu0 %v272, 127
        %v963 = vpop.permute.xlu0 %962
        %964 = vrot.lane.b32.xlu0 %v273, 127
        %v965 = vpop.permute.xlu0 %964
        %966 = vrot.lane.b32.xlu0 %v274, 127
        %v967 = vpop.permute.xlu0 %966
        %968 = vrot.lane.b32.xlu0 %v275, 127
        %v969 = vpop.permute.xlu0 %968
        %970 = vrot.lane.b32.xlu0 %v276, 127
        %v971 = vpop.permute.xlu0 %970
        %972 = vrot.lane.b32.xlu0 %v277, 127
        %v973 = vpop.permute.xlu0 %972
        %974 = vrot.lane.b32.xlu0 %v278, 127
        %v975 = vpop.permute.xlu0 %974
        %976 = vrot.lane.b32.xlu0 %v279, 127
        %v977 = vpop.permute.xlu0 %976
        %978 = vrot.lane.b32.xlu0 %v280, 127
        %v979 = vpop.permute.xlu0 %978
        %980 = vrot.lane.b32.xlu0 %v281, 127
        %v981 = vpop.permute.xlu0 %980
        %982 = vrot.lane.b32.xlu0 %v282, 127
        %v983 = vpop.permute.xlu0 %982
        %984 = vrot.lane.b32.xlu0 %v283, 127
        %v985 = vpop.permute.xlu0 %984
        %986 = vrot.lane.b32.xlu0 %v284, 127
        %v987 = vpop.permute.xlu0 %986
        %988 = vrot.lane.b32.xlu0 %v285, 127
        %v989 = vpop.permute.xlu0 %988
        %990 = vrot.lane.b32.xlu0 %v286, 127
        %v991 = vpop.permute.xlu0 %990
        %992 = vrot.lane.b32.xlu0 %v287, 127
        %v993 = vpop.permute.xlu0 %992
        %994 = vrot.lane.b32.xlu0 %v288, 127
        %v995 = vpop.permute.xlu0 %994
        %996 = vrot.lane.b32.xlu0 %v289, 127
        %v997 = vpop.permute.xlu0 %996
        %998 = vrot.lane.b32.xlu0 %v290, 127
        %v999 = vpop.permute.xlu0 %998
        %1000 = vrot.lane.b32.xlu0 %v291, 127
        %v1001 = vpop.permute.xlu0 %1000
        %1002 = vrot.lane.b32.xlu0 %v292, 127
        %v1003 = vpop.permute.xlu0 %1002
        %1004 = vrot.lane.b32.xlu0 %v293, 127
        %v1005 = vpop.permute.xlu0 %1004
        %1034 = vrot.lane.b32.xlu0 %v267, 2
        %v1035 = vpop.permute.xlu0 %1034
        %1036 = vrot.lane.b32.xlu0 %v268, 2
        %v1037 = vpop.permute.xlu0 %1036
        %1038 = vrot.lane.b32.xlu0 %v269, 2
        %v1039 = vpop.permute.xlu0 %1038
        %1040 = vrot.lane.b32.xlu0 %v270, 2
        %v1041 = vpop.permute.xlu0 %1040
        %1042 = vrot.lane.b32.xlu0 %v271, 2
        %v1043 = vpop.permute.xlu0 %1042
        %1044 = vrot.lane.b32.xlu0 %v272, 2
        %v1045 = vpop.permute.xlu0 %1044
        %1046 = vrot.lane.b32.xlu0 %v273, 2
        %v1047 = vpop.permute.xlu0 %1046
        %1048 = vrot.lane.b32.xlu0 %v274, 2
        %v1049 = vpop.permute.xlu0 %1048
        %1050 = vrot.lane.b32.xlu0 %v275, 2
        %v1051 = vpop.permute.xlu0 %1050
        %1052 = vrot.lane.b32.xlu0 %v276, 2
        %v1053 = vpop.permute.xlu0 %1052
        %1054 = vrot.lane.b32.xlu0 %v277, 2
        %v1055 = vpop.permute.xlu0 %1054
        %1056 = vrot.lane.b32.xlu0 %v278, 2
        %v1057 = vpop.permute.xlu0 %1056
        %1058 = vrot.lane.b32.xlu0 %v279, 2
        %v1059 = vpop.permute.xlu0 %1058
        %1060 = vrot.lane.b32.xlu0 %v280, 2
        %v1061 = vpop.permute.xlu0 %1060
        %1062 = vrot.lane.b32.xlu0 %v281, 2
        %v1063 = vpop.permute.xlu0 %1062
        %1064 = vrot.lane.b32.xlu0 %v282, 2
        %v1065 = vpop.permute.xlu0 %1064
        %1066 = vrot.lane.b32.xlu0 %v283, 2
        %v1067 = vpop.permute.xlu0 %1066
        %1068 = vrot.lane.b32.xlu0 %v284, 2
        %v1069 = vpop.permute.xlu0 %1068
        %1070 = vrot.lane.b32.xlu0 %v285, 2
        %v1071 = vpop.permute.xlu0 %1070
        %1072 = vrot.lane.b32.xlu0 %v286, 2
        %v1073 = vpop.permute.xlu0 %1072
        %1074 = vrot.lane.b32.xlu0 %v287, 2
        %v1075 = vpop.permute.xlu0 %1074
        %1076 = vrot.lane.b32.xlu0 %v288, 2
        %v1077 = vpop.permute.xlu0 %1076
        %1078 = vrot.lane.b32.xlu0 %v289, 2
        %v1079 = vpop.permute.xlu0 %1078
        %1080 = vrot.lane.b32.xlu0 %v290, 2
        %v1081 = vpop.permute.xlu0 %1080
        %1082 = vrot.lane.b32.xlu0 %v291, 2
        %v1083 = vpop.permute.xlu0 %1082
        %1084 = vrot.lane.b32.xlu0 %v292, 2
        %v1085 = vpop.permute.xlu0 %1084
        %1086 = vrot.lane.b32.xlu0 %v293, 2
        %v1087 = vpop.permute.xlu0 %1086
        %1088 = vrot.lane.b32.xlu0 %v294, 2
        %v1089 = vpop.permute.xlu0 %1088
        %1118 = vrot.lane.b32.xlu0 %v268, 5
        %v1119 = vpop.permute.xlu0 %1118
        %1120 = vrot.lane.b32.xlu0 %v269, 5
        %v1121 = vpop.permute.xlu0 %1120
        %1122 = vrot.lane.b32.xlu0 %v270, 5
        %v1123 = vpop.permute.xlu0 %1122
        %1124 = vrot.lane.b32.xlu0 %v271, 5
        %v1125 = vpop.permute.xlu0 %1124
        %1126 = vrot.lane.b32.xlu0 %v272, 5
        %v1127 = vpop.permute.xlu0 %1126
        %1128 = vrot.lane.b32.xlu0 %v273, 5
        %v1129 = vpop.permute.xlu0 %1128
        %1130 = vrot.lane.b32.xlu0 %v274, 5
        %v1131 = vpop.permute.xlu0 %1130
        %1132 = vrot.lane.b32.xlu0 %v275, 5
        %v1133 = vpop.permute.xlu0 %1132
        %1134 = vrot.lane.b32.xlu0 %v276, 5
        %v1135 = vpop.permute.xlu0 %1134
        %1136 = vrot.lane.b32.xlu0 %v277, 5
        %v1137 = vpop.permute.xlu0 %1136
        %1138 = vrot.lane.b32.xlu0 %v278, 5
        %v1139 = vpop.permute.xlu0 %1138
        %1140 = vrot.lane.b32.xlu0 %v279, 5
        %v1141 = vpop.permute.xlu0 %1140
        %1142 = vrot.lane.b32.xlu0 %v280, 5
        %v1143 = vpop.permute.xlu0 %1142
        %1144 = vrot.lane.b32.xlu0 %v281, 5
        %v1145 = vpop.permute.xlu0 %1144
        %1146 = vrot.lane.b32.xlu0 %v282, 5
        %v1147 = vpop.permute.xlu0 %1146
        %1148 = vrot.lane.b32.xlu0 %v283, 5
        %v1149 = vpop.permute.xlu0 %1148
        %1150 = vrot.lane.b32.xlu0 %v284, 5
        %v1151 = vpop.permute.xlu0 %1150
        %1152 = vrot.lane.b32.xlu0 %v285, 5
        %v1153 = vpop.permute.xlu0 %1152
        %1154 = vrot.lane.b32.xlu0 %v286, 5
        %v1155 = vpop.permute.xlu0 %1154
        %1156 = vrot.lane.b32.xlu0 %v287, 5
        %v1157 = vpop.permute.xlu0 %1156
        %1158 = vrot.lane.b32.xlu0 %v288, 5
        %v1159 = vpop.permute.xlu0 %1158
        %1160 = vrot.lane.b32.xlu0 %v289, 5
        %v1161 = vpop.permute.xlu0 %1160
        %1162 = vrot.lane.b32.xlu0 %v290, 5
        %v1163 = vpop.permute.xlu0 %1162
        %1164 = vrot.lane.b32.xlu0 %v291, 5
        %v1165 = vpop.permute.xlu0 %1164
        %1166 = vrot.lane.b32.xlu0 %v292, 5
        %v1167 = vpop.permute.xlu0 %1166
        %1168 = vrot.lane.b32.xlu0 %v293, 5
        %v1169 = vpop.permute.xlu0 %1168
        %1170 = vrot.lane.b32.xlu0 %v294, 5
        %v1171 = vpop.permute.xlu0 %1170
        %1172 = vrot.lane.b32.xlu0 %v295, 5
        %v1173 = vpop.permute.xlu0 %1172
        %v1202 = vsel %vm498, %v951, %v951
        %v1203 = vsel %vm498, %v953, %v953
        %v1204 = vsel %vm498, %v955, %v955
        %v1205 = vsel %vm498, %v957, %v957
        %v1206 = vsel %vm498, %v959, %v959
        %v1207 = vsel %vm498, %v961, %v961
        %v1208 = vsel %vm498, %v963, %v963
        %v1209 = vsel %vm498, %v965, %v965
        %v1210 = vsel %vm498, %v967, %v967
        %v1211 = vsel %vm498, %v969, %v969
        %v1212 = vsel %vm498, %v971, %v971
        %v1213 = vsel %vm498, %v973, %v973
        %v1214 = vsel %vm498, %v975, %v975
        %v1215 = vsel %vm498, %v977, %v977
        %v1216 = vsel %vm498, %v979, %v979
        %v1217 = vsel %vm498, %v981, %v981
        %v1218 = vsel %vm498, %v983, %v983
        %v1219 = vsel %vm498, %v985, %v985
        %v1220 = vsel %vm498, %v987, %v987
        %v1221 = vsel %vm498, %v989, %v989
        %v1222 = vsel %vm498, %v991, %v991
        %v1223 = vsel %vm498, %v993, %v993
        %v1224 = vsel %vm498, %v995, %v995
        %v1225 = vsel %vm498, %v997, %v997
        %v1226 = vsel %vm498, %v999, %v999
        %v1227 = vsel %vm498, %v1001, %v1001
        %v1228 = vsel %vm498, %v1003, %v1003
        %v1229 = vsel %vm498, %v1005, %v1005
        %v1230 = vsel %vm527, %v1202, %v1035
        %v1231 = vsel %vm527, %v1203, %v1037
        %v1232 = vsel %vm527, %v1204, %v1039
        %v1233 = vsel %vm527, %v1205, %v1041
        %v1234 = vsel %vm527, %v1206, %v1043
        %v1235 = vsel %vm527, %v1207, %v1045
        %v1236 = vsel %vm527, %v1208, %v1047
        %v1237 = vsel %vm527, %v1209, %v1049
        %v1238 = vsel %vm527, %v1210, %v1051
        %v1239 = vsel %vm527, %v1211, %v1053
        %v1240 = vsel %vm527, %v1212, %v1055
        %v1241 = vsel %vm527, %v1213, %v1057
        %v1242 = vsel %vm527, %v1214, %v1059
        %v1243 = vsel %vm527, %v1215, %v1061
        %v1244 = vsel %vm527, %v1216, %v1063
        %v1245 = vsel %vm527, %v1217, %v1065
        %v1246 = vsel %vm527, %v1218, %v1067
        %v1247 = vsel %vm527, %v1219, %v1069
        %v1248 = vsel %vm527, %v1220, %v1071
        %v1249 = vsel %vm527, %v1221, %v1073
        %v1250 = vsel %vm527, %v1222, %v1075
        %v1251 = vsel %vm527, %v1223, %v1077
        %v1252 = vsel %vm527, %v1224, %v1079
        %v1253 = vsel %vm527, %v1225, %v1081
        %v1254 = vsel %vm527, %v1226, %v1083
        %v1255 = vsel %vm527, %v1227, %v1085
        %v1256 = vsel %vm527, %v1228, %v1087
        %v1257 = vsel %vm527, %v1229, %v1089
        %v1258 = vsel %vm556, %v1230, %v1035
        %v1259 = vsel %vm556, %v1231, %v1037
        %v1260 = vsel %vm556, %v1232, %v1039
        %v1261 = vsel %vm556, %v1233, %v1041
        %v1262 = vsel %vm556, %v1234, %v1043
        %v1263 = vsel %vm556, %v1235, %v1045
        %v1264 = vsel %vm556, %v1236, %v1047
        %v1265 = vsel %vm556, %v1237, %v1049
        %v1266 = vsel %vm556, %v1238, %v1051
        %v1267 = vsel %vm556, %v1239, %v1053
        %v1268 = vsel %vm556, %v1240, %v1055
        %v1269 = vsel %vm556, %v1241, %v1057
        %v1270 = vsel %vm556, %v1242, %v1059
        %v1271 = vsel %vm556, %v1243, %v1061
        %v1272 = vsel %vm556, %v1244, %v1063
        %v1273 = vsel %vm556, %v1245, %v1065
        %v1274 = vsel %vm556, %v1246, %v1067
        %v1275 = vsel %vm556, %v1247, %v1069
        %v1276 = vsel %vm556, %v1248, %v1071
        %v1277 = vsel %vm556, %v1249, %v1073
        %v1278 = vsel %vm556, %v1250, %v1075
        %v1279 = vsel %vm556, %v1251, %v1077
        %v1280 = vsel %vm556, %v1252, %v1079
        %v1281 = vsel %vm556, %v1253, %v1081
        %v1282 = vsel %vm556, %v1254, %v1083
        %v1283 = vsel %vm556, %v1255, %v1085
        %v1284 = vsel %vm556, %v1256, %v1087
        %v1285 = vsel %vm556, %v1257, %v1089
        %v1286 = vsel %vm585, %v1258, %v1035
        %v1287 = vsel %vm585, %v1259, %v1037
        %v1288 = vsel %vm585, %v1260, %v1039
        %v1289 = vsel %vm585, %v1261, %v1041
        %v1290 = vsel %vm585, %v1262, %v1043
        %v1291 = vsel %vm585, %v1263, %v1045
        %v1292 = vsel %vm585, %v1264, %v1047
        %v1293 = vsel %vm585, %v1265, %v1049
        %v1294 = vsel %vm585, %v1266, %v1051
        %v1295 = vsel %vm585, %v1267, %v1053
        %v1296 = vsel %vm585, %v1268, %v1055
        %v1297 = vsel %vm585, %v1269, %v1057
        %v1298 = vsel %vm585, %v1270, %v1059
        %v1299 = vsel %vm585, %v1271, %v1061
        %v1300 = vsel %vm585, %v1272, %v1063
        %v1301 = vsel %vm585, %v1273, %v1065
        %v1302 = vsel %vm585, %v1274, %v1067
        %v1303 = vsel %vm585, %v1275, %v1069
        %v1304 = vsel %vm585, %v1276, %v1071
        %v1305 = vsel %vm585, %v1277, %v1073
        %v1306 = vsel %vm585, %v1278, %v1075
        %v1307 = vsel %vm585, %v1279, %v1077
        %v1308 = vsel %vm585, %v1280, %v1079
        %v1309 = vsel %vm585, %v1281, %v1081
        %v1310 = vsel %vm585, %v1282, %v1083
        %v1311 = vsel %vm585, %v1283, %v1085
        %v1312 = vsel %vm585, %v1284, %v1087
        %v1313 = vsel %vm585, %v1285, %v1089
        %v1314 = vsel %vm614, %v1286, %v1119
        %v1315 = vsel %vm614, %v1287, %v1121
        %v1316 = vsel %vm614, %v1288, %v1123
        %v1317 = vsel %vm614, %v1289, %v1125
        %v1318 = vsel %vm614, %v1290, %v1127
        %v1319 = vsel %vm614, %v1291, %v1129
        %v1320 = vsel %vm614, %v1292, %v1131
        %v1321 = vsel %vm614, %v1293, %v1133
        %v1322 = vsel %vm614, %v1294, %v1135
        %v1323 = vsel %vm614, %v1295, %v1137
        %v1324 = vsel %vm614, %v1296, %v1139
        %v1325 = vsel %vm614, %v1297, %v1141
        %v1326 = vsel %vm614, %v1298, %v1143
        %v1327 = vsel %vm614, %v1299, %v1145
        %v1328 = vsel %vm614, %v1300, %v1147
        %v1329 = vsel %vm614, %v1301, %v1149
        %v1330 = vsel %vm614, %v1302, %v1151
        %v1331 = vsel %vm614, %v1303, %v1153
        %v1332 = vsel %vm614, %v1304, %v1155
        %v1333 = vsel %vm614, %v1305, %v1157
        %v1334 = vsel %vm614, %v1306, %v1159
        %v1335 = vsel %vm614, %v1307, %v1161
        %v1336 = vsel %vm614, %v1308, %v1163
        %v1337 = vsel %vm614, %v1309, %v1165
        %v1338 = vsel %vm614, %v1310, %v1167
        %v1339 = vsel %vm614, %v1311, %v1169
        %v1340 = vsel %vm614, %v1312, %v1171
        %v1341 = vsel %vm614, %v1313, %v1173
        %v1342 = vsel %vm643, %v1314, %v1119
        %v1343 = vsel %vm643, %v1315, %v1121
        %v1344 = vsel %vm643, %v1316, %v1123
        %v1345 = vsel %vm643, %v1317, %v1125
        %v1346 = vsel %vm643, %v1318, %v1127
        %v1347 = vsel %vm643, %v1319, %v1129
        %v1348 = vsel %vm643, %v1320, %v1131
        %v1349 = vsel %vm643, %v1321, %v1133
        %v1350 = vsel %vm643, %v1322, %v1135
        %v1351 = vsel %vm643, %v1323, %v1137
        %v1352 = vsel %vm643, %v1324, %v1139
        %v1353 = vsel %vm643, %v1325, %v1141
        %v1354 = vsel %vm643, %v1326, %v1143
        %v1355 = vsel %vm643, %v1327, %v1145
        %v1356 = vsel %vm643, %v1328, %v1147
        %v1357 = vsel %vm643, %v1329, %v1149
        %v1358 = vsel %vm643, %v1330, %v1151
        %v1359 = vsel %vm643, %v1331, %v1153
        %v1360 = vsel %vm643, %v1332, %v1155
        %v1361 = vsel %vm643, %v1333, %v1157
        %v1362 = vsel %vm643, %v1334, %v1159
        %v1363 = vsel %vm643, %v1335, %v1161
        %v1364 = vsel %vm643, %v1336, %v1163
        %v1365 = vsel %vm643, %v1337, %v1165
        %v1366 = vsel %vm643, %v1338, %v1167
        %v1367 = vsel %vm643, %v1339, %v1169
        %v1368 = vsel %vm643, %v1340, %v1171
        %v1369 = vsel %vm643, %v1341, %v1173
        %v1370 = vsel %vm672, %v1342, %v1119
        %v1371 = vsel %vm672, %v1343, %v1121
        %v1372 = vsel %vm672, %v1344, %v1123
        %v1373 = vsel %vm672, %v1345, %v1125
        %v1374 = vsel %vm672, %v1346, %v1127
        %v1375 = vsel %vm672, %v1347, %v1129
        %v1376 = vsel %vm672, %v1348, %v1131
        %v1377 = vsel %vm672, %v1349, %v1133
        %v1378 = vsel %vm672, %v1350, %v1135
        %v1379 = vsel %vm672, %v1351, %v1137
        %v1380 = vsel %vm672, %v1352, %v1139
        %v1381 = vsel %vm672, %v1353, %v1141
        %v1382 = vsel %vm672, %v1354, %v1143
        %v1383 = vsel %vm672, %v1355, %v1145
        %v1384 = vsel %vm672, %v1356, %v1147
        %v1385 = vsel %vm672, %v1357, %v1149
        %v1386 = vsel %vm672, %v1358, %v1151
        %v1387 = vsel %vm672, %v1359, %v1153
        %v1388 = vsel %vm672, %v1360, %v1155
        %v1389 = vsel %vm672, %v1361, %v1157
        %v1390 = vsel %vm672, %v1362, %v1159
        %v1391 = vsel %vm672, %v1363, %v1161
        %v1392 = vsel %vm672, %v1364, %v1163
        %v1393 = vsel %vm672, %v1365, %v1165
        %v1394 = vsel %vm672, %v1366, %v1167
        %v1395 = vsel %vm672, %v1367, %v1169
        %v1396 = vsel %vm672, %v1368, %v1171
        %v1397 = vsel %vm672, %v1369, %v1173
        %v1398 = vpack.c.bf16 %v1371, %v1370
        %v1399 = vpack.c.bf16 %v1373, %v1372
        %v1400 = vpack.c.bf16 %v1375, %v1374
        %v1401 = vpack.c.bf16 %v1377, %v1376
        %v1402 = vpack.c.bf16 %v1379, %v1378
        %v1403 = vpack.c.bf16 %v1381, %v1380
        %v1404 = vpack.c.bf16 %v1383, %v1382
        %v1405 = vpack.c.bf16 %v1385, %v1384
        %v1406 = vpack.c.bf16 %v1387, %v1386
        %v1407 = vpack.c.bf16 %v1389, %v1388
        %v1408 = vpack.c.bf16 %v1391, %v1390
        %v1409 = vpack.c.bf16 %v1393, %v1392
        %v1410 = vpack.c.bf16 %v1395, %v1394
        %v1411 = vpack.c.bf16 %v1397, %v1396
        %v1413 = vsel %vm726, %v1398, 0
        %v1416 = vsel %vm726, %v1399, 0
        %v1419 = vsel %vm726, %v1400, 0
        %v1422 = vsel %vm726, %v1401, 0
        %v1425 = vsel %vm726, %v1402, 0
        %v1428 = vsel %vm726, %v1403, 0
        %v1431 = vsel %vm726, %v1404, 0
        %v1434 = vsel %vm726, %v1405, 0
        %v1437 = vsel %vm726, %v1406, 0
        %v1440 = vsel %vm726, %v1407, 0
        %v1443 = vsel %vm726, %v1408, 0
        %v1446 = vsel %vm726, %v1409, 0
        %v1449 = vsel %vm726, %v1410, 0
        %v1452 = vsel %vm726, %v1411, 0
        %1454 = vmatprep.subr.bf16.mxu0 0
        %1455 = vmatpush1.bf16.msra.mxu0 %v774
        %1456 = vmatprep.subr.bf16.mxu0 0
        %1457 = vmatpush1.bf16.msra.mxu0 0
        %1458 = vmatprep.subr.bf16.mxu0 0
        %1459 = vmatpush1.bf16.msra.mxu0 0
        %1460 = vmatprep.subr.bf16.mxu0 0
        %1461 = vmatpush1.bf16.msra.mxu0 0
        %1462 = vmatprep.subr.bf16.mxu0 0
        %1463 = vmatpush1.bf16.msra.mxu0 0
        %1464 = vmatprep.subr.bf16.mxu0 0
        %1465 = vmatpush1.bf16.msra.mxu0 0
        %1466 = vmatprep.subr.bf16.mxu0 0
        %1467 = vmatpush1.bf16.msra.mxu0 0
        %1468 = vmatprep.subr.bf16.mxu0 0
        %1469 = vmatpush1.bf16.msra.mxu0 0
        %1470 = vmatprep.subr.bf16.mxu0 0
        %1471 = vmatpush1.bf16.msra.mxu0 0
        %1472 = vmatprep.subr.bf16.mxu0 0
        %1473 = vmatpush1.bf16.msra.mxu0 0
        %1474 = vmatprep.subr.bf16.mxu0 0
        %1475 = vmatpush1.bf16.msra.mxu0 0
        %1476 = vmatprep.subr.bf16.mxu0 0
        %1477 = vmatpush1.bf16.msra.mxu0 0
        %1478 = vmatprep.subr.bf16.mxu0 0
        %1479 = vmatpush1.bf16.msra.mxu0 0
        %1480 = vmatprep.subr.bf16.mxu0 0
        %1481 = vmatpush1.bf16.msra.mxu0 0
        %1482 = vmatprep.subr.bf16.mxu0 0
        %1483 = vmatpush1.bf16.msra.mxu0 0
        %1484 = vmatprep.subr.bf16.mxu0 0
        %1485 = vmatpush1.bf16.msra.mxu0 0
        %1486 = vmatprep.mubr.bf16.mxu0 0
        %1487 = vmatmul.mubr.bf16.gmra.mrb[0].mxu0 %v1413
        %v1488 = vpop.f32.mrb[0].mxu0
        %v1489 = vadd.f32 %v719, %v1488
        %v1490 = vpop.f32.mrb[0].mxu0
        %v1491 = vpop.f32.mrb[0].mxu0
        %v1492 = vadd.f32 %v719, %v1491
        %v1493 = vpop.f32.mrb[0].mxu0
        %1494 = vmatprep.mubr.bf16.mxu0 0
        %1495 = vmatmul.mubr.bf16.gmra.mrb[0].mxu0 %v1416
        %v1496 = vpop.f32.mrb[0].mxu0
        %v1497 = vadd.f32 %v719, %v1496
        %v1498 = vpop.f32.mrb[0].mxu0
        %v1499 = vpop.f32.mrb[0].mxu0
        %v1500 = vadd.f32 %v719, %v1499
        %v1501 = vpop.f32.mrb[0].mxu0
        %1502 = vmatprep.mubr.bf16.mxu0 0
        %1503 = vmatmul.mubr.bf16.gmra.mrb[0].mxu0 %v1419
        %v1504 = vpop.f32.mrb[0].mxu0
        %v1505 = vadd.f32 %v719, %v1504
        %v1506 = vpop.f32.mrb[0].mxu0
        %v1507 = vpop.f32.mrb[0].mxu0
        %v1508 = vadd.f32 %v719, %v1507
        %v1509 = vpop.f32.mrb[0].mxu0
        %1510 = vmatprep.mubr.bf16.mxu0 0
        %1511 = vmatmul.mubr.bf16.gmra.mrb[0].mxu0 %v1422
        %v1512 = vpop.f32.mrb[0].mxu0
        %v1513 = vadd.f32 %v719, %v1512
        %v1514 = vpop.f32.mrb[0].mxu0
        %v1515 = vpop.f32.mrb[0].mxu0
        %v1516 = vadd.f32 %v719, %v1515
        %v1517 = vpop.f32.mrb[0].mxu0
        %1518 = vmatprep.mubr.bf16.mxu0 0
        %1519 = vmatmul.mubr.bf16.gmra.mrb[0].mxu0 %v1425
        %v1520 = vpop.f32.mrb[0].mxu0
        %v1521 = vadd.f32 %v719, %v1520
        %v1522 = vpop.f32.mrb[0].mxu0
        %v1523 = vpop.f32.mrb[0].mxu0
        %v1524 = vadd.f32 %v719, %v1523
        %v1525 = vpop.f32.mrb[0].mxu0
        %1526 = vmatprep.mubr.bf16.mxu0 0
        %1527 = vmatmul.mubr.bf16.gmra.mrb[0].mxu0 %v1428
        %v1528 = vpop.f32.mrb[0].mxu0
        %v1529 = vadd.f32 %v719, %v1528
        %v1530 = vpop.f32.mrb[0].mxu0
        %v1531 = vpop.f32.mrb[0].mxu0
        %v1532 = vadd.f32 %v719, %v1531
        %v1533 = vpop.f32.mrb[0].mxu0
        %1534 = vmatprep.mubr.bf16.mxu0 0
        %1535 = vmatmul.mubr.bf16.gmra.mrb[0].mxu0 %v1431
        %v1536 = vpop.f32.mrb[0].mxu0
        %v1537 = vadd.f32 %v719, %v1536
        %v1538 = vpop.f32.mrb[0].mxu0
        %v1539 = vpop.f32.mrb[0].mxu0
        %v1540 = vadd.f32 %v719, %v1539
        %v1541 = vpop.f32.mrb[0].mxu0
        %1542 = vmatprep.mubr.bf16.mxu0 0
        %1543 = vmatmul.mubr.bf16.gmra.mrb[0].mxu0 %v1434
        %v1544 = vpop.f32.mrb[0].mxu0
        %v1545 = vadd.f32 %v719, %v1544
        %v1546 = vpop.f32.mrb[0].mxu0
        %v1547 = vpop.f32.mrb[0].mxu0
        %v1548 = vadd.f32 %v719, %v1547
        %v1549 = vpop.f32.mrb[0].mxu0
        %1550 = vmatprep.mubr.bf16.mxu0 0
        %1551 = vmatmul.mubr.bf16.gmra.mrb[0].mxu0 %v1437
        %v1552 = vpop.f32.mrb[0].mxu0
        %v1553 = vadd.f32 %v719, %v1552
        %v1554 = vpop.f32.mrb[0].mxu0
        %v1555 = vpop.f32.mrb[0].mxu0
        %v1556 = vadd.f32 %v719, %v1555
        %v1557 = vpop.f32.mrb[0].mxu0
        %1558 = vmatprep.mubr.bf16.mxu0 0
        %1559 = vmatmul.mubr.bf16.gmra.mrb[0].mxu0 %v1440
        %v1560 = vpop.f32.mrb[0].mxu0
        %v1561 = vadd.f32 %v719, %v1560
        %v1562 = vpop.f32.mrb[0].mxu0
        %v1563 = vpop.f32.mrb[0].mxu0
        %v1564 = vadd.f32 %v719, %v1563
        %v1565 = vpop.f32.mrb[0].mxu0
        %1566 = vmatprep.mubr.bf16.mxu0 0
        %1567 = vmatmul.mubr.bf16.gmra.mrb[0].mxu0 %v1443
        %v1568 = vpop.f32.mrb[0].mxu0
        %v1569 = vadd.f32 %v719, %v1568
        %v1570 = vpop.f32.mrb[0].mxu0
        %v1571 = vpop.f32.mrb[0].mxu0
        %v1572 = vadd.f32 %v719, %v1571
        %v1573 = vpop.f32.mrb[0].mxu0
        %1574 = vmatprep.mubr.bf16.mxu0 0
        %1575 = vmatmul.mubr.bf16.gmra.mrb[0].mxu0 %v1446
        %v1576 = vpop.f32.mrb[0].mxu0
        %v1577 = vadd.f32 %v719, %v1576
        %v1578 = vpop.f32.mrb[0].mxu0
        %v1579 = vpop.f32.mrb[0].mxu0
        %v1580 = vadd.f32 %v719, %v1579
        %v1581 = vpop.f32.mrb[0].mxu0
        %1582 = vmatprep.mubr.bf16.mxu0 0
        %1583 = vmatmul.mubr.bf16.gmra.mrb[0].mxu0 %v1449
        %v1584 = vpop.f32.mrb[0].mxu0
        %v1585 = vadd.f32 %v719, %v1584
        %v1586 = vpop.f32.mrb[0].mxu0
        %v1587 = vpop.f32.mrb[0].mxu0
        %v1588 = vadd.f32 %v719, %v1587
        %v1589 = vpop.f32.mrb[0].mxu0
        %1590 = vmatprep.mubr.bf16.mxu0 0
        %1591 = vmatmul.mubr.bf16.gmra.mrb[0].mxu0 %v1452
        %v1592 = vpop.f32.mrb[0].mxu0
        %v1593 = vadd.f32 %v719, %v1592
        %v1594 = vpop.f32.mrb[0].mxu0
        %v1595 = vpop.f32.mrb[0].mxu0
        %v1596 = vadd.f32 %v719, %v1595
        %v1597 = vpop.f32.mrb[0].mxu0
        %1598 = vdwg.mxu0
        %v1599 = vmax.f32 %v1489, 0.0
        %v1600 = vmax.f32 %v1492, 0.0
        %v1601 = vmax.f32 %v1497, 0.0
        %v1602 = vmax.f32 %v1500, 0.0
        %v1603 = vmax.f32 %v1505, 0.0
        %v1604 = vmax.f32 %v1508, 0.0
        %v1605 = vmax.f32 %v1513, 0.0
        %v1606 = vmax.f32 %v1516, 0.0
        %v1607 = vmax.f32 %v1521, 0.0
        %v1608 = vmax.f32 %v1524, 0.0
        %v1609 = vmax.f32 %v1529, 0.0
        %v1610 = vmax.f32 %v1532, 0.0
        %v1611 = vmax.f32 %v1537, 0.0
        %v1612 = vmax.f32 %v1540, 0.0
        %v1613 = vmax.f32 %v1545, 0.0
        %v1614 = vmax.f32 %v1548, 0.0
        %v1615 = vmax.f32 %v1553, 0.0
        %v1616 = vmax.f32 %v1556, 0.0
        %v1617 = vmax.f32 %v1561, 0.0
        %v1618 = vmax.f32 %v1564, 0.0
        %v1619 = vmax.f32 %v1569, 0.0
        %v1620 = vmax.f32 %v1572, 0.0
        %v1621 = vmax.f32 %v1577, 0.0
        %v1622 = vmax.f32 %v1580, 0.0
        %v1623 = vmax.f32 %v1585, 0.0
        %v1624 = vmax.f32 %v1588, 0.0
        %v1625 = vmax.f32 %v1593, 0.0
        %v1626 = vmax.f32 %v1596, 0.0
        %1627 = vrot.lane.b32.xlu0 %v266, 126
        %v1628 = vpop.permute.xlu0 %1627
        %1629 = vrot.lane.b32.xlu0 %v267, 126
        %v1630 = vpop.permute.xlu0 %1629
        %1631 = vrot.lane.b32.xlu0 %v268, 126
        %v1632 = vpop.permute.xlu0 %1631
        %1633 = vrot.lane.b32.xlu0 %v269, 126
        %v1634 = vpop.permute.xlu0 %1633
        %1635 = vrot.lane.b32.xlu0 %v270, 126
        %v1636 = vpop.permute.xlu0 %1635
        %1637 = vrot.lane.b32.xlu0 %v271, 126
        %v1638 = vpop.permute.xlu0 %1637
        %1639 = vrot.lane.b32.xlu0 %v272, 126
        %v1640 = vpop.permute.xlu0 %1639
        %1641 = vrot.lane.b32.xlu0 %v273, 126
        %v1642 = vpop.permute.xlu0 %1641
        %1643 = vrot.lane.b32.xlu0 %v274, 126
        %v1644 = vpop.permute.xlu0 %1643
        %1645 = vrot.lane.b32.xlu0 %v275, 126
        %v1646 = vpop.permute.xlu0 %1645
        %1647 = vrot.lane.b32.xlu0 %v276, 126
        %v1648 = vpop.permute.xlu0 %1647
        %1649 = vrot.lane.b32.xlu0 %v277, 126
        %v1650 = vpop.permute.xlu0 %1649
        %1651 = vrot.lane.b32.xlu0 %v278, 126
        %v1652 = vpop.permute.xlu0 %1651
        %1653 = vrot.lane.b32.xlu0 %v279, 126
        %v1654 = vpop.permute.xlu0 %1653
        %1655 = vrot.lane.b32.xlu0 %v280, 126
        %v1656 = vpop.permute.xlu0 %1655
        %1657 = vrot.lane.b32.xlu0 %v281, 126
        %v1658 = vpop.permute.xlu0 %1657
        %1659 = vrot.lane.b32.xlu0 %v282, 126
        %v1660 = vpop.permute.xlu0 %1659
        %1661 = vrot.lane.b32.xlu0 %v283, 126
        %v1662 = vpop.permute.xlu0 %1661
        %1663 = vrot.lane.b32.xlu0 %v284, 126
        %v1664 = vpop.permute.xlu0 %1663
        %1665 = vrot.lane.b32.xlu0 %v285, 126
        %v1666 = vpop.permute.xlu0 %1665
        %1667 = vrot.lane.b32.xlu0 %v286, 126
        %v1668 = vpop.permute.xlu0 %1667
        %1669 = vrot.lane.b32.xlu0 %v287, 126
        %v1670 = vpop.permute.xlu0 %1669
        %1671 = vrot.lane.b32.xlu0 %v288, 126
        %v1672 = vpop.permute.xlu0 %1671
        %1673 = vrot.lane.b32.xlu0 %v289, 126
        %v1674 = vpop.permute.xlu0 %1673
        %1675 = vrot.lane.b32.xlu0 %v290, 126
        %v1676 = vpop.permute.xlu0 %1675
        %1677 = vrot.lane.b32.xlu0 %v291, 126
        %v1678 = vpop.permute.xlu0 %1677
        %1679 = vrot.lane.b32.xlu0 %v292, 126
        %v1680 = vpop.permute.xlu0 %1679
        %1681 = vrot.lane.b32.xlu0 %v293, 126
        %v1682 = vpop.permute.xlu0 %1681
        %vm1711 = vcmask 1046528
        %v1712 = vrot.slane %v266, 1
        %v1713 = vrot.slane %v267, 1
        %v1714 = vsel %vm1711, %v1712, %v1713
        %v1715 = vrot.slane %v268, 1
        %v1716 = vsel %vm1711, %v1713, %v1715
        %v1717 = vrot.slane %v269, 1
        %v1718 = vsel %vm1711, %v1715, %v1717
        %v1719 = vrot.slane %v270, 1
        %v1720 = vsel %vm1711, %v1717, %v1719
        %v1721 = vrot.slane %v271, 1
        %v1722 = vsel %vm1711, %v1719, %v1721
        %v1723 = vrot.slane %v272, 1
        %v1724 = vsel %vm1711, %v1721, %v1723
        %v1725 = vrot.slane %v273, 1
        %v1726 = vsel %vm1711, %v1723, %v1725
        %v1727 = vrot.slane %v274, 1
        %v1728 = vsel %vm1711, %v1725, %v1727
        %v1729 = vrot.slane %v275, 1
        %v1730 = vsel %vm1711, %v1727, %v1729
        %v1731 = vrot.slane %v276, 1
        %v1732 = vsel %vm1711, %v1729, %v1731
        %v1733 = vrot.slane %v277, 1
        %v1734 = vsel %vm1711, %v1731, %v1733
        %v1735 = vrot.slane %v278, 1
        %v1736 = vsel %vm1711, %v1733, %v1735
        %v1737 = vrot.slane %v279, 1
        %v1738 = vsel %vm1711, %v1735, %v1737
        %v1739 = vrot.slane %v280, 1
        %v1740 = vsel %vm1711, %v1737, %v1739
        %v1741 = vrot.slane %v281, 1
        %v1742 = vsel %vm1711, %v1739, %v1741
        %v1743 = vrot.slane %v282, 1
        %v1744 = vsel %vm1711, %v1741, %v1743
        %v1745 = vrot.slane %v283, 1
        %v1746 = vsel %vm1711, %v1743, %v1745
        %v1747 = vrot.slane %v284, 1
        %v1748 = vsel %vm1711, %v1745, %v1747
        %v1749 = vrot.slane %v285, 1
        %v1750 = vsel %vm1711, %v1747, %v1749
        %v1751 = vrot.slane %v286, 1
        %v1752 = vsel %vm1711, %v1749, %v1751
        %v1753 = vrot.slane %v287, 1
        %v1754 = vsel %vm1711, %v1751, %v1753
        %v1755 = vrot.slane %v288, 1
        %v1756 = vsel %vm1711, %v1753, %v1755
        %v1757 = vrot.slane %v289, 1
        %v1758 = vsel %vm1711, %v1755, %v1757
        %v1759 = vrot.slane %v290, 1
        %v1760 = vsel %vm1711, %v1757, %v1759
        %v1761 = vrot.slane %v291, 1
        %v1762 = vsel %vm1711, %v1759, %v1761
        %v1763 = vrot.slane %v292, 1
        %v1764 = vsel %vm1711, %v1761, %v1763
        %v1765 = vrot.slane %v293, 1
        %v1766 = vsel %vm1711, %v1763, %v1765
        %v1767 = vrot.slane %v294, 1
        %v1768 = vsel %vm1711, %v1765, %v1767
        %1769 = vrot.lane.b32.xlu0 %v1714, 2
        %v1770 = vpop.permute.xlu0 %1769
        %1771 = vrot.lane.b32.xlu0 %v1716, 2
        %v1772 = vpop.permute.xlu0 %1771
        %1773 = vrot.lane.b32.xlu0 %v1718, 2
        %v1774 = vpop.permute.xlu0 %1773
        %1775 = vrot.lane.b32.xlu0 %v1720, 2
        %v1776 = vpop.permute.xlu0 %1775
        %1777 = vrot.lane.b32.xlu0 %v1722, 2
        %v1778 = vpop.permute.xlu0 %1777
        %1779 = vrot.lane.b32.xlu0 %v1724, 2
        %v1780 = vpop.permute.xlu0 %1779
        %1781 = vrot.lane.b32.xlu0 %v1726, 2
        %v1782 = vpop.permute.xlu0 %1781
        %1783 = vrot.lane.b32.xlu0 %v1728, 2
        %v1784 = vpop.permute.xlu0 %1783
        %1785 = vrot.lane.b32.xlu0 %v1730, 2
        %v1786 = vpop.permute.xlu0 %1785
        %1787 = vrot.lane.b32.xlu0 %v1732, 2
        %v1788 = vpop.permute.xlu0 %1787
        %1789 = vrot.lane.b32.xlu0 %v1734, 2
        %v1790 = vpop.permute.xlu0 %1789
        %1791 = vrot.lane.b32.xlu0 %v1736, 2
        %v1792 = vpop.permute.xlu0 %1791
        %1793 = vrot.lane.b32.xlu0 %v1738, 2
        %v1794 = vpop.permute.xlu0 %1793
        %1795 = vrot.lane.b32.xlu0 %v1740, 2
        %v1796 = vpop.permute.xlu0 %1795
        %1797 = vrot.lane.b32.xlu0 %v1742, 2
        %v1798 = vpop.permute.xlu0 %1797
        %1799 = vrot.lane.b32.xlu0 %v1744, 2
        %v1800 = vpop.permute.xlu0 %1799
        %1801 = vrot.lane.b32.xlu0 %v1746, 2
        %v1802 = vpop.permute.xlu0 %1801
        %1803 = vrot.lane.b32.xlu0 %v1748, 2
        %v1804 = vpop.permute.xlu0 %1803
        %1805 = vrot.lane.b32.xlu0 %v1750, 2
        %v1806 = vpop.permute.xlu0 %1805
        %1807 = vrot.lane.b32.xlu0 %v1752, 2
        %v1808 = vpop.permute.xlu0 %1807
        %1809 = vrot.lane.b32.xlu0 %v1754, 2
        %v1810 = vpop.permute.xlu0 %1809
        %1811 = vrot.lane.b32.xlu0 %v1756, 2
        %v1812 = vpop.permute.xlu0 %1811
        %1813 = vrot.lane.b32.xlu0 %v1758, 2
        %v1814 = vpop.permute.xlu0 %1813
        %1815 = vrot.lane.b32.xlu0 %v1760, 2
        %v1816 = vpop.permute.xlu0 %1815
        %1817 = vrot.lane.b32.xlu0 %v1762, 2
        %v1818 = vpop.permute.xlu0 %1817
        %1819 = vrot.lane.b32.xlu0 %v1764, 2
        %v1820 = vpop.permute.xlu0 %1819
        %1821 = vrot.lane.b32.xlu0 %v1766, 2
        %v1822 = vpop.permute.xlu0 %1821
        %1823 = vrot.lane.b32.xlu0 %v1768, 2
        %v1824 = vpop.permute.xlu0 %1823
        %1853 = vrot.lane.b32.xlu0 %v267, 1
        %v1854 = vpop.permute.xlu0 %1853
        %1855 = vrot.lane.b32.xlu0 %v268, 1
        %v1856 = vpop.permute.xlu0 %1855
        %1857 = vrot.lane.b32.xlu0 %v269, 1
        %v1858 = vpop.permute.xlu0 %1857
        %1859 = vrot.lane.b32.xlu0 %v270, 1
        %v1860 = vpop.permute.xlu0 %1859
        %1861 = vrot.lane.b32.xlu0 %v271, 1
        %v1862 = vpop.permute.xlu0 %1861
        %1863 = vrot.lane.b32.xlu0 %v272, 1
        %v1864 = vpop.permute.xlu0 %1863
        %1865 = vrot.lane.b32.xlu0 %v273, 1
        %v1866 = vpop.permute.xlu0 %1865
        %1867 = vrot.lane.b32.xlu0 %v274, 1
        %v1868 = vpop.permute.xlu0 %1867
        %1869 = vrot.lane.b32.xlu0 %v275, 1
        %v1870 = vpop.permute.xlu0 %1869
        %1871 = vrot.lane.b32.xlu0 %v276, 1
        %v1872 = vpop.permute.xlu0 %1871
        %1873 = vrot.lane.b32.xlu0 %v277, 1
        %v1874 = vpop.permute.xlu0 %1873
        %1875 = vrot.lane.b32.xlu0 %v278, 1
        %v1876 = vpop.permute.xlu0 %1875
        %1877 = vrot.lane.b32.xlu0 %v279, 1
        %v1878 = vpop.permute.xlu0 %1877
        %1879 = vrot.lane.b32.xlu0 %v280, 1
        %v1880 = vpop.permute.xlu0 %1879
        %1881 = vrot.lane.b32.xlu0 %v281, 1
        %v1882 = vpop.permute.xlu0 %1881
        %1883 = vrot.lane.b32.xlu0 %v282, 1
        %v1884 = vpop.permute.xlu0 %1883
        %1885 = vrot.lane.b32.xlu0 %v283, 1
        %v1886 = vpop.permute.xlu0 %1885
        %1887 = vrot.lane.b32.xlu0 %v284, 1
        %v1888 = vpop.permute.xlu0 %1887
        %1889 = vrot.lane.b32.xlu0 %v285, 1
        %v1890 = vpop.permute.xlu0 %1889
        %1891 = vrot.lane.b32.xlu0 %v286, 1
        %v1892 = vpop.permute.xlu0 %1891
        %1893 = vrot.lane.b32.xlu0 %v287, 1
        %v1894 = vpop.permute.xlu0 %1893
        %1895 = vrot.lane.b32.xlu0 %v288, 1
        %v1896 = vpop.permute.xlu0 %1895
        %1897 = vrot.lane.b32.xlu0 %v289, 1
        %v1898 = vpop.permute.xlu0 %1897
        %1899 = vrot.lane.b32.xlu0 %v290, 1
        %v1900 = vpop.permute.xlu0 %1899
        %1901 = vrot.lane.b32.xlu0 %v291, 1
        %v1902 = vpop.permute.xlu0 %1901
        %1903 = vrot.lane.b32.xlu0 %v292, 1
        %v1904 = vpop.permute.xlu0 %1903
        %1905 = vrot.lane.b32.xlu0 %v293, 1
        %v1906 = vpop.permute.xlu0 %1905
        %1907 = vrot.lane.b32.xlu0 %v294, 1
        %v1908 = vpop.permute.xlu0 %1907
        %v1937 = vrot.slane %v295, 1
        %v1938 = vsel %vm1711, %v1767, %v1937
        %1939 = vrot.lane.b32.xlu0 %v1716, 5
        %v1940 = vpop.permute.xlu0 %1939
        %1941 = vrot.lane.b32.xlu0 %v1718, 5
        %v1942 = vpop.permute.xlu0 %1941
        %1943 = vrot.lane.b32.xlu0 %v1720, 5
        %v1944 = vpop.permute.xlu0 %1943
        %1945 = vrot.lane.b32.xlu0 %v1722, 5
        %v1946 = vpop.permute.xlu0 %1945
        %1947 = vrot.lane.b32.xlu0 %v1724, 5
        %v1948 = vpop.permute.xlu0 %1947
        %1949 = vrot.lane.b32.xlu0 %v1726, 5
        %v1950 = vpop.permute.xlu0 %1949
        %1951 = vrot.lane.b32.xlu0 %v1728, 5
        %v1952 = vpop.permute.xlu0 %1951
        %1953 = vrot.lane.b32.xlu0 %v1730, 5
        %v1954 = vpop.permute.xlu0 %1953
        %1955 = vrot.lane.b32.xlu0 %v1732, 5
        %v1956 = vpop.permute.xlu0 %1955
        %1957 = vrot.lane.b32.xlu0 %v1734, 5
        %v1958 = vpop.permute.xlu0 %1957
        %1959 = vrot.lane.b32.xlu0 %v1736, 5
        %v1960 = vpop.permute.xlu0 %1959
        %1961 = vrot.lane.b32.xlu0 %v1738, 5
        %v1962 = vpop.permute.xlu0 %1961
        %1963 = vrot.lane.b32.xlu0 %v1740, 5
        %v1964 = vpop.permute.xlu0 %1963
        %1965 = vrot.lane.b32.xlu0 %v1742, 5
        %v1966 = vpop.permute.xlu0 %1965
        %1967 = vrot.lane.b32.xlu0 %v1744, 5
        %v1968 = vpop.permute.xlu0 %1967
        %1969 = vrot.lane.b32.xlu0 %v1746, 5
        %v1970 = vpop.permute.xlu0 %1969
        %1971 = vrot.lane.b32.xlu0 %v1748, 5
        %v1972 = vpop.permute.xlu0 %1971
        %1973 = vrot.lane.b32.xlu0 %v1750, 5
        %v1974 = vpop.permute.xlu0 %1973
        %1975 = vrot.lane.b32.xlu0 %v1752, 5
        %v1976 = vpop.permute.xlu0 %1975
        %1977 = vrot.lane.b32.xlu0 %v1754, 5
        %v1978 = vpop.permute.xlu0 %1977
        %1979 = vrot.lane.b32.xlu0 %v1756, 5
        %v1980 = vpop.permute.xlu0 %1979
        %1981 = vrot.lane.b32.xlu0 %v1758, 5
        %v1982 = vpop.permute.xlu0 %1981
        %1983 = vrot.lane.b32.xlu0 %v1760, 5
        %v1984 = vpop.permute.xlu0 %1983
        %1985 = vrot.lane.b32.xlu0 %v1762, 5
        %v1986 = vpop.permute.xlu0 %1985
        %1987 = vrot.lane.b32.xlu0 %v1764, 5
        %v1988 = vpop.permute.xlu0 %1987
        %1989 = vrot.lane.b32.xlu0 %v1766, 5
        %v1990 = vpop.permute.xlu0 %1989
        %1991 = vrot.lane.b32.xlu0 %v1768, 5
        %v1992 = vpop.permute.xlu0 %1991
        %1993 = vrot.lane.b32.xlu0 %v1938, 5
        %v1994 = vpop.permute.xlu0 %1993
        %2023 = vrot.lane.b32.xlu0 %v268, 4
        %v2024 = vpop.permute.xlu0 %2023
        %2025 = vrot.lane.b32.xlu0 %v269, 4
        %v2026 = vpop.permute.xlu0 %2025
        %2027 = vrot.lane.b32.xlu0 %v270, 4
        %v2028 = vpop.permute.xlu0 %2027
        %2029 = vrot.lane.b32.xlu0 %v271, 4
        %v2030 = vpop.permute.xlu0 %2029
        %2031 = vrot.lane.b32.xlu0 %v272, 4
        %v2032 = vpop.permute.xlu0 %2031
        %2033 = vrot.lane.b32.xlu0 %v273, 4
        %v2034 = vpop.permute.xlu0 %2033
        %2035 = vrot.lane.b32.xlu0 %v274, 4
        %v2036 = vpop.permute.xlu0 %2035
        %2037 = vrot.lane.b32.xlu0 %v275, 4
        %v2038 = vpop.permute.xlu0 %2037
        %2039 = vrot.lane.b32.xlu0 %v276, 4
        %v2040 = vpop.permute.xlu0 %2039
        %2041 = vrot.lane.b32.xlu0 %v277, 4
        %v2042 = vpop.permute.xlu0 %2041
        %2043 = vrot.lane.b32.xlu0 %v278, 4
        %v2044 = vpop.permute.xlu0 %2043
        %2045 = vrot.lane.b32.xlu0 %v279, 4
        %v2046 = vpop.permute.xlu0 %2045
        %2047 = vrot.lane.b32.xlu0 %v280, 4
        %v2048 = vpop.permute.xlu0 %2047
        %2049 = vrot.lane.b32.xlu0 %v281, 4
        %v2050 = vpop.permute.xlu0 %2049
        %2051 = vrot.lane.b32.xlu0 %v282, 4
        %v2052 = vpop.permute.xlu0 %2051
        %2053 = vrot.lane.b32.xlu0 %v283, 4
        %v2054 = vpop.permute.xlu0 %2053
        %2055 = vrot.lane.b32.xlu0 %v284, 4
        %v2056 = vpop.permute.xlu0 %2055
        %2057 = vrot.lane.b32.xlu0 %v285, 4
        %v2058 = vpop.permute.xlu0 %2057
        %2059 = vrot.lane.b32.xlu0 %v286, 4
        %v2060 = vpop.permute.xlu0 %2059
        %2061 = vrot.lane.b32.xlu0 %v287, 4
        %v2062 = vpop.permute.xlu0 %2061
        %2063 = vrot.lane.b32.xlu0 %v288, 4
        %v2064 = vpop.permute.xlu0 %2063
        %2065 = vrot.lane.b32.xlu0 %v289, 4
        %v2066 = vpop.permute.xlu0 %2065
        %2067 = vrot.lane.b32.xlu0 %v290, 4
        %v2068 = vpop.permute.xlu0 %2067
        %2069 = vrot.lane.b32.xlu0 %v291, 4
        %v2070 = vpop.permute.xlu0 %2069
        %2071 = vrot.lane.b32.xlu0 %v292, 4
        %v2072 = vpop.permute.xlu0 %2071
        %2073 = vrot.lane.b32.xlu0 %v293, 4
        %v2074 = vpop.permute.xlu0 %2073
        %2075 = vrot.lane.b32.xlu0 %v294, 4
        %v2076 = vpop.permute.xlu0 %2075
        %2077 = vrot.lane.b32.xlu0 %v295, 4
        %v2078 = vpop.permute.xlu0 %2077
        %v2108 = vrot.slane %v296, 1
        %v2109 = vsel %vm1711, %v1937, %v2108
        %2110 = vrot.lane.b32.xlu0 %v1718, 8
        %v2111 = vpop.permute.xlu0 %2110
        %2112 = vrot.lane.b32.xlu0 %v1720, 8
        %v2113 = vpop.permute.xlu0 %2112
        %2114 = vrot.lane.b32.xlu0 %v1722, 8
        %v2115 = vpop.permute.xlu0 %2114
        %2116 = vrot.lane.b32.xlu0 %v1724, 8
        %v2117 = vpop.permute.xlu0 %2116
        %2118 = vrot.lane.b32.xlu0 %v1726, 8
        %v2119 = vpop.permute.xlu0 %2118
        %2120 = vrot.lane.b32.xlu0 %v1728, 8
        %v2121 = vpop.permute.xlu0 %2120
        %2122 = vrot.lane.b32.xlu0 %v1730, 8
        %v2123 = vpop.permute.xlu0 %2122
        %2124 = vrot.lane.b32.xlu0 %v1732, 8
        %v2125 = vpop.permute.xlu0 %2124
        %2126 = vrot.lane.b32.xlu0 %v1734, 8
        %v2127 = vpop.permute.xlu0 %2126
        %2128 = vrot.lane.b32.xlu0 %v1736, 8
        %v2129 = vpop.permute.xlu0 %2128
        %2130 = vrot.lane.b32.xlu0 %v1738, 8
        %v2131 = vpop.permute.xlu0 %2130
        %2132 = vrot.lane.b32.xlu0 %v1740, 8
        %v2133 = vpop.permute.xlu0 %2132
        %2134 = vrot.lane.b32.xlu0 %v1742, 8
        %v2135 = vpop.permute.xlu0 %2134
        %2136 = vrot.lane.b32.xlu0 %v1744, 8
        %v2137 = vpop.permute.xlu0 %2136
        %2138 = vrot.lane.b32.xlu0 %v1746, 8
        %v2139 = vpop.permute.xlu0 %2138
        %2140 = vrot.lane.b32.xlu0 %v1748, 8
        %v2141 = vpop.permute.xlu0 %2140
        %2142 = vrot.lane.b32.xlu0 %v1750, 8
        %v2143 = vpop.permute.xlu0 %2142
        %2144 = vrot.lane.b32.xlu0 %v1752, 8
        %v2145 = vpop.permute.xlu0 %2144
        %2146 = vrot.lane.b32.xlu0 %v1754, 8
        %v2147 = vpop.permute.xlu0 %2146
        %2148 = vrot.lane.b32.xlu0 %v1756, 8
        %v2149 = vpop.permute.xlu0 %2148
        %2150 = vrot.lane.b32.xlu0 %v1758, 8
        %v2151 = vpop.permute.xlu0 %2150
        %2152 = vrot.lane.b32.xlu0 %v1760, 8
        %v2153 = vpop.permute.xlu0 %2152
        %2154 = vrot.lane.b32.xlu0 %v1762, 8
        %v2155 = vpop.permute.xlu0 %2154
        %2156 = vrot.lane.b32.xlu0 %v1764, 8
        %v2157 = vpop.permute.xlu0 %2156
        %2158 = vrot.lane.b32.xlu0 %v1766, 8
        %v2159 = vpop.permute.xlu0 %2158
        %2160 = vrot.lane.b32.xlu0 %v1768, 8
        %v2161 = vpop.permute.xlu0 %2160
        %2162 = vrot.lane.b32.xlu0 %v1938, 8
        %v2163 = vpop.permute.xlu0 %2162
        %2164 = vrot.lane.b32.xlu0 %v2109, 8
        %v2165 = vpop.permute.xlu0 %2164
        %v2194 = vsel %vm498, %v1628, %v1770
        %v2195 = vsel %vm498, %v1630, %v1772
        %v2196 = vsel %vm498, %v1632, %v1774
        %v2197 = vsel %vm498, %v1634, %v1776
        %v2198 = vsel %vm498, %v1636, %v1778
        %v2199 = vsel %vm498, %v1638, %v1780
        %v2200 = vsel %vm498, %v1640, %v1782
        %v2201 = vsel %vm498, %v1642, %v1784
        %v2202 = vsel %vm498, %v1644, %v1786
        %v2203 = vsel %vm498, %v1646, %v1788
        %v2204 = vsel %vm498, %v1648, %v1790
        %v2205 = vsel %vm498, %v1650, %v1792
        %v2206 = vsel %vm498, %v1652, %v1794
        %v2207 = vsel %vm498, %v1654, %v1796
        %v2208 = vsel %vm498, %v1656, %v1798
        %v2209 = vsel %vm498, %v1658, %v1800
        %v2210 = vsel %vm498, %v1660, %v1802
        %v2211 = vsel %vm498, %v1662, %v1804
        %v2212 = vsel %vm498, %v1664, %v1806
        %v2213 = vsel %vm498, %v1666, %v1808
        %v2214 = vsel %vm498, %v1668, %v1810
        %v2215 = vsel %vm498, %v1670, %v1812
        %v2216 = vsel %vm498, %v1672, %v1814
        %v2217 = vsel %vm498, %v1674, %v1816
        %v2218 = vsel %vm498, %v1676, %v1818
        %v2219 = vsel %vm498, %v1678, %v1820
        %v2220 = vsel %vm498, %v1680, %v1822
        %v2221 = vsel %vm498, %v1682, %v1824
        %v2222 = vsel %vm527, %v2194, %v1854
        %v2223 = vsel %vm527, %v2195, %v1856
        %v2224 = vsel %vm527, %v2196, %v1858
        %v2225 = vsel %vm527, %v2197, %v1860
        %v2226 = vsel %vm527, %v2198, %v1862
        %v2227 = vsel %vm527, %v2199, %v1864
        %v2228 = vsel %vm527, %v2200, %v1866
        %v2229 = vsel %vm527, %v2201, %v1868
        %v2230 = vsel %vm527, %v2202, %v1870
        %v2231 = vsel %vm527, %v2203, %v1872
        %v2232 = vsel %vm527, %v2204, %v1874
        %v2233 = vsel %vm527, %v2205, %v1876
        %v2234 = vsel %vm527, %v2206, %v1878
        %v2235 = vsel %vm527, %v2207, %v1880
        %v2236 = vsel %vm527, %v2208, %v1882
        %v2237 = vsel %vm527, %v2209, %v1884
        %v2238 = vsel %vm527, %v2210, %v1886
        %v2239 = vsel %vm527, %v2211, %v1888
        %v2240 = vsel %vm527, %v2212, %v1890
        %v2241 = vsel %vm527, %v2213, %v1892
        %v2242 = vsel %vm527, %v2214, %v1894
        %v2243 = vsel %vm527, %v2215, %v1896
        %v2244 = vsel %vm527, %v2216, %v1898
        %v2245 = vsel %vm527, %v2217, %v1900
        %v2246 = vsel %vm527, %v2218, %v1902
        %v2247 = vsel %vm527, %v2219, %v1904
        %v2248 = vsel %vm527, %v2220, %v1906
        %v2249 = vsel %vm527, %v2221, %v1908
        %v2250 = vsel %vm556, %v2222, %v1854
        %v2251 = vsel %vm556, %v2223, %v1856
        %v2252 = vsel %vm556, %v2224, %v1858
        %v2253 = vsel %vm556, %v2225, %v1860
        %v2254 = vsel %vm556, %v2226, %v1862
        %v2255 = vsel %vm556, %v2227, %v1864
        %v2256 = vsel %vm556, %v2228, %v1866
        %v2257 = vsel %vm556, %v2229, %v1868
        %v2258 = vsel %vm556, %v2230, %v1870
        %v2259 = vsel %vm556, %v2231, %v1872
        %v2260 = vsel %vm556, %v2232, %v1874
        %v2261 = vsel %vm556, %v2233, %v1876
        %v2262 = vsel %vm556, %v2234, %v1878
        %v2263 = vsel %vm556, %v2235, %v1880
        %v2264 = vsel %vm556, %v2236, %v1882
        %v2265 = vsel %vm556, %v2237, %v1884
        %v2266 = vsel %vm556, %v2238, %v1886
        %v2267 = vsel %vm556, %v2239, %v1888
        %v2268 = vsel %vm556, %v2240, %v1890
        %v2269 = vsel %vm556, %v2241, %v1892
        %v2270 = vsel %vm556, %v2242, %v1894
        %v2271 = vsel %vm556, %v2243, %v1896
        %v2272 = vsel %vm556, %v2244, %v1898
        %v2273 = vsel %vm556, %v2245, %v1900
        %v2274 = vsel %vm556, %v2246, %v1902
        %v2275 = vsel %vm556, %v2247, %v1904
        %v2276 = vsel %vm556, %v2248, %v1906
        %v2277 = vsel %vm556, %v2249, %v1908
        %v2278 = vsel %vm585, %v2250, %v1940
        %v2279 = vsel %vm585, %v2251, %v1942
        %v2280 = vsel %vm585, %v2252, %v1944
        %v2281 = vsel %vm585, %v2253, %v1946
        %v2282 = vsel %vm585, %v2254, %v1948
        %v2283 = vsel %vm585, %v2255, %v1950
        %v2284 = vsel %vm585, %v2256, %v1952
        %v2285 = vsel %vm585, %v2257, %v1954
        %v2286 = vsel %vm585, %v2258, %v1956
        %v2287 = vsel %vm585, %v2259, %v1958
        %v2288 = vsel %vm585, %v2260, %v1960
        %v2289 = vsel %vm585, %v2261, %v1962
        %v2290 = vsel %vm585, %v2262, %v1964
        %v2291 = vsel %vm585, %v2263, %v1966
        %v2292 = vsel %vm585, %v2264, %v1968
        %v2293 = vsel %vm585, %v2265, %v1970
        %v2294 = vsel %vm585, %v2266, %v1972
        %v2295 = vsel %vm585, %v2267, %v1974
        %v2296 = vsel %vm585, %v2268, %v1976
        %v2297 = vsel %vm585, %v2269, %v1978
        %v2298 = vsel %vm585, %v2270, %v1980
        %v2299 = vsel %vm585, %v2271, %v1982
        %v2300 = vsel %vm585, %v2272, %v1984
        %v2301 = vsel %vm585, %v2273, %v1986
        %v2302 = vsel %vm585, %v2274, %v1988
        %v2303 = vsel %vm585, %v2275, %v1990
        %v2304 = vsel %vm585, %v2276, %v1992
        %v2305 = vsel %vm585, %v2277, %v1994
        %v2306 = vsel %vm614, %v2278, %v2024
        %v2307 = vsel %vm614, %v2279, %v2026
        %v2308 = vsel %vm614, %v2280, %v2028
        %v2309 = vsel %vm614, %v2281, %v2030
        %v2310 = vsel %vm614, %v2282, %v2032
        %v2311 = vsel %vm614, %v2283, %v2034
        %v2312 = vsel %vm614, %v2284, %v2036
        %v2313 = vsel %vm614, %v2285, %v2038
        %v2314 = vsel %vm614, %v2286, %v2040
        %v2315 = vsel %vm614, %v2287, %v2042
        %v2316 = vsel %vm614, %v2288, %v2044
        %v2317 = vsel %vm614, %v2289, %v2046
        %v2318 = vsel %vm614, %v2290, %v2048
        %v2319 = vsel %vm614, %v2291, %v2050
        %v2320 = vsel %vm614, %v2292, %v2052
        %v2321 = vsel %vm614, %v2293, %v2054
        %v2322 = vsel %vm614, %v2294, %v2056
        %v2323 = vsel %vm614, %v2295, %v2058
        %v2324 = vsel %vm614, %v2296, %v2060
        %v2325 = vsel %vm614, %v2297, %v2062
        %v2326 = vsel %vm614, %v2298, %v2064
        %v2327 = vsel %vm614, %v2299, %v2066
        %v2328 = vsel %vm614, %v2300, %v2068
        %v2329 = vsel %vm614, %v2301, %v2070
        %v2330 = vsel %vm614, %v2302, %v2072
        %v2331 = vsel %vm614, %v2303, %v2074
        %v2332 = vsel %vm614, %v2304, %v2076
        %v2333 = vsel %vm614, %v2305, %v2078
        %v2334 = vsel %vm643, %v2306, %v2024
        %v2335 = vsel %vm643, %v2307, %v2026
        %v2336 = vsel %vm643, %v2308, %v2028
        %v2337 = vsel %vm643, %v2309, %v2030
        %v2338 = vsel %vm643, %v2310, %v2032
        %v2339 = vsel %vm643, %v2311, %v2034
        %v2340 = vsel %vm643, %v2312, %v2036
        %v2341 = vsel %vm643, %v2313, %v2038
        %v2342 = vsel %vm643, %v2314, %v2040
        %v2343 = vsel %vm643, %v2315, %v2042
        %v2344 = vsel %vm643, %v2316, %v2044
        %v2345 = vsel %vm643, %v2317, %v2046
        %v2346 = vsel %vm643, %v2318, %v2048
        %v2347 = vsel %vm643, %v2319, %v2050
        %v2348 = vsel %vm643, %v2320, %v2052
        %v2349 = vsel %vm643, %v2321, %v2054
        %v2350 = vsel %vm643, %v2322, %v2056
        %v2351 = vsel %vm643, %v2323, %v2058
        %v2352 = vsel %vm643, %v2324, %v2060
        %v2353 = vsel %vm643, %v2325, %v2062
        %v2354 = vsel %vm643, %v2326, %v2064
        %v2355 = vsel %vm643, %v2327, %v2066
        %v2356 = vsel %vm643, %v2328, %v2068
        %v2357 = vsel %vm643, %v2329, %v2070
        %v2358 = vsel %vm643, %v2330, %v2072
        %v2359 = vsel %vm643, %v2331, %v2074
        %v2360 = vsel %vm643, %v2332, %v2076
        %v2361 = vsel %vm643, %v2333, %v2078
        %v2362 = vsel %vm672, %v2334, %v2111
        %v2363 = vsel %vm672, %v2335, %v2113
        %v2364 = vsel %vm672, %v2336, %v2115
        %v2365 = vsel %vm672, %v2337, %v2117
        %v2366 = vsel %vm672, %v2338, %v2119
        %v2367 = vsel %vm672, %v2339, %v2121
        %v2368 = vsel %vm672, %v2340, %v2123
        %v2369 = vsel %vm672, %v2341, %v2125
        %v2370 = vsel %vm672, %v2342, %v2127
        %v2371 = vsel %vm672, %v2343, %v2129
        %v2372 = vsel %vm672, %v2344, %v2131
        %v2373 = vsel %vm672, %v2345, %v2133
        %v2374 = vsel %vm672, %v2346, %v2135
        %v2375 = vsel %vm672, %v2347, %v2137
        %v2376 = vsel %vm672, %v2348, %v2139
        %v2377 = vsel %vm672, %v2349, %v2141
        %v2378 = vsel %vm672, %v2350, %v2143
        %v2379 = vsel %vm672, %v2351, %v2145
        %v2380 = vsel %vm672, %v2352, %v2147
        %v2381 = vsel %vm672, %v2353, %v2149
        %v2382 = vsel %vm672, %v2354, %v2151
        %v2383 = vsel %vm672, %v2355, %v2153
        %v2384 = vsel %vm672, %v2356, %v2155
        %v2385 = vsel %vm672, %v2357, %v2157
        %v2386 = vsel %vm672, %v2358, %v2159
        %v2387 = vsel %vm672, %v2359, %v2161
        %v2388 = vsel %vm672, %v2360, %v2163
        %v2389 = vsel %vm672, %v2361, %v2165
        %v2390 = vpack.c.bf16 %v2363, %v2362
        %v2391 = vpack.c.bf16 %v2365, %v2364
        %v2392 = vpack.c.bf16 %v2367, %v2366
        %v2393 = vpack.c.bf16 %v2369, %v2368
        %v2394 = vpack.c.bf16 %v2371, %v2370
        %v2395 = vpack.c.bf16 %v2373, %v2372
        %v2396 = vpack.c.bf16 %v2375, %v2374
        %v2397 = vpack.c.bf16 %v2377, %v2376
        %v2398 = vpack.c.bf16 %v2379, %v2378
        %v2399 = vpack.c.bf16 %v2381, %v2380
        %v2400 = vpack.c.bf16 %v2383, %v2382
        %v2401 = vpack.c.bf16 %v2385, %v2384
        %v2402 = vpack.c.bf16 %v2387, %v2386
        %v2403 = vpack.c.bf16 %v2389, %v2388
        %v2405 = vsel %vm726, %v2390, 0
        %v2408 = vsel %vm726, %v2391, 0
        %v2411 = vsel %vm726, %v2392, 0
        %v2414 = vsel %vm726, %v2393, 0
        %v2417 = vsel %vm726, %v2394, 0
        %v2420 = vsel %vm726, %v2395, 0
        %v2423 = vsel %vm726, %v2396, 0
        %v2426 = vsel %vm726, %v2397, 0
        %v2429 = vsel %vm726, %v2398, 0
        %v2432 = vsel %vm726, %v2399, 0
        %v2435 = vsel %vm726, %v2400, 0
        %v2438 = vsel %vm726, %v2401, 0
        %v2441 = vsel %vm726, %v2402, 0
        %v2444 = vsel %vm726, %v2403, 0
        %2446 = vmatprep.subr.bf16.mxu0 0
        %2447 = vmatpush1.bf16.msra.mxu0 %v774
        %2448 = vmatprep.subr.bf16.mxu0 0
        %2449 = vmatpush1.bf16.msra.mxu0 0
        %2450 = vmatprep.subr.bf16.mxu0 0
        %2451 = vmatpush1.bf16.msra.mxu0 0
        %2452 = vmatprep.subr.bf16.mxu0 0
        %2453 = vmatpush1.bf16.msra.mxu0 0
        %2454 = vmatprep.subr.bf16.mxu0 0
        %2455 = vmatpush1.bf16.msra.mxu0 0
        %2456 = vmatprep.subr.bf16.mxu0 0
        %2457 = vmatpush1.bf16.msra.mxu0 0
        %2458 = vmatprep.subr.bf16.mxu0 0
        %2459 = vmatpush1.bf16.msra.mxu0 0
        %2460 = vmatprep.subr.bf16.mxu0 0
        %2461 = vmatpush1.bf16.msra.mxu0 0
        %2462 = vmatprep.subr.bf16.mxu0 0
        %2463 = vmatpush1.bf16.msra.mxu0 0
        %2464 = vmatprep.subr.bf16.mxu0 0
        %2465 = vmatpush1.bf16.msra.mxu0 0
        %2466 = vmatprep.subr.bf16.mxu0 0
        %2467 = vmatpush1.bf16.msra.mxu0 0
        %2468 = vmatprep.subr.bf16.mxu0 0
        %2469 = vmatpush1.bf16.msra.mxu0 0
        %2470 = vmatprep.subr.bf16.mxu0 0
        %2471 = vmatpush1.bf16.msra.mxu0 0
        %2472 = vmatprep.subr.bf16.mxu0 0
        %2473 = vmatpush1.bf16.msra.mxu0 0
        %2474 = vmatprep.subr.bf16.mxu0 0
        %2475 = vmatpush1.bf16.msra.mxu0 0
        %2476 = vmatprep.subr.bf16.mxu0 0
        %2477 = vmatpush1.bf16.msra.mxu0 0
        %2478 = vmatprep.mubr.bf16.mxu0 0
        %2479 = vmatmul.mubr.bf16.gmra.mrb[0].mxu0 %v2405
        %v2480 = vpop.f32.mrb[0].mxu0
        %v2481 = vadd.f32 %v719, %v2480
        %v2482 = vpop.f32.mrb[0].mxu0
        %v2483 = vpop.f32.mrb[0].mxu0
        %v2484 = vadd.f32 %v719, %v2483
        %v2485 = vpop.f32.mrb[0].mxu0
        %2486 = vmatprep.mubr.bf16.mxu0 0
        %2487 = vmatmul.mubr.bf16.gmra.mrb[0].mxu0 %v2408
        %v2488 = vpop.f32.mrb[0].mxu0
        %v2489 = vadd.f32 %v719, %v2488
        %v2490 = vpop.f32.mrb[0].mxu0
        %v2491 = vpop.f32.mrb[0].mxu0
        %v2492 = vadd.f32 %v719, %v2491
        %v2493 = vpop.f32.mrb[0].mxu0
        %2494 = vmatprep.mubr.bf16.mxu0 0
        %2495 = vmatmul.mubr.bf16.gmra.mrb[0].mxu0 %v2411
        %v2496 = vpop.f32.mrb[0].mxu0
        %v2497 = vadd.f32 %v719, %v2496
        %v2498 = vpop.f32.mrb[0].mxu0
        %v2499 = vpop.f32.mrb[0].mxu0
        %v2500 = vadd.f32 %v719, %v2499
        %v2501 = vpop.f32.mrb[0].mxu0
        %2502 = vmatprep.mubr.bf16.mxu0 0
        %2503 = vmatmul.mubr.bf16.gmra.mrb[0].mxu0 %v2414
        %v2504 = vpop.f32.mrb[0].mxu0
        %v2505 = vadd.f32 %v719, %v2504
        %v2506 = vpop.f32.mrb[0].mxu0
        %v2507 = vpop.f32.mrb[0].mxu0
        %v2508 = vadd.f32 %v719, %v2507
        %v2509 = vpop.f32.mrb[0].mxu0
        %2510 = vmatprep.mubr.bf16.mxu0 0
        %2511 = vmatmul.mubr.bf16.gmra.mrb[0].mxu0 %v2417
        %v2512 = vpop.f32.mrb[0].mxu0
        %v2513 = vadd.f32 %v719, %v2512
        %v2514 = vpop.f32.mrb[0].mxu0
        %v2515 = vpop.f32.mrb[0].mxu0
        %v2516 = vadd.f32 %v719, %v2515
        %v2517 = vpop.f32.mrb[0].mxu0
        %2518 = vmatprep.mubr.bf16.mxu0 0
        %2519 = vmatmul.mubr.bf16.gmra.mrb[0].mxu0 %v2420
        %v2520 = vpop.f32.mrb[0].mxu0
        %v2521 = vadd.f32 %v719, %v2520
        %v2522 = vpop.f32.mrb[0].mxu0
        %v2523 = vpop.f32.mrb[0].mxu0
        %v2524 = vadd.f32 %v719, %v2523
        %v2525 = vpop.f32.mrb[0].mxu0
        %2526 = vmatprep.mubr.bf16.mxu0 0
        %2527 = vmatmul.mubr.bf16.gmra.mrb[0].mxu0 %v2423
        %v2528 = vpop.f32.mrb[0].mxu0
        %v2529 = vadd.f32 %v719, %v2528
        %v2530 = vpop.f32.mrb[0].mxu0
        %v2531 = vpop.f32.mrb[0].mxu0
        %v2532 = vadd.f32 %v719, %v2531
        %v2533 = vpop.f32.mrb[0].mxu0
        %2534 = vmatprep.mubr.bf16.mxu0 0
        %2535 = vmatmul.mubr.bf16.gmra.mrb[0].mxu0 %v2426
        %v2536 = vpop.f32.mrb[0].mxu0
        %v2537 = vadd.f32 %v719, %v2536
        %v2538 = vpop.f32.mrb[0].mxu0
        %v2539 = vpop.f32.mrb[0].mxu0
        %v2540 = vadd.f32 %v719, %v2539
        %v2541 = vpop.f32.mrb[0].mxu0
        %2542 = vmatprep.mubr.bf16.mxu0 0
        %2543 = vmatmul.mubr.bf16.gmra.mrb[0].mxu0 %v2429
        %v2544 = vpop.f32.mrb[0].mxu0
        %v2545 = vadd.f32 %v719, %v2544
        %v2546 = vpop.f32.mrb[0].mxu0
        %v2547 = vpop.f32.mrb[0].mxu0
        %v2548 = vadd.f32 %v719, %v2547
        %v2549 = vpop.f32.mrb[0].mxu0
        %2550 = vmatprep.mubr.bf16.mxu0 0
        %2551 = vmatmul.mubr.bf16.gmra.mrb[0].mxu0 %v2432
        %v2552 = vpop.f32.mrb[0].mxu0
        %v2553 = vadd.f32 %v719, %v2552
        %v2554 = vpop.f32.mrb[0].mxu0
        %v2555 = vpop.f32.mrb[0].mxu0
        %v2556 = vadd.f32 %v719, %v2555
        %v2557 = vpop.f32.mrb[0].mxu0
        %2558 = vmatprep.mubr.bf16.mxu0 0
        %2559 = vmatmul.mubr.bf16.gmra.mrb[0].mxu0 %v2435
        %v2560 = vpop.f32.mrb[0].mxu0
        %v2561 = vadd.f32 %v719, %v2560
        %v2562 = vpop.f32.mrb[0].mxu0
        %v2563 = vpop.f32.mrb[0].mxu0
        %v2564 = vadd.f32 %v719, %v2563
        %v2565 = vpop.f32.mrb[0].mxu0
        %2566 = vmatprep.mubr.bf16.mxu0 0
        %2567 = vmatmul.mubr.bf16.gmra.mrb[0].mxu0 %v2438
        %v2568 = vpop.f32.mrb[0].mxu0
        %v2569 = vadd.f32 %v719, %v2568
        %v2570 = vpop.f32.mrb[0].mxu0
        %v2571 = vpop.f32.mrb[0].mxu0
        %v2572 = vadd.f32 %v719, %v2571
        %v2573 = vpop.f32.mrb[0].mxu0
        %2574 = vmatprep.mubr.bf16.mxu0 0
        %2575 = vmatmul.mubr.bf16.gmra.mrb[0].mxu0 %v2441
        %v2576 = vpop.f32.mrb[0].mxu0
        %v2577 = vadd.f32 %v719, %v2576
        %v2578 = vpop.f32.mrb[0].mxu0
        %v2579 = vpop.f32.mrb[0].mxu0
        %v2580 = vadd.f32 %v719, %v2579
        %v2581 = vpop.f32.mrb[0].mxu0
        %2582 = vmatprep.mubr.bf16.mxu0 0
        %2583 = vmatmul.mubr.bf16.gmra.mrb[0].mxu0 %v2444
        %v2584 = vpop.f32.mrb[0].mxu0
        %v2585 = vadd.f32 %v719, %v2584
        %v2586 = vpop.f32.mrb[0].mxu0
        %v2587 = vpop.f32.mrb[0].mxu0
        %v2588 = vadd.f32 %v719, %v2587
        %v2589 = vpop.f32.mrb[0].mxu0
        %2590 = vdwg.mxu0
        %v2591 = vmax.f32 %v2481, 0.0
        %v2592 = vmax.f32 %v2484, 0.0
        %v2593 = vmax.f32 %v2489, 0.0
        %v2594 = vmax.f32 %v2492, 0.0
        %v2595 = vmax.f32 %v2497, 0.0
        %v2596 = vmax.f32 %v2500, 0.0
        %v2597 = vmax.f32 %v2505, 0.0
        %v2598 = vmax.f32 %v2508, 0.0
        %v2599 = vmax.f32 %v2513, 0.0
        %v2600 = vmax.f32 %v2516, 0.0
        %v2601 = vmax.f32 %v2521, 0.0
        %v2602 = vmax.f32 %v2524, 0.0
        %v2603 = vmax.f32 %v2529, 0.0
        %v2604 = vmax.f32 %v2532, 0.0
        %v2605 = vmax.f32 %v2537, 0.0
        %v2606 = vmax.f32 %v2540, 0.0
        %v2607 = vmax.f32 %v2545, 0.0
        %v2608 = vmax.f32 %v2548, 0.0
        %v2609 = vmax.f32 %v2553, 0.0
        %v2610 = vmax.f32 %v2556, 0.0
        %v2611 = vmax.f32 %v2561, 0.0
        %v2612 = vmax.f32 %v2564, 0.0
        %v2613 = vmax.f32 %v2569, 0.0
        %v2614 = vmax.f32 %v2572, 0.0
        %v2615 = vmax.f32 %v2577, 0.0
        %v2616 = vmax.f32 %v2580, 0.0
        %v2617 = vmax.f32 %v2585, 0.0
        %v2618 = vmax.f32 %v2588, 0.0
        %2619 = vrot.lane.b32.xlu0 %v266, 125
        %v2620 = vpop.permute.xlu0 %2619
        %2621 = vrot.lane.b32.xlu0 %v267, 125
        %v2622 = vpop.permute.xlu0 %2621
        %2623 = vrot.lane.b32.xlu0 %v268, 125
        %v2624 = vpop.permute.xlu0 %2623
        %2625 = vrot.lane.b32.xlu0 %v269, 125
        %v2626 = vpop.permute.xlu0 %2625
        %2627 = vrot.lane.b32.xlu0 %v270, 125
        %v2628 = vpop.permute.xlu0 %2627
        %2629 = vrot.lane.b32.xlu0 %v271, 125
        %v2630 = vpop.permute.xlu0 %2629
        %2631 = vrot.lane.b32.xlu0 %v272, 125
        %v2632 = vpop.permute.xlu0 %2631
        %2633 = vrot.lane.b32.xlu0 %v273, 125
        %v2634 = vpop.permute.xlu0 %2633
        %2635 = vrot.lane.b32.xlu0 %v274, 125
        %v2636 = vpop.permute.xlu0 %2635
        %2637 = vrot.lane.b32.xlu0 %v275, 125
        %v2638 = vpop.permute.xlu0 %2637
        %2639 = vrot.lane.b32.xlu0 %v276, 125
        %v2640 = vpop.permute.xlu0 %2639
        %2641 = vrot.lane.b32.xlu0 %v277, 125
        %v2642 = vpop.permute.xlu0 %2641
        %2643 = vrot.lane.b32.xlu0 %v278, 125
        %v2644 = vpop.permute.xlu0 %2643
        %2645 = vrot.lane.b32.xlu0 %v279, 125
        %v2646 = vpop.permute.xlu0 %2645
        %2647 = vrot.lane.b32.xlu0 %v280, 125
        %v2648 = vpop.permute.xlu0 %2647
        %2649 = vrot.lane.b32.xlu0 %v281, 125
        %v2650 = vpop.permute.xlu0 %2649
        %2651 = vrot.lane.b32.xlu0 %v282, 125
        %v2652 = vpop.permute.xlu0 %2651
        %2653 = vrot.lane.b32.xlu0 %v283, 125
        %v2654 = vpop.permute.xlu0 %2653
        %2655 = vrot.lane.b32.xlu0 %v284, 125
        %v2656 = vpop.permute.xlu0 %2655
        %2657 = vrot.lane.b32.xlu0 %v285, 125
        %v2658 = vpop.permute.xlu0 %2657
        %2659 = vrot.lane.b32.xlu0 %v286, 125
        %v2660 = vpop.permute.xlu0 %2659
        %2661 = vrot.lane.b32.xlu0 %v287, 125
        %v2662 = vpop.permute.xlu0 %2661
        %2663 = vrot.lane.b32.xlu0 %v288, 125
        %v2664 = vpop.permute.xlu0 %2663
        %2665 = vrot.lane.b32.xlu0 %v289, 125
        %v2666 = vpop.permute.xlu0 %2665
        %2667 = vrot.lane.b32.xlu0 %v290, 125
        %v2668 = vpop.permute.xlu0 %2667
        %2669 = vrot.lane.b32.xlu0 %v291, 125
        %v2670 = vpop.permute.xlu0 %2669
        %2671 = vrot.lane.b32.xlu0 %v292, 125
        %v2672 = vpop.permute.xlu0 %2671
        %2673 = vrot.lane.b32.xlu0 %v293, 125
        %v2674 = vpop.permute.xlu0 %2673
        %2703 = vrot.lane.b32.xlu0 %v1714, 1
        %v2704 = vpop.permute.xlu0 %2703
        %2705 = vrot.lane.b32.xlu0 %v1716, 1
        %v2706 = vpop.permute.xlu0 %2705
        %2707 = vrot.lane.b32.xlu0 %v1718, 1
        %v2708 = vpop.permute.xlu0 %2707
        %2709 = vrot.lane.b32.xlu0 %v1720, 1
        %v2710 = vpop.permute.xlu0 %2709
        %2711 = vrot.lane.b32.xlu0 %v1722, 1
        %v2712 = vpop.permute.xlu0 %2711
        %2713 = vrot.lane.b32.xlu0 %v1724, 1
        %v2714 = vpop.permute.xlu0 %2713
        %2715 = vrot.lane.b32.xlu0 %v1726, 1
        %v2716 = vpop.permute.xlu0 %2715
        %2717 = vrot.lane.b32.xlu0 %v1728, 1
        %v2718 = vpop.permute.xlu0 %2717
        %2719 = vrot.lane.b32.xlu0 %v1730, 1
        %v2720 = vpop.permute.xlu0 %2719
        %2721 = vrot.lane.b32.xlu0 %v1732, 1
        %v2722 = vpop.permute.xlu0 %2721
        %2723 = vrot.lane.b32.xlu0 %v1734, 1
        %v2724 = vpop.permute.xlu0 %2723
        %2725 = vrot.lane.b32.xlu0 %v1736, 1
        %v2726 = vpop.permute.xlu0 %2725
        %2727 = vrot.lane.b32.xlu0 %v1738, 1
        %v2728 = vpop.permute.xlu0 %2727
        %2729 = vrot.lane.b32.xlu0 %v1740, 1
        %v2730 = vpop.permute.xlu0 %2729
        %2731 = vrot.lane.b32.xlu0 %v1742, 1
        %v2732 = vpop.permute.xlu0 %2731
        %2733 = vrot.lane.b32.xlu0 %v1744, 1
        %v2734 = vpop.permute.xlu0 %2733
        %2735 = vrot.lane.b32.xlu0 %v1746, 1
        %v2736 = vpop.permute.xlu0 %2735
        %2737 = vrot.lane.b32.xlu0 %v1748, 1
        %v2738 = vpop.permute.xlu0 %2737
        %2739 = vrot.lane.b32.xlu0 %v1750, 1
        %v2740 = vpop.permute.xlu0 %2739
        %2741 = vrot.lane.b32.xlu0 %v1752, 1
        %v2742 = vpop.permute.xlu0 %2741
        %2743 = vrot.lane.b32.xlu0 %v1754, 1
        %v2744 = vpop.permute.xlu0 %2743
        %2745 = vrot.lane.b32.xlu0 %v1756, 1
        %v2746 = vpop.permute.xlu0 %2745
        %2747 = vrot.lane.b32.xlu0 %v1758, 1
        %v2748 = vpop.permute.xlu0 %2747
        %2749 = vrot.lane.b32.xlu0 %v1760, 1
        %v2750 = vpop.permute.xlu0 %2749
        %2751 = vrot.lane.b32.xlu0 %v1762, 1
        %v2752 = vpop.permute.xlu0 %2751
        %2753 = vrot.lane.b32.xlu0 %v1764, 1
        %v2754 = vpop.permute.xlu0 %2753
        %2755 = vrot.lane.b32.xlu0 %v1766, 1
        %v2756 = vpop.permute.xlu0 %2755
        %2757 = vrot.lane.b32.xlu0 %v1768, 1
        %v2758 = vpop.permute.xlu0 %2757
        %2787 = vrot.lane.b32.xlu0 %v1716, 4
        %v2788 = vpop.permute.xlu0 %2787
        %2789 = vrot.lane.b32.xlu0 %v1718, 4
        %v2790 = vpop.permute.xlu0 %2789
        %2791 = vrot.lane.b32.xlu0 %v1720, 4
        %v2792 = vpop.permute.xlu0 %2791
        %2793 = vrot.lane.b32.xlu0 %v1722, 4
        %v2794 = vpop.permute.xlu0 %2793
        %2795 = vrot.lane.b32.xlu0 %v1724, 4
        %v2796 = vpop.permute.xlu0 %2795
        %2797 = vrot.lane.b32.xlu0 %v1726, 4
        %v2798 = vpop.permute.xlu0 %2797
        %2799 = vrot.lane.b32.xlu0 %v1728, 4
        %v2800 = vpop.permute.xlu0 %2799
        %2801 = vrot.lane.b32.xlu0 %v1730, 4
        %v2802 = vpop.permute.xlu0 %2801
        %2803 = vrot.lane.b32.xlu0 %v1732, 4
        %v2804 = vpop.permute.xlu0 %2803
        %2805 = vrot.lane.b32.xlu0 %v1734, 4
        %v2806 = vpop.permute.xlu0 %2805
        %2807 = vrot.lane.b32.xlu0 %v1736, 4
        %v2808 = vpop.permute.xlu0 %2807
        %2809 = vrot.lane.b32.xlu0 %v1738, 4
        %v2810 = vpop.permute.xlu0 %2809
        %2811 = vrot.lane.b32.xlu0 %v1740, 4
        %v2812 = vpop.permute.xlu0 %2811
        %2813 = vrot.lane.b32.xlu0 %v1742, 4
        %v2814 = vpop.permute.xlu0 %2813
        %2815 = vrot.lane.b32.xlu0 %v1744, 4
        %v2816 = vpop.permute.xlu0 %2815
        %2817 = vrot.lane.b32.xlu0 %v1746, 4
        %v2818 = vpop.permute.xlu0 %2817
        %2819 = vrot.lane.b32.xlu0 %v1748, 4
        %v2820 = vpop.permute.xlu0 %2819
        %2821 = vrot.lane.b32.xlu0 %v1750, 4
        %v2822 = vpop.permute.xlu0 %2821
        %2823 = vrot.lane.b32.xlu0 %v1752, 4
        %v2824 = vpop.permute.xlu0 %2823
        %2825 = vrot.lane.b32.xlu0 %v1754, 4
        %v2826 = vpop.permute.xlu0 %2825
        %2827 = vrot.lane.b32.xlu0 %v1756, 4
        %v2828 = vpop.permute.xlu0 %2827
        %2829 = vrot.lane.b32.xlu0 %v1758, 4
        %v2830 = vpop.permute.xlu0 %2829
        %2831 = vrot.lane.b32.xlu0 %v1760, 4
        %v2832 = vpop.permute.xlu0 %2831
        %2833 = vrot.lane.b32.xlu0 %v1762, 4
        %v2834 = vpop.permute.xlu0 %2833
        %2835 = vrot.lane.b32.xlu0 %v1764, 4
        %v2836 = vpop.permute.xlu0 %2835
        %2837 = vrot.lane.b32.xlu0 %v1766, 4
        %v2838 = vpop.permute.xlu0 %2837
        %2839 = vrot.lane.b32.xlu0 %v1768, 4
        %v2840 = vpop.permute.xlu0 %2839
        %2841 = vrot.lane.b32.xlu0 %v1938, 4
        %v2842 = vpop.permute.xlu0 %2841
        %2871 = vrot.lane.b32.xlu0 %v295, 3
        %v2872 = vpop.permute.xlu0 %2871
        %2874 = vrot.lane.b32.xlu0 %v1718, 7
        %v2875 = vpop.permute.xlu0 %2874
        %2876 = vrot.lane.b32.xlu0 %v1720, 7
        %v2877 = vpop.permute.xlu0 %2876
        %2878 = vrot.lane.b32.xlu0 %v1722, 7
        %v2879 = vpop.permute.xlu0 %2878
        %2880 = vrot.lane.b32.xlu0 %v1724, 7
        %v2881 = vpop.permute.xlu0 %2880
        %2882 = vrot.lane.b32.xlu0 %v1726, 7
        %v2883 = vpop.permute.xlu0 %2882
        %2884 = vrot.lane.b32.xlu0 %v1728, 7
        %v2885 = vpop.permute.xlu0 %2884
        %2886 = vrot.lane.b32.xlu0 %v1730, 7
        %v2887 = vpop.permute.xlu0 %2886
        %2888 = vrot.lane.b32.xlu0 %v1732, 7
        %v2889 = vpop.permute.xlu0 %2888
        %2890 = vrot.lane.b32.xlu0 %v1734, 7
        %v2891 = vpop.permute.xlu0 %2890
        %2892 = vrot.lane.b32.xlu0 %v1736, 7
        %v2893 = vpop.permute.xlu0 %2892
        %2894 = vrot.lane.b32.xlu0 %v1738, 7
        %v2895 = vpop.permute.xlu0 %2894
        %2896 = vrot.lane.b32.xlu0 %v1740, 7
        %v2897 = vpop.permute.xlu0 %2896
        %2898 = vrot.lane.b32.xlu0 %v1742, 7
        %v2899 = vpop.permute.xlu0 %2898
        %2900 = vrot.lane.b32.xlu0 %v1744, 7
        %v2901 = vpop.permute.xlu0 %2900
        %2902 = vrot.lane.b32.xlu0 %v1746, 7
        %v2903 = vpop.permute.xlu0 %2902
        %2904 = vrot.lane.b32.xlu0 %v1748, 7
        %v2905 = vpop.permute.xlu0 %2904
        %2906 = vrot.lane.b32.xlu0 %v1750, 7
        %v2907 = vpop.permute.xlu0 %2906
        %2908 = vrot.lane.b32.xlu0 %v1752, 7
        %v2909 = vpop.permute.xlu0 %2908
        %2910 = vrot.lane.b32.xlu0 %v1754, 7
        %v2911 = vpop.permute.xlu0 %2910
        %2912 = vrot.lane.b32.xlu0 %v1756, 7
        %v2913 = vpop.permute.xlu0 %2912
        %2914 = vrot.lane.b32.xlu0 %v1758, 7
        %v2915 = vpop.permute.xlu0 %2914
        %2916 = vrot.lane.b32.xlu0 %v1760, 7
        %v2917 = vpop.permute.xlu0 %2916
        %2918 = vrot.lane.b32.xlu0 %v1762, 7
        %v2919 = vpop.permute.xlu0 %2918
        %2920 = vrot.lane.b32.xlu0 %v1764, 7
        %v2921 = vpop.permute.xlu0 %2920
        %2922 = vrot.lane.b32.xlu0 %v1766, 7
        %v2923 = vpop.permute.xlu0 %2922
        %2924 = vrot.lane.b32.xlu0 %v1768, 7
        %v2925 = vpop.permute.xlu0 %2924
        %2926 = vrot.lane.b32.xlu0 %v1938, 7
        %v2927 = vpop.permute.xlu0 %2926
        %2928 = vrot.lane.b32.xlu0 %v2109, 7
        %v2929 = vpop.permute.xlu0 %2928
        %v2958 = vsel %vm497, %v2620, %v2704
        %v2959 = vsel %vm497, %v2622, %v2706
        %v2960 = vsel %vm497, %v2624, %v2708
        %v2961 = vsel %vm497, %v2626, %v2710
        %v2962 = vsel %vm497, %v2628, %v2712
        %v2963 = vsel %vm497, %v2630, %v2714
        %v2964 = vsel %vm497, %v2632, %v2716
        %v2965 = vsel %vm497, %v2634, %v2718
        %v2966 = vsel %vm497, %v2636, %v2720
        %v2967 = vsel %vm497, %v2638, %v2722
        %v2968 = vsel %vm497, %v2640, %v2724
        %v2969 = vsel %vm497, %v2642, %v2726
        %v2970 = vsel %vm497, %v2644, %v2728
        %v2971 = vsel %vm497, %v2646, %v2730
        %v2972 = vsel %vm497, %v2648, %v2732
        %v2973 = vsel %vm497, %v2650, %v2734
        %v2974 = vsel %vm497, %v2652, %v2736
        %v2975 = vsel %vm497, %v2654, %v2738
        %v2976 = vsel %vm497, %v2656, %v2740
        %v2977 = vsel %vm497, %v2658, %v2742
        %v2978 = vsel %vm497, %v2660, %v2744
        %v2979 = vsel %vm497, %v2662, %v2746
        %v2980 = vsel %vm497, %v2664, %v2748
        %v2981 = vsel %vm497, %v2666, %v2750
        %v2982 = vsel %vm497, %v2668, %v2752
        %v2983 = vsel %vm497, %v2670, %v2754
        %v2984 = vsel %vm497, %v2672, %v2756
        %v2985 = vsel %vm497, %v2674, %v2758
        %v2986 = vsel %vm498, %v2958, %v2704
        %v2987 = vsel %vm498, %v2959, %v2706
        %v2988 = vsel %vm498, %v2960, %v2708
        %v2989 = vsel %vm498, %v2961, %v2710
        %v2990 = vsel %vm498, %v2962, %v2712
        %v2991 = vsel %vm498, %v2963, %v2714
        %v2992 = vsel %vm498, %v2964, %v2716
        %v2993 = vsel %vm498, %v2965, %v2718
        %v2994 = vsel %vm498, %v2966, %v2720
        %v2995 = vsel %vm498, %v2967, %v2722
        %v2996 = vsel %vm498, %v2968, %v2724
        %v2997 = vsel %vm498, %v2969, %v2726
        %v2998 = vsel %vm498, %v2970, %v2728
        %v2999 = vsel %vm498, %v2971, %v2730
        %v3000 = vsel %vm498, %v2972, %v2732
        %v3001 = vsel %vm498, %v2973, %v2734
        %v3002 = vsel %vm498, %v2974, %v2736
        %v3003 = vsel %vm498, %v2975, %v2738
        %v3004 = vsel %vm498, %v2976, %v2740
        %v3005 = vsel %vm498, %v2977, %v2742
        %v3006 = vsel %vm498, %v2978, %v2744
        %v3007 = vsel %vm498, %v2979, %v2746
        %v3008 = vsel %vm498, %v2980, %v2748
        %v3009 = vsel %vm498, %v2981, %v2750
        %v3010 = vsel %vm498, %v2982, %v2752
        %v3011 = vsel %vm498, %v2983, %v2754
        %v3012 = vsel %vm498, %v2984, %v2756
        %v3013 = vsel %vm498, %v2985, %v2758
        %v3014 = vsel %vm527, %v2986, %v267
        %v3015 = vsel %vm527, %v2987, %v268
        %v3016 = vsel %vm527, %v2988, %v269
        %v3017 = vsel %vm527, %v2989, %v270
        %v3018 = vsel %vm527, %v2990, %v271
        %v3019 = vsel %vm527, %v2991, %v272
        %v3020 = vsel %vm527, %v2992, %v273
        %v3021 = vsel %vm527, %v2993, %v274
        %v3022 = vsel %vm527, %v2994, %v275
        %v3023 = vsel %vm527, %v2995, %v276
        %v3024 = vsel %vm527, %v2996, %v277
        %v3025 = vsel %vm527, %v2997, %v278
        %v3026 = vsel %vm527, %v2998, %v279
        %v3027 = vsel %vm527, %v2999, %v280
        %v3028 = vsel %vm527, %v3000, %v281
        %v3029 = vsel %vm527, %v3001, %v282
        %v3030 = vsel %vm527, %v3002, %v283
        %v3031 = vsel %vm527, %v3003, %v284
        %v3032 = vsel %vm527, %v3004, %v285
        %v3033 = vsel %vm527, %v3005, %v286
        %v3034 = vsel %vm527, %v3006, %v287
        %v3035 = vsel %vm527, %v3007, %v288
        %v3036 = vsel %vm527, %v3008, %v289
        %v3037 = vsel %vm527, %v3009, %v290
        %v3038 = vsel %vm527, %v3010, %v291
        %v3039 = vsel %vm527, %v3011, %v292
        %v3040 = vsel %vm527, %v3012, %v293
        %v3041 = vsel %vm527, %v3013, %v294
        %v3042 = vsel %vm556, %v3014, %v2788
        %v3043 = vsel %vm556, %v3015, %v2790
        %v3044 = vsel %vm556, %v3016, %v2792
        %v3045 = vsel %vm556, %v3017, %v2794
        %v3046 = vsel %vm556, %v3018, %v2796
        %v3047 = vsel %vm556, %v3019, %v2798
        %v3048 = vsel %vm556, %v3020, %v2800
        %v3049 = vsel %vm556, %v3021, %v2802
        %v3050 = vsel %vm556, %v3022, %v2804
        %v3051 = vsel %vm556, %v3023, %v2806
        %v3052 = vsel %vm556, %v3024, %v2808
        %v3053 = vsel %vm556, %v3025, %v2810
        %v3054 = vsel %vm556, %v3026, %v2812
        %v3055 = vsel %vm556, %v3027, %v2814
        %v3056 = vsel %vm556, %v3028, %v2816
        %v3057 = vsel %vm556, %v3029, %v2818
        %v3058 = vsel %vm556, %v3030, %v2820
        %v3059 = vsel %vm556, %v3031, %v2822
        %v3060 = vsel %vm556, %v3032, %v2824
        %v3061 = vsel %vm556, %v3033, %v2826
        %v3062 = vsel %vm556, %v3034, %v2828
        %v3063 = vsel %vm556, %v3035, %v2830
        %v3064 = vsel %vm556, %v3036, %v2832
        %v3065 = vsel %vm556, %v3037, %v2834
        %v3066 = vsel %vm556, %v3038, %v2836
        %v3067 = vsel %vm556, %v3039, %v2838
        %v3068 = vsel %vm556, %v3040, %v2840
        %v3069 = vsel %vm556, %v3041, %v2842
        %v3070 = vsel %vm585, %v3042, %v2788
        %v3071 = vsel %vm585, %v3043, %v2790
        %v3072 = vsel %vm585, %v3044, %v2792
        %v3073 = vsel %vm585, %v3045, %v2794
        %v3074 = vsel %vm585, %v3046, %v2796
        %v3075 = vsel %vm585, %v3047, %v2798
        %v3076 = vsel %vm585, %v3048, %v2800
        %v3077 = vsel %vm585, %v3049, %v2802
        %v3078 = vsel %vm585, %v3050, %v2804
        %v3079 = vsel %vm585, %v3051, %v2806
        %v3080 = vsel %vm585, %v3052, %v2808
        %v3081 = vsel %vm585, %v3053, %v2810
        %v3082 = vsel %vm585, %v3054, %v2812
        %v3083 = vsel %vm585, %v3055, %v2814
        %v3084 = vsel %vm585, %v3056, %v2816
        %v3085 = vsel %vm585, %v3057, %v2818
        %v3086 = vsel %vm585, %v3058, %v2820
        %v3087 = vsel %vm585, %v3059, %v2822
        %v3088 = vsel %vm585, %v3060, %v2824
        %v3089 = vsel %vm585, %v3061, %v2826
        %v3090 = vsel %vm585, %v3062, %v2828
        %v3091 = vsel %vm585, %v3063, %v2830
        %v3092 = vsel %vm585, %v3064, %v2832
        %v3093 = vsel %vm585, %v3065, %v2834
        %v3094 = vsel %vm585, %v3066, %v2836
        %v3095 = vsel %vm585, %v3067, %v2838
        %v3096 = vsel %vm585, %v3068, %v2840
        %v3097 = vsel %vm585, %v3069, %v2842
        %v3098 = vsel %vm614, %v3070, %v331
        %v3099 = vsel %vm614, %v3071, %v333
        %v3100 = vsel %vm614, %v3072, %v335
        %v3101 = vsel %vm614, %v3073, %v337
        %v3102 = vsel %vm614, %v3074, %v339
        %v3103 = vsel %vm614, %v3075, %v341
        %v3104 = vsel %vm614, %v3076, %v343
        %v3105 = vsel %vm614, %v3077, %v345
        %v3106 = vsel %vm614, %v3078, %v347
        %v3107 = vsel %vm614, %v3079, %v349
        %v3108 = vsel %vm614, %v3080, %v351
        %v3109 = vsel %vm614, %v3081, %v353
        %v3110 = vsel %vm614, %v3082, %v355
        %v3111 = vsel %vm614, %v3083, %v357
        %v3112 = vsel %vm614, %v3084, %v359
        %v3113 = vsel %vm614, %v3085, %v361
        %v3114 = vsel %vm614, %v3086, %v363
        %v3115 = vsel %vm614, %v3087, %v365
        %v3116 = vsel %vm614, %v3088, %v367
        %v3117 = vsel %vm614, %v3089, %v369
        %v3118 = vsel %vm614, %v3090, %v371
        %v3119 = vsel %vm614, %v3091, %v373
        %v3120 = vsel %vm614, %v3092, %v375
        %v3121 = vsel %vm614, %v3093, %v377
        %v3122 = vsel %vm614, %v3094, %v379
        %v3123 = vsel %vm614, %v3095, %v381
        %v3124 = vsel %vm614, %v3096, %v383
        %v3125 = vsel %vm614, %v3097, %v2872
        %v3126 = vsel %vm643, %v3098, %v2875
        %v3127 = vsel %vm643, %v3099, %v2877
        %v3128 = vsel %vm643, %v3100, %v2879
        %v3129 = vsel %vm643, %v3101, %v2881
        %v3130 = vsel %vm643, %v3102, %v2883
        %v3131 = vsel %vm643, %v3103, %v2885
        %v3132 = vsel %vm643, %v3104, %v2887
        %v3133 = vsel %vm643, %v3105, %v2889
        %v3134 = vsel %vm643, %v3106, %v2891
        %v3135 = vsel %vm643, %v3107, %v2893
        %v3136 = vsel %vm643, %v3108, %v2895
        %v3137 = vsel %vm643, %v3109, %v2897
        %v3138 = vsel %vm643, %v3110, %v2899
        %v3139 = vsel %vm643, %v3111, %v2901
        %v3140 = vsel %vm643, %v3112, %v2903
        %v3141 = vsel %vm643, %v3113, %v2905
        %v3142 = vsel %vm643, %v3114, %v2907
        %v3143 = vsel %vm643, %v3115, %v2909
        %v3144 = vsel %vm643, %v3116, %v2911
        %v3145 = vsel %vm643, %v3117, %v2913
        %v3146 = vsel %vm643, %v3118, %v2915
        %v3147 = vsel %vm643, %v3119, %v2917
        %v3148 = vsel %vm643, %v3120, %v2919
        %v3149 = vsel %vm643, %v3121, %v2921
        %v3150 = vsel %vm643, %v3122, %v2923
        %v3151 = vsel %vm643, %v3123, %v2925
        %v3152 = vsel %vm643, %v3124, %v2927
        %v3153 = vsel %vm643, %v3125, %v2929
        %v3154 = vsel %vm672, %v3126, %v2875
        %v3155 = vsel %vm672, %v3127, %v2877
        %v3156 = vsel %vm672, %v3128, %v2879
        %v3157 = vsel %vm672, %v3129, %v2881
        %v3158 = vsel %vm672, %v3130, %v2883
        %v3159 = vsel %vm672, %v3131, %v2885
        %v3160 = vsel %vm672, %v3132, %v2887
        %v3161 = vsel %vm672, %v3133, %v2889
        %v3162 = vsel %vm672, %v3134, %v2891
        %v3163 = vsel %vm672, %v3135, %v2893
        %v3164 = vsel %vm672, %v3136, %v2895
        %v3165 = vsel %vm672, %v3137, %v2897
        %v3166 = vsel %vm672, %v3138, %v2899
        %v3167 = vsel %vm672, %v3139, %v2901
        %v3168 = vsel %vm672, %v3140, %v2903
        %v3169 = vsel %vm672, %v3141, %v2905
        %v3170 = vsel %vm672, %v3142, %v2907
        %v3171 = vsel %vm672, %v3143, %v2909
        %v3172 = vsel %vm672, %v3144, %v2911
        %v3173 = vsel %vm672, %v3145, %v2913
        %v3174 = vsel %vm672, %v3146, %v2915
        %v3175 = vsel %vm672, %v3147, %v2917
        %v3176 = vsel %vm672, %v3148, %v2919
        %v3177 = vsel %vm672, %v3149, %v2921
        %v3178 = vsel %vm672, %v3150, %v2923
        %v3179 = vsel %vm672, %v3151, %v2925
        %v3180 = vsel %vm672, %v3152, %v2927
        %v3181 = vsel %vm672, %v3153, %v2929
        %v3182 = vpack.c.bf16 %v3155, %v3154
        %v3183 = vpack.c.bf16 %v3157, %v3156
        %v3184 = vpack.c.bf16 %v3159, %v3158
        %v3185 = vpack.c.bf16 %v3161, %v3160
        %v3186 = vpack.c.bf16 %v3163, %v3162
        %v3187 = vpack.c.bf16 %v3165, %v3164
        %v3188 = vpack.c.bf16 %v3167, %v3166
        %v3189 = vpack.c.bf16 %v3169, %v3168
        %v3190 = vpack.c.bf16 %v3171, %v3170
        %v3191 = vpack.c.bf16 %v3173, %v3172
        %v3192 = vpack.c.bf16 %v3175, %v3174
        %v3193 = vpack.c.bf16 %v3177, %v3176
        %v3194 = vpack.c.bf16 %v3179, %v3178
        %v3195 = vpack.c.bf16 %v3181, %v3180
        %v3197 = vsel %vm726, %v3182, 0
        %v3200 = vsel %vm726, %v3183, 0
        %v3203 = vsel %vm726, %v3184, 0
        %v3206 = vsel %vm726, %v3185, 0
        %v3209 = vsel %vm726, %v3186, 0
        %v3212 = vsel %vm726, %v3187, 0
        %v3215 = vsel %vm726, %v3188, 0
        %v3218 = vsel %vm726, %v3189, 0
        %v3221 = vsel %vm726, %v3190, 0
        %v3224 = vsel %vm726, %v3191, 0
        %v3227 = vsel %vm726, %v3192, 0
        %v3230 = vsel %vm726, %v3193, 0
        %v3233 = vsel %vm726, %v3194, 0
        %v3236 = vsel %vm726, %v3195, 0
        %3238 = vmatprep.subr.bf16.mxu0 0
        %3239 = vmatpush1.bf16.msra.mxu0 %v774
        %3240 = vmatprep.subr.bf16.mxu0 0
        %3241 = vmatpush1.bf16.msra.mxu0 0
        %3242 = vmatprep.subr.bf16.mxu0 0
        %3243 = vmatpush1.bf16.msra.mxu0 0
        %3244 = vmatprep.subr.bf16.mxu0 0
        %3245 = vmatpush1.bf16.msra.mxu0 0
        %3246 = vmatprep.subr.bf16.mxu0 0
        %3247 = vmatpush1.bf16.msra.mxu0 0
        %3248 = vmatprep.subr.bf16.mxu0 0
        %3249 = vmatpush1.bf16.msra.mxu0 0
        %3250 = vmatprep.subr.bf16.mxu0 0
        %3251 = vmatpush1.bf16.msra.mxu0 0
        %3252 = vmatprep.subr.bf16.mxu0 0
        %3253 = vmatpush1.bf16.msra.mxu0 0
        %3254 = vmatprep.subr.bf16.mxu0 0
        %3255 = vmatpush1.bf16.msra.mxu0 0
        %3256 = vmatprep.subr.bf16.mxu0 0
        %3257 = vmatpush1.bf16.msra.mxu0 0
        %3258 = vmatprep.subr.bf16.mxu0 0
        %3259 = vmatpush1.bf16.msra.mxu0 0
        %3260 = vmatprep.subr.bf16.mxu0 0
        %3261 = vmatpush1.bf16.msra.mxu0 0
        %3262 = vmatprep.subr.bf16.mxu0 0
        %3263 = vmatpush1.bf16.msra.mxu0 0
        %3264 = vmatprep.subr.bf16.mxu0 0
        %3265 = vmatpush1.bf16.msra.mxu0 0
        %3266 = vmatprep.subr.bf16.mxu0 0
        %3267 = vmatpush1.bf16.msra.mxu0 0
        %3268 = vmatprep.subr.bf16.mxu0 0
        %3269 = vmatpush1.bf16.msra.mxu0 0
        %3270 = vmatprep.mubr.bf16.mxu0 0
        %3271 = vmatmul.mubr.bf16.gmra.mrb[0].mxu0 %v3197
        %v3272 = vpop.f32.mrb[0].mxu0
        %v3273 = vadd.f32 %v719, %v3272
        %v3274 = vpop.f32.mrb[0].mxu0
        %v3275 = vpop.f32.mrb[0].mxu0
        %v3276 = vadd.f32 %v719, %v3275
        %v3277 = vpop.f32.mrb[0].mxu0
        %3278 = vmatprep.mubr.bf16.mxu0 0
        %3279 = vmatmul.mubr.bf16.gmra.mrb[0].mxu0 %v3200
        %v3280 = vpop.f32.mrb[0].mxu0
        %v3281 = vadd.f32 %v719, %v3280
        %v3282 = vpop.f32.mrb[0].mxu0
        %v3283 = vpop.f32.mrb[0].mxu0
        %v3284 = vadd.f32 %v719, %v3283
        %v3285 = vpop.f32.mrb[0].mxu0
        %3286 = vmatprep.mubr.bf16.mxu0 0
        %3287 = vmatmul.mubr.bf16.gmra.mrb[0].mxu0 %v3203
        %v3288 = vpop.f32.mrb[0].mxu0
        %v3289 = vadd.f32 %v719, %v3288
        %v3290 = vpop.f32.mrb[0].mxu0
        %v3291 = vpop.f32.mrb[0].mxu0
        %v3292 = vadd.f32 %v719, %v3291
        %v3293 = vpop.f32.mrb[0].mxu0
        %3294 = vmatprep.mubr.bf16.mxu0 0
        %3295 = vmatmul.mubr.bf16.gmra.mrb[0].mxu0 %v3206
        %v3296 = vpop.f32.mrb[0].mxu0
        %v3297 = vadd.f32 %v719, %v3296
        %v3298 = vpop.f32.mrb[0].mxu0
        %v3299 = vpop.f32.mrb[0].mxu0
        %v3300 = vadd.f32 %v719, %v3299
        %v3301 = vpop.f32.mrb[0].mxu0
        %3302 = vmatprep.mubr.bf16.mxu0 0
        %3303 = vmatmul.mubr.bf16.gmra.mrb[0].mxu0 %v3209
        %v3304 = vpop.f32.mrb[0].mxu0
        %v3305 = vadd.f32 %v719, %v3304
        %v3306 = vpop.f32.mrb[0].mxu0
        %v3307 = vpop.f32.mrb[0].mxu0
        %v3308 = vadd.f32 %v719, %v3307
        %v3309 = vpop.f32.mrb[0].mxu0
        %3310 = vmatprep.mubr.bf16.mxu0 0
        %3311 = vmatmul.mubr.bf16.gmra.mrb[0].mxu0 %v3212
        %v3312 = vpop.f32.mrb[0].mxu0
        %v3313 = vadd.f32 %v719, %v3312
        %v3314 = vpop.f32.mrb[0].mxu0
        %v3315 = vpop.f32.mrb[0].mxu0
        %v3316 = vadd.f32 %v719, %v3315
        %v3317 = vpop.f32.mrb[0].mxu0
        %3318 = vmatprep.mubr.bf16.mxu0 0
        %3319 = vmatmul.mubr.bf16.gmra.mrb[0].mxu0 %v3215
        %v3320 = vpop.f32.mrb[0].mxu0
        %v3321 = vadd.f32 %v719, %v3320
        %v3322 = vpop.f32.mrb[0].mxu0
        %v3323 = vpop.f32.mrb[0].mxu0
        %v3324 = vadd.f32 %v719, %v3323
        %v3325 = vpop.f32.mrb[0].mxu0
        %3326 = vmatprep.mubr.bf16.mxu0 0
        %3327 = vmatmul.mubr.bf16.gmra.mrb[0].mxu0 %v3218
        %v3328 = vpop.f32.mrb[0].mxu0
        %v3329 = vadd.f32 %v719, %v3328
        %v3330 = vpop.f32.mrb[0].mxu0
        %v3331 = vpop.f32.mrb[0].mxu0
        %v3332 = vadd.f32 %v719, %v3331
        %v3333 = vpop.f32.mrb[0].mxu0
        %3334 = vmatprep.mubr.bf16.mxu0 0
        %3335 = vmatmul.mubr.bf16.gmra.mrb[0].mxu0 %v3221
        %v3336 = vpop.f32.mrb[0].mxu0
        %v3337 = vadd.f32 %v719, %v3336
        %v3338 = vpop.f32.mrb[0].mxu0
        %v3339 = vpop.f32.mrb[0].mxu0
        %v3340 = vadd.f32 %v719, %v3339
        %v3341 = vpop.f32.mrb[0].mxu0
        %3342 = vmatprep.mubr.bf16.mxu0 0
        %3343 = vmatmul.mubr.bf16.gmra.mrb[0].mxu0 %v3224
        %v3344 = vpop.f32.mrb[0].mxu0
        %v3345 = vadd.f32 %v719, %v3344
        %v3346 = vpop.f32.mrb[0].mxu0
        %v3347 = vpop.f32.mrb[0].mxu0
        %v3348 = vadd.f32 %v719, %v3347
        %v3349 = vpop.f32.mrb[0].mxu0
        %3350 = vmatprep.mubr.bf16.mxu0 0
        %3351 = vmatmul.mubr.bf16.gmra.mrb[0].mxu0 %v3227
        %v3352 = vpop.f32.mrb[0].mxu0
        %v3353 = vadd.f32 %v719, %v3352
        %v3354 = vpop.f32.mrb[0].mxu0
        %v3355 = vpop.f32.mrb[0].mxu0
        %v3356 = vadd.f32 %v719, %v3355
        %v3357 = vpop.f32.mrb[0].mxu0
        %3358 = vmatprep.mubr.bf16.mxu0 0
        %3359 = vmatmul.mubr.bf16.gmra.mrb[0].mxu0 %v3230
        %v3360 = vpop.f32.mrb[0].mxu0
        %v3361 = vadd.f32 %v719, %v3360
        %v3362 = vpop.f32.mrb[0].mxu0
        %v3363 = vpop.f32.mrb[0].mxu0
        %v3364 = vadd.f32 %v719, %v3363
        %v3365 = vpop.f32.mrb[0].mxu0
        %3366 = vmatprep.mubr.bf16.mxu0 0
        %3367 = vmatmul.mubr.bf16.gmra.mrb[0].mxu0 %v3233
        %v3368 = vpop.f32.mrb[0].mxu0
        %v3369 = vadd.f32 %v719, %v3368
        %v3370 = vpop.f32.mrb[0].mxu0
        %v3371 = vpop.f32.mrb[0].mxu0
        %v3372 = vadd.f32 %v719, %v3371
        %v3373 = vpop.f32.mrb[0].mxu0
        %3374 = vmatprep.mubr.bf16.mxu0 0
        %3375 = vmatmul.mubr.bf16.gmra.mrb[0].mxu0 %v3236
        %v3376 = vpop.f32.mrb[0].mxu0
        %v3377 = vadd.f32 %v719, %v3376
        %v3378 = vpop.f32.mrb[0].mxu0
        %v3379 = vpop.f32.mrb[0].mxu0
        %v3380 = vadd.f32 %v719, %v3379
        %v3381 = vpop.f32.mrb[0].mxu0
        %3382 = vdwg.mxu0
        %v3383 = vmax.f32 %v3273, 0.0
        %v3384 = vmax.f32 %v3276, 0.0
        %v3385 = vmax.f32 %v3281, 0.0
        %v3386 = vmax.f32 %v3284, 0.0
        %v3387 = vmax.f32 %v3289, 0.0
        %v3388 = vmax.f32 %v3292, 0.0
        %v3389 = vmax.f32 %v3297, 0.0
        %v3390 = vmax.f32 %v3300, 0.0
        %v3391 = vmax.f32 %v3305, 0.0
        %v3392 = vmax.f32 %v3308, 0.0
        %v3393 = vmax.f32 %v3313, 0.0
        %v3394 = vmax.f32 %v3316, 0.0
        %v3395 = vmax.f32 %v3321, 0.0
        %v3396 = vmax.f32 %v3324, 0.0
        %v3397 = vmax.f32 %v3329, 0.0
        %v3398 = vmax.f32 %v3332, 0.0
        %v3399 = vmax.f32 %v3337, 0.0
        %v3400 = vmax.f32 %v3340, 0.0
        %v3401 = vmax.f32 %v3345, 0.0
        %v3402 = vmax.f32 %v3348, 0.0
        %v3403 = vmax.f32 %v3353, 0.0
        %v3404 = vmax.f32 %v3356, 0.0
        %v3405 = vmax.f32 %v3361, 0.0
        %v3406 = vmax.f32 %v3364, 0.0
        %v3407 = vmax.f32 %v3369, 0.0
        %v3408 = vmax.f32 %v3372, 0.0
        %v3409 = vmax.f32 %v3377, 0.0
        %v3410 = vmax.f32 %v3380, 0.0
        %v3411 = vmax.f32 %v921, %v1599
        %v3412 = vmax.f32 %v922, %v1600
        %v3413 = vmax.f32 %v923, %v1601
        %v3414 = vmax.f32 %v924, %v1602
        %v3415 = vmax.f32 %v925, %v1603
        %v3416 = vmax.f32 %v926, %v1604
        %v3417 = vmax.f32 %v927, %v1605
        %v3418 = vmax.f32 %v928, %v1606
        %v3419 = vmax.f32 %v929, %v1607
        %v3420 = vmax.f32 %v930, %v1608
        %v3421 = vmax.f32 %v931, %v1609
        %v3422 = vmax.f32 %v932, %v1610
        %v3423 = vmax.f32 %v933, %v1611
        %v3424 = vmax.f32 %v934, %v1612
        %v3425 = vmax.f32 %v935, %v1613
        %v3426 = vmax.f32 %v936, %v1614
        %v3427 = vmax.f32 %v937, %v1615
        %v3428 = vmax.f32 %v938, %v1616
        %v3429 = vmax.f32 %v939, %v1617
        %v3430 = vmax.f32 %v940, %v1618
        %v3431 = vmax.f32 %v941, %v1619
        %v3432 = vmax.f32 %v942, %v1620
        %v3433 = vmax.f32 %v943, %v1621
        %v3434 = vmax.f32 %v944, %v1622
        %v3435 = vmax.f32 %v945, %v1623
        %v3436 = vmax.f32 %v946, %v1624
        %v3437 = vmax.f32 %v947, %v1625
        %v3438 = vmax.f32 %v948, %v1626
        %v3439 = vmax.f32 %v2591, %v3383
        %v3440 = vmax.f32 %v2592, %v3384
        %v3441 = vmax.f32 %v2593, %v3385
        %v3442 = vmax.f32 %v2594, %v3386
        %v3443 = vmax.f32 %v2595, %v3387
        %v3444 = vmax.f32 %v2596, %v3388
        %v3445 = vmax.f32 %v2597, %v3389
        %v3446 = vmax.f32 %v2598, %v3390
        %v3447 = vmax.f32 %v2599, %v3391
        %v3448 = vmax.f32 %v2600, %v3392
        %v3449 = vmax.f32 %v2601, %v3393
        %v3450 = vmax.f32 %v2602, %v3394
        %v3451 = vmax.f32 %v2603, %v3395
        %v3452 = vmax.f32 %v2604, %v3396
        %v3453 = vmax.f32 %v2605, %v3397
        %v3454 = vmax.f32 %v2606, %v3398
        %v3455 = vmax.f32 %v2607, %v3399
        %v3456 = vmax.f32 %v2608, %v3400
        %v3457 = vmax.f32 %v2609, %v3401
        %v3458 = vmax.f32 %v2610, %v3402
        %v3459 = vmax.f32 %v2611, %v3403
        %v3460 = vmax.f32 %v2612, %v3404
        %v3461 = vmax.f32 %v2613, %v3405
        %v3462 = vmax.f32 %v2614, %v3406
        %v3463 = vmax.f32 %v2615, %v3407
        %v3464 = vmax.f32 %v2616, %v3408
        %v3465 = vmax.f32 %v2617, %v3409
        %v3466 = vmax.f32 %v2618, %v3410
        %v3467 = vmax.f32 %v3411, %v3412
        %v3468 = vmax.f32 %v3413, %v3414
        %v3469 = vmax.f32 %v3415, %v3416
        %v3470 = vmax.f32 %v3417, %v3418
        %v3471 = vmax.f32 %v3419, %v3420
        %v3472 = vmax.f32 %v3421, %v3422
        %v3473 = vmax.f32 %v3423, %v3424
        %v3474 = vmax.f32 %v3425, %v3426
        %v3475 = vmax.f32 %v3427, %v3428
        %v3476 = vmax.f32 %v3429, %v3430
        %v3477 = vmax.f32 %v3431, %v3432
        %v3478 = vmax.f32 %v3433, %v3434
        %v3479 = vmax.f32 %v3435, %v3436
        %v3480 = vmax.f32 %v3437, %v3438
        %v3481 = vmax.f32 %v3439, %v3440
        %v3482 = vmax.f32 %v3441, %v3442
        %v3483 = vmax.f32 %v3443, %v3444
        %v3484 = vmax.f32 %v3445, %v3446
        %v3485 = vmax.f32 %v3447, %v3448
        %v3486 = vmax.f32 %v3449, %v3450
        %v3487 = vmax.f32 %v3451, %v3452
        %v3488 = vmax.f32 %v3453, %v3454
        %v3489 = vmax.f32 %v3455, %v3456
        %v3490 = vmax.f32 %v3457, %v3458
        %v3491 = vmax.f32 %v3459, %v3460
        %v3492 = vmax.f32 %v3461, %v3462
        %v3493 = vmax.f32 %v3463, %v3464
        %v3494 = vmax.f32 %v3465, %v3466
        %vm3495 = vcmask 130048
        %3496 = vst.msk [vmem:[#allocation2] sm:$0xff] %vm3495, 0.0
        %3497 = vst.msk [vmem:[#allocation2 + $0x8] sm:$0xff] %vm3495, 0.0
        %3498 = vst.msk [vmem:[#allocation2 + $0x10] sm:$0xff] %vm3495, 0.0
        %3499 = vst.msk [vmem:[#allocation2 + $0x18] sm:$0xff] %vm3495, 0.0
        %3500 = vst.msk [vmem:[#allocation2 + $0x20] sm:$0xff] %vm3495, 0.0
        %3501 = vst.msk [vmem:[#allocation2 + $0x28] sm:$0xff] %vm3495, 0.0
        %3502 = vst.msk [vmem:[#allocation2 + $0x30] sm:$0xff] %vm3495, 0.0
        %3503 = vst.msk [vmem:[#allocation2 + $0x38] sm:$0xff] %vm3495, 0.0
        %3504 = vst.msk [vmem:[#allocation2 + $0x40] sm:$0xff] %vm3495, 0.0
        %3505 = vst.msk [vmem:[#allocation2 + $0x48] sm:$0xff] %vm3495, 0.0
        %3506 = vst.msk [vmem:[#allocation2 + $0x50] sm:$0xff] %vm3495, 0.0
        %3507 = vst.msk [vmem:[#allocation2 + $0x58] sm:$0xff] %vm3495, 0.0
        %3508 = vst.msk [vmem:[#allocation2 + $0x60] sm:$0xff] %vm3495, 0.0
        %3509 = vst.msk [vmem:[#allocation2 + $0x68] sm:$0xff] %vm3495, 0.0
        %3510 = vst.msk [vmem:[#allocation2 + $0x70] sm:$0xff] %vm3495, 0.0
        %3511 = vst.msk [vmem:[#allocation2 + $0x78] sm:$0xff] %vm3495, 0.0
        %vm3512 = vcmask 122880
        %3513 = vst.msk [vmem:[#allocation2 + $0x80] sm:$0x1] %vm3512, 0.0
        %3514 = vst.msk [vmem:[#allocation3] sm:$0xff] %vm3495, 0.0
        %3515 = vst.msk [vmem:[#allocation3 + $0x8] sm:$0xff] %vm3495, 0.0
        %3516 = vst.msk [vmem:[#allocation3 + $0x10] sm:$0xff] %vm3495, 0.0
        %3517 = vst.msk [vmem:[#allocation3 + $0x18] sm:$0xff] %vm3495, 0.0
        %3518 = vst.msk [vmem:[#allocation3 + $0x20] sm:$0xff] %vm3495, 0.0
        %3519 = vst.msk [vmem:[#allocation3 + $0x28] sm:$0xff] %vm3495, 0.0
        %3520 = vst.msk [vmem:[#allocation3 + $0x30] sm:$0xff] %vm3495, 0.0
        %3521 = vst.msk [vmem:[#allocation3 + $0x38] sm:$0xff] %vm3495, 0.0
        %3522 = vst.msk [vmem:[#allocation3 + $0x40] sm:$0xff] %vm3495, 0.0
        %3523 = vst.msk [vmem:[#allocation3 + $0x48] sm:$0xff] %vm3495, 0.0
        %3524 = vst.msk [vmem:[#allocation3 + $0x50] sm:$0xff] %vm3495, 0.0
        %3525 = vst.msk [vmem:[#allocation3 + $0x58] sm:$0xff] %vm3495, 0.0
        %3526 = vst.msk [vmem:[#allocation3 + $0x60] sm:$0xff] %vm3495, 0.0
        %3527 = vst.msk [vmem:[#allocation3 + $0x68] sm:$0xff] %vm3495, 0.0
        %3528 = vst.msk [vmem:[#allocation3 + $0x70] sm:$0xff] %vm3495, 0.0
        %3529 = vst.msk [vmem:[#allocation3 + $0x78] sm:$0xff] %vm3495, 0.0
        %3530 = vst.msk [vmem:[#allocation3 + $0x80] sm:$0x1] %vm3512, 0.0
        %vm3531 = vcmask 129024
        %3532 = vst.msk [vmem:[#allocation3 + $0x8] sm:$0x7f] %vm3531, %v3467
        %3533 = vst.msk [vmem:[#allocation2 + $0x9] sm:$0x7f] %vm3531, %v3481
        %3534 = vst.msk [vmem:[#allocation3 + $0x10] sm:$0x7f] %vm3531, %v3468
        %3535 = vst.msk [vmem:[#allocation2 + $0x11] sm:$0x7f] %vm3531, %v3482
        %3536 = vst.msk [vmem:[#allocation3 + $0x18] sm:$0x7f] %vm3531, %v3469
        %3537 = vst.msk [vmem:[#allocation2 + $0x19] sm:$0x7f] %vm3531, %v3483
        %3538 = vst.msk [vmem:[#allocation3 + $0x20] sm:$0x7f] %vm3531, %v3470
        %3539 = vst.msk [vmem:[#allocation2 + $0x21] sm:$0x7f] %vm3531, %v3484
        %3540 = vst.msk [vmem:[#allocation3 + $0x28] sm:$0x7f] %vm3531, %v3471
        %3541 = vst.msk [vmem:[#allocation2 + $0x29] sm:$0x7f] %vm3531, %v3485
        %3542 = vst.msk [vmem:[#allocation3 + $0x30] sm:$0x7f] %vm3531, %v3472
        %3543 = vst.msk [vmem:[#allocation2 + $0x31] sm:$0x7f] %vm3531, %v3486
        %3544 = vst.msk [vmem:[#allocation3 + $0x38] sm:$0x7f] %vm3531, %v3473
        %3545 = vst.msk [vmem:[#allocation2 + $0x39] sm:$0x7f] %vm3531, %v3487
        %3546 = vst.msk [vmem:[#allocation3 + $0x40] sm:$0x7f] %vm3531, %v3474
        %3547 = vst.msk [vmem:[#allocation2 + $0x41] sm:$0x7f] %vm3531, %v3488
        %3548 = vst.msk [vmem:[#allocation3 + $0x48] sm:$0x7f] %vm3531, %v3475
        %3549 = vst.msk [vmem:[#allocation2 + $0x49] sm:$0x7f] %vm3531, %v3489
        %3550 = vst.msk [vmem:[#allocation3 + $0x50] sm:$0x7f] %vm3531, %v3476
        %3551 = vst.msk [vmem:[#allocation2 + $0x51] sm:$0x7f] %vm3531, %v3490
        %3552 = vst.msk [vmem:[#allocation3 + $0x58] sm:$0x7f] %vm3531, %v3477
        %3553 = vst.msk [vmem:[#allocation2 + $0x59] sm:$0x7f] %vm3531, %v3491
        %3554 = vst.msk [vmem:[#allocation3 + $0x60] sm:$0x7f] %vm3531, %v3478
        %3555 = vst.msk [vmem:[#allocation2 + $0x61] sm:$0x7f] %vm3531, %v3492
        %3556 = vst.msk [vmem:[#allocation3 + $0x68] sm:$0x7f] %vm3531, %v3479
        %3557 = vst.msk [vmem:[#allocation2 + $0x69] sm:$0x7f] %vm3531, %v3493
        %3558 = vst.msk [vmem:[#allocation3 + $0x70] sm:$0x7f] %vm3531, %v3480
        %3559 = vst.msk [vmem:[#allocation2 + $0x71] sm:$0x7f] %vm3531, %v3494
        %v3560 = vld [vmem:[%s3] sm:$0xf]
        %v3561 = vld [vmem:[%s3 + $0x4] sm:$0xf]
        %v3562 = vld [vmem:[%s3 + $0x8] sm:$0xf]
        %v3563 = vld [vmem:[%s3 + $0xc] sm:$0xf]
        %v3564 = vld [vmem:[%s3 + $0x10] sm:$0xf]
        %v3565 = vld [vmem:[%s3 + $0x14] sm:$0xf]
        %v3566 = vld [vmem:[%s3 + $0x18] sm:$0xf]
        %v3567 = vld [vmem:[%s3 + $0x1c] sm:$0xf]
        %v3568 = vld [vmem:[%s3 + $0x20] sm:$0xf]
        %v3569 = vld [vmem:[%s3 + $0x24] sm:$0xf]
        %v3570 = vld [vmem:[%s3 + $0x28] sm:$0xf]
        %v3571 = vld [vmem:[%s3 + $0x2c] sm:$0xf]
        %v3572 = vld [vmem:[%s3 + $0x30] sm:$0xf]
        %v3573 = vld [vmem:[%s3 + $0x34] sm:$0xf]
        %v3574 = vld [vmem:[%s3 + $0x38] sm:$0xf]
        %v3575 = vld [vmem:[%s3 + $0x3c] sm:$0xf]
        %v3576 = vld [vmem:[%s3 + $0x40] sm:$0xf]
        %v3577 = vld [vmem:[%s3 + $0x44] sm:$0xf]
        %v3578 = vld [vmem:[#allocation8] sm:$0x1]
        %v3579 = vld [vmem:[#allocation2] sm:$0xff]
        %v3580 = vld [vmem:[#allocation2 + $0x8] sm:$0xff]
        %v3581 = vld [vmem:[#allocation2 + $0x10] sm:$0xff]
        %v3582 = vld [vmem:[#allocation2 + $0x18] sm:$0xff]
        %v3583 = vld [vmem:[#allocation2 + $0x20] sm:$0xff]
        %v3584 = vld [vmem:[#allocation2 + $0x28] sm:$0xff]
        %v3585 = vld [vmem:[#allocation2 + $0x30] sm:$0xff]
        %v3586 = vld [vmem:[#allocation2 + $0x38] sm:$0xff]
        %v3587 = vld [vmem:[#allocation2 + $0x40] sm:$0xff]
        %v3588 = vld [vmem:[#allocation2 + $0x48] sm:$0xff]
        %v3589 = vld [vmem:[#allocation2 + $0x50] sm:$0xff]
        %v3590 = vld [vmem:[#allocation2 + $0x58] sm:$0xff]
        %v3591 = vld [vmem:[#allocation2 + $0x60] sm:$0xff]
        %v3592 = vld [vmem:[#allocation2 + $0x68] sm:$0xff]
        %v3593 = vld [vmem:[#allocation3] sm:$0xff]
        %v3594 = vld [vmem:[#allocation3 + $0x8] sm:$0xff]
        %v3595 = vld [vmem:[#allocation3 + $0x10] sm:$0xff]
        %v3596 = vld [vmem:[#allocation3 + $0x18] sm:$0xff]
        %v3597 = vld [vmem:[#allocation3 + $0x20] sm:$0xff]
        %v3598 = vld [vmem:[#allocation3 + $0x28] sm:$0xff]
        %v3599 = vld [vmem:[#allocation3 + $0x30] sm:$0xff]
        %v3600 = vld [vmem:[#allocation3 + $0x38] sm:$0xff]
        %v3601 = vld [vmem:[#allocation3 + $0x40] sm:$0xff]
        %v3602 = vld [vmem:[#allocation3 + $0x48] sm:$0xff]
        %v3603 = vld [vmem:[#allocation3 + $0x50] sm:$0xff]
        %v3604 = vld [vmem:[#allocation3 + $0x58] sm:$0xff]
        %v3605 = vld [vmem:[#allocation3 + $0x60] sm:$0xff]
        %v3606 = vld [vmem:[#allocation3 + $0x68] sm:$0xff]
        %v3607 = vld [vmem:[#allocation2 + $0x1] sm:$0xff]
        %v3608 = vld [vmem:[#allocation2 + $0x9] sm:$0xff]
        %v3609 = vld [vmem:[#allocation2 + $0x11] sm:$0xff]
        %v3610 = vld [vmem:[#allocation2 + $0x19] sm:$0xff]
        %v3611 = vld [vmem:[#allocation2 + $0x21] sm:$0xff]
        %v3612 = vld [vmem:[#allocation2 + $0x29] sm:$0xff]
        %v3613 = vld [vmem:[#allocation2 + $0x31] sm:$0xff]
        %v3614 = vld [vmem:[#allocation2 + $0x39] sm:$0xff]
        %v3615 = vld [vmem:[#allocation2 + $0x41] sm:$0xff]
        %v3616 = vld [vmem:[#allocation2 + $0x49] sm:$0xff]
        %v3617 = vld [vmem:[#allocation2 + $0x51] sm:$0xff]
        %v3618 = vld [vmem:[#allocation2 + $0x59] sm:$0xff]
        %v3619 = vld [vmem:[#allocation2 + $0x61] sm:$0xff]
        %v3620 = vld [vmem:[#allocation2 + $0x69] sm:$0xff]
        %v3621 = vld [vmem:[#allocation3 + $0x1] sm:$0xff]
        %v3622 = vld [vmem:[#allocation3 + $0x9] sm:$0xff]
        %v3623 = vld [vmem:[#allocation3 + $0x11] sm:$0xff]
        %v3624 = vld [vmem:[#allocation3 + $0x19] sm:$0xff]
        %v3625 = vld [vmem:[#allocation3 + $0x21] sm:$0xff]
        %v3626 = vld [vmem:[#allocation3 + $0x29] sm:$0xff]
        %v3627 = vld [vmem:[#allocation3 + $0x31] sm:$0xff]
        %v3628 = vld [vmem:[#allocation3 + $0x39] sm:$0xff]
        %v3629 = vld [vmem:[#allocation3 + $0x41] sm:$0xff]
        %v3630 = vld [vmem:[#allocation3 + $0x49] sm:$0xff]
        %v3631 = vld [vmem:[#allocation3 + $0x51] sm:$0xff]
        %v3632 = vld [vmem:[#allocation3 + $0x59] sm:$0xff]
        %v3633 = vld [vmem:[#allocation3 + $0x61] sm:$0xff]
        %v3634 = vld [vmem:[#allocation3 + $0x69] sm:$0xff]
        %v3635 = vld [vmem:[#allocation2 + $0x70] sm:$0xff]
        %v3636 = vld [vmem:[#allocation3 + $0x70] sm:$0xff]
        %v3637 = vld [vmem:[#allocation2 + $0x71] sm:$0xff]
        %v3638 = vld [vmem:[#allocation3 + $0x71] sm:$0xff]
        %v3639 = vld [vmem:[#allocation2 + $0x78] sm:$0xff]
        %v3640 = vld [vmem:[#allocation3 + $0x78] sm:$0xff]
        %v3641 = vld [vmem:[#allocation2 + $0x79] sm:$0xff]
        %v3642 = vld [vmem:[#allocation3 + $0x79] sm:$0xff]
        %3657 = vrot.lane.b32.xlu0 %v3593, 16
        %v3658 = vpop.permute.xlu0 %3657
        %3659 = vrot.lane.b32.xlu0 %v3594, 16
        %v3660 = vpop.permute.xlu0 %3659
        %3661 = vrot.lane.b32.xlu0 %v3595, 16
        %v3662 = vpop.permute.xlu0 %3661
        %3663 = vrot.lane.b32.xlu0 %v3596, 16
        %v3664 = vpop.permute.xlu0 %3663
        %3665 = vrot.lane.b32.xlu0 %v3597, 16
        %v3666 = vpop.permute.xlu0 %3665
        %3667 = vrot.lane.b32.xlu0 %v3598, 16
        %v3668 = vpop.permute.xlu0 %3667
        %3669 = vrot.lane.b32.xlu0 %v3599, 16
        %v3670 = vpop.permute.xlu0 %3669
        %3671 = vrot.lane.b32.xlu0 %v3600, 16
        %v3672 = vpop.permute.xlu0 %3671
        %3673 = vrot.lane.b32.xlu0 %v3601, 16
        %v3674 = vpop.permute.xlu0 %3673
        %3675 = vrot.lane.b32.xlu0 %v3602, 16
        %v3676 = vpop.permute.xlu0 %3675
        %3677 = vrot.lane.b32.xlu0 %v3603, 16
        %v3678 = vpop.permute.xlu0 %3677
        %3679 = vrot.lane.b32.xlu0 %v3604, 16
        %v3680 = vpop.permute.xlu0 %3679
        %3681 = vrot.lane.b32.xlu0 %v3605, 16
        %v3682 = vpop.permute.xlu0 %3681
        %3683 = vrot.lane.b32.xlu0 %v3606, 16
        %v3684 = vpop.permute.xlu0 %3683
        %3713 = vrot.lane.b32.xlu0 %v3607, 32
        %v3714 = vpop.permute.xlu0 %3713
        %3715 = vrot.lane.b32.xlu0 %v3608, 32
        %v3716 = vpop.permute.xlu0 %3715
        %3717 = vrot.lane.b32.xlu0 %v3609, 32
        %v3718 = vpop.permute.xlu0 %3717
        %3719 = vrot.lane.b32.xlu0 %v3610, 32
        %v3720 = vpop.permute.xlu0 %3719
        %3721 = vrot.lane.b32.xlu0 %v3611, 32
        %v3722 = vpop.permute.xlu0 %3721
        %3723 = vrot.lane.b32.xlu0 %v3612, 32
        %v3724 = vpop.permute.xlu0 %3723
        %3725 = vrot.lane.b32.xlu0 %v3613, 32
        %v3726 = vpop.permute.xlu0 %3725
        %3727 = vrot.lane.b32.xlu0 %v3614, 32
        %v3728 = vpop.permute.xlu0 %3727
        %3729 = vrot.lane.b32.xlu0 %v3615, 32
        %v3730 = vpop.permute.xlu0 %3729
        %3731 = vrot.lane.b32.xlu0 %v3616, 32
        %v3732 = vpop.permute.xlu0 %3731
        %3733 = vrot.lane.b32.xlu0 %v3617, 32
        %v3734 = vpop.permute.xlu0 %3733
        %3735 = vrot.lane.b32.xlu0 %v3618, 32
        %v3736 = vpop.permute.xlu0 %3735
        %3737 = vrot.lane.b32.xlu0 %v3619, 32
        %v3738 = vpop.permute.xlu0 %3737
        %3739 = vrot.lane.b32.xlu0 %v3620, 32
        %v3740 = vpop.permute.xlu0 %3739
        %3769 = vrot.lane.b32.xlu0 %v3580, 48
        %v3770 = vpop.permute.xlu0 %3769
        %3771 = vrot.lane.b32.xlu0 %v3581, 48
        %v3772 = vpop.permute.xlu0 %3771
        %3773 = vrot.lane.b32.xlu0 %v3582, 48
        %v3774 = vpop.permute.xlu0 %3773
        %3775 = vrot.lane.b32.xlu0 %v3583, 48
        %v3776 = vpop.permute.xlu0 %3775
        %3777 = vrot.lane.b32.xlu0 %v3584, 48
        %v3778 = vpop.permute.xlu0 %3777
        %3779 = vrot.lane.b32.xlu0 %v3585, 48
        %v3780 = vpop.permute.xlu0 %3779
        %3781 = vrot.lane.b32.xlu0 %v3586, 48
        %v3782 = vpop.permute.xlu0 %3781
        %3783 = vrot.lane.b32.xlu0 %v3587, 48
        %v3784 = vpop.permute.xlu0 %3783
        %3785 = vrot.lane.b32.xlu0 %v3588, 48
        %v3786 = vpop.permute.xlu0 %3785
        %3787 = vrot.lane.b32.xlu0 %v3589, 48
        %v3788 = vpop.permute.xlu0 %3787
        %3789 = vrot.lane.b32.xlu0 %v3590, 48
        %v3790 = vpop.permute.xlu0 %3789
        %3791 = vrot.lane.b32.xlu0 %v3591, 48
        %v3792 = vpop.permute.xlu0 %3791
        %3793 = vrot.lane.b32.xlu0 %v3592, 48
        %v3794 = vpop.permute.xlu0 %3793
        %3795 = vrot.lane.b32.xlu0 %v3635, 48
        %v3796 = vpop.permute.xlu0 %3795
        %3812 = vrot.lane.b32.xlu0 %v3594, 64
        %v3813 = vpop.permute.xlu0 %3812
        %3814 = vrot.lane.b32.xlu0 %v3595, 64
        %v3815 = vpop.permute.xlu0 %3814
        %3816 = vrot.lane.b32.xlu0 %v3596, 64
        %v3817 = vpop.permute.xlu0 %3816
        %3818 = vrot.lane.b32.xlu0 %v3597, 64
        %v3819 = vpop.permute.xlu0 %3818
        %3820 = vrot.lane.b32.xlu0 %v3598, 64
        %v3821 = vpop.permute.xlu0 %3820
        %3822 = vrot.lane.b32.xlu0 %v3599, 64
        %v3823 = vpop.permute.xlu0 %3822
        %3824 = vrot.lane.b32.xlu0 %v3600, 64
        %v3825 = vpop.permute.xlu0 %3824
        %3826 = vrot.lane.b32.xlu0 %v3601, 64
        %v3827 = vpop.permute.xlu0 %3826
        %3828 = vrot.lane.b32.xlu0 %v3602, 64
        %v3829 = vpop.permute.xlu0 %3828
        %3830 = vrot.lane.b32.xlu0 %v3603, 64
        %v3831 = vpop.permute.xlu0 %3830
        %3832 = vrot.lane.b32.xlu0 %v3604, 64
        %v3833 = vpop.permute.xlu0 %3832
        %3834 = vrot.lane.b32.xlu0 %v3605, 64
        %v3835 = vpop.permute.xlu0 %3834
        %3836 = vrot.lane.b32.xlu0 %v3606, 64
        %v3837 = vpop.permute.xlu0 %3836
        %3838 = vrot.lane.b32.xlu0 %v3636, 64
        %v3839 = vpop.permute.xlu0 %3838
        %3855 = vrot.lane.b32.xlu0 %v3608, 80
        %v3856 = vpop.permute.xlu0 %3855
        %3857 = vrot.lane.b32.xlu0 %v3609, 80
        %v3858 = vpop.permute.xlu0 %3857
        %3859 = vrot.lane.b32.xlu0 %v3610, 80
        %v3860 = vpop.permute.xlu0 %3859
        %3861 = vrot.lane.b32.xlu0 %v3611, 80
        %v3862 = vpop.permute.xlu0 %3861
        %3863 = vrot.lane.b32.xlu0 %v3612, 80
        %v3864 = vpop.permute.xlu0 %3863
        %3865 = vrot.lane.b32.xlu0 %v3613, 80
        %v3866 = vpop.permute.xlu0 %3865
        %3867 = vrot.lane.b32.xlu0 %v3614, 80
        %v3868 = vpop.permute.xlu0 %3867
        %3869 = vrot.lane.b32.xlu0 %v3615, 80
        %v3870 = vpop.permute.xlu0 %3869
        %3871 = vrot.lane.b32.xlu0 %v3616, 80
        %v3872 = vpop.permute.xlu0 %3871
        %3873 = vrot.lane.b32.xlu0 %v3617, 80
        %v3874 = vpop.permute.xlu0 %3873
        %3875 = vrot.lane.b32.xlu0 %v3618, 80
        %v3876 = vpop.permute.xlu0 %3875
        %3877 = vrot.lane.b32.xlu0 %v3619, 80
        %v3878 = vpop.permute.xlu0 %3877
        %3879 = vrot.lane.b32.xlu0 %v3620, 80
        %v3880 = vpop.permute.xlu0 %3879
        %3881 = vrot.lane.b32.xlu0 %v3637, 80
        %v3882 = vpop.permute.xlu0 %3881
        %3898 = vrot.lane.b32.xlu0 %v3581, 96
        %v3899 = vpop.permute.xlu0 %3898
        %3900 = vrot.lane.b32.xlu0 %v3582, 96
        %v3901 = vpop.permute.xlu0 %3900
        %3902 = vrot.lane.b32.xlu0 %v3583, 96
        %v3903 = vpop.permute.xlu0 %3902
        %3904 = vrot.lane.b32.xlu0 %v3584, 96
        %v3905 = vpop.permute.xlu0 %3904
        %3906 = vrot.lane.b32.xlu0 %v3585, 96
        %v3907 = vpop.permute.xlu0 %3906
        %3908 = vrot.lane.b32.xlu0 %v3586, 96
        %v3909 = vpop.permute.xlu0 %3908
        %3910 = vrot.lane.b32.xlu0 %v3587, 96
        %v3911 = vpop.permute.xlu0 %3910
        %3912 = vrot.lane.b32.xlu0 %v3588, 96
        %v3913 = vpop.permute.xlu0 %3912
        %3914 = vrot.lane.b32.xlu0 %v3589, 96
        %v3915 = vpop.permute.xlu0 %3914
        %3916 = vrot.lane.b32.xlu0 %v3590, 96
        %v3917 = vpop.permute.xlu0 %3916
        %3918 = vrot.lane.b32.xlu0 %v3591, 96
        %v3919 = vpop.permute.xlu0 %3918
        %3920 = vrot.lane.b32.xlu0 %v3592, 96
        %v3921 = vpop.permute.xlu0 %3920
        %3922 = vrot.lane.b32.xlu0 %v3635, 96
        %v3923 = vpop.permute.xlu0 %3922
        %3924 = vrot.lane.b32.xlu0 %v3639, 96
        %v3925 = vpop.permute.xlu0 %3924
        %3941 = vrot.lane.b32.xlu0 %v3595, 112
        %v3942 = vpop.permute.xlu0 %3941
        %3943 = vrot.lane.b32.xlu0 %v3596, 112
        %v3944 = vpop.permute.xlu0 %3943
        %3945 = vrot.lane.b32.xlu0 %v3597, 112
        %v3946 = vpop.permute.xlu0 %3945
        %3947 = vrot.lane.b32.xlu0 %v3598, 112
        %v3948 = vpop.permute.xlu0 %3947
        %3949 = vrot.lane.b32.xlu0 %v3599, 112
        %v3950 = vpop.permute.xlu0 %3949
        %3951 = vrot.lane.b32.xlu0 %v3600, 112
        %v3952 = vpop.permute.xlu0 %3951
        %3953 = vrot.lane.b32.xlu0 %v3601, 112
        %v3954 = vpop.permute.xlu0 %3953
        %3955 = vrot.lane.b32.xlu0 %v3602, 112
        %v3956 = vpop.permute.xlu0 %3955
        %3957 = vrot.lane.b32.xlu0 %v3603, 112
        %v3958 = vpop.permute.xlu0 %3957
        %3959 = vrot.lane.b32.xlu0 %v3604, 112
        %v3960 = vpop.permute.xlu0 %3959
        %3961 = vrot.lane.b32.xlu0 %v3605, 112
        %v3962 = vpop.permute.xlu0 %3961
        %3963 = vrot.lane.b32.xlu0 %v3606, 112
        %v3964 = vpop.permute.xlu0 %3963
        %3965 = vrot.lane.b32.xlu0 %v3636, 112
        %v3966 = vpop.permute.xlu0 %3965
        %3967 = vrot.lane.b32.xlu0 %v3640, 112
        %v3968 = vpop.permute.xlu0 %3967
        %v3983 = vsel %vm3495, %v3579, %v3658
        %v3984 = vsel %vm3495, %v3580, %v3660
        %v3985 = vsel %vm3495, %v3581, %v3662
        %v3986 = vsel %vm3495, %v3582, %v3664
        %v3987 = vsel %vm3495, %v3583, %v3666
        %v3988 = vsel %vm3495, %v3584, %v3668
        %v3989 = vsel %vm3495, %v3585, %v3670
        %v3990 = vsel %vm3495, %v3586, %v3672
        %v3991 = vsel %vm3495, %v3587, %v3674
        %v3992 = vsel %vm3495, %v3588, %v3676
        %v3993 = vsel %vm3495, %v3589, %v3678
        %v3994 = vsel %vm3495, %v3590, %v3680
        %v3995 = vsel %vm3495, %v3591, %v3682
        %v3996 = vsel %vm3495, %v3592, %v3684
        %vm3997 = vcmask 261120
        %v3998 = vsel %vm3997, %v3983, %v3714
        %v3999 = vsel %vm3997, %v3984, %v3716
        %v4000 = vsel %vm3997, %v3985, %v3718
        %v4001 = vsel %vm3997, %v3986, %v3720
        %v4002 = vsel %vm3997, %v3987, %v3722
        %v4003 = vsel %vm3997, %v3988, %v3724
        %v4004 = vsel %vm3997, %v3989, %v3726
        %v4005 = vsel %vm3997, %v3990, %v3728
        %v4006 = vsel %vm3997, %v3991, %v3730
        %v4007 = vsel %vm3997, %v3992, %v3732
        %v4008 = vsel %vm3997, %v3993, %v3734
        %v4009 = vsel %vm3997, %v3994, %v3736
        %v4010 = vsel %vm3997, %v3995, %v3738
        %v4011 = vsel %vm3997, %v3996, %v3740
        %vm4012 = vcmask 392192
        %v4013 = vsel %vm4012, %v3998, %v3770
        %v4014 = vsel %vm4012, %v3999, %v3772
        %v4015 = vsel %vm4012, %v4000, %v3774
        %v4016 = vsel %vm4012, %v4001, %v3776
        %v4017 = vsel %vm4012, %v4002, %v3778
        %v4018 = vsel %vm4012, %v4003, %v3780
        %v4019 = vsel %vm4012, %v4004, %v3782
        %v4020 = vsel %vm4012, %v4005, %v3784
        %v4021 = vsel %vm4012, %v4006, %v3786
        %v4022 = vsel %vm4012, %v4007, %v3788
        %v4023 = vsel %vm4012, %v4008, %v3790
        %v4024 = vsel %vm4012, %v4009, %v3792
        %v4025 = vsel %vm4012, %v4010, %v3794
        %v4026 = vsel %vm4012, %v4011, %v3796
        %vm4027 = vcmask 523264
        %v4028 = vsel %vm4027, %v4013, %v3813
        %v4029 = vsel %vm4027, %v4014, %v3815
        %v4030 = vsel %vm4027, %v4015, %v3817
        %v4031 = vsel %vm4027, %v4016, %v3819
        %v4032 = vsel %vm4027, %v4017, %v3821
        %v4033 = vsel %vm4027, %v4018, %v3823
        %v4034 = vsel %vm4027, %v4019, %v3825
        %v4035 = vsel %vm4027, %v4020, %v3827
        %v4036 = vsel %vm4027, %v4021, %v3829
        %v4037 = vsel %vm4027, %v4022, %v3831
        %v4038 = vsel %vm4027, %v4023, %v3833
        %v4039 = vsel %vm4027, %v4024, %v3835
        %v4040 = vsel %vm4027, %v4025, %v3837
        %v4041 = vsel %vm4027, %v4026, %v3839
        %vm4042 = vcmask 654336
        %v4043 = vsel %vm4042, %v4028, %v3856
        %v4044 = vsel %vm4042, %v4029, %v3858
        %v4045 = vsel %vm4042, %v4030, %v3860
        %v4046 = vsel %vm4042, %v4031, %v3862
        %v4047 = vsel %vm4042, %v4032, %v3864
        %v4048 = vsel %vm4042, %v4033, %v3866
        %v4049 = vsel %vm4042, %v4034, %v3868
        %v4050 = vsel %vm4042, %v4035, %v3870
        %v4051 = vsel %vm4042, %v4036, %v3872
        %v4052 = vsel %vm4042, %v4037, %v3874
        %v4053 = vsel %vm4042, %v4038, %v3876
        %v4054 = vsel %vm4042, %v4039, %v3878
        %v4055 = vsel %vm4042, %v4040, %v3880
        %v4056 = vsel %vm4042, %v4041, %v3882
        %vm4057 = vcmask 785408
        %v4058 = vsel %vm4057, %v4043, %v3899
        %v4059 = vsel %vm4057, %v4044, %v3901
        %v4060 = vsel %vm4057, %v4045, %v3903
        %v4061 = vsel %vm4057, %v4046, %v3905
        %v4062 = vsel %vm4057, %v4047, %v3907
        %v4063 = vsel %vm4057, %v4048, %v3909
        %v4064 = vsel %vm4057, %v4049, %v3911
        %v4065 = vsel %vm4057, %v4050, %v3913
        %v4066 = vsel %vm4057, %v4051, %v3915
        %v4067 = vsel %vm4057, %v4052, %v3917
        %v4068 = vsel %vm4057, %v4053, %v3919
        %v4069 = vsel %vm4057, %v4054, %v3921
        %v4070 = vsel %vm4057, %v4055, %v3923
        %v4071 = vsel %vm4057, %v4056, %v3925
        %vm4072 = vcmask 916480
        %v4073 = vsel %vm4072, %v4058, %v3942
        %v4074 = vsel %vm4072, %v4059, %v3944
        %v4075 = vsel %vm4072, %v4060, %v3946
        %v4076 = vsel %vm4072, %v4061, %v3948
        %v4077 = vsel %vm4072, %v4062, %v3950
        %v4078 = vsel %vm4072, %v4063, %v3952
        %v4079 = vsel %vm4072, %v4064, %v3954
        %v4080 = vsel %vm4072, %v4065, %v3956
        %v4081 = vsel %vm4072, %v4066, %v3958
        %v4082 = vsel %vm4072, %v4067, %v3960
        %v4083 = vsel %vm4072, %v4068, %v3962
        %v4084 = vsel %vm4072, %v4069, %v3964
        %v4085 = vsel %vm4072, %v4070, %v3966
        %v4086 = vsel %vm4072, %v4071, %v3968
        %v4087 = vpack.c.bf16 %v4074, %v4073
        %v4088 = vpack.c.bf16 %v3610, %v3609
        %v4089 = vpack.c.bf16 %v4076, %v4075
        %v4090 = vpack.c.bf16 %v3612, %v3611
        %v4091 = vpack.c.bf16 %v4078, %v4077
        %v4092 = vpack.c.bf16 %v3614, %v3613
        %v4093 = vpack.c.bf16 %v4080, %v4079
        %v4094 = vpack.c.bf16 %v3616, %v3615
        %v4095 = vpack.c.bf16 %v4082, %v4081
        %v4096 = vpack.c.bf16 %v3618, %v3617
        %v4097 = vpack.c.bf16 %v4084, %v4083
        %v4098 = vpack.c.bf16 %v3620, %v3619
        %v4099 = vpack.c.bf16 %v4086, %v4085
        %v4100 = vpack.c.bf16 %v3641, %v3637
        %4101 = vrot.lane.b32.xlu0 %v3607, 16
        %v4102 = vpop.permute.xlu0 %4101
        %4103 = vrot.lane.b32.xlu0 %v3608, 16
        %v4104 = vpop.permute.xlu0 %4103
        %4105 = vrot.lane.b32.xlu0 %v3609, 16
        %v4106 = vpop.permute.xlu0 %4105
        %4107 = vrot.lane.b32.xlu0 %v3610, 16
        %v4108 = vpop.permute.xlu0 %4107
        %4109 = vrot.lane.b32.xlu0 %v3611, 16
        %v4110 = vpop.permute.xlu0 %4109
        %4111 = vrot.lane.b32.xlu0 %v3612, 16
        %v4112 = vpop.permute.xlu0 %4111
        %4113 = vrot.lane.b32.xlu0 %v3613, 16
        %v4114 = vpop.permute.xlu0 %4113
        %4115 = vrot.lane.b32.xlu0 %v3614, 16
        %v4116 = vpop.permute.xlu0 %4115
        %4117 = vrot.lane.b32.xlu0 %v3615, 16
        %v4118 = vpop.permute.xlu0 %4117
        %4119 = vrot.lane.b32.xlu0 %v3616, 16
        %v4120 = vpop.permute.xlu0 %4119
        %4121 = vrot.lane.b32.xlu0 %v3617, 16
        %v4122 = vpop.permute.xlu0 %4121
        %4123 = vrot.lane.b32.xlu0 %v3618, 16
        %v4124 = vpop.permute.xlu0 %4123
        %4125 = vrot.lane.b32.xlu0 %v3619, 16
        %v4126 = vpop.permute.xlu0 %4125
        %4127 = vrot.lane.b32.xlu0 %v3620, 16
        %v4128 = vpop.permute.xlu0 %4127
        %4157 = vrot.lane.b32.xlu0 %v3621, 32
        %v4158 = vpop.permute.xlu0 %4157
        %4159 = vrot.lane.b32.xlu0 %v3622, 32
        %v4160 = vpop.permute.xlu0 %4159
        %4161 = vrot.lane.b32.xlu0 %v3623, 32
        %v4162 = vpop.permute.xlu0 %4161
        %4163 = vrot.lane.b32.xlu0 %v3624, 32
        %v4164 = vpop.permute.xlu0 %4163
        %4165 = vrot.lane.b32.xlu0 %v3625, 32
        %v4166 = vpop.permute.xlu0 %4165
        %4167 = vrot.lane.b32.xlu0 %v3626, 32
        %v4168 = vpop.permute.xlu0 %4167
        %4169 = vrot.lane.b32.xlu0 %v3627, 32
        %v4170 = vpop.permute.xlu0 %4169
        %4171 = vrot.lane.b32.xlu0 %v3628, 32
        %v4172 = vpop.permute.xlu0 %4171
        %4173 = vrot.lane.b32.xlu0 %v3629, 32
        %v4174 = vpop.permute.xlu0 %4173
        %4175 = vrot.lane.b32.xlu0 %v3630, 32
        %v4176 = vpop.permute.xlu0 %4175
        %4177 = vrot.lane.b32.xlu0 %v3631, 32
        %v4178 = vpop.permute.xlu0 %4177
        %4179 = vrot.lane.b32.xlu0 %v3632, 32
        %v4180 = vpop.permute.xlu0 %4179
        %4181 = vrot.lane.b32.xlu0 %v3633, 32
        %v4182 = vpop.permute.xlu0 %4181
        %4183 = vrot.lane.b32.xlu0 %v3634, 32
        %v4184 = vpop.permute.xlu0 %4183
        %4199 = vrot.lane.b32.xlu0 %v3594, 48
        %v4200 = vpop.permute.xlu0 %4199
        %4201 = vrot.lane.b32.xlu0 %v3595, 48
        %v4202 = vpop.permute.xlu0 %4201
        %4203 = vrot.lane.b32.xlu0 %v3596, 48
        %v4204 = vpop.permute.xlu0 %4203
        %4205 = vrot.lane.b32.xlu0 %v3597, 48
        %v4206 = vpop.permute.xlu0 %4205
        %4207 = vrot.lane.b32.xlu0 %v3598, 48
        %v4208 = vpop.permute.xlu0 %4207
        %4209 = vrot.lane.b32.xlu0 %v3599, 48
        %v4210 = vpop.permute.xlu0 %4209
        %4211 = vrot.lane.b32.xlu0 %v3600, 48
        %v4212 = vpop.permute.xlu0 %4211
        %4213 = vrot.lane.b32.xlu0 %v3601, 48
        %v4214 = vpop.permute.xlu0 %4213
        %4215 = vrot.lane.b32.xlu0 %v3602, 48
        %v4216 = vpop.permute.xlu0 %4215
        %4217 = vrot.lane.b32.xlu0 %v3603, 48
        %v4218 = vpop.permute.xlu0 %4217
        %4219 = vrot.lane.b32.xlu0 %v3604, 48
        %v4220 = vpop.permute.xlu0 %4219
        %4221 = vrot.lane.b32.xlu0 %v3605, 48
        %v4222 = vpop.permute.xlu0 %4221
        %4223 = vrot.lane.b32.xlu0 %v3606, 48
        %v4224 = vpop.permute.xlu0 %4223
        %4225 = vrot.lane.b32.xlu0 %v3636, 48
        %v4226 = vpop.permute.xlu0 %4225
        %4241 = vrot.lane.b32.xlu0 %v3608, 64
        %v4242 = vpop.permute.xlu0 %4241
        %4243 = vrot.lane.b32.xlu0 %v3609, 64
        %v4244 = vpop.permute.xlu0 %4243
        %4245 = vrot.lane.b32.xlu0 %v3610, 64
        %v4246 = vpop.permute.xlu0 %4245
        %4247 = vrot.lane.b32.xlu0 %v3611, 64
        %v4248 = vpop.permute.xlu0 %4247
        %4249 = vrot.lane.b32.xlu0 %v3612, 64
        %v4250 = vpop.permute.xlu0 %4249
        %4251 = vrot.lane.b32.xlu0 %v3613, 64
        %v4252 = vpop.permute.xlu0 %4251
        %4253 = vrot.lane.b32.xlu0 %v3614, 64
        %v4254 = vpop.permute.xlu0 %4253
        %4255 = vrot.lane.b32.xlu0 %v3615, 64
        %v4256 = vpop.permute.xlu0 %4255
        %4257 = vrot.lane.b32.xlu0 %v3616, 64
        %v4258 = vpop.permute.xlu0 %4257
        %4259 = vrot.lane.b32.xlu0 %v3617, 64
        %v4260 = vpop.permute.xlu0 %4259
        %4261 = vrot.lane.b32.xlu0 %v3618, 64
        %v4262 = vpop.permute.xlu0 %4261
        %4263 = vrot.lane.b32.xlu0 %v3619, 64
        %v4264 = vpop.permute.xlu0 %4263
        %4265 = vrot.lane.b32.xlu0 %v3620, 64
        %v4266 = vpop.permute.xlu0 %4265
        %4267 = vrot.lane.b32.xlu0 %v3637, 64
        %v4268 = vpop.permute.xlu0 %4267
        %4284 = vrot.lane.b32.xlu0 %v3622, 80
        %v4285 = vpop.permute.xlu0 %4284
        %4286 = vrot.lane.b32.xlu0 %v3623, 80
        %v4287 = vpop.permute.xlu0 %4286
        %4288 = vrot.lane.b32.xlu0 %v3624, 80
        %v4289 = vpop.permute.xlu0 %4288
        %4290 = vrot.lane.b32.xlu0 %v3625, 80
        %v4291 = vpop.permute.xlu0 %4290
        %4292 = vrot.lane.b32.xlu0 %v3626, 80
        %v4293 = vpop.permute.xlu0 %4292
        %4294 = vrot.lane.b32.xlu0 %v3627, 80
        %v4295 = vpop.permute.xlu0 %4294
        %4296 = vrot.lane.b32.xlu0 %v3628, 80
        %v4297 = vpop.permute.xlu0 %4296
        %4298 = vrot.lane.b32.xlu0 %v3629, 80
        %v4299 = vpop.permute.xlu0 %4298
        %4300 = vrot.lane.b32.xlu0 %v3630, 80
        %v4301 = vpop.permute.xlu0 %4300
        %4302 = vrot.lane.b32.xlu0 %v3631, 80
        %v4303 = vpop.permute.xlu0 %4302
        %4304 = vrot.lane.b32.xlu0 %v3632, 80
        %v4305 = vpop.permute.xlu0 %4304
        %4306 = vrot.lane.b32.xlu0 %v3633, 80
        %v4307 = vpop.permute.xlu0 %4306
        %4308 = vrot.lane.b32.xlu0 %v3634, 80
        %v4309 = vpop.permute.xlu0 %4308
        %4310 = vrot.lane.b32.xlu0 %v3638, 80
        %v4311 = vpop.permute.xlu0 %4310
        %4326 = vrot.lane.b32.xlu0 %v3595, 96
        %v4327 = vpop.permute.xlu0 %4326
        %4328 = vrot.lane.b32.xlu0 %v3596, 96
        %v4329 = vpop.permute.xlu0 %4328
        %4330 = vrot.lane.b32.xlu0 %v3597, 96
        %v4331 = vpop.permute.xlu0 %4330
        %4332 = vrot.lane.b32.xlu0 %v3598, 96
        %v4333 = vpop.permute.xlu0 %4332
        %4334 = vrot.lane.b32.xlu0 %v3599, 96
        %v4335 = vpop.permute.xlu0 %4334
        %4336 = vrot.lane.b32.xlu0 %v3600, 96
        %v4337 = vpop.permute.xlu0 %4336
        %4338 = vrot.lane.b32.xlu0 %v3601, 96
        %v4339 = vpop.permute.xlu0 %4338
        %4340 = vrot.lane.b32.xlu0 %v3602, 96
        %v4341 = vpop.permute.xlu0 %4340
        %4342 = vrot.lane.b32.xlu0 %v3603, 96
        %v4343 = vpop.permute.xlu0 %4342
        %4344 = vrot.lane.b32.xlu0 %v3604, 96
        %v4345 = vpop.permute.xlu0 %4344
        %4346 = vrot.lane.b32.xlu0 %v3605, 96
        %v4347 = vpop.permute.xlu0 %4346
        %4348 = vrot.lane.b32.xlu0 %v3606, 96
        %v4349 = vpop.permute.xlu0 %4348
        %4350 = vrot.lane.b32.xlu0 %v3636, 96
        %v4351 = vpop.permute.xlu0 %4350
        %4352 = vrot.lane.b32.xlu0 %v3640, 96
        %v4353 = vpop.permute.xlu0 %4352
        %4369 = vrot.lane.b32.xlu0 %v3609, 112
        %v4370 = vpop.permute.xlu0 %4369
        %4371 = vrot.lane.b32.xlu0 %v3610, 112
        %v4372 = vpop.permute.xlu0 %4371
        %4373 = vrot.lane.b32.xlu0 %v3611, 112
        %v4374 = vpop.permute.xlu0 %4373
        %4375 = vrot.lane.b32.xlu0 %v3612, 112
        %v4376 = vpop.permute.xlu0 %4375
        %4377 = vrot.lane.b32.xlu0 %v3613, 112
        %v4378 = vpop.permute.xlu0 %4377
        %4379 = vrot.lane.b32.xlu0 %v3614, 112
        %v4380 = vpop.permute.xlu0 %4379
        %4381 = vrot.lane.b32.xlu0 %v3615, 112
        %v4382 = vpop.permute.xlu0 %4381
        %4383 = vrot.lane.b32.xlu0 %v3616, 112
        %v4384 = vpop.permute.xlu0 %4383
        %4385 = vrot.lane.b32.xlu0 %v3617, 112
        %v4386 = vpop.permute.xlu0 %4385
        %4387 = vrot.lane.b32.xlu0 %v3618, 112
        %v4388 = vpop.permute.xlu0 %4387
        %4389 = vrot.lane.b32.xlu0 %v3619, 112
        %v4390 = vpop.permute.xlu0 %4389
        %4391 = vrot.lane.b32.xlu0 %v3620, 112
        %v4392 = vpop.permute.xlu0 %4391
        %4393 = vrot.lane.b32.xlu0 %v3637, 112
        %v4394 = vpop.permute.xlu0 %4393
        %4395 = vrot.lane.b32.xlu0 %v3641, 112
        %v4396 = vpop.permute.xlu0 %4395
        %v4411 = vsel %vm3495, %v3593, %v4102
        %v4412 = vsel %vm3495, %v3594, %v4104
        %v4413 = vsel %vm3495, %v3595, %v4106
        %v4414 = vsel %vm3495, %v3596, %v4108
        %v4415 = vsel %vm3495, %v3597, %v4110
        %v4416 = vsel %vm3495, %v3598, %v4112
        %v4417 = vsel %vm3495, %v3599, %v4114
        %v4418 = vsel %vm3495, %v3600, %v4116
        %v4419 = vsel %vm3495, %v3601, %v4118
        %v4420 = vsel %vm3495, %v3602, %v4120
        %v4421 = vsel %vm3495, %v3603, %v4122
        %v4422 = vsel %vm3495, %v3604, %v4124
        %v4423 = vsel %vm3495, %v3605, %v4126
        %v4424 = vsel %vm3495, %v3606, %v4128
        %v4425 = vsel %vm3997, %v4411, %v4158
        %v4426 = vsel %vm3997, %v4412, %v4160
        %v4427 = vsel %vm3997, %v4413, %v4162
        %v4428 = vsel %vm3997, %v4414, %v4164
        %v4429 = vsel %vm3997, %v4415, %v4166
        %v4430 = vsel %vm3997, %v4416, %v4168
        %v4431 = vsel %vm3997, %v4417, %v4170
        %v4432 = vsel %vm3997, %v4418, %v4172
        %v4433 = vsel %vm3997, %v4419, %v4174
        %v4434 = vsel %vm3997, %v4420, %v4176
        %v4435 = vsel %vm3997, %v4421, %v4178
        %v4436 = vsel %vm3997, %v4422, %v4180
        %v4437 = vsel %vm3997, %v4423, %v4182
        %v4438 = vsel %vm3997, %v4424, %v4184
        %v4439 = vsel %vm4012, %v4425, %v4200
        %v4440 = vsel %vm4012, %v4426, %v4202
        %v4441 = vsel %vm4012, %v4427, %v4204
        %v4442 = vsel %vm4012, %v4428, %v4206
        %v4443 = vsel %vm4012, %v4429, %v4208
        %v4444 = vsel %vm4012, %v4430, %v4210
        %v4445 = vsel %vm4012, %v4431, %v4212
        %v4446 = vsel %vm4012, %v4432, %v4214
        %v4447 = vsel %vm4012, %v4433, %v4216
        %v4448 = vsel %vm4012, %v4434, %v4218
        %v4449 = vsel %vm4012, %v4435, %v4220
        %v4450 = vsel %vm4012, %v4436, %v4222
        %v4451 = vsel %vm4012, %v4437, %v4224
        %v4452 = vsel %vm4012, %v4438, %v4226
        %v4453 = vsel %vm4027, %v4439, %v4242
        %v4454 = vsel %vm4027, %v4440, %v4244
        %v4455 = vsel %vm4027, %v4441, %v4246
        %v4456 = vsel %vm4027, %v4442, %v4248
        %v4457 = vsel %vm4027, %v4443, %v4250
        %v4458 = vsel %vm4027, %v4444, %v4252
        %v4459 = vsel %vm4027, %v4445, %v4254
        %v4460 = vsel %vm4027, %v4446, %v4256
        %v4461 = vsel %vm4027, %v4447, %v4258
        %v4462 = vsel %vm4027, %v4448, %v4260
        %v4463 = vsel %vm4027, %v4449, %v4262
        %v4464 = vsel %vm4027, %v4450, %v4264
        %v4465 = vsel %vm4027, %v4451, %v4266
        %v4466 = vsel %vm4027, %v4452, %v4268
        %v4467 = vsel %vm4042, %v4453, %v4285
        %v4468 = vsel %vm4042, %v4454, %v4287
        %v4469 = vsel %vm4042, %v4455, %v4289
        %v4470 = vsel %vm4042, %v4456, %v4291
        %v4471 = vsel %vm4042, %v4457, %v4293
        %v4472 = vsel %vm4042, %v4458, %v4295
        %v4473 = vsel %vm4042, %v4459, %v4297
        %v4474 = vsel %vm4042, %v4460, %v4299
        %v4475 = vsel %vm4042, %v4461, %v4301
        %v4476 = vsel %vm4042, %v4462, %v4303
        %v4477 = vsel %vm4042, %v4463, %v4305
        %v4478 = vsel %vm4042, %v4464, %v4307
        %v4479 = vsel %vm4042, %v4465, %v4309
        %v4480 = vsel %vm4042, %v4466, %v4311
        %v4481 = vsel %vm4057, %v4467, %v4327
        %v4482 = vsel %vm4057, %v4468, %v4329
        %v4483 = vsel %vm4057, %v4469, %v4331
        %v4484 = vsel %vm4057, %v4470, %v4333
        %v4485 = vsel %vm4057, %v4471, %v4335
        %v4486 = vsel %vm4057, %v4472, %v4337
        %v4487 = vsel %vm4057, %v4473, %v4339
        %v4488 = vsel %vm4057, %v4474, %v4341
        %v4489 = vsel %vm4057, %v4475, %v4343
        %v4490 = vsel %vm4057, %v4476, %v4345
        %v4491 = vsel %vm4057, %v4477, %v4347
        %v4492 = vsel %vm4057, %v4478, %v4349
        %v4493 = vsel %vm4057, %v4479, %v4351
        %v4494 = vsel %vm4057, %v4480, %v4353
        %v4495 = vsel %vm4072, %v4481, %v4370
        %v4496 = vsel %vm4072, %v4482, %v4372
        %v4497 = vsel %vm4072, %v4483, %v4374
        %v4498 = vsel %vm4072, %v4484, %v4376
        %v4499 = vsel %vm4072, %v4485, %v4378
        %v4500 = vsel %vm4072, %v4486, %v4380
        %v4501 = vsel %vm4072, %v4487, %v4382
        %v4502 = vsel %vm4072, %v4488, %v4384
        %v4503 = vsel %vm4072, %v4489, %v4386
        %v4504 = vsel %vm4072, %v4490, %v4388
        %v4505 = vsel %vm4072, %v4491, %v4390
        %v4506 = vsel %vm4072, %v4492, %v4392
        %v4507 = vsel %vm4072, %v4493, %v4394
        %v4508 = vsel %vm4072, %v4494, %v4396
        %v4509 = vpack.c.bf16 %v4496, %v4495
        %v4510 = vpack.c.bf16 %v3624, %v3623
        %v4511 = vpack.c.bf16 %v4498, %v4497
        %v4512 = vpack.c.bf16 %v3626, %v3625
        %v4513 = vpack.c.bf16 %v4500, %v4499
        %v4514 = vpack.c.bf16 %v3628, %v3627
        %v4515 = vpack.c.bf16 %v4502, %v4501
        %v4516 = vpack.c.bf16 %v3630, %v3629
        %v4517 = vpack.c.bf16 %v4504, %v4503
        %v4518 = vpack.c.bf16 %v3632, %v3631
        %v4519 = vpack.c.bf16 %v4506, %v4505
        %v4520 = vpack.c.bf16 %v3634, %v3633
        %v4521 = vpack.c.bf16 %v4508, %v4507
        %v4522 = vpack.c.bf16 %v3642, %v3638
        %v4524 = vlaneseq
        %v4525 = vshrl.u32 %v4524, 7
        %v4526 = vsub.s32 0, %v4525
        %v4527 = vrot.slane %v3578, %v4526
        %v4547 = vunpack.c.l.b16 %v3560
        %v4548 = vunpack.c.l.b16 %v3561
        %v4549 = vunpack.c.l.b16 %v3562
        %v4550 = vunpack.c.l.b16 %v3563
        %v4551 = vunpack.c.l.b16 %v3564
        %v4552 = vunpack.c.l.b16 %v3565
        %v4553 = vunpack.c.l.b16 %v3566
        %v4554 = vunpack.c.l.b16 %v3567
        %v4555 = vunpack.c.l.b16 %v3568
        %v4556 = vunpack.c.l.b16 %v3569
        %v4557 = vunpack.c.l.b16 %v3570
        %v4558 = vunpack.c.l.b16 %v3571
        %v4559 = vunpack.c.l.b16 %v3572
        %v4560 = vunpack.c.l.b16 %v3573
        %v4561 = vunpack.c.l.b16 %v3574
        %v4562 = vunpack.c.l.b16 %v3575
        %v4563 = vunpack.c.l.b16 %v3576
        %v4564 = vunpack.c.l.b16 %v3577
        %v4565 = vpack.c.b16 %v4548, %v4547
        %v4566 = vpack.c.b16 %v4550, %v4549
        %v4567 = vpack.c.b16 %v4552, %v4551
        %v4568 = vpack.c.b16 %v4554, %v4553
        %v4569 = vpack.c.b16 %v4556, %v4555
        %v4570 = vpack.c.b16 %v4558, %v4557
        %v4571 = vpack.c.b16 %v4560, %v4559
        %v4572 = vpack.c.b16 %v4562, %v4561
        %v4573 = vpack.c.b16 %v4564, %v4563
        %v4584 = vsel %vm3495, %v4088, 0
        %v4587 = vsel %vm3495, %v4090, 0
        %v4590 = vsel %vm3495, %v4092, 0
        %v4593 = vsel %vm3495, %v4094, 0
        %v4596 = vsel %vm3495, %v4096, 0
        %v4599 = vsel %vm3495, %v4098, 0
        %v4602 = vsel %vm3495, %v4100, 0
        %4604 = vmatprep.subr.bf16.mxu0 0
        %4605 = vmatpush1.bf16.msra.mxu0 %v4565
        %4606 = vmatprep.subr.bf16.mxu0 0
        %4607 = vmatpush1.bf16.msra.mxu0 %v4566
        %4608 = vmatprep.subr.bf16.mxu0 0
        %4609 = vmatpush1.bf16.msra.mxu0 %v4567
        %4610 = vmatprep.subr.bf16.mxu0 0
        %4611 = vmatpush1.bf16.msra.mxu0 %v4568
        %4612 = vmatprep.subr.bf16.mxu0 0
        %4613 = vmatpush1.bf16.msra.mxu0 %v4569
        %4614 = vmatprep.subr.bf16.mxu0 0
        %4615 = vmatpush1.bf16.msra.mxu0 %v4570
        %4616 = vmatprep.subr.bf16.mxu0 0
        %4617 = vmatpush1.bf16.msra.mxu0 %v4571
        %4618 = vmatprep.subr.bf16.mxu0 0
        %4619 = vmatpush1.bf16.msra.mxu0 %v4572
        %4620 = vmatprep.subr.bf16.mxu0 0
        %4621 = vmatpush1.bf16.msra.mxu0 %v4573
        %4622 = vmatprep.subr.bf16.mxu0 0
        %4623 = vmatpush1.bf16.msra.mxu0 0
        %4624 = vmatprep.subr.bf16.mxu0 0
        %4625 = vmatpush1.bf16.msra.mxu0 0
        %4626 = vmatprep.subr.bf16.mxu0 0
        %4627 = vmatpush1.bf16.msra.mxu0 0
        %4628 = vmatprep.subr.bf16.mxu0 0
        %4629 = vmatpush1.bf16.msra.mxu0 0
        %4630 = vmatprep.subr.bf16.mxu0 0
        %4631 = vmatpush1.bf16.msra.mxu0 0
        %4632 = vmatprep.subr.bf16.mxu0 0
        %4633 = vmatpush1.bf16.msra.mxu0 0
        %4634 = vmatprep.subr.bf16.mxu0 0
        %4635 = vmatpush1.bf16.msra.mxu0 0
        %4636 = vmatprep.mubr.bf16.mxu0 %v4584
        %4637 = vmatmul.mubr.bf16.gmra.mrb[0].mxu0 %v4087
        %v4638 = vpop.f32.mrb[0].mxu0
        %v4639 = vadd.f32 %v4527, %v4638
        %v4640 = vpop.f32.mrb[0].mxu0
        %v4641 = vpop.f32.mrb[0].mxu0
        %v4642 = vadd.f32 %v4527, %v4641
        %v4643 = vpop.f32.mrb[0].mxu0
        %4644 = vmatprep.mubr.bf16.mxu0 %v4587
        %4645 = vmatmul.mubr.bf16.gmra.mrb[0].mxu0 %v4089
        %v4646 = vpop.f32.mrb[0].mxu0
        %v4647 = vadd.f32 %v4527, %v4646
        %v4648 = vpop.f32.mrb[0].mxu0
        %v4649 = vpop.f32.mrb[0].mxu0
        %v4650 = vadd.f32 %v4527, %v4649
        %v4651 = vpop.f32.mrb[0].mxu0
        %4652 = vmatprep.mubr.bf16.mxu0 %v4590
        %4653 = vmatmul.mubr.bf16.gmra.mrb[0].mxu0 %v4091
        %v4654 = vpop.f32.mrb[0].mxu0
        %v4655 = vadd.f32 %v4527, %v4654
        %v4656 = vpop.f32.mrb[0].mxu0
        %v4657 = vpop.f32.mrb[0].mxu0
        %v4658 = vadd.f32 %v4527, %v4657
        %v4659 = vpop.f32.mrb[0].mxu0
        %4660 = vmatprep.mubr.bf16.mxu0 %v4593
        %4661 = vmatmul.mubr.bf16.gmra.mrb[0].mxu0 %v4093
        %v4662 = vpop.f32.mrb[0].mxu0
        %v4663 = vadd.f32 %v4527, %v4662
        %v4664 = vpop.f32.mrb[0].mxu0
        %v4665 = vpop.f32.mrb[0].mxu0
        %v4666 = vadd.f32 %v4527, %v4665
        %v4667 = vpop.f32.mrb[0].mxu0
        %4668 = vmatprep.mubr.bf16.mxu0 %v4596
        %4669 = vmatmul.mubr.bf16.gmra.mrb[0].mxu0 %v4095
        %v4670 = vpop.f32.mrb[0].mxu0
        %v4671 = vadd.f32 %v4527, %v4670
        %v4672 = vpop.f32.mrb[0].mxu0
        %v4673 = vpop.f32.mrb[0].mxu0
        %v4674 = vadd.f32 %v4527, %v4673
        %v4675 = vpop.f32.mrb[0].mxu0
        %4676 = vmatprep.mubr.bf16.mxu0 %v4599
        %4677 = vmatmul.mubr.bf16.gmra.mrb[0].mxu0 %v4097
        %v4678 = vpop.f32.mrb[0].mxu0
        %v4679 = vadd.f32 %v4527, %v4678
        %v4680 = vpop.f32.mrb[0].mxu0
        %v4681 = vpop.f32.mrb[0].mxu0
        %v4682 = vadd.f32 %v4527, %v4681
        %v4683 = vpop.f32.mrb[0].mxu0
        %4684 = vmatprep.mubr.bf16.mxu0 %v4602
        %4685 = vmatmul.mubr.bf16.gmra.mrb[0].mxu0 %v4099
        %v4686 = vpop.f32.mrb[0].mxu0
        %v4687 = vadd.f32 %v4527, %v4686
        %v4688 = vpop.f32.mrb[0].mxu0
        %v4689 = vpop.f32.mrb[0].mxu0
        %v4690 = vadd.f32 %v4527, %v4689
        %v4691 = vpop.f32.mrb[0].mxu0
        %4692 = vdwg.mxu0
        %v4693 = vmax.f32 %v4639, 0.0
        %v4694 = vmax.f32 %v4642, 0.0
        %v4695 = vmax.f32 %v4647, 0.0
        %v4696 = vmax.f32 %v4650, 0.0
        %v4697 = vmax.f32 %v4655, 0.0
        %v4698 = vmax.f32 %v4658, 0.0
        %v4699 = vmax.f32 %v4663, 0.0
        %v4700 = vmax.f32 %v4666, 0.0
        %v4701 = vmax.f32 %v4671, 0.0
        %v4702 = vmax.f32 %v4674, 0.0
        %v4703 = vmax.f32 %v4679, 0.0
        %v4704 = vmax.f32 %v4682, 0.0
        %v4705 = vmax.f32 %v4687, 0.0
        %v4706 = vmax.f32 %v4690, 0.0
        %v4708 = vsel %vm3495, %v4510, 0
        %v4711 = vsel %vm3495, %v4512, 0
        %v4714 = vsel %vm3495, %v4514, 0
        %v4717 = vsel %vm3495, %v4516, 0
        %v4720 = vsel %vm3495, %v4518, 0
        %v4723 = vsel %vm3495, %v4520, 0
        %v4726 = vsel %vm3495, %v4522, 0
        %4728 = vmatprep.subr.bf16.mxu0 0
        %4729 = vmatpush1.bf16.msra.mxu0 %v4565
        %4730 = vmatprep.subr.bf16.mxu0 0
        %4731 = vmatpush1.bf16.msra.mxu0 %v4566
        %4732 = vmatprep.subr.bf16.mxu0 0
        %4733 = vmatpush1.bf16.msra.mxu0 %v4567
        %4734 = vmatprep.subr.bf16.mxu0 0
        %4735 = vmatpush1.bf16.msra.mxu0 %v4568
        %4736 = vmatprep.subr.bf16.mxu0 0
        %4737 = vmatpush1.bf16.msra.mxu0 %v4569
        %4738 = vmatprep.subr.bf16.mxu0 0
        %4739 = vmatpush1.bf16.msra.mxu0 %v4570
        %4740 = vmatprep.subr.bf16.mxu0 0
        %4741 = vmatpush1.bf16.msra.mxu0 %v4571
        %4742 = vmatprep.subr.bf16.mxu0 0
        %4743 = vmatpush1.bf16.msra.mxu0 %v4572
        %4744 = vmatprep.subr.bf16.mxu0 0
        %4745 = vmatpush1.bf16.msra.mxu0 %v4573
        %4746 = vmatprep.subr.bf16.mxu0 0
        %4747 = vmatpush1.bf16.msra.mxu0 0
        %4748 = vmatprep.subr.bf16.mxu0 0
        %4749 = vmatpush1.bf16.msra.mxu0 0
        %4750 = vmatprep.subr.bf16.mxu0 0
        %4751 = vmatpush1.bf16.msra.mxu0 0
        %4752 = vmatprep.subr.bf16.mxu0 0
        %4753 = vmatpush1.bf16.msra.mxu0 0
        %4754 = vmatprep.subr.bf16.mxu0 0
        %4755 = vmatpush1.bf16.msra.mxu0 0
        %4756 = vmatprep.subr.bf16.mxu0 0
        %4757 = vmatpush1.bf16.msra.mxu0 0
        %4758 = vmatprep.subr.bf16.mxu0 0
        %4759 = vmatpush1.bf16.msra.mxu0 0
        %4760 = vmatprep.mubr.bf16.mxu0 %v4708
        %4761 = vmatmul.mubr.bf16.gmra.mrb[0].mxu0 %v4509
        %v4762 = vpop.f32.mrb[0].mxu0
        %v4763 = vadd.f32 %v4527, %v4762
        %v4764 = vpop.f32.mrb[0].mxu0
        %v4765 = vpop.f32.mrb[0].mxu0
        %v4766 = vadd.f32 %v4527, %v4765
        %v4767 = vpop.f32.mrb[0].mxu0
        %4768 = vmatprep.mubr.bf16.mxu0 %v4711
        %4769 = vmatmul.mubr.bf16.gmra.mrb[0].mxu0 %v4511
        %v4770 = vpop.f32.mrb[0].mxu0
        %v4771 = vadd.f32 %v4527, %v4770
        %v4772 = vpop.f32.mrb[0].mxu0
        %v4773 = vpop.f32.mrb[0].mxu0
        %v4774 = vadd.f32 %v4527, %v4773
        %v4775 = vpop.f32.mrb[0].mxu0
        %4776 = vmatprep.mubr.bf16.mxu0 %v4714
        %4777 = vmatmul.mubr.bf16.gmra.mrb[0].mxu0 %v4513
        %v4778 = vpop.f32.mrb[0].mxu0
        %v4779 = vadd.f32 %v4527, %v4778
        %v4780 = vpop.f32.mrb[0].mxu0
        %v4781 = vpop.f32.mrb[0].mxu0
        %v4782 = vadd.f32 %v4527, %v4781
        %v4783 = vpop.f32.mrb[0].mxu0
        %4784 = vmatprep.mubr.bf16.mxu0 %v4717
        %4785 = vmatmul.mubr.bf16.gmra.mrb[0].mxu0 %v4515
        %v4786 = vpop.f32.mrb[0].mxu0
        %v4787 = vadd.f32 %v4527, %v4786
        %v4788 = vpop.f32.mrb[0].mxu0
        %v4789 = vpop.f32.mrb[0].mxu0
        %v4790 = vadd.f32 %v4527, %v4789
        %v4791 = vpop.f32.mrb[0].mxu0
        %4792 = vmatprep.mubr.bf16.mxu0 %v4720
        %4793 = vmatmul.mubr.bf16.gmra.mrb[0].mxu0 %v4517
        %v4794 = vpop.f32.mrb[0].mxu0
        %v4795 = vadd.f32 %v4527, %v4794
        %v4796 = vpop.f32.mrb[0].mxu0
        %v4797 = vpop.f32.mrb[0].mxu0
        %v4798 = vadd.f32 %v4527, %v4797
        %v4799 = vpop.f32.mrb[0].mxu0
        %4800 = vmatprep.mubr.bf16.mxu0 %v4723
        %4801 = vmatmul.mubr.bf16.gmra.mrb[0].mxu0 %v4519
        %v4802 = vpop.f32.mrb[0].mxu0
        %v4803 = vadd.f32 %v4527, %v4802
        %v4804 = vpop.f32.mrb[0].mxu0
        %v4805 = vpop.f32.mrb[0].mxu0
        %v4806 = vadd.f32 %v4527, %v4805
        %v4807 = vpop.f32.mrb[0].mxu0
        %4808 = vmatprep.mubr.bf16.mxu0 %v4726
        %4809 = vmatmul.mubr.bf16.gmra.mrb[0].mxu0 %v4521
        %v4810 = vpop.f32.mrb[0].mxu0
        %v4811 = vadd.f32 %v4527, %v4810
        %v4812 = vpop.f32.mrb[0].mxu0
        %v4813 = vpop.f32.mrb[0].mxu0
        %v4814 = vadd.f32 %v4527, %v4813
        %v4815 = vpop.f32.mrb[0].mxu0
        %4816 = vdwg.mxu0
        %v4817 = vmax.f32 %v4763, 0.0
        %v4818 = vmax.f32 %v4766, 0.0
        %v4819 = vmax.f32 %v4771, 0.0
        %v4820 = vmax.f32 %v4774, 0.0
        %v4821 = vmax.f32 %v4779, 0.0
        %v4822 = vmax.f32 %v4782, 0.0
        %v4823 = vmax.f32 %v4787, 0.0
        %v4824 = vmax.f32 %v4790, 0.0
        %v4825 = vmax.f32 %v4795, 0.0
        %v4826 = vmax.f32 %v4798, 0.0
        %v4827 = vmax.f32 %v4803, 0.0
        %v4828 = vmax.f32 %v4806, 0.0
        %v4829 = vmax.f32 %v4811, 0.0
        %v4830 = vmax.f32 %v4814, 0.0
        %v4831 = vmax.f32 %v4693, %v4817
        %v4832 = vmax.f32 %v4694, %v4818
        %v4833 = vmax.f32 %v4695, %v4819
        %v4834 = vmax.f32 %v4696, %v4820
        %v4835 = vmax.f32 %v4697, %v4821
        %v4836 = vmax.f32 %v4698, %v4822
        %v4837 = vmax.f32 %v4699, %v4823
        %v4838 = vmax.f32 %v4700, %v4824
        %v4839 = vmax.f32 %v4701, %v4825
        %v4840 = vmax.f32 %v4702, %v4826
        %v4841 = vmax.f32 %v4703, %v4827
        %v4842 = vmax.f32 %v4704, %v4828
        %v4843 = vmax.f32 %v4705, %v4829
        %v4844 = vmax.f32 %v4706, %v4830
        %v4845 = vmax.f32 %v4831, %v4832
        %v4846 = vmax.f32 %v4833, %v4834
        %v4847 = vmax.f32 %v4835, %v4836
        %v4848 = vmax.f32 %v4837, %v4838
        %v4849 = vmax.f32 %v4839, %v4840
        %v4850 = vmax.f32 %v4841, %v4842
        %v4851 = vmax.f32 %v4843, %v4844
        %vm4852 = vcmask 260096
        %4853 = vst.msk [vmem:[%s264] sm:$0x7f] %vm4852, %v4845
        %4854 = vst.msk [vmem:[%s264 + $0x7] sm:$0x7f] %vm4852, %v4846
        %4855 = vst.msk [vmem:[%s264 + $0xe] sm:$0x7f] %vm4852, %v4847
        %4856 = vst.msk [vmem:[%s264 + $0x15] sm:$0x7f] %vm4852, %v4848
        %4857 = vst.msk [vmem:[%s264 + $0x1c] sm:$0x7f] %vm4852, %v4849
        %4858 = vst.msk [vmem:[%s264 + $0x23] sm:$0x7f] %vm4852, %v4850
        %4859 = vst.msk [vmem:[%s264 + $0x2a] sm:$0x7f] %vm4852, %v4851
        %p4860 = scmp.lt.s32.totalorder %s18, 1
        %s4861 = scalar_select %p4860, %s18, 1
        %s4862 = smul.addr %s4861, 7
        %s4863 = smul.addr %s4862, 8
        %s4864 = scalar_lea.vmem %s5, %s4863
        // Predicated region
        $region53: #{custom_cnn_forward.2} parent=39 // pred_check
          %p4865 = pneg %p146
        $region54: #{custom_cnn_forward.2} parent=39 // pred_check_branch
          %4867 = sbr.rel (%p4865) target = $region56
        $region55: #{custom_cnn_forward.2} parent=39 // pred_region
          _
        $region56: #{custom_cnn_forward.2} parent=39 // pred_fallthru
          _
      $region40: #{custom_cnn_forward.2} parent=5 // pred_fallthru
        _
      %p4868 = scmp.le.s32.totalorder 2, %s13
      // Predicated region
      $region57: #{custom_cnn_forward.2} parent=5 // pred_check
        %p4869 = pneg %p4868
      $region58: #{custom_cnn_forward.2} parent=5 // pred_check_branch
        %4871 = sbr.rel (%p4869) target = $region60
      $region59: #{custom_cnn_forward.2} parent=5 // pred_region
        %s4872 = ssub.s32 %s13, 2
        // Predicated region
        $region61: #{custom_cnn_forward.2} parent=59 // pred_check
          %p4873 = pneg %p152
        $region62: #{custom_cnn_forward.2} parent=59 // pred_check_branch
          %4875 = sbr.rel (%p4873) target = $region64
        $region63: #{custom_cnn_forward.2} parent=59 // pred_region
          %p4876 = scmp.lt.s32.totalorder %s19, 1
          %s4877 = scalar_select %p4876, %s19, 1
          %s4878 = smul.addr %s4877, 7
          %s4879 = smul.addr %s4878, 8
          %s4880 = scalar_lea.vmem %s5, %s4879
        $region64: #{custom_cnn_forward.2} parent=59 // pred_fallthru
          _
      $region60: #{custom_cnn_forward.2} parent=5 // pred_fallthru
        _
    $region6: #{custom_cnn_forward.2} parent=1 // loop_footer
      %s17 = sadd.s32 1, %s13
    $region7: #{custom_cnn_forward.2} parent=1 // loop_footer_branch
      %12 = sbr.rel target = $region3
    $region8: #{custom_cnn_forward.2} parent=1 // loop_exit
      _
    %4881 = vsyncpa [#allocation5], 1
    %s4882 = scalar_lea.sflag [#allocation5], 1
    %4883 = vsyncpa %s4882, 1
    %4884 = vsyncpa [#allocation7], 1

</llo_original>
